<compile_context>
chip_gen: v7x
topology: tpu7x:2x2x1
jax: 0.10.0
libtpu: 0.0.40
codegen_flags: <defaults>
</compile_context>

<pallas_src>
import functools
import math

import jax
import jax.numpy as jnp
from jax.experimental import pallas as pl
from jax.experimental.pallas import tpu as pltpu


def _round_up(x: int, m: int) -> int:
    return ((x + m - 1) // m) * m


def _pe_kernel(strips_ref, o_ref, *, group: int, block_rows: int):
    """One (block_rows, bw) lane-dense tile of the flattened sinusoidal table.

    Slab element (r, w) holds the table entry at
        position = r * group + w // d_model,   feature = w % d_model.
    strips_ref rows: 0 = pos_off (w // d_model), 1 = div_term, 2 = parity.
    """
    tr, bw = o_ref.shape

    pos_off = strips_ref[0:1, :]      # (1, bw) small exact ints as f32
    div_term = strips_ref[1:2, :]     # (1, bw) per-feature frequency
    parity = strips_ref[2:3, :]       # (1, bw): 1.0 on odd (cos) features

    # Exact integer position arithmetic in f32 (all values < 2^24), then a
    # single rounding in pos*div_term -> angles bit-match the reference.
    base_pos = (pl.program_id(0) * (block_rows * group)).astype(jnp.float32)
    off = pos_off + base_pos                                   # (1, bw) strip
    row = jax.lax.broadcasted_iota(jnp.int32, (tr, bw), 0).astype(jnp.float32)
    pos = row * jnp.float32(group) + off
    angle = pos * div_term

    val = jnp.where(parity > 0.5, jnp.cos(angle), jnp.sin(angle))
    o_ref[...] = val.astype(o_ref.dtype)


@functools.lru_cache(maxsize=None)
def _pe_table(d_model: int, max_len: int = 5000, dtype=jnp.float32) -> jax.Array:
    """Build the full (max_len, d_model) sinusoidal table once (cached).

    TODO(synk): lru_cache pins the device buffer and is not keyed on
    device/mesh/sharding; rebuild or re-place per mesh in multi-device setups.
    """
    assert d_model % 2 == 0, "PyTorch reference requires even d_model"

    # Lane-dense slab width: smallest multiple of 128 packing whole rows.
    w_total = (128 * d_model) // math.gcd(128, d_model)   # lcm(d_model, 128)
    group = w_total // d_model                             # positions per slab row
    rows = pl.cdiv(max_len, group)
    rows8 = _round_up(rows, 8)

    # Grid-invariant per-lane strips, computed once in plain JAX (tiny DMA).
    lane = jnp.arange(w_total, dtype=jnp.int32)
    col = lane % d_model
    pos_off = (lane // d_model).astype(jnp.float32)
    div_term = jnp.exp(
        (2 * (col // 2)).astype(jnp.float32) * (-(math.log(10000.0) / d_model))
    )
    parity = (col % 2).astype(jnp.float32)
    strips = (
        jnp.zeros((8, w_total), jnp.float32)
        .at[0].set(pos_off)
        .at[1].set(div_term)
        .at[2].set(parity)
    )

    # Block sizing: ~2 MiB output blocks (4 MiB double-buffered), well under
    # every generation's scoped-VMEM default.  If lcm(d_model, 128) is
    # pathologically wide, tile the lane axis too (second grid dim) so a
    # single block can never exceed the budget.
    lane_budget = 65536                          # 8 rows * 65536 * 4 B = 2 MiB
    if w_total > lane_budget:
        bw = lane_budget                         # multiple of 128
        block_rows = 8
    else:
        bw = w_total
        bytes_per_row = bw * 4
        max_block_rows = max(8, (2 * 1024 * 1024 // bytes_per_row) // 8 * 8)
        nb = pl.cdiv(rows8, max_block_rows)
        # v7x has 2 TensorCores: prefer an even (>=4 when possible) number of
        # row blocks so the "parallel" grid shards evenly across cores.
        if rows8 >= 32:
            nb = max(nb, 4)
        elif rows8 >= 16:
            nb = max(nb, 2)
        if nb % 2 and rows8 >= 16:
            nb += 1
        block_rows = max(8, _round_up(pl.cdiv(rows8, nb), 8))
        while block_rows > 8 and pl.cdiv(rows8, block_rows) % 2 == 1:
            block_rows -= 8                      # best-effort even block count

    num_row_blocks = pl.cdiv(rows8, block_rows)
    num_lane_blocks = pl.cdiv(w_total, bw)
    rows_pad = num_row_blocks * block_rows

    pe_slab = pl.pallas_call(
        functools.partial(_pe_kernel, group=group, block_rows=block_rows),
        out_shape=jax.ShapeDtypeStruct((rows_pad, w_total), dtype),
        grid=(num_row_blocks, num_lane_blocks),
        in_specs=[pl.BlockSpec((8, bw), lambda i, j: (0, j))],
        out_specs=pl.BlockSpec((block_rows, bw), lambda i, j: (i, j)),
        compiler_params=pltpu.CompilerParams(
            dimension_semantics=("parallel", "parallel")
        ),
    )(strips)

    # Row-major reshape (free, no transpose) back to (positions, d_model).
    return pe_slab.reshape(rows_pad * group, d_model)[:max_len]


def positional_embedding(
    x: jax.Array, d_model: int, max_len: int = 5000, dtype=jnp.float32
) -> jax.Array:
    """Equivalent of PositionalEmbedding(d_model, max_len).forward(x).

    The table build is one-shot and cached; the recurring cost is the slice
    and the downstream `x + pe`.  Call this inside the consumer's jit so XLA
    fuses slice/add, and pass dtype=jnp.bfloat16 to halve the steady-state HBM
    read if the add tolerates it (default f32 matches the PyTorch buffer).
    """
    seq_len = x.shape[1]
    assert seq_len <= max_len, "seq_len exceeds max_len"
    return _pe_table(d_model, max_len, dtype)[None, :seq_len, :]


def _reference_pe(seq_len: int, d_model: int) -> jnp.ndarray:
    """Plain-JAX transcription of the PyTorch __init__ table (for checking)."""
    position = jnp.arange(seq_len, dtype=jnp.float32)[:, None]
    div_term = jnp.exp(
        jnp.arange(0, d_model, 2, dtype=jnp.float32) * -(math.log(10000.0) / d_model)
    )
    pe = jnp.zeros((seq_len, d_model), jnp.float32)
    pe = pe.at[:, 0::2].set(jnp.sin(position * div_term))
    pe = pe.at[:, 1::2].set(jnp.cos(position * div_term))
    return pe[None]


if __name__ == "__main__":
    key = jax.random.PRNGKey(0)
    batch, seq, d_model, max_len = 2, 8, 32, 5000
    x = jax.random.normal(key, (batch, seq, d_model), dtype=jnp.float32)

    out = positional_embedding(x, d_model=d_model, max_len=max_len)
    out = jax.block_until_ready(out)
    assert out.shape == (1, seq, d_model), out.shape

    # Short-sequence check: angles are small and bit-match the reference
    # construction, so only sin/cos implementation ulps remain.
    ref_small = _reference_pe(seq, d_model)
    assert jnp.allclose(out, ref_small, atol=1e-5, rtol=1e-5), "mismatch (short)"

    # Long-position check (review item): angles reach ~max_len rad where
    # different sin/cos range reductions may legitimately differ by ~1e-4,
    # but any parity/layout/interleave bug would be O(1).
    full = jax.block_until_ready(_pe_table(d_model, max_len, jnp.float32))
    ref_full = _reference_pe(max_len, d_model)[0]
    assert full.shape == (max_len, d_model), full.shape
    assert jnp.allclose(full[:64], ref_full[:64], atol=1e-5, rtol=1e-5), (
        "mismatch (head)"
    )
    assert jnp.allclose(full, ref_full, atol=5e-3, rtol=0.0), "mismatch (long)"

    print("KERNEL_OK")
</pallas_src>

<mosaic_0001>
module attributes {stable_mosaic.version = 11 : i64} {
  func.func @_pe_kernel(%arg0: i32, %arg1: i32, %arg2: memref<8x128xf32, #tpu.memory_space<vmem>>, %arg3: memref<320x128xf32, #tpu.memory_space<vmem>>) attributes {dimension_semantics = [#tpu.dimension_semantics<parallel>, #tpu.dimension_semantics<parallel>], iteration_bounds = array<i64: 4, 1>, scalar_prefetch = 0 : i64, scratch_operands = 0 : i64, tpu.core_type = #tpu.core_type<tc>, window_params = [{transform_indices = @transform_0, window_bounds = array<i64: 8, 128>}, {transform_indices = @transform_1, window_bounds = array<i64: 320, 128>}]} {
    %c0 = arith.constant 0 : index
    %c0_0 = arith.constant 0 : index
    %0 = vector.load %arg2[%c0, %c0_0] : memref<8x128xf32, #tpu.memory_space<vmem>>, vector<1x128xf32>
    %c1 = arith.constant 1 : index
    %c0_1 = arith.constant 0 : index
    %1 = vector.load %arg2[%c1, %c0_1] : memref<8x128xf32, #tpu.memory_space<vmem>>, vector<1x128xf32>
    %c2 = arith.constant 2 : index
    %c0_2 = arith.constant 0 : index
    %2 = vector.load %arg2[%c2, %c0_2] : memref<8x128xf32, #tpu.memory_space<vmem>>, vector<1x128xf32>
    %c1280_i32 = arith.constant 1280 : i32
    %3 = arith.muli %arg0, %c1280_i32 : i32
    %4 = arith.sitofp %3 : i32 to f32
    %5 = vector.broadcast %4 : f32 to vector<1x128xf32>
    %6 = arith.addf %0, %5 : vector<1x128xf32>
    %7 = tpu.iota {dimensions = array<i32: 0>} : vector<320x128xi32>
    %8 = arith.sitofp %7 : vector<320x128xi32> to vector<320x128xf32>
    %cst = arith.constant 4.000000e+00 : f32
    %9 = vector.broadcast %cst : f32 to vector<320x128xf32>
    %10 = arith.mulf %8, %9 : vector<320x128xf32>
    %11 = vector.broadcast %6 : vector<1x128xf32> to vector<320x128xf32>
    %12 = arith.addf %10, %11 : vector<320x128xf32>
    %13 = vector.broadcast %1 : vector<1x128xf32> to vector<320x128xf32>
    %14 = arith.mulf %12, %13 : vector<320x128xf32>
    %cst_3 = arith.constant 5.000000e-01 : f32
    %15 = vector.broadcast %cst_3 : f32 to vector<1x128xf32>
    %16 = arith.cmpf ogt, %2, %15 : vector<1x128xf32>
    %17 = math.cos %14 : vector<320x128xf32>
    %18 = math.sin %14 : vector<320x128xf32>
    %19 = vector.shape_cast %16 : vector<1x128xi1> to vector<1x128xi1>
    %20 = vector.broadcast %19 : vector<1x128xi1> to vector<320x128xi1>
    %21 = arith.select %20, %17, %18 : vector<320x128xi1>, vector<320x128xf32>
    %c0_4 = arith.constant 0 : index
    %c0_5 = arith.constant 0 : index
    %22 = vector.load %arg3[%c0_4, %c0_5] : memref<320x128xf32, #tpu.memory_space<vmem>>, vector<320x128xf32>
    tpu.vector_store %arg3[%c0_4, %c0_5], %21 {strides = array<i32>} : memref<320x128xf32, #tpu.memory_space<vmem>>, vector<320x128xf32>,
    return
  }
  func.func @transform_0(%arg0: i32, %arg1: i32) -> (i32, i32) {
    %c0_i32 = arith.constant 0 : i32
    %c0_i32_0 = arith.constant 0 : i32
    return %c0_i32, %arg1 : i32, i32
  }
  func.func @transform_1(%arg0: i32, %arg1: i32) -> (i32, i32) {
    %c0_i32 = arith.constant 0 : i32
    return %arg0, %arg1 : i32, i32
  }
}

</mosaic_0001>

<llo_original>
// kernel: tpu_custom_call.1
$region0: #{tpu_custom_call.1}
  #allocation0 [shape = 'u32[]', space=smem, size = 0x4, offset = 0x4, fixed_abs, tag = 'smem constant byte address 0x4 - core index']
  #allocation1 [shape = 'u32[144,128]{1,0:T(1,128)}', space=vmem, size = 0x12000, scoped, tag = 'internal scratch']
  %s0 = inlined_call_operand.hbm [shape: f32[8,128], index: 0, kind: input, shape index: {}]
  %s1 = inlined_call_operand.hbm [shape: f32[1280,128], index: 1, kind: output, shape index: {}]
  %s2 = sld [smem:[#allocation0]]
  $region41: #{tpu_custom_call.1} parent=0
    _
  %s4 = ssub.s32 1, %s2
  %s5 = scalar_select 0, %s4, %s2
  $region1: #{tpu_custom_call.1} parent=0
    #allocation2 [shape = 'u8[4096]{0}', space=vmem, size = 0x1000, scoped, tag = 'input window, operand 0, single buffered']
    #allocation3 [shape = 's32[2]{0}', space=sflag, size = 0x8, scoped, tag = 'scoped memory for tpu_custom_call.1']
    #allocation4 [shape = 's32[2]{0}', space=sflag, size = 0x8, scoped, tag = 'scoped memory for tpu_custom_call.1']
    #allocation5 [shape = 'u8[327680]{0}', space=vmem, size = 0x50000, scoped, tag = 'output window, operand 0']
    %6 = vsyncpa [#allocation3], 0
    %7 = vsyncpa [#allocation4], 0
    %s8 = scalar_lea.sflag [#allocation4], 1
    %9 = vsyncpa %s8, 0
    loop: start=0, step=1, limit=6
    $region2: #{tpu_custom_call.1} parent=1 // loop_pre_header
      _
    $region3: #{tpu_custom_call.1} parent=1 // loop_header
      %s11 = sphi 0, %s15
      %p12 = scmp.ge.s32.totalorder %s11, 6
      %s18 = sphi 0, %s30
      %s19 = sphi 0, %s26
      %s20 = sphi 0, %s18
      %s21 = sphi 0, %s19
      %s22 = sphi 0, %s20
      %s23 = sphi 0, %s21
      %s33 = sphi 0, %s35
      %s36 = sphi 0, %s33
      %s37 = sphi 0, %s36
      %s53 = sphi 0, %s37
      %s61 = sphi 0, %s63
      %s64 = sphi 0, %s61
      %s65 = sphi 0, %s64
      %s81 = sphi 0, %s65
    $region4: #{tpu_custom_call.1} parent=1 // loop_header_branch
      %14 = sbr.rel (%p12) target = $region8
    $region5: #{tpu_custom_call.1} parent=1 // loop_body
      %s16 = ssub.s32 %s11, 1
      %s17 = ssub.s32 %s11, 2
      %s24 = sadd.s32 1, %s19
      %p25 = scmp.ge.s32.totalorder %s24, 1
      %s26 = scalar_select %p25, 0, %s24
      %s27 = sadd.s32 1, %s18
      %s28 = scalar_select %p25, %s27, %s18
      %p29 = scmp.ge.s32.totalorder %s28, 4
      %s30 = scalar_select %p29, 0, %s28
      %s31 = ssub.s32 %s19, %s26
      %p32 = scmp.eq.s32.totalorder %s31, 0
      %s34 = sadd.s32 %s33, 1
      %s35 = scalar_select %p32, %s33, %s34
      %p38 = pneg %p32
      %p39 = scmp.eq.s32.totalorder %s11, 3
      %p40 = por %p38, %p39
      %p41 = scmp.ne.s32.totalorder %s33, %s36
      %p42 = scmp.eq.s32.totalorder %s11, 0
      %p43 = por %p41, %p42
      %p44 = scmp.ne.s32.totalorder %s33, %s36
      %p45 = scmp.eq.s32.totalorder %s16, 3
      %p46 = por %p44, %p45
      %p47 = scmp.ne.s32.totalorder %s36, %s37
      %p48 = scmp.eq.s32.totalorder %s16, 0
      %p49 = por %p47, %p48
      %p50 = scmp.ne.s32.totalorder %s36, %s37
      %p51 = scmp.eq.s32.totalorder %s17, 3
      %p52 = por %p50, %p51
      %p54 = scmp.ne.s32.totalorder %s37, %s53
      %p55 = scmp.eq.s32.totalorder %s17, 0
      %p56 = por %p54, %p55
      %s57 = ssub.s32 %s18, %s30
      %s58 = ssub.s32 %s19, %s26
      %s59 = sor.u32 %s57, %s58
      %p60 = scmp.eq.s32.totalorder %s59, 0
      %s62 = sadd.s32 %s61, 1
      %s63 = scalar_select %p60, %s61, %s62
      %p66 = pneg %p60
      %p67 = scmp.eq.s32.totalorder %s11, 3
      %p68 = por %p66, %p67
      %p69 = scmp.ne.s32.totalorder %s61, %s64
      %p70 = scmp.eq.s32.totalorder %s11, 0
      %p71 = por %p69, %p70
      %p72 = scmp.ne.s32.totalorder %s61, %s64
      %p73 = scmp.eq.s32.totalorder %s16, 3
      %p74 = por %p72, %p73
      %p75 = scmp.ne.s32.totalorder %s64, %s65
      %p76 = scmp.eq.s32.totalorder %s16, 0
      %p77 = por %p75, %p76
      %p78 = scmp.ne.s32.totalorder %s64, %s65
      %p79 = scmp.eq.s32.totalorder %s17, 3
      %p80 = por %p78, %p79
      %p82 = scmp.ne.s32.totalorder %s65, %s81
      %p83 = scmp.eq.s32.totalorder %s17, 0
      %p84 = por %p82, %p83
      %p85 = scmp.le.s32.totalorder 1, %s11
      %p86 = scmp.lt.s32.totalorder %s11, 5
      %p87 = pnand %p85, %p86
      %p88 = pneg %p87
      // Predicated region
      $region9: #{tpu_custom_call.1} parent=5 // pred_check
        _
      $region10: #{tpu_custom_call.1} parent=5 // pred_check_branch
        %90 = sbr.rel (%p87) target = $region12
      $region11: #{tpu_custom_call.1} parent=5 // pred_region
        %s91 = ssub.s32 %s11, 1
        // Predicated region
        $region13: #{tpu_custom_call.1} parent=11 // pred_check
          %p92 = pneg %p49
        $region14: #{tpu_custom_call.1} parent=11 // pred_check_branch
          %94 = sbr.rel (%p92) target = $region16
        $region15: #{tpu_custom_call.1} parent=11 // pred_region
          %s96 = ssub.s32 128, 128
          %97 = vsyncadd [#allocation3], %s96
          %s98 = smul.addr %s21, 128
          %s99 = scalar_lea.hbm %s0, %s98
          %s101 = sshll.u32 [#allocation2], 4
          %s102 = int_to_ptr.vmem [resolvable:$true] %s101
          %104 = dma.hbm_to_vmem [thread:$0]  %s99, 128, %s102, [#allocation3]
        $region16: #{tpu_custom_call.1} parent=11 // pred_fallthru
          _
      $region12: #{tpu_custom_call.1} parent=5 // pred_fallthru
        _
      %p105 = scmp.lt.s32.totalorder %s11, 4
      // Predicated region
      $region17: #{tpu_custom_call.1} parent=5 // pred_check
        %p106 = pneg %p105
      $region18: #{tpu_custom_call.1} parent=5 // pred_check_branch
        %108 = sbr.rel (%p106) target = $region20
      $region19: #{tpu_custom_call.1} parent=5 // pred_region
        _
      $region20: #{tpu_custom_call.1} parent=5 // pred_fallthru
        _
      %p109 = scmp.le.s32.totalorder 1, %s11
      %p110 = scmp.lt.s32.totalorder %s11, 5
      %p111 = pnand %p109, %p110
      %p112 = pneg %p111
      // Predicated region
      $region21: #{tpu_custom_call.1} parent=5 // pred_check
        _
      $region22: #{tpu_custom_call.1} parent=5 // pred_check_branch
        %114 = sbr.rel (%p111) target = $region24
      $region23: #{tpu_custom_call.1} parent=5 // pred_region
        %s115 = ssub.s32 %s11, 1
        // Predicated region
        $region25: #{tpu_custom_call.1} parent=23 // pred_check
          %p116 = pneg %p49
        $region26: #{tpu_custom_call.1} parent=23 // pred_check_branch
          %118 = sbr.rel (%p116) target = $region28
        $region27: #{tpu_custom_call.1} parent=23 // pred_region
          %119 = dma.done [#allocation3], 128
        $region28: #{tpu_custom_call.1} parent=23 // pred_fallthru
          _
        %p120 = pneg %p49
        %p121 = pneg %p46
        %p122 = pneg %p77
        %p123 = pneg %p74
        %s124 = sand.u32 %s64, 1
        %s125 = scalar_lea.sflag [#allocation4], %s124
        %s126 = sand.u32 %s64, 1
        %s127 = smul.addr %s126, 320
        %s128 = scalar_lea.vmem [#allocation5], %s127
        %s129 = smul.u32 40, %s20
        %v130 = vld [vmem:[#allocation2] sm:$0x1]
        %v131 = vld [vmem:[#allocation2 + $0x1] sm:$0x1]
        %v132 = vld [vmem:[#allocation2 + $0x2] sm:$0x1]
        %s133 = smul.u32 %s20, 1280
        %s134 = scvt.s32.f32 %s133
        %v135 = vstv %s134
        %v136 = vadd.f32 %v130, %v135
        %v137 = vlaneseq
        %v138 = vshrl.u32 %v137, 7
        %v139 = vadd.s32 %v138, 8
        %v140 = vadd.s32 %v138, 16
        %v141 = vadd.s32 %v138, 24
        %v142 = vadd.s32 %v138, 32
        %v143 = vadd.s32 %v138, 40
        %v144 = vadd.s32 %v138, 48
        %v145 = vadd.s32 %v138, 56
        %v146 = vadd.s32 %v138, 64
        %v147 = vadd.s32 %v138, 72
        %v148 = vadd.s32 %v138, 80
        %v149 = vadd.s32 %v138, 88
        %v150 = vadd.s32 %v138, 96
        %v151 = vadd.s32 %v138, 104
        %v152 = vadd.s32 %v138, 112
        %v153 = vadd.s32 %v138, 120
        %v154 = vadd.s32 %v138, 128
        %v155 = vadd.s32 %v138, 136
        %v156 = vadd.s32 %v138, 144
        %v157 = vadd.s32 %v138, 152
        %v158 = vadd.s32 %v138, 160
        %v159 = vadd.s32 %v138, 168
        %v160 = vadd.s32 %v138, 176
        %v161 = vadd.s32 %v138, 184
        %v162 = vadd.s32 %v138, 192
        %v163 = vadd.s32 %v138, 200
        %v164 = vadd.s32 %v138, 208
        %v165 = vadd.s32 %v138, 216
        %v166 = vadd.s32 %v138, 224
        %v167 = vadd.s32 %v138, 232
        %v168 = vadd.s32 %v138, 240
        %v169 = vadd.s32 %v138, 248
        %v170 = vadd.s32 %v138, 256
        %v171 = vadd.s32 %v138, 264
        %v172 = vadd.s32 %v138, 272
        %v173 = vadd.s32 %v138, 280
        %v174 = vadd.s32 %v138, 288
        %v175 = vadd.s32 %v138, 296
        %v176 = vadd.s32 %v138, 304
        %v177 = vadd.s32 %v138, 312
        %v178 = vcvt.s32.f32 %v138
        %v179 = vcvt.s32.f32 %v139
        %v180 = vcvt.s32.f32 %v140
        %v181 = vcvt.s32.f32 %v141
        %v182 = vcvt.s32.f32 %v142
        %v183 = vcvt.s32.f32 %v143
        %v184 = vcvt.s32.f32 %v144
        %v185 = vcvt.s32.f32 %v145
        %v186 = vcvt.s32.f32 %v146
        %v187 = vcvt.s32.f32 %v147
        %v188 = vcvt.s32.f32 %v148
        %v189 = vcvt.s32.f32 %v149
        %v190 = vcvt.s32.f32 %v150
        %v191 = vcvt.s32.f32 %v151
        %v192 = vcvt.s32.f32 %v152
        %v193 = vcvt.s32.f32 %v153
        %v194 = vcvt.s32.f32 %v154
        %v195 = vcvt.s32.f32 %v155
        %v196 = vcvt.s32.f32 %v156
        %v197 = vcvt.s32.f32 %v157
        %v198 = vcvt.s32.f32 %v158
        %v199 = vcvt.s32.f32 %v159
        %v200 = vcvt.s32.f32 %v160
        %v201 = vcvt.s32.f32 %v161
        %v202 = vcvt.s32.f32 %v162
        %v203 = vcvt.s32.f32 %v163
        %v204 = vcvt.s32.f32 %v164
        %v205 = vcvt.s32.f32 %v165
        %v206 = vcvt.s32.f32 %v166
        %v207 = vcvt.s32.f32 %v167
        %v208 = vcvt.s32.f32 %v168
        %v209 = vcvt.s32.f32 %v169
        %v210 = vcvt.s32.f32 %v170
        %v211 = vcvt.s32.f32 %v171
        %v212 = vcvt.s32.f32 %v172
        %v213 = vcvt.s32.f32 %v173
        %v214 = vcvt.s32.f32 %v174
        %v215 = vcvt.s32.f32 %v175
        %v216 = vcvt.s32.f32 %v176
        %v217 = vcvt.s32.f32 %v177
        %v218 = vmul.f32 %v178, 4.0
        %v219 = vmul.f32 %v179, 4.0
        %v220 = vmul.f32 %v180, 4.0
        %v221 = vmul.f32 %v181, 4.0
        %v222 = vmul.f32 %v182, 4.0
        %v223 = vmul.f32 %v183, 4.0
        %v224 = vmul.f32 %v184, 4.0
        %v225 = vmul.f32 %v185, 4.0
        %v226 = vmul.f32 %v186, 4.0
        %v227 = vmul.f32 %v187, 4.0
        %v228 = vmul.f32 %v188, 4.0
        %v229 = vmul.f32 %v189, 4.0
        %v230 = vmul.f32 %v190, 4.0
        %v231 = vmul.f32 %v191, 4.0
        %v232 = vmul.f32 %v192, 4.0
        %v233 = vmul.f32 %v193, 4.0
        %v234 = vmul.f32 %v194, 4.0
        %v235 = vmul.f32 %v195, 4.0
        %v236 = vmul.f32 %v196, 4.0
        %v237 = vmul.f32 %v197, 4.0
        %v238 = vmul.f32 %v198, 4.0
        %v239 = vmul.f32 %v199, 4.0
        %v240 = vmul.f32 %v200, 4.0
        %v241 = vmul.f32 %v201, 4.0
        %v242 = vmul.f32 %v202, 4.0
        %v243 = vmul.f32 %v203, 4.0
        %v244 = vmul.f32 %v204, 4.0
        %v245 = vmul.f32 %v205, 4.0
        %v246 = vmul.f32 %v206, 4.0
        %v247 = vmul.f32 %v207, 4.0
        %v248 = vmul.f32 %v208, 4.0
        %v249 = vmul.f32 %v209, 4.0
        %v250 = vmul.f32 %v210, 4.0
        %v251 = vmul.f32 %v211, 4.0
        %v252 = vmul.f32 %v212, 4.0
        %v253 = vmul.f32 %v213, 4.0
        %v254 = vmul.f32 %v214, 4.0
        %v255 = vmul.f32 %v215, 4.0
        %v256 = vmul.f32 %v216, 4.0
        %v257 = vmul.f32 %v217, 4.0
        %v258 = vlaneseq
        %v259 = vshrl.u32 %v258, 7
        %v260 = vsub.s32 0, %v259
        %v261 = vrot.slane %v136, %v260
        %v262 = vadd.f32 %v218, %v261
        %v263 = vadd.f32 %v219, %v261
        %v264 = vadd.f32 %v220, %v261
        %v265 = vadd.f32 %v221, %v261
        %v266 = vadd.f32 %v222, %v261
        %v267 = vadd.f32 %v223, %v261
        %v268 = vadd.f32 %v224, %v261
        %v269 = vadd.f32 %v225, %v261
        %v270 = vadd.f32 %v226, %v261
        %v271 = vadd.f32 %v227, %v261
        %v272 = vadd.f32 %v228, %v261
        %v273 = vadd.f32 %v229, %v261
        %v274 = vadd.f32 %v230, %v261
        %v275 = vadd.f32 %v231, %v261
        %v276 = vadd.f32 %v232, %v261
        %v277 = vadd.f32 %v233, %v261
        %v278 = vadd.f32 %v234, %v261
        %v279 = vadd.f32 %v235, %v261
        %v280 = vadd.f32 %v236, %v261
        %v281 = vadd.f32 %v237, %v261
        %v282 = vadd.f32 %v238, %v261
        %v283 = vadd.f32 %v239, %v261
        %v284 = vadd.f32 %v240, %v261
        %v285 = vadd.f32 %v241, %v261
        %v286 = vadd.f32 %v242, %v261
        %v287 = vadd.f32 %v243, %v261
        %v288 = vadd.f32 %v244, %v261
        %v289 = vadd.f32 %v245, %v261
        %v290 = vadd.f32 %v246, %v261
        %v291 = vadd.f32 %v247, %v261
        %v292 = vadd.f32 %v248, %v261
        %v293 = vadd.f32 %v249, %v261
        %v294 = vadd.f32 %v250, %v261
        %v295 = vadd.f32 %v251, %v261
        %v296 = vadd.f32 %v252, %v261
        %v297 = vadd.f32 %v253, %v261
        %v298 = vadd.f32 %v254, %v261
        %v299 = vadd.f32 %v255, %v261
        %v300 = vadd.f32 %v256, %v261
        %v301 = vadd.f32 %v257, %v261
        %v302 = vlaneseq
        %v303 = vshrl.u32 %v302, 7
        %v304 = vsub.s32 0, %v303
        %v305 = vrot.slane %v131, %v304
        %v306 = vmul.f32 %v262, %v305
        %v307 = vmul.f32 %v263, %v305
        %v308 = vmul.f32 %v264, %v305
        %v309 = vmul.f32 %v265, %v305
        %v310 = vmul.f32 %v266, %v305
        %v311 = vmul.f32 %v267, %v305
        %v312 = vmul.f32 %v268, %v305
        %v313 = vmul.f32 %v269, %v305
        %v314 = vmul.f32 %v270, %v305
        %v315 = vmul.f32 %v271, %v305
        %v316 = vmul.f32 %v272, %v305
        %v317 = vmul.f32 %v273, %v305
        %v318 = vmul.f32 %v274, %v305
        %v319 = vmul.f32 %v275, %v305
        %v320 = vmul.f32 %v276, %v305
        %v321 = vmul.f32 %v277, %v305
        %v322 = vmul.f32 %v278, %v305
        %v323 = vmul.f32 %v279, %v305
        %v324 = vmul.f32 %v280, %v305
        %v325 = vmul.f32 %v281, %v305
        %v326 = vmul.f32 %v282, %v305
        %v327 = vmul.f32 %v283, %v305
        %v328 = vmul.f32 %v284, %v305
        %v329 = vmul.f32 %v285, %v305
        %v330 = vmul.f32 %v286, %v305
        %v331 = vmul.f32 %v287, %v305
        %v332 = vmul.f32 %v288, %v305
        %v333 = vmul.f32 %v289, %v305
        %v334 = vmul.f32 %v290, %v305
        %v335 = vmul.f32 %v291, %v305
        %v336 = vmul.f32 %v292, %v305
        %v337 = vmul.f32 %v293, %v305
        %v338 = vmul.f32 %v294, %v305
        %v339 = vmul.f32 %v295, %v305
        %v340 = vmul.f32 %v296, %v305
        %v341 = vmul.f32 %v297, %v305
        %v342 = vmul.f32 %v298, %v305
        %v343 = vmul.f32 %v299, %v305
        %v344 = vmul.f32 %v300, %v305
        %v345 = vmul.f32 %v301, %v305
        %vm346 = vcmp.gt.f32.partialorder %v132, 0.5
        %v347 = vand.u32 2147483647, %v306
        %vm348 = vcmp.le.f32.partialorder %v347, 0.7853982
        %vm349 = vcmp.lt.s32.totalorder %v306, 0
        %v350 = vand.u32 %v306, 2139095040
        %v351 = vshrl.u32 %v350, 23
        %v352 = vsub.s32 %v351, 127
        %v353 = vand.u32 2147483647, %v306
        %v354 = vand.u32 %v353, 8388607
        %v355 = vor.u32 %v354, 8388608
        %v356 = vsub.s32 0, %v355
        %v357 = vadd.s32 %v352, 1
        %vm358 = vcmp.gt.s32.totalorder %v357, 0
        %v359 = vsel %vm358, %v357, 0
        %v360 = vshrl.u32 %v359, 5
        %v361 = vand.u32 %v359, 31
        %v362 = vsub.s32 32, %v361
        %v363 = vshrl.u32 683565275, %v362
        %v364 = vshll.u32 683565275, %v361
        %v365 = vshrl.u32 2475754826, %v362
        %v366 = vor.u32 %v364, %v365
        %v367 = vshll.u32 2475754826, %v361
        %v368 = vshrl.u32 2131351028, %v362
        %v369 = vor.u32 %v367, %v368
        %v370 = vshll.u32 2131351028, %v361
        %v371 = vshrl.u32 2102212464, %v362
        %v372 = vor.u32 %v370, %v371
        %v373 = vshll.u32 2102212464, %v361
        %v374 = vshrl.u32 920167782, %v362
        %v375 = vor.u32 %v373, %v374
        %v376 = vshll.u32 920167782, %v361
        %v377 = vshrl.u32 1326507024, %v362
        %v378 = vor.u32 %v376, %v377
        %vm379 = vcmp.lt.s32.totalorder %v360, 1
        %vm380 = vcmp.lt.s32.totalorder %v360, 2
        %vm381 = vcmp.lt.s32.totalorder %v360, 3
        %vm382 = vcmp.lt.s32.totalorder %v360, 4
        %v383 = vsel %vm379, %v363, %v366
        %v384 = vsel %vm382, %v372, 2102212464
        %v385 = vsel %vm381, %v369, %v384
        %v386 = vsel %vm380, %v383, %v385
        %v387 = vsel %vm379, %v366, %v369
        %v388 = vsel %vm382, %v375, 920167782
        %v389 = vsel %vm381, %v372, %v388
        %v390 = vsel %vm380, %v387, %v389
        %v391 = vsel %vm379, %v369, %v372
        %v392 = vsel %vm382, %v378, 1326507024
        %v393 = vsel %vm381, %v375, %v392
        %v394 = vsel %vm380, %v391, %v393
        %v395 = vshll.u32 %v355, 8
        %v396 = vmul.u32.u64.compose %v395, %v394
        %v397 = vextract.low.u32 %v396
        %v398 = vextract.high.u32 %v396
        %v399 = vmul.u32.u64.compose %v395, %v390
        %v400 = vextract.low.u32 %v399
        %v401 = vextract.high.u32 %v399
        %v402 = vmul.u32 %v395, %v386
        %v403 = vadd.s32 %v398, %v400
        %vm404 = vc.u32 %v398, %v400
        %v405 = vadd.s32 %v401, 1
        %v406 = vsel %vm404, %v405, %v401
        %v407 = vadd.s32 %v402, %v406
        %v408 = vadd.s32 %v407, 536870912
        %v409 = vshrl.u32 %v408, 30
        %v410 = vshll.u32 %v409, 30
        %v411 = vsub.s32 %v407, %v410
        %vm412 = vcmp.lt.s32.totalorder %v411, 0
        %v413 = vsub.s32 0, %v411
        %v414 = vsel %vm412, %v413, %v411
        %v415 = vclz %v414
        %v416 = vsub.s32 %v415, 2
        %vm417 = vcmp.gt.s32.totalorder 0, %v416
        %v418 = vsel %vm417, 0, %v416
        %v419 = vsub.s32 32, %v418
        %v420 = vshll.u32 %v411, %v418
        %v421 = vshrl.u32 %v403, %v419
        %v422 = vor.u32 %v420, %v421
        %v423 = vsub.s32 4294967266, %v418
        %v424 = vadd.s32 %v423, 127
        %v425 = vshll.u32 %v424, 23
        %v426 = vor.u32 4788187, %v425
        %v427 = vand.u32 2147483647, %v426
        %v429 = vcvt.s32.f32 %v422
        %v430 = vmul.f32 %v429, %v427
        %v431 = vxor.u32 %v430, 2147483648
        %v432 = vsel %vm349, %v431, %v430
        %v433 = vsub.s32 4, %v409
        %v434 = vsel %vm349, %v433, %v409
        %v435 = vsel %vm348, %v306, %v432
        %v436 = vsel %vm348, 0, %v434
        %v437 = vcosq.f32.pop %v435
        %v438 = vsinq.f32.pop %v435
        %vm439 = vweird.f32 %v306
        %v440 = vand.u32 %v436, 3
        %vm441 = vcmp.lt.s32.totalorder %v440, 2
        %vm442 = vcmp.eq.s32.totalorder %v440, 0
        %v443 = vxor.u32 %v438, 2147483648
        %v444 = vsel %vm442, %v437, %v443
        %vm445 = vcmp.eq.s32.totalorder %v440, 2
        %v446 = vxor.u32 %v437, 2147483648
        %v447 = vsel %vm445, %v446, %v438
        %v448 = vsel %vm441, %v444, %v447
        %v449 = vsel %vm439, nan, %v448
        %v450 = vand.u32 2147483647, %v307
        %vm451 = vcmp.le.f32.partialorder %v450, 0.7853982
        %vm452 = vcmp.lt.s32.totalorder %v307, 0
        %v453 = vand.u32 %v307, 2139095040
        %v454 = vshrl.u32 %v453, 23
        %v455 = vsub.s32 %v454, 127
        %v456 = vand.u32 2147483647, %v307
        %v457 = vand.u32 %v456, 8388607
        %v458 = vor.u32 %v457, 8388608
        %v459 = vsub.s32 0, %v458
        %v460 = vadd.s32 %v455, 1
        %vm461 = vcmp.gt.s32.totalorder %v460, 0
        %v462 = vsel %vm461, %v460, 0
        %v463 = vshrl.u32 %v462, 5
        %v464 = vand.u32 %v462, 31
        %v465 = vsub.s32 32, %v464
        %v466 = vshrl.u32 683565275, %v465
        %v467 = vshll.u32 683565275, %v464
        %v468 = vshrl.u32 2475754826, %v465
        %v469 = vor.u32 %v467, %v468
        %v470 = vshll.u32 2475754826, %v464
        %v471 = vshrl.u32 2131351028, %v465
        %v472 = vor.u32 %v470, %v471
        %v473 = vshll.u32 2131351028, %v464
        %v474 = vshrl.u32 2102212464, %v465
        %v475 = vor.u32 %v473, %v474
        %v476 = vshll.u32 2102212464, %v464
        %v477 = vshrl.u32 920167782, %v465
        %v478 = vor.u32 %v476, %v477
        %v479 = vshll.u32 920167782, %v464
        %v480 = vshrl.u32 1326507024, %v465
        %v481 = vor.u32 %v479, %v480
        %vm482 = vcmp.lt.s32.totalorder %v463, 1
        %vm483 = vcmp.lt.s32.totalorder %v463, 2
        %vm484 = vcmp.lt.s32.totalorder %v463, 3
        %vm485 = vcmp.lt.s32.totalorder %v463, 4
        %v486 = vsel %vm482, %v466, %v469
        %v487 = vsel %vm485, %v475, 2102212464
        %v488 = vsel %vm484, %v472, %v487
        %v489 = vsel %vm483, %v486, %v488
        %v490 = vsel %vm482, %v469, %v472
        %v491 = vsel %vm485, %v478, 920167782
        %v492 = vsel %vm484, %v475, %v491
        %v493 = vsel %vm483, %v490, %v492
        %v494 = vsel %vm482, %v472, %v475
        %v495 = vsel %vm485, %v481, 1326507024
        %v496 = vsel %vm484, %v478, %v495
        %v497 = vsel %vm483, %v494, %v496
        %v498 = vshll.u32 %v458, 8
        %v499 = vmul.u32.u64.compose %v498, %v497
        %v500 = vextract.low.u32 %v499
        %v501 = vextract.high.u32 %v499
        %v502 = vmul.u32.u64.compose %v498, %v493
        %v503 = vextract.low.u32 %v502
        %v504 = vextract.high.u32 %v502
        %v505 = vmul.u32 %v498, %v489
        %v506 = vadd.s32 %v501, %v503
        %vm507 = vc.u32 %v501, %v503
        %v508 = vadd.s32 %v504, 1
        %v509 = vsel %vm507, %v508, %v504
        %v510 = vadd.s32 %v505, %v509
        %v511 = vadd.s32 %v510, 536870912
        %v512 = vshrl.u32 %v511, 30
        %v513 = vshll.u32 %v512, 30
        %v514 = vsub.s32 %v510, %v513
        %vm515 = vcmp.lt.s32.totalorder %v514, 0
        %v516 = vsub.s32 0, %v514
        %v517 = vsel %vm515, %v516, %v514
        %v518 = vclz %v517
        %v519 = vsub.s32 %v518, 2
        %vm520 = vcmp.gt.s32.totalorder 0, %v519
        %v521 = vsel %vm520, 0, %v519
        %v522 = vsub.s32 32, %v521
        %v523 = vshll.u32 %v514, %v521
        %v524 = vshrl.u32 %v506, %v522
        %v525 = vor.u32 %v523, %v524
        %v526 = vsub.s32 4294967266, %v521
        %v527 = vadd.s32 %v526, 127
        %v528 = vshll.u32 %v527, 23
        %v529 = vor.u32 4788187, %v528
        %v530 = vand.u32 2147483647, %v529
        %v532 = vcvt.s32.f32 %v525
        %v533 = vmul.f32 %v532, %v530
        %v534 = vxor.u32 %v533, 2147483648
        %v535 = vsel %vm452, %v534, %v533
        %v536 = vsub.s32 4, %v512
        %v537 = vsel %vm452, %v536, %v512
        %v538 = vsel %vm451, %v307, %v535
        %v539 = vsel %vm451, 0, %v537
        %v540 = vcosq.f32.pop %v538
        %v541 = vsinq.f32.pop %v538
        %vm542 = vweird.f32 %v307
        %v543 = vand.u32 %v539, 3
        %vm544 = vcmp.lt.s32.totalorder %v543, 2
        %vm545 = vcmp.eq.s32.totalorder %v543, 0
        %v546 = vxor.u32 %v541, 2147483648
        %v547 = vsel %vm545, %v540, %v546
        %vm548 = vcmp.eq.s32.totalorder %v543, 2
        %v549 = vxor.u32 %v540, 2147483648
        %v550 = vsel %vm548, %v549, %v541
        %v551 = vsel %vm544, %v547, %v550
        %v552 = vsel %vm542, nan, %v551
        %v553 = vand.u32 2147483647, %v308
        %vm554 = vcmp.le.f32.partialorder %v553, 0.7853982
        %vm555 = vcmp.lt.s32.totalorder %v308, 0
        %v556 = vand.u32 %v308, 2139095040
        %v557 = vshrl.u32 %v556, 23
        %v558 = vsub.s32 %v557, 127
        %v559 = vand.u32 2147483647, %v308
        %v560 = vand.u32 %v559, 8388607
        %v561 = vor.u32 %v560, 8388608
        %v562 = vsub.s32 0, %v561
        %v563 = vadd.s32 %v558, 1
        %vm564 = vcmp.gt.s32.totalorder %v563, 0
        %v565 = vsel %vm564, %v563, 0
        %v566 = vshrl.u32 %v565, 5
        %v567 = vand.u32 %v565, 31
        %v568 = vsub.s32 32, %v567
        %v569 = vshrl.u32 683565275, %v568
        %v570 = vshll.u32 683565275, %v567
        %v571 = vshrl.u32 2475754826, %v568
        %v572 = vor.u32 %v570, %v571
        %v573 = vshll.u32 2475754826, %v567
        %v574 = vshrl.u32 2131351028, %v568
        %v575 = vor.u32 %v573, %v574
        %v576 = vshll.u32 2131351028, %v567
        %v577 = vshrl.u32 2102212464, %v568
        %v578 = vor.u32 %v576, %v577
        %v579 = vshll.u32 2102212464, %v567
        %v580 = vshrl.u32 920167782, %v568
        %v581 = vor.u32 %v579, %v580
        %v582 = vshll.u32 920167782, %v567
        %v583 = vshrl.u32 1326507024, %v568
        %v584 = vor.u32 %v582, %v583
        %vm585 = vcmp.lt.s32.totalorder %v566, 1
        %vm586 = vcmp.lt.s32.totalorder %v566, 2
        %vm587 = vcmp.lt.s32.totalorder %v566, 3
        %vm588 = vcmp.lt.s32.totalorder %v566, 4
        %v589 = vsel %vm585, %v569, %v572
        %v590 = vsel %vm588, %v578, 2102212464
        %v591 = vsel %vm587, %v575, %v590
        %v592 = vsel %vm586, %v589, %v591
        %v593 = vsel %vm585, %v572, %v575
        %v594 = vsel %vm588, %v581, 920167782
        %v595 = vsel %vm587, %v578, %v594
        %v596 = vsel %vm586, %v593, %v595
        %v597 = vsel %vm585, %v575, %v578
        %v598 = vsel %vm588, %v584, 1326507024
        %v599 = vsel %vm587, %v581, %v598
        %v600 = vsel %vm586, %v597, %v599
        %v601 = vshll.u32 %v561, 8
        %v602 = vmul.u32.u64.compose %v601, %v600
        %v603 = vextract.low.u32 %v602
        %v604 = vextract.high.u32 %v602
        %v605 = vmul.u32.u64.compose %v601, %v596
        %v606 = vextract.low.u32 %v605
        %v607 = vextract.high.u32 %v605
        %v608 = vmul.u32 %v601, %v592
        %v609 = vadd.s32 %v604, %v606
        %vm610 = vc.u32 %v604, %v606
        %v611 = vadd.s32 %v607, 1
        %v612 = vsel %vm610, %v611, %v607
        %v613 = vadd.s32 %v608, %v612
        %v614 = vadd.s32 %v613, 536870912
        %v615 = vshrl.u32 %v614, 30
        %v616 = vshll.u32 %v615, 30
        %v617 = vsub.s32 %v613, %v616
        %vm618 = vcmp.lt.s32.totalorder %v617, 0
        %v619 = vsub.s32 0, %v617
        %v620 = vsel %vm618, %v619, %v617
        %v621 = vclz %v620
        %v622 = vsub.s32 %v621, 2
        %vm623 = vcmp.gt.s32.totalorder 0, %v622
        %v624 = vsel %vm623, 0, %v622
        %v625 = vsub.s32 32, %v624
        %v626 = vshll.u32 %v617, %v624
        %v627 = vshrl.u32 %v609, %v625
        %v628 = vor.u32 %v626, %v627
        %v629 = vsub.s32 4294967266, %v624
        %v630 = vadd.s32 %v629, 127
        %v631 = vshll.u32 %v630, 23
        %v632 = vor.u32 4788187, %v631
        %v633 = vand.u32 2147483647, %v632
        %v635 = vcvt.s32.f32 %v628
        %v636 = vmul.f32 %v635, %v633
        %v637 = vxor.u32 %v636, 2147483648
        %v638 = vsel %vm555, %v637, %v636
        %v639 = vsub.s32 4, %v615
        %v640 = vsel %vm555, %v639, %v615
        %v641 = vsel %vm554, %v308, %v638
        %v642 = vsel %vm554, 0, %v640
        %v643 = vcosq.f32.pop %v641
        %v644 = vsinq.f32.pop %v641
        %vm645 = vweird.f32 %v308
        %v646 = vand.u32 %v642, 3
        %vm647 = vcmp.lt.s32.totalorder %v646, 2
        %vm648 = vcmp.eq.s32.totalorder %v646, 0
        %v649 = vxor.u32 %v644, 2147483648
        %v650 = vsel %vm648, %v643, %v649
        %vm651 = vcmp.eq.s32.totalorder %v646, 2
        %v652 = vxor.u32 %v643, 2147483648
        %v653 = vsel %vm651, %v652, %v644
        %v654 = vsel %vm647, %v650, %v653
        %v655 = vsel %vm645, nan, %v654
        %v656 = vand.u32 2147483647, %v309
        %vm657 = vcmp.le.f32.partialorder %v656, 0.7853982
        %vm658 = vcmp.lt.s32.totalorder %v309, 0
        %v659 = vand.u32 %v309, 2139095040
        %v660 = vshrl.u32 %v659, 23
        %v661 = vsub.s32 %v660, 127
        %v662 = vand.u32 2147483647, %v309
        %v663 = vand.u32 %v662, 8388607
        %v664 = vor.u32 %v663, 8388608
        %v665 = vsub.s32 0, %v664
        %v666 = vadd.s32 %v661, 1
        %vm667 = vcmp.gt.s32.totalorder %v666, 0
        %v668 = vsel %vm667, %v666, 0
        %v669 = vshrl.u32 %v668, 5
        %v670 = vand.u32 %v668, 31
        %v671 = vsub.s32 32, %v670
        %v672 = vshrl.u32 683565275, %v671
        %v673 = vshll.u32 683565275, %v670
        %v674 = vshrl.u32 2475754826, %v671
        %v675 = vor.u32 %v673, %v674
        %v676 = vshll.u32 2475754826, %v670
        %v677 = vshrl.u32 2131351028, %v671
        %v678 = vor.u32 %v676, %v677
        %v679 = vshll.u32 2131351028, %v670
        %v680 = vshrl.u32 2102212464, %v671
        %v681 = vor.u32 %v679, %v680
        %v682 = vshll.u32 2102212464, %v670
        %v683 = vshrl.u32 920167782, %v671
        %v684 = vor.u32 %v682, %v683
        %v685 = vshll.u32 920167782, %v670
        %v686 = vshrl.u32 1326507024, %v671
        %v687 = vor.u32 %v685, %v686
        %vm688 = vcmp.lt.s32.totalorder %v669, 1
        %vm689 = vcmp.lt.s32.totalorder %v669, 2
        %vm690 = vcmp.lt.s32.totalorder %v669, 3
        %vm691 = vcmp.lt.s32.totalorder %v669, 4
        %v692 = vsel %vm688, %v672, %v675
        %v693 = vsel %vm691, %v681, 2102212464
        %v694 = vsel %vm690, %v678, %v693
        %v695 = vsel %vm689, %v692, %v694
        %v696 = vsel %vm688, %v675, %v678
        %v697 = vsel %vm691, %v684, 920167782
        %v698 = vsel %vm690, %v681, %v697
        %v699 = vsel %vm689, %v696, %v698
        %v700 = vsel %vm688, %v678, %v681
        %v701 = vsel %vm691, %v687, 1326507024
        %v702 = vsel %vm690, %v684, %v701
        %v703 = vsel %vm689, %v700, %v702
        %v704 = vshll.u32 %v664, 8
        %v705 = vmul.u32.u64.compose %v704, %v703
        %v706 = vextract.low.u32 %v705
        %v707 = vextract.high.u32 %v705
        %v708 = vmul.u32.u64.compose %v704, %v699
        %v709 = vextract.low.u32 %v708
        %v710 = vextract.high.u32 %v708
        %v711 = vmul.u32 %v704, %v695
        %v712 = vadd.s32 %v707, %v709
        %vm713 = vc.u32 %v707, %v709
        %v714 = vadd.s32 %v710, 1
        %v715 = vsel %vm713, %v714, %v710
        %v716 = vadd.s32 %v711, %v715
        %v717 = vadd.s32 %v716, 536870912
        %v718 = vshrl.u32 %v717, 30
        %v719 = vshll.u32 %v718, 30
        %v720 = vsub.s32 %v716, %v719
        %vm721 = vcmp.lt.s32.totalorder %v720, 0
        %v722 = vsub.s32 0, %v720
        %v723 = vsel %vm721, %v722, %v720
        %v724 = vclz %v723
        %v725 = vsub.s32 %v724, 2
        %vm726 = vcmp.gt.s32.totalorder 0, %v725
        %v727 = vsel %vm726, 0, %v725
        %v728 = vsub.s32 32, %v727
        %v729 = vshll.u32 %v720, %v727
        %v730 = vshrl.u32 %v712, %v728
        %v731 = vor.u32 %v729, %v730
        %v732 = vsub.s32 4294967266, %v727
        %v733 = vadd.s32 %v732, 127
        %v734 = vshll.u32 %v733, 23
        %v735 = vor.u32 4788187, %v734
        %v736 = vand.u32 2147483647, %v735
        %v738 = vcvt.s32.f32 %v731
        %v739 = vmul.f32 %v738, %v736
        %v740 = vxor.u32 %v739, 2147483648
        %v741 = vsel %vm658, %v740, %v739
        %v742 = vsub.s32 4, %v718
        %v743 = vsel %vm658, %v742, %v718
        %v744 = vsel %vm657, %v309, %v741
        %v745 = vsel %vm657, 0, %v743
        %v746 = vcosq.f32.pop %v744
        %v747 = vsinq.f32.pop %v744
        %vm748 = vweird.f32 %v309
        %v749 = vand.u32 %v745, 3
        %vm750 = vcmp.lt.s32.totalorder %v749, 2
        %vm751 = vcmp.eq.s32.totalorder %v749, 0
        %v752 = vxor.u32 %v747, 2147483648
        %v753 = vsel %vm751, %v746, %v752
        %vm754 = vcmp.eq.s32.totalorder %v749, 2
        %v755 = vxor.u32 %v746, 2147483648
        %v756 = vsel %vm754, %v755, %v747
        %v757 = vsel %vm750, %v753, %v756
        %v758 = vsel %vm748, nan, %v757
        %v759 = vand.u32 2147483647, %v310
        %vm760 = vcmp.le.f32.partialorder %v759, 0.7853982
        %vm761 = vcmp.lt.s32.totalorder %v310, 0
        %v762 = vand.u32 %v310, 2139095040
        %v763 = vshrl.u32 %v762, 23
        %v764 = vsub.s32 %v763, 127
        %v765 = vand.u32 2147483647, %v310
        %v766 = vand.u32 %v765, 8388607
        %v767 = vor.u32 %v766, 8388608
        %v768 = vsub.s32 0, %v767
        %v769 = vadd.s32 %v764, 1
        %vm770 = vcmp.gt.s32.totalorder %v769, 0
        %v771 = vsel %vm770, %v769, 0
        %v772 = vshrl.u32 %v771, 5
        %v773 = vand.u32 %v771, 31
        %v774 = vsub.s32 32, %v773
        %v775 = vshrl.u32 683565275, %v774
        %v776 = vshll.u32 683565275, %v773
        %v777 = vshrl.u32 2475754826, %v774
        %v778 = vor.u32 %v776, %v777
        %v779 = vshll.u32 2475754826, %v773
        %v780 = vshrl.u32 2131351028, %v774
        %v781 = vor.u32 %v779, %v780
        %v782 = vshll.u32 2131351028, %v773
        %v783 = vshrl.u32 2102212464, %v774
        %v784 = vor.u32 %v782, %v783
        %v785 = vshll.u32 2102212464, %v773
        %v786 = vshrl.u32 920167782, %v774
        %v787 = vor.u32 %v785, %v786
        %v788 = vshll.u32 920167782, %v773
        %v789 = vshrl.u32 1326507024, %v774
        %v790 = vor.u32 %v788, %v789
        %vm791 = vcmp.lt.s32.totalorder %v772, 1
        %vm792 = vcmp.lt.s32.totalorder %v772, 2
        %vm793 = vcmp.lt.s32.totalorder %v772, 3
        %vm794 = vcmp.lt.s32.totalorder %v772, 4
        %v795 = vsel %vm791, %v775, %v778
        %v796 = vsel %vm794, %v784, 2102212464
        %v797 = vsel %vm793, %v781, %v796
        %v798 = vsel %vm792, %v795, %v797
        %v799 = vsel %vm791, %v778, %v781
        %v800 = vsel %vm794, %v787, 920167782
        %v801 = vsel %vm793, %v784, %v800
        %v802 = vsel %vm792, %v799, %v801
        %v803 = vsel %vm791, %v781, %v784
        %v804 = vsel %vm794, %v790, 1326507024
        %v805 = vsel %vm793, %v787, %v804
        %v806 = vsel %vm792, %v803, %v805
        %v807 = vshll.u32 %v767, 8
        %v808 = vmul.u32.u64.compose %v807, %v806
        %v809 = vextract.low.u32 %v808
        %v810 = vextract.high.u32 %v808
        %v811 = vmul.u32.u64.compose %v807, %v802
        %v812 = vextract.low.u32 %v811
        %v813 = vextract.high.u32 %v811
        %v814 = vmul.u32 %v807, %v798
        %v815 = vadd.s32 %v810, %v812
        %vm816 = vc.u32 %v810, %v812
        %v817 = vadd.s32 %v813, 1
        %v818 = vsel %vm816, %v817, %v813
        %v819 = vadd.s32 %v814, %v818
        %v820 = vadd.s32 %v819, 536870912
        %v821 = vshrl.u32 %v820, 30
        %v822 = vshll.u32 %v821, 30
        %v823 = vsub.s32 %v819, %v822
        %vm824 = vcmp.lt.s32.totalorder %v823, 0
        %v825 = vsub.s32 0, %v823
        %v826 = vsel %vm824, %v825, %v823
        %v827 = vclz %v826
        %v828 = vsub.s32 %v827, 2
        %vm829 = vcmp.gt.s32.totalorder 0, %v828
        %v830 = vsel %vm829, 0, %v828
        %v831 = vsub.s32 32, %v830
        %v832 = vshll.u32 %v823, %v830
        %v833 = vshrl.u32 %v815, %v831
        %v834 = vor.u32 %v832, %v833
        %v835 = vsub.s32 4294967266, %v830
        %v836 = vadd.s32 %v835, 127
        %v837 = vshll.u32 %v836, 23
        %v838 = vor.u32 4788187, %v837
        %v839 = vand.u32 2147483647, %v838
        %v841 = vcvt.s32.f32 %v834
        %v842 = vmul.f32 %v841, %v839
        %v843 = vxor.u32 %v842, 2147483648
        %v844 = vsel %vm761, %v843, %v842
        %v845 = vsub.s32 4, %v821
        %v846 = vsel %vm761, %v845, %v821
        %v847 = vsel %vm760, %v310, %v844
        %v848 = vsel %vm760, 0, %v846
        %v849 = vcosq.f32.pop %v847
        %v850 = vsinq.f32.pop %v847
        %vm851 = vweird.f32 %v310
        %v852 = vand.u32 %v848, 3
        %vm853 = vcmp.lt.s32.totalorder %v852, 2
        %vm854 = vcmp.eq.s32.totalorder %v852, 0
        %v855 = vxor.u32 %v850, 2147483648
        %v856 = vsel %vm854, %v849, %v855
        %vm857 = vcmp.eq.s32.totalorder %v852, 2
        %v858 = vxor.u32 %v849, 2147483648
        %v859 = vsel %vm857, %v858, %v850
        %v860 = vsel %vm853, %v856, %v859
        %v861 = vsel %vm851, nan, %v860
        %v862 = vand.u32 2147483647, %v311
        %vm863 = vcmp.le.f32.partialorder %v862, 0.7853982
        %vm864 = vcmp.lt.s32.totalorder %v311, 0
        %v865 = vand.u32 %v311, 2139095040
        %v866 = vshrl.u32 %v865, 23
        %v867 = vsub.s32 %v866, 127
        %v868 = vand.u32 2147483647, %v311
        %v869 = vand.u32 %v868, 8388607
        %v870 = vor.u32 %v869, 8388608
        %v871 = vsub.s32 0, %v870
        %v872 = vadd.s32 %v867, 1
        %vm873 = vcmp.gt.s32.totalorder %v872, 0
        %v874 = vsel %vm873, %v872, 0
        %v875 = vshrl.u32 %v874, 5
        %v876 = vand.u32 %v874, 31
        %v877 = vsub.s32 32, %v876
        %v878 = vshrl.u32 683565275, %v877
        %v879 = vshll.u32 683565275, %v876
        %v880 = vshrl.u32 2475754826, %v877
        %v881 = vor.u32 %v879, %v880
        %v882 = vshll.u32 2475754826, %v876
        %v883 = vshrl.u32 2131351028, %v877
        %v884 = vor.u32 %v882, %v883
        %v885 = vshll.u32 2131351028, %v876
        %v886 = vshrl.u32 2102212464, %v877
        %v887 = vor.u32 %v885, %v886
        %v888 = vshll.u32 2102212464, %v876
        %v889 = vshrl.u32 920167782, %v877
        %v890 = vor.u32 %v888, %v889
        %v891 = vshll.u32 920167782, %v876
        %v892 = vshrl.u32 1326507024, %v877
        %v893 = vor.u32 %v891, %v892
        %vm894 = vcmp.lt.s32.totalorder %v875, 1
        %vm895 = vcmp.lt.s32.totalorder %v875, 2
        %vm896 = vcmp.lt.s32.totalorder %v875, 3
        %vm897 = vcmp.lt.s32.totalorder %v875, 4
        %v898 = vsel %vm894, %v878, %v881
        %v899 = vsel %vm897, %v887, 2102212464
        %v900 = vsel %vm896, %v884, %v899
        %v901 = vsel %vm895, %v898, %v900
        %v902 = vsel %vm894, %v881, %v884
        %v903 = vsel %vm897, %v890, 920167782
        %v904 = vsel %vm896, %v887, %v903
        %v905 = vsel %vm895, %v902, %v904
        %v906 = vsel %vm894, %v884, %v887
        %v907 = vsel %vm897, %v893, 1326507024
        %v908 = vsel %vm896, %v890, %v907
        %v909 = vsel %vm895, %v906, %v908
        %v910 = vshll.u32 %v870, 8
        %v911 = vmul.u32.u64.compose %v910, %v909
        %v912 = vextract.low.u32 %v911
        %v913 = vextract.high.u32 %v911
        %v914 = vmul.u32.u64.compose %v910, %v905
        %v915 = vextract.low.u32 %v914
        %v916 = vextract.high.u32 %v914
        %v917 = vmul.u32 %v910, %v901
        %v918 = vadd.s32 %v913, %v915
        %vm919 = vc.u32 %v913, %v915
        %v920 = vadd.s32 %v916, 1
        %v921 = vsel %vm919, %v920, %v916
        %v922 = vadd.s32 %v917, %v921
        %v923 = vadd.s32 %v922, 536870912
        %v924 = vshrl.u32 %v923, 30
        %v925 = vshll.u32 %v924, 30
        %v926 = vsub.s32 %v922, %v925
        %vm927 = vcmp.lt.s32.totalorder %v926, 0
        %v928 = vsub.s32 0, %v926
        %v929 = vsel %vm927, %v928, %v926
        %v930 = vclz %v929
        %v931 = vsub.s32 %v930, 2
        %vm932 = vcmp.gt.s32.totalorder 0, %v931
        %v933 = vsel %vm932, 0, %v931
        %v934 = vsub.s32 32, %v933
        %v935 = vshll.u32 %v926, %v933
        %v936 = vshrl.u32 %v918, %v934
        %v937 = vor.u32 %v935, %v936
        %v938 = vsub.s32 4294967266, %v933
        %v939 = vadd.s32 %v938, 127
        %v940 = vshll.u32 %v939, 23
        %v941 = vor.u32 4788187, %v940
        %v942 = vand.u32 2147483647, %v941
        %v944 = vcvt.s32.f32 %v937
        %v945 = vmul.f32 %v944, %v942
        %v946 = vxor.u32 %v945, 2147483648
        %v947 = vsel %vm864, %v946, %v945
        %v948 = vsub.s32 4, %v924
        %v949 = vsel %vm864, %v948, %v924
        %v950 = vsel %vm863, %v311, %v947
        %v951 = vsel %vm863, 0, %v949
        %v952 = vcosq.f32.pop %v950
        %v953 = vsinq.f32.pop %v950
        %vm954 = vweird.f32 %v311
        %v955 = vand.u32 %v951, 3
        %vm956 = vcmp.lt.s32.totalorder %v955, 2
        %vm957 = vcmp.eq.s32.totalorder %v955, 0
        %v958 = vxor.u32 %v953, 2147483648
        %v959 = vsel %vm957, %v952, %v958
        %vm960 = vcmp.eq.s32.totalorder %v955, 2
        %v961 = vxor.u32 %v952, 2147483648
        %v962 = vsel %vm960, %v961, %v953
        %v963 = vsel %vm956, %v959, %v962
        %v964 = vsel %vm954, nan, %v963
        %v965 = vand.u32 2147483647, %v312
        %vm966 = vcmp.le.f32.partialorder %v965, 0.7853982
        %vm967 = vcmp.lt.s32.totalorder %v312, 0
        %v968 = vand.u32 %v312, 2139095040
        %v969 = vshrl.u32 %v968, 23
        %v970 = vsub.s32 %v969, 127
        %v971 = vand.u32 2147483647, %v312
        %v972 = vand.u32 %v971, 8388607
        %v973 = vor.u32 %v972, 8388608
        %v974 = vsub.s32 0, %v973
        %v975 = vadd.s32 %v970, 1
        %vm976 = vcmp.gt.s32.totalorder %v975, 0
        %v977 = vsel %vm976, %v975, 0
        %v978 = vshrl.u32 %v977, 5
        %v979 = vand.u32 %v977, 31
        %v980 = vsub.s32 32, %v979
        %v981 = vshrl.u32 683565275, %v980
        %v982 = vshll.u32 683565275, %v979
        %v983 = vshrl.u32 2475754826, %v980
        %v984 = vor.u32 %v982, %v983
        %v985 = vshll.u32 2475754826, %v979
        %v986 = vshrl.u32 2131351028, %v980
        %v987 = vor.u32 %v985, %v986
        %v988 = vshll.u32 2131351028, %v979
        %v989 = vshrl.u32 2102212464, %v980
        %v990 = vor.u32 %v988, %v989
        %v991 = vshll.u32 2102212464, %v979
        %v992 = vshrl.u32 920167782, %v980
        %v993 = vor.u32 %v991, %v992
        %v994 = vshll.u32 920167782, %v979
        %v995 = vshrl.u32 1326507024, %v980
        %v996 = vor.u32 %v994, %v995
        %vm997 = vcmp.lt.s32.totalorder %v978, 1
        %vm998 = vcmp.lt.s32.totalorder %v978, 2
        %vm999 = vcmp.lt.s32.totalorder %v978, 3
        %vm1000 = vcmp.lt.s32.totalorder %v978, 4
        %v1001 = vsel %vm997, %v981, %v984
        %v1002 = vsel %vm1000, %v990, 2102212464
        %v1003 = vsel %vm999, %v987, %v1002
        %v1004 = vsel %vm998, %v1001, %v1003
        %v1005 = vsel %vm997, %v984, %v987
        %v1006 = vsel %vm1000, %v993, 920167782
        %v1007 = vsel %vm999, %v990, %v1006
        %v1008 = vsel %vm998, %v1005, %v1007
        %v1009 = vsel %vm997, %v987, %v990
        %v1010 = vsel %vm1000, %v996, 1326507024
        %v1011 = vsel %vm999, %v993, %v1010
        %v1012 = vsel %vm998, %v1009, %v1011
        %v1013 = vshll.u32 %v973, 8
        %v1014 = vmul.u32.u64.compose %v1013, %v1012
        %v1015 = vextract.low.u32 %v1014
        %v1016 = vextract.high.u32 %v1014
        %v1017 = vmul.u32.u64.compose %v1013, %v1008
        %v1018 = vextract.low.u32 %v1017
        %v1019 = vextract.high.u32 %v1017
        %v1020 = vmul.u32 %v1013, %v1004
        %v1021 = vadd.s32 %v1016, %v1018
        %vm1022 = vc.u32 %v1016, %v1018
        %v1023 = vadd.s32 %v1019, 1
        %v1024 = vsel %vm1022, %v1023, %v1019
        %v1025 = vadd.s32 %v1020, %v1024
        %v1026 = vadd.s32 %v1025, 536870912
        %v1027 = vshrl.u32 %v1026, 30
        %v1028 = vshll.u32 %v1027, 30
        %v1029 = vsub.s32 %v1025, %v1028
        %vm1030 = vcmp.lt.s32.totalorder %v1029, 0
        %v1031 = vsub.s32 0, %v1029
        %v1032 = vsel %vm1030, %v1031, %v1029
        %v1033 = vclz %v1032
        %v1034 = vsub.s32 %v1033, 2
        %vm1035 = vcmp.gt.s32.totalorder 0, %v1034
        %v1036 = vsel %vm1035, 0, %v1034
        %v1037 = vsub.s32 32, %v1036
        %v1038 = vshll.u32 %v1029, %v1036
        %v1039 = vshrl.u32 %v1021, %v1037
        %v1040 = vor.u32 %v1038, %v1039
        %v1041 = vsub.s32 4294967266, %v1036
        %v1042 = vadd.s32 %v1041, 127
        %v1043 = vshll.u32 %v1042, 23
        %v1044 = vor.u32 4788187, %v1043
        %v1045 = vand.u32 2147483647, %v1044
        %v1047 = vcvt.s32.f32 %v1040
        %v1048 = vmul.f32 %v1047, %v1045
        %v1049 = vxor.u32 %v1048, 2147483648
        %v1050 = vsel %vm967, %v1049, %v1048
        %v1051 = vsub.s32 4, %v1027
        %v1052 = vsel %vm967, %v1051, %v1027
        %v1053 = vsel %vm966, %v312, %v1050
        %v1054 = vsel %vm966, 0, %v1052
        %v1055 = vcosq.f32.pop %v1053
        %v1056 = vsinq.f32.pop %v1053
        %vm1057 = vweird.f32 %v312
        %v1058 = vand.u32 %v1054, 3
        %vm1059 = vcmp.lt.s32.totalorder %v1058, 2
        %vm1060 = vcmp.eq.s32.totalorder %v1058, 0
        %v1061 = vxor.u32 %v1056, 2147483648
        %v1062 = vsel %vm1060, %v1055, %v1061
        %vm1063 = vcmp.eq.s32.totalorder %v1058, 2
        %v1064 = vxor.u32 %v1055, 2147483648
        %v1065 = vsel %vm1063, %v1064, %v1056
        %v1066 = vsel %vm1059, %v1062, %v1065
        %v1067 = vsel %vm1057, nan, %v1066
        %v1068 = vand.u32 2147483647, %v313
        %vm1069 = vcmp.le.f32.partialorder %v1068, 0.7853982
        %vm1070 = vcmp.lt.s32.totalorder %v313, 0
        %v1071 = vand.u32 %v313, 2139095040
        %v1072 = vshrl.u32 %v1071, 23
        %v1073 = vsub.s32 %v1072, 127
        %v1074 = vand.u32 2147483647, %v313
        %v1075 = vand.u32 %v1074, 8388607
        %v1076 = vor.u32 %v1075, 8388608
        %v1077 = vsub.s32 0, %v1076
        %v1078 = vadd.s32 %v1073, 1
        %vm1079 = vcmp.gt.s32.totalorder %v1078, 0
        %v1080 = vsel %vm1079, %v1078, 0
        %v1081 = vshrl.u32 %v1080, 5
        %v1082 = vand.u32 %v1080, 31
        %v1083 = vsub.s32 32, %v1082
        %v1084 = vshrl.u32 683565275, %v1083
        %v1085 = vshll.u32 683565275, %v1082
        %v1086 = vshrl.u32 2475754826, %v1083
        %v1087 = vor.u32 %v1085, %v1086
        %v1088 = vshll.u32 2475754826, %v1082
        %v1089 = vshrl.u32 2131351028, %v1083
        %v1090 = vor.u32 %v1088, %v1089
        %v1091 = vshll.u32 2131351028, %v1082
        %v1092 = vshrl.u32 2102212464, %v1083
        %v1093 = vor.u32 %v1091, %v1092
        %v1094 = vshll.u32 2102212464, %v1082
        %v1095 = vshrl.u32 920167782, %v1083
        %v1096 = vor.u32 %v1094, %v1095
        %v1097 = vshll.u32 920167782, %v1082
        %v1098 = vshrl.u32 1326507024, %v1083
        %v1099 = vor.u32 %v1097, %v1098
        %vm1100 = vcmp.lt.s32.totalorder %v1081, 1
        %vm1101 = vcmp.lt.s32.totalorder %v1081, 2
        %vm1102 = vcmp.lt.s32.totalorder %v1081, 3
        %vm1103 = vcmp.lt.s32.totalorder %v1081, 4
        %v1104 = vsel %vm1100, %v1084, %v1087
        %v1105 = vsel %vm1103, %v1093, 2102212464
        %v1106 = vsel %vm1102, %v1090, %v1105
        %v1107 = vsel %vm1101, %v1104, %v1106
        %v1108 = vsel %vm1100, %v1087, %v1090
        %v1109 = vsel %vm1103, %v1096, 920167782
        %v1110 = vsel %vm1102, %v1093, %v1109
        %v1111 = vsel %vm1101, %v1108, %v1110
        %v1112 = vsel %vm1100, %v1090, %v1093
        %v1113 = vsel %vm1103, %v1099, 1326507024
        %v1114 = vsel %vm1102, %v1096, %v1113
        %v1115 = vsel %vm1101, %v1112, %v1114
        %v1116 = vshll.u32 %v1076, 8
        %v1117 = vmul.u32.u64.compose %v1116, %v1115
        %v1118 = vextract.low.u32 %v1117
        %v1119 = vextract.high.u32 %v1117
        %v1120 = vmul.u32.u64.compose %v1116, %v1111
        %v1121 = vextract.low.u32 %v1120
        %v1122 = vextract.high.u32 %v1120
        %v1123 = vmul.u32 %v1116, %v1107
        %v1124 = vadd.s32 %v1119, %v1121
        %vm1125 = vc.u32 %v1119, %v1121
        %v1126 = vadd.s32 %v1122, 1
        %v1127 = vsel %vm1125, %v1126, %v1122
        %v1128 = vadd.s32 %v1123, %v1127
        %v1129 = vadd.s32 %v1128, 536870912
        %v1130 = vshrl.u32 %v1129, 30
        %v1131 = vshll.u32 %v1130, 30
        %v1132 = vsub.s32 %v1128, %v1131
        %vm1133 = vcmp.lt.s32.totalorder %v1132, 0
        %v1134 = vsub.s32 0, %v1132
        %v1135 = vsel %vm1133, %v1134, %v1132
        %v1136 = vclz %v1135
        %v1137 = vsub.s32 %v1136, 2
        %vm1138 = vcmp.gt.s32.totalorder 0, %v1137
        %v1139 = vsel %vm1138, 0, %v1137
        %v1140 = vsub.s32 32, %v1139
        %v1141 = vshll.u32 %v1132, %v1139
        %v1142 = vshrl.u32 %v1124, %v1140
        %v1143 = vor.u32 %v1141, %v1142
        %v1144 = vsub.s32 4294967266, %v1139
        %v1145 = vadd.s32 %v1144, 127
        %v1146 = vshll.u32 %v1145, 23
        %v1147 = vor.u32 4788187, %v1146
        %v1148 = vand.u32 2147483647, %v1147
        %v1150 = vcvt.s32.f32 %v1143
        %v1151 = vmul.f32 %v1150, %v1148
        %v1152 = vxor.u32 %v1151, 2147483648
        %v1153 = vsel %vm1070, %v1152, %v1151
        %v1154 = vsub.s32 4, %v1130
        %v1155 = vsel %vm1070, %v1154, %v1130
        %v1156 = vsel %vm1069, %v313, %v1153
        %v1157 = vsel %vm1069, 0, %v1155
        %v1158 = vcosq.f32.pop %v1156
        %v1159 = vsinq.f32.pop %v1156
        %vm1160 = vweird.f32 %v313
        %v1161 = vand.u32 %v1157, 3
        %vm1162 = vcmp.lt.s32.totalorder %v1161, 2
        %vm1163 = vcmp.eq.s32.totalorder %v1161, 0
        %v1164 = vxor.u32 %v1159, 2147483648
        %v1165 = vsel %vm1163, %v1158, %v1164
        %vm1166 = vcmp.eq.s32.totalorder %v1161, 2
        %v1167 = vxor.u32 %v1158, 2147483648
        %v1168 = vsel %vm1166, %v1167, %v1159
        %v1169 = vsel %vm1162, %v1165, %v1168
        %v1170 = vsel %vm1160, nan, %v1169
        %v1171 = vand.u32 2147483647, %v314
        %vm1172 = vcmp.le.f32.partialorder %v1171, 0.7853982
        %vm1173 = vcmp.lt.s32.totalorder %v314, 0
        %v1174 = vand.u32 %v314, 2139095040
        %v1175 = vshrl.u32 %v1174, 23
        %v1176 = vsub.s32 %v1175, 127
        %v1177 = vand.u32 2147483647, %v314
        %v1178 = vand.u32 %v1177, 8388607
        %v1179 = vor.u32 %v1178, 8388608
        %v1180 = vsub.s32 0, %v1179
        %v1181 = vadd.s32 %v1176, 1
        %vm1182 = vcmp.gt.s32.totalorder %v1181, 0
        %v1183 = vsel %vm1182, %v1181, 0
        %v1184 = vshrl.u32 %v1183, 5
        %v1185 = vand.u32 %v1183, 31
        %v1186 = vsub.s32 32, %v1185
        %v1187 = vshrl.u32 683565275, %v1186
        %v1188 = vshll.u32 683565275, %v1185
        %v1189 = vshrl.u32 2475754826, %v1186
        %v1190 = vor.u32 %v1188, %v1189
        %v1191 = vshll.u32 2475754826, %v1185
        %v1192 = vshrl.u32 2131351028, %v1186
        %v1193 = vor.u32 %v1191, %v1192
        %v1194 = vshll.u32 2131351028, %v1185
        %v1195 = vshrl.u32 2102212464, %v1186
        %v1196 = vor.u32 %v1194, %v1195
        %v1197 = vshll.u32 2102212464, %v1185
        %v1198 = vshrl.u32 920167782, %v1186
        %v1199 = vor.u32 %v1197, %v1198
        %v1200 = vshll.u32 920167782, %v1185
        %v1201 = vshrl.u32 1326507024, %v1186
        %v1202 = vor.u32 %v1200, %v1201
        %vm1203 = vcmp.lt.s32.totalorder %v1184, 1
        %vm1204 = vcmp.lt.s32.totalorder %v1184, 2
        %vm1205 = vcmp.lt.s32.totalorder %v1184, 3
        %vm1206 = vcmp.lt.s32.totalorder %v1184, 4
        %v1207 = vsel %vm1203, %v1187, %v1190
        %v1208 = vsel %vm1206, %v1196, 2102212464
        %v1209 = vsel %vm1205, %v1193, %v1208
        %v1210 = vsel %vm1204, %v1207, %v1209
        %v1211 = vsel %vm1203, %v1190, %v1193
        %v1212 = vsel %vm1206, %v1199, 920167782
        %v1213 = vsel %vm1205, %v1196, %v1212
        %v1214 = vsel %vm1204, %v1211, %v1213
        %v1215 = vsel %vm1203, %v1193, %v1196
        %v1216 = vsel %vm1206, %v1202, 1326507024
        %v1217 = vsel %vm1205, %v1199, %v1216
        %v1218 = vsel %vm1204, %v1215, %v1217
        %v1219 = vshll.u32 %v1179, 8
        %v1220 = vmul.u32.u64.compose %v1219, %v1218
        %v1221 = vextract.low.u32 %v1220
        %v1222 = vextract.high.u32 %v1220
        %v1223 = vmul.u32.u64.compose %v1219, %v1214
        %v1224 = vextract.low.u32 %v1223
        %v1225 = vextract.high.u32 %v1223
        %v1226 = vmul.u32 %v1219, %v1210
        %v1227 = vadd.s32 %v1222, %v1224
        %vm1228 = vc.u32 %v1222, %v1224
        %v1229 = vadd.s32 %v1225, 1
        %v1230 = vsel %vm1228, %v1229, %v1225
        %v1231 = vadd.s32 %v1226, %v1230
        %v1232 = vadd.s32 %v1231, 536870912
        %v1233 = vshrl.u32 %v1232, 30
        %v1234 = vshll.u32 %v1233, 30
        %v1235 = vsub.s32 %v1231, %v1234
        %vm1236 = vcmp.lt.s32.totalorder %v1235, 0
        %v1237 = vsub.s32 0, %v1235
        %v1238 = vsel %vm1236, %v1237, %v1235
        %v1239 = vclz %v1238
        %v1240 = vsub.s32 %v1239, 2
        %vm1241 = vcmp.gt.s32.totalorder 0, %v1240
        %v1242 = vsel %vm1241, 0, %v1240
        %v1243 = vsub.s32 32, %v1242
        %v1244 = vshll.u32 %v1235, %v1242
        %v1245 = vshrl.u32 %v1227, %v1243
        %v1246 = vor.u32 %v1244, %v1245
        %v1247 = vsub.s32 4294967266, %v1242
        %v1248 = vadd.s32 %v1247, 127
        %v1249 = vshll.u32 %v1248, 23
        %v1250 = vor.u32 4788187, %v1249
        %v1251 = vand.u32 2147483647, %v1250
        %v1253 = vcvt.s32.f32 %v1246
        %v1254 = vmul.f32 %v1253, %v1251
        %v1255 = vxor.u32 %v1254, 2147483648
        %v1256 = vsel %vm1173, %v1255, %v1254
        %v1257 = vsub.s32 4, %v1233
        %v1258 = vsel %vm1173, %v1257, %v1233
        %v1259 = vsel %vm1172, %v314, %v1256
        %v1260 = vsel %vm1172, 0, %v1258
        %v1261 = vcosq.f32.pop %v1259
        %v1262 = vsinq.f32.pop %v1259
        %vm1263 = vweird.f32 %v314
        %v1264 = vand.u32 %v1260, 3
        %vm1265 = vcmp.lt.s32.totalorder %v1264, 2
        %vm1266 = vcmp.eq.s32.totalorder %v1264, 0
        %v1267 = vxor.u32 %v1262, 2147483648
        %v1268 = vsel %vm1266, %v1261, %v1267
        %vm1269 = vcmp.eq.s32.totalorder %v1264, 2
        %v1270 = vxor.u32 %v1261, 2147483648
        %v1271 = vsel %vm1269, %v1270, %v1262
        %v1272 = vsel %vm1265, %v1268, %v1271
        %v1273 = vsel %vm1263, nan, %v1272
        %v1274 = vand.u32 2147483647, %v315
        %vm1275 = vcmp.le.f32.partialorder %v1274, 0.7853982
        %vm1276 = vcmp.lt.s32.totalorder %v315, 0
        %v1277 = vand.u32 %v315, 2139095040
        %v1278 = vshrl.u32 %v1277, 23
        %v1279 = vsub.s32 %v1278, 127
        %v1280 = vand.u32 2147483647, %v315
        %v1281 = vand.u32 %v1280, 8388607
        %v1282 = vor.u32 %v1281, 8388608
        %v1283 = vsub.s32 0, %v1282
        %v1284 = vadd.s32 %v1279, 1
        %vm1285 = vcmp.gt.s32.totalorder %v1284, 0
        %v1286 = vsel %vm1285, %v1284, 0
        %v1287 = vshrl.u32 %v1286, 5
        %v1288 = vand.u32 %v1286, 31
        %v1289 = vsub.s32 32, %v1288
        %v1290 = vshrl.u32 683565275, %v1289
        %v1291 = vshll.u32 683565275, %v1288
        %v1292 = vshrl.u32 2475754826, %v1289
        %v1293 = vor.u32 %v1291, %v1292
        %v1294 = vshll.u32 2475754826, %v1288
        %v1295 = vshrl.u32 2131351028, %v1289
        %v1296 = vor.u32 %v1294, %v1295
        %v1297 = vshll.u32 2131351028, %v1288
        %v1298 = vshrl.u32 2102212464, %v1289
        %v1299 = vor.u32 %v1297, %v1298
        %v1300 = vshll.u32 2102212464, %v1288
        %v1301 = vshrl.u32 920167782, %v1289
        %v1302 = vor.u32 %v1300, %v1301
        %v1303 = vshll.u32 920167782, %v1288
        %v1304 = vshrl.u32 1326507024, %v1289
        %v1305 = vor.u32 %v1303, %v1304
        %vm1306 = vcmp.lt.s32.totalorder %v1287, 1
        %vm1307 = vcmp.lt.s32.totalorder %v1287, 2
        %vm1308 = vcmp.lt.s32.totalorder %v1287, 3
        %vm1309 = vcmp.lt.s32.totalorder %v1287, 4
        %v1310 = vsel %vm1306, %v1290, %v1293
        %v1311 = vsel %vm1309, %v1299, 2102212464
        %v1312 = vsel %vm1308, %v1296, %v1311
        %v1313 = vsel %vm1307, %v1310, %v1312
        %v1314 = vsel %vm1306, %v1293, %v1296
        %v1315 = vsel %vm1309, %v1302, 920167782
        %v1316 = vsel %vm1308, %v1299, %v1315
        %v1317 = vsel %vm1307, %v1314, %v1316
        %v1318 = vsel %vm1306, %v1296, %v1299
        %v1319 = vsel %vm1309, %v1305, 1326507024
        %v1320 = vsel %vm1308, %v1302, %v1319
        %v1321 = vsel %vm1307, %v1318, %v1320
        %v1322 = vshll.u32 %v1282, 8
        %v1323 = vmul.u32.u64.compose %v1322, %v1321
        %v1324 = vextract.low.u32 %v1323
        %v1325 = vextract.high.u32 %v1323
        %v1326 = vmul.u32.u64.compose %v1322, %v1317
        %v1327 = vextract.low.u32 %v1326
        %v1328 = vextract.high.u32 %v1326
        %v1329 = vmul.u32 %v1322, %v1313
        %v1330 = vadd.s32 %v1325, %v1327
        %vm1331 = vc.u32 %v1325, %v1327
        %v1332 = vadd.s32 %v1328, 1
        %v1333 = vsel %vm1331, %v1332, %v1328
        %v1334 = vadd.s32 %v1329, %v1333
        %v1335 = vadd.s32 %v1334, 536870912
        %v1336 = vshrl.u32 %v1335, 30
        %v1337 = vshll.u32 %v1336, 30
        %v1338 = vsub.s32 %v1334, %v1337
        %vm1339 = vcmp.lt.s32.totalorder %v1338, 0
        %v1340 = vsub.s32 0, %v1338
        %v1341 = vsel %vm1339, %v1340, %v1338
        %v1342 = vclz %v1341
        %v1343 = vsub.s32 %v1342, 2
        %vm1344 = vcmp.gt.s32.totalorder 0, %v1343
        %v1345 = vsel %vm1344, 0, %v1343
        %v1346 = vsub.s32 32, %v1345
        %v1347 = vshll.u32 %v1338, %v1345
        %v1348 = vshrl.u32 %v1330, %v1346
        %v1349 = vor.u32 %v1347, %v1348
        %v1350 = vsub.s32 4294967266, %v1345
        %v1351 = vadd.s32 %v1350, 127
        %v1352 = vshll.u32 %v1351, 23
        %v1353 = vor.u32 4788187, %v1352
        %v1354 = vand.u32 2147483647, %v1353
        %v1356 = vcvt.s32.f32 %v1349
        %v1357 = vmul.f32 %v1356, %v1354
        %v1358 = vxor.u32 %v1357, 2147483648
        %v1359 = vsel %vm1276, %v1358, %v1357
        %v1360 = vsub.s32 4, %v1336
        %v1361 = vsel %vm1276, %v1360, %v1336
        %v1362 = vsel %vm1275, %v315, %v1359
        %v1363 = vsel %vm1275, 0, %v1361
        %v1364 = vcosq.f32.pop %v1362
        %v1365 = vsinq.f32.pop %v1362
        %vm1366 = vweird.f32 %v315
        %v1367 = vand.u32 %v1363, 3
        %vm1368 = vcmp.lt.s32.totalorder %v1367, 2
        %vm1369 = vcmp.eq.s32.totalorder %v1367, 0
        %v1370 = vxor.u32 %v1365, 2147483648
        %v1371 = vsel %vm1369, %v1364, %v1370
        %vm1372 = vcmp.eq.s32.totalorder %v1367, 2
        %v1373 = vxor.u32 %v1364, 2147483648
        %v1374 = vsel %vm1372, %v1373, %v1365
        %v1375 = vsel %vm1368, %v1371, %v1374
        %v1376 = vsel %vm1366, nan, %v1375
        %v1377 = vand.u32 2147483647, %v316
        %vm1378 = vcmp.le.f32.partialorder %v1377, 0.7853982
        %vm1379 = vcmp.lt.s32.totalorder %v316, 0
        %v1380 = vand.u32 %v316, 2139095040
        %v1381 = vshrl.u32 %v1380, 23
        %v1382 = vsub.s32 %v1381, 127
        %v1383 = vand.u32 2147483647, %v316
        %v1384 = vand.u32 %v1383, 8388607
        %v1385 = vor.u32 %v1384, 8388608
        %v1386 = vsub.s32 0, %v1385
        %v1387 = vadd.s32 %v1382, 1
        %vm1388 = vcmp.gt.s32.totalorder %v1387, 0
        %v1389 = vsel %vm1388, %v1387, 0
        %v1390 = vshrl.u32 %v1389, 5
        %v1391 = vand.u32 %v1389, 31
        %v1392 = vsub.s32 32, %v1391
        %v1393 = vshrl.u32 683565275, %v1392
        %v1394 = vshll.u32 683565275, %v1391
        %v1395 = vshrl.u32 2475754826, %v1392
        %v1396 = vor.u32 %v1394, %v1395
        %v1397 = vshll.u32 2475754826, %v1391
        %v1398 = vshrl.u32 2131351028, %v1392
        %v1399 = vor.u32 %v1397, %v1398
        %v1400 = vshll.u32 2131351028, %v1391
        %v1401 = vshrl.u32 2102212464, %v1392
        %v1402 = vor.u32 %v1400, %v1401
        %v1403 = vshll.u32 2102212464, %v1391
        %v1404 = vshrl.u32 920167782, %v1392
        %v1405 = vor.u32 %v1403, %v1404
        %v1406 = vshll.u32 920167782, %v1391
        %v1407 = vshrl.u32 1326507024, %v1392
        %v1408 = vor.u32 %v1406, %v1407
        %vm1409 = vcmp.lt.s32.totalorder %v1390, 1
        %vm1410 = vcmp.lt.s32.totalorder %v1390, 2
        %vm1411 = vcmp.lt.s32.totalorder %v1390, 3
        %vm1412 = vcmp.lt.s32.totalorder %v1390, 4
        %v1413 = vsel %vm1409, %v1393, %v1396
        %v1414 = vsel %vm1412, %v1402, 2102212464
        %v1415 = vsel %vm1411, %v1399, %v1414
        %v1416 = vsel %vm1410, %v1413, %v1415
        %v1417 = vsel %vm1409, %v1396, %v1399
        %v1418 = vsel %vm1412, %v1405, 920167782
        %v1419 = vsel %vm1411, %v1402, %v1418
        %v1420 = vsel %vm1410, %v1417, %v1419
        %v1421 = vsel %vm1409, %v1399, %v1402
        %v1422 = vsel %vm1412, %v1408, 1326507024
        %v1423 = vsel %vm1411, %v1405, %v1422
        %v1424 = vsel %vm1410, %v1421, %v1423
        %v1425 = vshll.u32 %v1385, 8
        %v1426 = vmul.u32.u64.compose %v1425, %v1424
        %v1427 = vextract.low.u32 %v1426
        %v1428 = vextract.high.u32 %v1426
        %v1429 = vmul.u32.u64.compose %v1425, %v1420
        %v1430 = vextract.low.u32 %v1429
        %v1431 = vextract.high.u32 %v1429
        %v1432 = vmul.u32 %v1425, %v1416
        %v1433 = vadd.s32 %v1428, %v1430
        %vm1434 = vc.u32 %v1428, %v1430
        %v1435 = vadd.s32 %v1431, 1
        %v1436 = vsel %vm1434, %v1435, %v1431
        %v1437 = vadd.s32 %v1432, %v1436
        %v1438 = vadd.s32 %v1437, 536870912
        %v1439 = vshrl.u32 %v1438, 30
        %v1440 = vshll.u32 %v1439, 30
        %v1441 = vsub.s32 %v1437, %v1440
        %vm1442 = vcmp.lt.s32.totalorder %v1441, 0
        %v1443 = vsub.s32 0, %v1441
        %v1444 = vsel %vm1442, %v1443, %v1441
        %v1445 = vclz %v1444
        %v1446 = vsub.s32 %v1445, 2
        %vm1447 = vcmp.gt.s32.totalorder 0, %v1446
        %v1448 = vsel %vm1447, 0, %v1446
        %v1449 = vsub.s32 32, %v1448
        %v1450 = vshll.u32 %v1441, %v1448
        %v1451 = vshrl.u32 %v1433, %v1449
        %v1452 = vor.u32 %v1450, %v1451
        %v1453 = vsub.s32 4294967266, %v1448
        %v1454 = vadd.s32 %v1453, 127
        %v1455 = vshll.u32 %v1454, 23
        %v1456 = vor.u32 4788187, %v1455
        %v1457 = vand.u32 2147483647, %v1456
        %v1459 = vcvt.s32.f32 %v1452
        %v1460 = vmul.f32 %v1459, %v1457
        %v1461 = vxor.u32 %v1460, 2147483648
        %v1462 = vsel %vm1379, %v1461, %v1460
        %v1463 = vsub.s32 4, %v1439
        %v1464 = vsel %vm1379, %v1463, %v1439
        %v1465 = vsel %vm1378, %v316, %v1462
        %v1466 = vsel %vm1378, 0, %v1464
        %v1467 = vcosq.f32.pop %v1465
        %v1468 = vsinq.f32.pop %v1465
        %vm1469 = vweird.f32 %v316
        %v1470 = vand.u32 %v1466, 3
        %vm1471 = vcmp.lt.s32.totalorder %v1470, 2
        %vm1472 = vcmp.eq.s32.totalorder %v1470, 0
        %v1473 = vxor.u32 %v1468, 2147483648
        %v1474 = vsel %vm1472, %v1467, %v1473
        %vm1475 = vcmp.eq.s32.totalorder %v1470, 2
        %v1476 = vxor.u32 %v1467, 2147483648
        %v1477 = vsel %vm1475, %v1476, %v1468
        %v1478 = vsel %vm1471, %v1474, %v1477
        %v1479 = vsel %vm1469, nan, %v1478
        %v1480 = vand.u32 2147483647, %v317
        %vm1481 = vcmp.le.f32.partialorder %v1480, 0.7853982
        %vm1482 = vcmp.lt.s32.totalorder %v317, 0
        %v1483 = vand.u32 %v317, 2139095040
        %v1484 = vshrl.u32 %v1483, 23
        %v1485 = vsub.s32 %v1484, 127
        %v1486 = vand.u32 2147483647, %v317
        %v1487 = vand.u32 %v1486, 8388607
        %v1488 = vor.u32 %v1487, 8388608
        %v1489 = vsub.s32 0, %v1488
        %v1490 = vadd.s32 %v1485, 1
        %vm1491 = vcmp.gt.s32.totalorder %v1490, 0
        %v1492 = vsel %vm1491, %v1490, 0
        %v1493 = vshrl.u32 %v1492, 5
        %v1494 = vand.u32 %v1492, 31
        %v1495 = vsub.s32 32, %v1494
        %v1496 = vshrl.u32 683565275, %v1495
        %v1497 = vshll.u32 683565275, %v1494
        %v1498 = vshrl.u32 2475754826, %v1495
        %v1499 = vor.u32 %v1497, %v1498
        %v1500 = vshll.u32 2475754826, %v1494
        %v1501 = vshrl.u32 2131351028, %v1495
        %v1502 = vor.u32 %v1500, %v1501
        %v1503 = vshll.u32 2131351028, %v1494
        %v1504 = vshrl.u32 2102212464, %v1495
        %v1505 = vor.u32 %v1503, %v1504
        %v1506 = vshll.u32 2102212464, %v1494
        %v1507 = vshrl.u32 920167782, %v1495
        %v1508 = vor.u32 %v1506, %v1507
        %v1509 = vshll.u32 920167782, %v1494
        %v1510 = vshrl.u32 1326507024, %v1495
        %v1511 = vor.u32 %v1509, %v1510
        %vm1512 = vcmp.lt.s32.totalorder %v1493, 1
        %vm1513 = vcmp.lt.s32.totalorder %v1493, 2
        %vm1514 = vcmp.lt.s32.totalorder %v1493, 3
        %vm1515 = vcmp.lt.s32.totalorder %v1493, 4
        %v1516 = vsel %vm1512, %v1496, %v1499
        %v1517 = vsel %vm1515, %v1505, 2102212464
        %v1518 = vsel %vm1514, %v1502, %v1517
        %v1519 = vsel %vm1513, %v1516, %v1518
        %v1520 = vsel %vm1512, %v1499, %v1502
        %v1521 = vsel %vm1515, %v1508, 920167782
        %v1522 = vsel %vm1514, %v1505, %v1521
        %v1523 = vsel %vm1513, %v1520, %v1522
        %v1524 = vsel %vm1512, %v1502, %v1505
        %v1525 = vsel %vm1515, %v1511, 1326507024
        %v1526 = vsel %vm1514, %v1508, %v1525
        %v1527 = vsel %vm1513, %v1524, %v1526
        %v1528 = vshll.u32 %v1488, 8
        %v1529 = vmul.u32.u64.compose %v1528, %v1527
        %v1530 = vextract.low.u32 %v1529
        %v1531 = vextract.high.u32 %v1529
        %v1532 = vmul.u32.u64.compose %v1528, %v1523
        %v1533 = vextract.low.u32 %v1532
        %v1534 = vextract.high.u32 %v1532
        %v1535 = vmul.u32 %v1528, %v1519
        %v1536 = vadd.s32 %v1531, %v1533
        %vm1537 = vc.u32 %v1531, %v1533
        %v1538 = vadd.s32 %v1534, 1
        %v1539 = vsel %vm1537, %v1538, %v1534
        %v1540 = vadd.s32 %v1535, %v1539
        %v1541 = vadd.s32 %v1540, 536870912
        %v1542 = vshrl.u32 %v1541, 30
        %v1543 = vshll.u32 %v1542, 30
        %v1544 = vsub.s32 %v1540, %v1543
        %vm1545 = vcmp.lt.s32.totalorder %v1544, 0
        %v1546 = vsub.s32 0, %v1544
        %v1547 = vsel %vm1545, %v1546, %v1544
        %v1548 = vclz %v1547
        %v1549 = vsub.s32 %v1548, 2
        %vm1550 = vcmp.gt.s32.totalorder 0, %v1549
        %v1551 = vsel %vm1550, 0, %v1549
        %v1552 = vsub.s32 32, %v1551
        %v1553 = vshll.u32 %v1544, %v1551
        %v1554 = vshrl.u32 %v1536, %v1552
        %v1555 = vor.u32 %v1553, %v1554
        %v1556 = vsub.s32 4294967266, %v1551
        %v1557 = vadd.s32 %v1556, 127
        %v1558 = vshll.u32 %v1557, 23
        %v1559 = vor.u32 4788187, %v1558
        %v1560 = vand.u32 2147483647, %v1559
        %v1562 = vcvt.s32.f32 %v1555
        %v1563 = vmul.f32 %v1562, %v1560
        %v1564 = vxor.u32 %v1563, 2147483648
        %v1565 = vsel %vm1482, %v1564, %v1563
        %v1566 = vsub.s32 4, %v1542
        %v1567 = vsel %vm1482, %v1566, %v1542
        %v1568 = vsel %vm1481, %v317, %v1565
        %v1569 = vsel %vm1481, 0, %v1567
        %v1570 = vcosq.f32.pop %v1568
        %v1571 = vsinq.f32.pop %v1568
        %vm1572 = vweird.f32 %v317
        %v1573 = vand.u32 %v1569, 3
        %vm1574 = vcmp.lt.s32.totalorder %v1573, 2
        %vm1575 = vcmp.eq.s32.totalorder %v1573, 0
        %v1576 = vxor.u32 %v1571, 2147483648
        %v1577 = vsel %vm1575, %v1570, %v1576
        %vm1578 = vcmp.eq.s32.totalorder %v1573, 2
        %v1579 = vxor.u32 %v1570, 2147483648
        %v1580 = vsel %vm1578, %v1579, %v1571
        %v1581 = vsel %vm1574, %v1577, %v1580
        %v1582 = vsel %vm1572, nan, %v1581
        %v1583 = vand.u32 2147483647, %v318
        %vm1584 = vcmp.le.f32.partialorder %v1583, 0.7853982
        %vm1585 = vcmp.lt.s32.totalorder %v318, 0
        %v1586 = vand.u32 %v318, 2139095040
        %v1587 = vshrl.u32 %v1586, 23
        %v1588 = vsub.s32 %v1587, 127
        %v1589 = vand.u32 2147483647, %v318
        %v1590 = vand.u32 %v1589, 8388607
        %v1591 = vor.u32 %v1590, 8388608
        %v1592 = vsub.s32 0, %v1591
        %v1593 = vadd.s32 %v1588, 1
        %vm1594 = vcmp.gt.s32.totalorder %v1593, 0
        %v1595 = vsel %vm1594, %v1593, 0
        %v1596 = vshrl.u32 %v1595, 5
        %v1597 = vand.u32 %v1595, 31
        %v1598 = vsub.s32 32, %v1597
        %v1599 = vshrl.u32 683565275, %v1598
        %v1600 = vshll.u32 683565275, %v1597
        %v1601 = vshrl.u32 2475754826, %v1598
        %v1602 = vor.u32 %v1600, %v1601
        %v1603 = vshll.u32 2475754826, %v1597
        %v1604 = vshrl.u32 2131351028, %v1598
        %v1605 = vor.u32 %v1603, %v1604
        %v1606 = vshll.u32 2131351028, %v1597
        %v1607 = vshrl.u32 2102212464, %v1598
        %v1608 = vor.u32 %v1606, %v1607
        %v1609 = vshll.u32 2102212464, %v1597
        %v1610 = vshrl.u32 920167782, %v1598
        %v1611 = vor.u32 %v1609, %v1610
        %v1612 = vshll.u32 920167782, %v1597
        %v1613 = vshrl.u32 1326507024, %v1598
        %v1614 = vor.u32 %v1612, %v1613
        %vm1615 = vcmp.lt.s32.totalorder %v1596, 1
        %vm1616 = vcmp.lt.s32.totalorder %v1596, 2
        %vm1617 = vcmp.lt.s32.totalorder %v1596, 3
        %vm1618 = vcmp.lt.s32.totalorder %v1596, 4
        %v1619 = vsel %vm1615, %v1599, %v1602
        %v1620 = vsel %vm1618, %v1608, 2102212464
        %v1621 = vsel %vm1617, %v1605, %v1620
        %v1622 = vsel %vm1616, %v1619, %v1621
        %v1623 = vsel %vm1615, %v1602, %v1605
        %v1624 = vsel %vm1618, %v1611, 920167782
        %v1625 = vsel %vm1617, %v1608, %v1624
        %v1626 = vsel %vm1616, %v1623, %v1625
        %v1627 = vsel %vm1615, %v1605, %v1608
        %v1628 = vsel %vm1618, %v1614, 1326507024
        %v1629 = vsel %vm1617, %v1611, %v1628
        %v1630 = vsel %vm1616, %v1627, %v1629
        %v1631 = vshll.u32 %v1591, 8
        %v1632 = vmul.u32.u64.compose %v1631, %v1630
        %v1633 = vextract.low.u32 %v1632
        %v1634 = vextract.high.u32 %v1632
        %v1635 = vmul.u32.u64.compose %v1631, %v1626
        %v1636 = vextract.low.u32 %v1635
        %v1637 = vextract.high.u32 %v1635
        %v1638 = vmul.u32 %v1631, %v1622
        %v1639 = vadd.s32 %v1634, %v1636
        %vm1640 = vc.u32 %v1634, %v1636
        %v1641 = vadd.s32 %v1637, 1
        %v1642 = vsel %vm1640, %v1641, %v1637
        %v1643 = vadd.s32 %v1638, %v1642
        %v1644 = vadd.s32 %v1643, 536870912
        %v1645 = vshrl.u32 %v1644, 30
        %v1646 = vshll.u32 %v1645, 30
        %v1647 = vsub.s32 %v1643, %v1646
        %vm1648 = vcmp.lt.s32.totalorder %v1647, 0
        %v1649 = vsub.s32 0, %v1647
        %v1650 = vsel %vm1648, %v1649, %v1647
        %v1651 = vclz %v1650
        %v1652 = vsub.s32 %v1651, 2
        %vm1653 = vcmp.gt.s32.totalorder 0, %v1652
        %v1654 = vsel %vm1653, 0, %v1652
        %v1655 = vsub.s32 32, %v1654
        %v1656 = vshll.u32 %v1647, %v1654
        %v1657 = vshrl.u32 %v1639, %v1655
        %v1658 = vor.u32 %v1656, %v1657
        %v1659 = vsub.s32 4294967266, %v1654
        %v1660 = vadd.s32 %v1659, 127
        %v1661 = vshll.u32 %v1660, 23
        %v1662 = vor.u32 4788187, %v1661
        %v1663 = vand.u32 2147483647, %v1662
        %v1665 = vcvt.s32.f32 %v1658
        %v1666 = vmul.f32 %v1665, %v1663
        %v1667 = vxor.u32 %v1666, 2147483648
        %v1668 = vsel %vm1585, %v1667, %v1666
        %v1669 = vsub.s32 4, %v1645
        %v1670 = vsel %vm1585, %v1669, %v1645
        %v1671 = vsel %vm1584, %v318, %v1668
        %v1672 = vsel %vm1584, 0, %v1670
        %v1673 = vcosq.f32.pop %v1671
        %v1674 = vsinq.f32.pop %v1671
        %vm1675 = vweird.f32 %v318
        %v1676 = vand.u32 %v1672, 3
        %vm1677 = vcmp.lt.s32.totalorder %v1676, 2
        %vm1678 = vcmp.eq.s32.totalorder %v1676, 0
        %v1679 = vxor.u32 %v1674, 2147483648
        %v1680 = vsel %vm1678, %v1673, %v1679
        %vm1681 = vcmp.eq.s32.totalorder %v1676, 2
        %v1682 = vxor.u32 %v1673, 2147483648
        %v1683 = vsel %vm1681, %v1682, %v1674
        %v1684 = vsel %vm1677, %v1680, %v1683
        %v1685 = vsel %vm1675, nan, %v1684
        %v1686 = vand.u32 2147483647, %v319
        %vm1687 = vcmp.le.f32.partialorder %v1686, 0.7853982
        %vm1688 = vcmp.lt.s32.totalorder %v319, 0
        %v1689 = vand.u32 %v319, 2139095040
        %v1690 = vshrl.u32 %v1689, 23
        %v1691 = vsub.s32 %v1690, 127
        %v1692 = vand.u32 2147483647, %v319
        %v1693 = vand.u32 %v1692, 8388607
        %v1694 = vor.u32 %v1693, 8388608
        %v1695 = vsub.s32 0, %v1694
        %v1696 = vadd.s32 %v1691, 1
        %vm1697 = vcmp.gt.s32.totalorder %v1696, 0
        %v1698 = vsel %vm1697, %v1696, 0
        %v1699 = vshrl.u32 %v1698, 5
        %v1700 = vand.u32 %v1698, 31
        %v1701 = vsub.s32 32, %v1700
        %v1702 = vshrl.u32 683565275, %v1701
        %v1703 = vshll.u32 683565275, %v1700
        %v1704 = vshrl.u32 2475754826, %v1701
        %v1705 = vor.u32 %v1703, %v1704
        %v1706 = vshll.u32 2475754826, %v1700
        %v1707 = vshrl.u32 2131351028, %v1701
        %v1708 = vor.u32 %v1706, %v1707
        %v1709 = vshll.u32 2131351028, %v1700
        %v1710 = vshrl.u32 2102212464, %v1701
        %v1711 = vor.u32 %v1709, %v1710
        %v1712 = vshll.u32 2102212464, %v1700
        %v1713 = vshrl.u32 920167782, %v1701
        %v1714 = vor.u32 %v1712, %v1713
        %v1715 = vshll.u32 920167782, %v1700
        %v1716 = vshrl.u32 1326507024, %v1701
        %v1717 = vor.u32 %v1715, %v1716
        %vm1718 = vcmp.lt.s32.totalorder %v1699, 1
        %vm1719 = vcmp.lt.s32.totalorder %v1699, 2
        %vm1720 = vcmp.lt.s32.totalorder %v1699, 3
        %vm1721 = vcmp.lt.s32.totalorder %v1699, 4
        %v1722 = vsel %vm1718, %v1702, %v1705
        %v1723 = vsel %vm1721, %v1711, 2102212464
        %v1724 = vsel %vm1720, %v1708, %v1723
        %v1725 = vsel %vm1719, %v1722, %v1724
        %v1726 = vsel %vm1718, %v1705, %v1708
        %v1727 = vsel %vm1721, %v1714, 920167782
        %v1728 = vsel %vm1720, %v1711, %v1727
        %v1729 = vsel %vm1719, %v1726, %v1728
        %v1730 = vsel %vm1718, %v1708, %v1711
        %v1731 = vsel %vm1721, %v1717, 1326507024
        %v1732 = vsel %vm1720, %v1714, %v1731
        %v1733 = vsel %vm1719, %v1730, %v1732
        %v1734 = vshll.u32 %v1694, 8
        %v1735 = vmul.u32.u64.compose %v1734, %v1733
        %v1736 = vextract.low.u32 %v1735
        %v1737 = vextract.high.u32 %v1735
        %v1738 = vmul.u32.u64.compose %v1734, %v1729
        %v1739 = vextract.low.u32 %v1738
        %v1740 = vextract.high.u32 %v1738
        %v1741 = vmul.u32 %v1734, %v1725
        %v1742 = vadd.s32 %v1737, %v1739
        %vm1743 = vc.u32 %v1737, %v1739
        %v1744 = vadd.s32 %v1740, 1
        %v1745 = vsel %vm1743, %v1744, %v1740
        %v1746 = vadd.s32 %v1741, %v1745
        %v1747 = vadd.s32 %v1746, 536870912
        %v1748 = vshrl.u32 %v1747, 30
        %v1749 = vshll.u32 %v1748, 30
        %v1750 = vsub.s32 %v1746, %v1749
        %vm1751 = vcmp.lt.s32.totalorder %v1750, 0
        %v1752 = vsub.s32 0, %v1750
        %v1753 = vsel %vm1751, %v1752, %v1750
        %v1754 = vclz %v1753
        %v1755 = vsub.s32 %v1754, 2
        %vm1756 = vcmp.gt.s32.totalorder 0, %v1755
        %v1757 = vsel %vm1756, 0, %v1755
        %v1758 = vsub.s32 32, %v1757
        %v1759 = vshll.u32 %v1750, %v1757
        %v1760 = vshrl.u32 %v1742, %v1758
        %v1761 = vor.u32 %v1759, %v1760
        %v1762 = vsub.s32 4294967266, %v1757
        %v1763 = vadd.s32 %v1762, 127
        %v1764 = vshll.u32 %v1763, 23
        %v1765 = vor.u32 4788187, %v1764
        %v1766 = vand.u32 2147483647, %v1765
        %v1768 = vcvt.s32.f32 %v1761
        %v1769 = vmul.f32 %v1768, %v1766
        %v1770 = vxor.u32 %v1769, 2147483648
        %v1771 = vsel %vm1688, %v1770, %v1769
        %v1772 = vsub.s32 4, %v1748
        %v1773 = vsel %vm1688, %v1772, %v1748
        %v1774 = vsel %vm1687, %v319, %v1771
        %v1775 = vsel %vm1687, 0, %v1773
        %v1776 = vcosq.f32.pop %v1774
        %v1777 = vsinq.f32.pop %v1774
        %vm1778 = vweird.f32 %v319
        %v1779 = vand.u32 %v1775, 3
        %vm1780 = vcmp.lt.s32.totalorder %v1779, 2
        %vm1781 = vcmp.eq.s32.totalorder %v1779, 0
        %v1782 = vxor.u32 %v1777, 2147483648
        %v1783 = vsel %vm1781, %v1776, %v1782
        %vm1784 = vcmp.eq.s32.totalorder %v1779, 2
        %v1785 = vxor.u32 %v1776, 2147483648
        %v1786 = vsel %vm1784, %v1785, %v1777
        %v1787 = vsel %vm1780, %v1783, %v1786
        %v1788 = vsel %vm1778, nan, %v1787
        %v1789 = vand.u32 2147483647, %v320
        %vm1790 = vcmp.le.f32.partialorder %v1789, 0.7853982
        %vm1791 = vcmp.lt.s32.totalorder %v320, 0
        %v1792 = vand.u32 %v320, 2139095040
        %v1793 = vshrl.u32 %v1792, 23
        %v1794 = vsub.s32 %v1793, 127
        %v1795 = vand.u32 2147483647, %v320
        %v1796 = vand.u32 %v1795, 8388607
        %v1797 = vor.u32 %v1796, 8388608
        %v1798 = vsub.s32 0, %v1797
        %v1799 = vadd.s32 %v1794, 1
        %vm1800 = vcmp.gt.s32.totalorder %v1799, 0
        %v1801 = vsel %vm1800, %v1799, 0
        %v1802 = vshrl.u32 %v1801, 5
        %v1803 = vand.u32 %v1801, 31
        %v1804 = vsub.s32 32, %v1803
        %v1805 = vshrl.u32 683565275, %v1804
        %v1806 = vshll.u32 683565275, %v1803
        %v1807 = vshrl.u32 2475754826, %v1804
        %v1808 = vor.u32 %v1806, %v1807
        %v1809 = vshll.u32 2475754826, %v1803
        %v1810 = vshrl.u32 2131351028, %v1804
        %v1811 = vor.u32 %v1809, %v1810
        %v1812 = vshll.u32 2131351028, %v1803
        %v1813 = vshrl.u32 2102212464, %v1804
        %v1814 = vor.u32 %v1812, %v1813
        %v1815 = vshll.u32 2102212464, %v1803
        %v1816 = vshrl.u32 920167782, %v1804
        %v1817 = vor.u32 %v1815, %v1816
        %v1818 = vshll.u32 920167782, %v1803
        %v1819 = vshrl.u32 1326507024, %v1804
        %v1820 = vor.u32 %v1818, %v1819
        %vm1821 = vcmp.lt.s32.totalorder %v1802, 1
        %vm1822 = vcmp.lt.s32.totalorder %v1802, 2
        %vm1823 = vcmp.lt.s32.totalorder %v1802, 3
        %vm1824 = vcmp.lt.s32.totalorder %v1802, 4
        %v1825 = vsel %vm1821, %v1805, %v1808
        %v1826 = vsel %vm1824, %v1814, 2102212464
        %v1827 = vsel %vm1823, %v1811, %v1826
        %v1828 = vsel %vm1822, %v1825, %v1827
        %v1829 = vsel %vm1821, %v1808, %v1811
        %v1830 = vsel %vm1824, %v1817, 920167782
        %v1831 = vsel %vm1823, %v1814, %v1830
        %v1832 = vsel %vm1822, %v1829, %v1831
        %v1833 = vsel %vm1821, %v1811, %v1814
        %v1834 = vsel %vm1824, %v1820, 1326507024
        %v1835 = vsel %vm1823, %v1817, %v1834
        %v1836 = vsel %vm1822, %v1833, %v1835
        %v1837 = vshll.u32 %v1797, 8
        %v1838 = vmul.u32.u64.compose %v1837, %v1836
        %v1839 = vextract.low.u32 %v1838
        %v1840 = vextract.high.u32 %v1838
        %v1841 = vmul.u32.u64.compose %v1837, %v1832
        %v1842 = vextract.low.u32 %v1841
        %v1843 = vextract.high.u32 %v1841
        %v1844 = vmul.u32 %v1837, %v1828
        %v1845 = vadd.s32 %v1840, %v1842
        %vm1846 = vc.u32 %v1840, %v1842
        %v1847 = vadd.s32 %v1843, 1
        %v1848 = vsel %vm1846, %v1847, %v1843
        %v1849 = vadd.s32 %v1844, %v1848
        %v1850 = vadd.s32 %v1849, 536870912
        %v1851 = vshrl.u32 %v1850, 30
        %v1852 = vshll.u32 %v1851, 30
        %v1853 = vsub.s32 %v1849, %v1852
        %vm1854 = vcmp.lt.s32.totalorder %v1853, 0
        %v1855 = vsub.s32 0, %v1853
        %v1856 = vsel %vm1854, %v1855, %v1853
        %v1857 = vclz %v1856
        %v1858 = vsub.s32 %v1857, 2
        %vm1859 = vcmp.gt.s32.totalorder 0, %v1858
        %v1860 = vsel %vm1859, 0, %v1858
        %v1861 = vsub.s32 32, %v1860
        %v1862 = vshll.u32 %v1853, %v1860
        %v1863 = vshrl.u32 %v1845, %v1861
        %v1864 = vor.u32 %v1862, %v1863
        %v1865 = vsub.s32 4294967266, %v1860
        %v1866 = vadd.s32 %v1865, 127
        %v1867 = vshll.u32 %v1866, 23
        %v1868 = vor.u32 4788187, %v1867
        %v1869 = vand.u32 2147483647, %v1868
        %v1871 = vcvt.s32.f32 %v1864
        %v1872 = vmul.f32 %v1871, %v1869
        %v1873 = vxor.u32 %v1872, 2147483648
        %v1874 = vsel %vm1791, %v1873, %v1872
        %v1875 = vsub.s32 4, %v1851
        %v1876 = vsel %vm1791, %v1875, %v1851
        %v1877 = vsel %vm1790, %v320, %v1874
        %v1878 = vsel %vm1790, 0, %v1876
        %v1879 = vcosq.f32.pop %v1877
        %v1880 = vsinq.f32.pop %v1877
        %vm1881 = vweird.f32 %v320
        %v1882 = vand.u32 %v1878, 3
        %vm1883 = vcmp.lt.s32.totalorder %v1882, 2
        %vm1884 = vcmp.eq.s32.totalorder %v1882, 0
        %v1885 = vxor.u32 %v1880, 2147483648
        %v1886 = vsel %vm1884, %v1879, %v1885
        %vm1887 = vcmp.eq.s32.totalorder %v1882, 2
        %v1888 = vxor.u32 %v1879, 2147483648
        %v1889 = vsel %vm1887, %v1888, %v1880
        %v1890 = vsel %vm1883, %v1886, %v1889
        %v1891 = vsel %vm1881, nan, %v1890
        %v1892 = vand.u32 2147483647, %v321
        %vm1893 = vcmp.le.f32.partialorder %v1892, 0.7853982
        %vm1894 = vcmp.lt.s32.totalorder %v321, 0
        %v1895 = vand.u32 %v321, 2139095040
        %v1896 = vshrl.u32 %v1895, 23
        %v1897 = vsub.s32 %v1896, 127
        %v1898 = vand.u32 2147483647, %v321
        %v1899 = vand.u32 %v1898, 8388607
        %v1900 = vor.u32 %v1899, 8388608
        %v1901 = vsub.s32 0, %v1900
        %v1902 = vadd.s32 %v1897, 1
        %vm1903 = vcmp.gt.s32.totalorder %v1902, 0
        %v1904 = vsel %vm1903, %v1902, 0
        %v1905 = vshrl.u32 %v1904, 5
        %v1906 = vand.u32 %v1904, 31
        %v1907 = vsub.s32 32, %v1906
        %v1908 = vshrl.u32 683565275, %v1907
        %v1909 = vshll.u32 683565275, %v1906
        %v1910 = vshrl.u32 2475754826, %v1907
        %v1911 = vor.u32 %v1909, %v1910
        %v1912 = vshll.u32 2475754826, %v1906
        %v1913 = vshrl.u32 2131351028, %v1907
        %v1914 = vor.u32 %v1912, %v1913
        %v1915 = vshll.u32 2131351028, %v1906
        %v1916 = vshrl.u32 2102212464, %v1907
        %v1917 = vor.u32 %v1915, %v1916
        %v1918 = vshll.u32 2102212464, %v1906
        %v1919 = vshrl.u32 920167782, %v1907
        %v1920 = vor.u32 %v1918, %v1919
        %v1921 = vshll.u32 920167782, %v1906
        %v1922 = vshrl.u32 1326507024, %v1907
        %v1923 = vor.u32 %v1921, %v1922
        %vm1924 = vcmp.lt.s32.totalorder %v1905, 1
        %vm1925 = vcmp.lt.s32.totalorder %v1905, 2
        %vm1926 = vcmp.lt.s32.totalorder %v1905, 3
        %vm1927 = vcmp.lt.s32.totalorder %v1905, 4
        %v1928 = vsel %vm1924, %v1908, %v1911
        %v1929 = vsel %vm1927, %v1917, 2102212464
        %v1930 = vsel %vm1926, %v1914, %v1929
        %v1931 = vsel %vm1925, %v1928, %v1930
        %v1932 = vsel %vm1924, %v1911, %v1914
        %v1933 = vsel %vm1927, %v1920, 920167782
        %v1934 = vsel %vm1926, %v1917, %v1933
        %v1935 = vsel %vm1925, %v1932, %v1934
        %v1936 = vsel %vm1924, %v1914, %v1917
        %v1937 = vsel %vm1927, %v1923, 1326507024
        %v1938 = vsel %vm1926, %v1920, %v1937
        %v1939 = vsel %vm1925, %v1936, %v1938
        %v1940 = vshll.u32 %v1900, 8
        %v1941 = vmul.u32.u64.compose %v1940, %v1939
        %v1942 = vextract.low.u32 %v1941
        %v1943 = vextract.high.u32 %v1941
        %v1944 = vmul.u32.u64.compose %v1940, %v1935
        %v1945 = vextract.low.u32 %v1944
        %v1946 = vextract.high.u32 %v1944
        %v1947 = vmul.u32 %v1940, %v1931
        %v1948 = vadd.s32 %v1943, %v1945
        %vm1949 = vc.u32 %v1943, %v1945
        %v1950 = vadd.s32 %v1946, 1
        %v1951 = vsel %vm1949, %v1950, %v1946
        %v1952 = vadd.s32 %v1947, %v1951
        %v1953 = vadd.s32 %v1952, 536870912
        %v1954 = vshrl.u32 %v1953, 30
        %v1955 = vshll.u32 %v1954, 30
        %v1956 = vsub.s32 %v1952, %v1955
        %vm1957 = vcmp.lt.s32.totalorder %v1956, 0
        %v1958 = vsub.s32 0, %v1956
        %v1959 = vsel %vm1957, %v1958, %v1956
        %v1960 = vclz %v1959
        %v1961 = vsub.s32 %v1960, 2
        %vm1962 = vcmp.gt.s32.totalorder 0, %v1961
        %v1963 = vsel %vm1962, 0, %v1961
        %v1964 = vsub.s32 32, %v1963
        %v1965 = vshll.u32 %v1956, %v1963
        %v1966 = vshrl.u32 %v1948, %v1964
        %v1967 = vor.u32 %v1965, %v1966
        %v1968 = vsub.s32 4294967266, %v1963
        %v1969 = vadd.s32 %v1968, 127
        %v1970 = vshll.u32 %v1969, 23
        %v1971 = vor.u32 4788187, %v1970
        %v1972 = vand.u32 2147483647, %v1971
        %v1974 = vcvt.s32.f32 %v1967
        %v1975 = vmul.f32 %v1974, %v1972
        %v1976 = vxor.u32 %v1975, 2147483648
        %v1977 = vsel %vm1894, %v1976, %v1975
        %v1978 = vsub.s32 4, %v1954
        %v1979 = vsel %vm1894, %v1978, %v1954
        %v1980 = vsel %vm1893, %v321, %v1977
        %v1981 = vsel %vm1893, 0, %v1979
        %v1982 = vcosq.f32.pop %v1980
        %v1983 = vsinq.f32.pop %v1980
        %vm1984 = vweird.f32 %v321
        %v1985 = vand.u32 %v1981, 3
        %vm1986 = vcmp.lt.s32.totalorder %v1985, 2
        %vm1987 = vcmp.eq.s32.totalorder %v1985, 0
        %v1988 = vxor.u32 %v1983, 2147483648
        %v1989 = vsel %vm1987, %v1982, %v1988
        %vm1990 = vcmp.eq.s32.totalorder %v1985, 2
        %v1991 = vxor.u32 %v1982, 2147483648
        %v1992 = vsel %vm1990, %v1991, %v1983
        %v1993 = vsel %vm1986, %v1989, %v1992
        %v1994 = vsel %vm1984, nan, %v1993
        %v1995 = vand.u32 2147483647, %v322
        %vm1996 = vcmp.le.f32.partialorder %v1995, 0.7853982
        %vm1997 = vcmp.lt.s32.totalorder %v322, 0
        %v1998 = vand.u32 %v322, 2139095040
        %v1999 = vshrl.u32 %v1998, 23
        %v2000 = vsub.s32 %v1999, 127
        %v2001 = vand.u32 2147483647, %v322
        %v2002 = vand.u32 %v2001, 8388607
        %v2003 = vor.u32 %v2002, 8388608
        %v2004 = vsub.s32 0, %v2003
        %v2005 = vadd.s32 %v2000, 1
        %vm2006 = vcmp.gt.s32.totalorder %v2005, 0
        %v2007 = vsel %vm2006, %v2005, 0
        %v2008 = vshrl.u32 %v2007, 5
        %v2009 = vand.u32 %v2007, 31
        %v2010 = vsub.s32 32, %v2009
        %v2011 = vshrl.u32 683565275, %v2010
        %v2012 = vshll.u32 683565275, %v2009
        %v2013 = vshrl.u32 2475754826, %v2010
        %v2014 = vor.u32 %v2012, %v2013
        %v2015 = vshll.u32 2475754826, %v2009
        %v2016 = vshrl.u32 2131351028, %v2010
        %v2017 = vor.u32 %v2015, %v2016
        %v2018 = vshll.u32 2131351028, %v2009
        %v2019 = vshrl.u32 2102212464, %v2010
        %v2020 = vor.u32 %v2018, %v2019
        %v2021 = vshll.u32 2102212464, %v2009
        %v2022 = vshrl.u32 920167782, %v2010
        %v2023 = vor.u32 %v2021, %v2022
        %v2024 = vshll.u32 920167782, %v2009
        %v2025 = vshrl.u32 1326507024, %v2010
        %v2026 = vor.u32 %v2024, %v2025
        %vm2027 = vcmp.lt.s32.totalorder %v2008, 1
        %vm2028 = vcmp.lt.s32.totalorder %v2008, 2
        %vm2029 = vcmp.lt.s32.totalorder %v2008, 3
        %vm2030 = vcmp.lt.s32.totalorder %v2008, 4
        %v2031 = vsel %vm2027, %v2011, %v2014
        %v2032 = vsel %vm2030, %v2020, 2102212464
        %v2033 = vsel %vm2029, %v2017, %v2032
        %v2034 = vsel %vm2028, %v2031, %v2033
        %v2035 = vsel %vm2027, %v2014, %v2017
        %v2036 = vsel %vm2030, %v2023, 920167782
        %v2037 = vsel %vm2029, %v2020, %v2036
        %v2038 = vsel %vm2028, %v2035, %v2037
        %v2039 = vsel %vm2027, %v2017, %v2020
        %v2040 = vsel %vm2030, %v2026, 1326507024
        %v2041 = vsel %vm2029, %v2023, %v2040
        %v2042 = vsel %vm2028, %v2039, %v2041
        %v2043 = vshll.u32 %v2003, 8
        %v2044 = vmul.u32.u64.compose %v2043, %v2042
        %v2045 = vextract.low.u32 %v2044
        %v2046 = vextract.high.u32 %v2044
        %v2047 = vmul.u32.u64.compose %v2043, %v2038
        %v2048 = vextract.low.u32 %v2047
        %v2049 = vextract.high.u32 %v2047
        %v2050 = vmul.u32 %v2043, %v2034
        %v2051 = vadd.s32 %v2046, %v2048
        %vm2052 = vc.u32 %v2046, %v2048
        %v2053 = vadd.s32 %v2049, 1
        %v2054 = vsel %vm2052, %v2053, %v2049
        %v2055 = vadd.s32 %v2050, %v2054
        %v2056 = vadd.s32 %v2055, 536870912
        %v2057 = vshrl.u32 %v2056, 30
        %v2058 = vshll.u32 %v2057, 30
        %v2059 = vsub.s32 %v2055, %v2058
        %vm2060 = vcmp.lt.s32.totalorder %v2059, 0
        %v2061 = vsub.s32 0, %v2059
        %v2062 = vsel %vm2060, %v2061, %v2059
        %v2063 = vclz %v2062
        %v2064 = vsub.s32 %v2063, 2
        %vm2065 = vcmp.gt.s32.totalorder 0, %v2064
        %v2066 = vsel %vm2065, 0, %v2064
        %v2067 = vsub.s32 32, %v2066
        %v2068 = vshll.u32 %v2059, %v2066
        %v2069 = vshrl.u32 %v2051, %v2067
        %v2070 = vor.u32 %v2068, %v2069
        %v2071 = vsub.s32 4294967266, %v2066
        %v2072 = vadd.s32 %v2071, 127
        %v2073 = vshll.u32 %v2072, 23
        %v2074 = vor.u32 4788187, %v2073
        %v2075 = vand.u32 2147483647, %v2074
        %v2077 = vcvt.s32.f32 %v2070
        %v2078 = vmul.f32 %v2077, %v2075
        %v2079 = vxor.u32 %v2078, 2147483648
        %v2080 = vsel %vm1997, %v2079, %v2078
        %v2081 = vsub.s32 4, %v2057
        %v2082 = vsel %vm1997, %v2081, %v2057
        %v2083 = vsel %vm1996, %v322, %v2080
        %v2084 = vsel %vm1996, 0, %v2082
        %v2085 = vcosq.f32.pop %v2083
        %v2086 = vsinq.f32.pop %v2083
        %vm2087 = vweird.f32 %v322
        %v2088 = vand.u32 %v2084, 3
        %vm2089 = vcmp.lt.s32.totalorder %v2088, 2
        %vm2090 = vcmp.eq.s32.totalorder %v2088, 0
        %v2091 = vxor.u32 %v2086, 2147483648
        %v2092 = vsel %vm2090, %v2085, %v2091
        %vm2093 = vcmp.eq.s32.totalorder %v2088, 2
        %v2094 = vxor.u32 %v2085, 2147483648
        %v2095 = vsel %vm2093, %v2094, %v2086
        %v2096 = vsel %vm2089, %v2092, %v2095
        %v2097 = vsel %vm2087, nan, %v2096
        %v2098 = vand.u32 2147483647, %v323
        %vm2099 = vcmp.le.f32.partialorder %v2098, 0.7853982
        %vm2100 = vcmp.lt.s32.totalorder %v323, 0
        %v2101 = vand.u32 %v323, 2139095040
        %v2102 = vshrl.u32 %v2101, 23
        %v2103 = vsub.s32 %v2102, 127
        %v2104 = vand.u32 2147483647, %v323
        %v2105 = vand.u32 %v2104, 8388607
        %v2106 = vor.u32 %v2105, 8388608
        %v2107 = vsub.s32 0, %v2106
        %v2108 = vadd.s32 %v2103, 1
        %vm2109 = vcmp.gt.s32.totalorder %v2108, 0
        %v2110 = vsel %vm2109, %v2108, 0
        %v2111 = vshrl.u32 %v2110, 5
        %v2112 = vand.u32 %v2110, 31
        %v2113 = vsub.s32 32, %v2112
        %v2114 = vshrl.u32 683565275, %v2113
        %v2115 = vshll.u32 683565275, %v2112
        %v2116 = vshrl.u32 2475754826, %v2113
        %v2117 = vor.u32 %v2115, %v2116
        %v2118 = vshll.u32 2475754826, %v2112
        %v2119 = vshrl.u32 2131351028, %v2113
        %v2120 = vor.u32 %v2118, %v2119
        %v2121 = vshll.u32 2131351028, %v2112
        %v2122 = vshrl.u32 2102212464, %v2113
        %v2123 = vor.u32 %v2121, %v2122
        %v2124 = vshll.u32 2102212464, %v2112
        %v2125 = vshrl.u32 920167782, %v2113
        %v2126 = vor.u32 %v2124, %v2125
        %v2127 = vshll.u32 920167782, %v2112
        %v2128 = vshrl.u32 1326507024, %v2113
        %v2129 = vor.u32 %v2127, %v2128
        %vm2130 = vcmp.lt.s32.totalorder %v2111, 1
        %vm2131 = vcmp.lt.s32.totalorder %v2111, 2
        %vm2132 = vcmp.lt.s32.totalorder %v2111, 3
        %vm2133 = vcmp.lt.s32.totalorder %v2111, 4
        %v2134 = vsel %vm2130, %v2114, %v2117
        %v2135 = vsel %vm2133, %v2123, 2102212464
        %v2136 = vsel %vm2132, %v2120, %v2135
        %v2137 = vsel %vm2131, %v2134, %v2136
        %v2138 = vsel %vm2130, %v2117, %v2120
        %v2139 = vsel %vm2133, %v2126, 920167782
        %v2140 = vsel %vm2132, %v2123, %v2139
        %v2141 = vsel %vm2131, %v2138, %v2140
        %v2142 = vsel %vm2130, %v2120, %v2123
        %v2143 = vsel %vm2133, %v2129, 1326507024
        %v2144 = vsel %vm2132, %v2126, %v2143
        %v2145 = vsel %vm2131, %v2142, %v2144
        %v2146 = vshll.u32 %v2106, 8
        %v2147 = vmul.u32.u64.compose %v2146, %v2145
        %v2148 = vextract.low.u32 %v2147
        %v2149 = vextract.high.u32 %v2147
        %v2150 = vmul.u32.u64.compose %v2146, %v2141
        %v2151 = vextract.low.u32 %v2150
        %v2152 = vextract.high.u32 %v2150
        %v2153 = vmul.u32 %v2146, %v2137
        %v2154 = vadd.s32 %v2149, %v2151
        %vm2155 = vc.u32 %v2149, %v2151
        %v2156 = vadd.s32 %v2152, 1
        %v2157 = vsel %vm2155, %v2156, %v2152
        %v2158 = vadd.s32 %v2153, %v2157
        %v2159 = vadd.s32 %v2158, 536870912
        %v2160 = vshrl.u32 %v2159, 30
        %v2161 = vshll.u32 %v2160, 30
        %v2162 = vsub.s32 %v2158, %v2161
        %vm2163 = vcmp.lt.s32.totalorder %v2162, 0
        %v2164 = vsub.s32 0, %v2162
        %v2165 = vsel %vm2163, %v2164, %v2162
        %v2166 = vclz %v2165
        %v2167 = vsub.s32 %v2166, 2
        %vm2168 = vcmp.gt.s32.totalorder 0, %v2167
        %v2169 = vsel %vm2168, 0, %v2167
        %v2170 = vsub.s32 32, %v2169
        %v2171 = vshll.u32 %v2162, %v2169
        %v2172 = vshrl.u32 %v2154, %v2170
        %v2173 = vor.u32 %v2171, %v2172
        %v2174 = vsub.s32 4294967266, %v2169
        %v2175 = vadd.s32 %v2174, 127
        %v2176 = vshll.u32 %v2175, 23
        %v2177 = vor.u32 4788187, %v2176
        %v2178 = vand.u32 2147483647, %v2177
        %v2180 = vcvt.s32.f32 %v2173
        %v2181 = vmul.f32 %v2180, %v2178
        %v2182 = vxor.u32 %v2181, 2147483648
        %v2183 = vsel %vm2100, %v2182, %v2181
        %v2184 = vsub.s32 4, %v2160
        %v2185 = vsel %vm2100, %v2184, %v2160
        %v2186 = vsel %vm2099, %v323, %v2183
        %v2187 = vsel %vm2099, 0, %v2185
        %v2188 = vcosq.f32.pop %v2186
        %v2189 = vsinq.f32.pop %v2186
        %vm2190 = vweird.f32 %v323
        %v2191 = vand.u32 %v2187, 3
        %vm2192 = vcmp.lt.s32.totalorder %v2191, 2
        %vm2193 = vcmp.eq.s32.totalorder %v2191, 0
        %v2194 = vxor.u32 %v2189, 2147483648
        %v2195 = vsel %vm2193, %v2188, %v2194
        %vm2196 = vcmp.eq.s32.totalorder %v2191, 2
        %v2197 = vxor.u32 %v2188, 2147483648
        %v2198 = vsel %vm2196, %v2197, %v2189
        %v2199 = vsel %vm2192, %v2195, %v2198
        %v2200 = vsel %vm2190, nan, %v2199
        %v2201 = vand.u32 2147483647, %v324
        %vm2202 = vcmp.le.f32.partialorder %v2201, 0.7853982
        %vm2203 = vcmp.lt.s32.totalorder %v324, 0
        %v2204 = vand.u32 %v324, 2139095040
        %v2205 = vshrl.u32 %v2204, 23
        %v2206 = vsub.s32 %v2205, 127
        %v2207 = vand.u32 2147483647, %v324
        %v2208 = vand.u32 %v2207, 8388607
        %v2209 = vor.u32 %v2208, 8388608
        %v2210 = vsub.s32 0, %v2209
        %v2211 = vadd.s32 %v2206, 1
        %vm2212 = vcmp.gt.s32.totalorder %v2211, 0
        %v2213 = vsel %vm2212, %v2211, 0
        %v2214 = vshrl.u32 %v2213, 5
        %v2215 = vand.u32 %v2213, 31
        %v2216 = vsub.s32 32, %v2215
        %v2217 = vshrl.u32 683565275, %v2216
        %v2218 = vshll.u32 683565275, %v2215
        %v2219 = vshrl.u32 2475754826, %v2216
        %v2220 = vor.u32 %v2218, %v2219
        %v2221 = vshll.u32 2475754826, %v2215
        %v2222 = vshrl.u32 2131351028, %v2216
        %v2223 = vor.u32 %v2221, %v2222
        %v2224 = vshll.u32 2131351028, %v2215
        %v2225 = vshrl.u32 2102212464, %v2216
        %v2226 = vor.u32 %v2224, %v2225
        %v2227 = vshll.u32 2102212464, %v2215
        %v2228 = vshrl.u32 920167782, %v2216
        %v2229 = vor.u32 %v2227, %v2228
        %v2230 = vshll.u32 920167782, %v2215
        %v2231 = vshrl.u32 1326507024, %v2216
        %v2232 = vor.u32 %v2230, %v2231
        %vm2233 = vcmp.lt.s32.totalorder %v2214, 1
        %vm2234 = vcmp.lt.s32.totalorder %v2214, 2
        %vm2235 = vcmp.lt.s32.totalorder %v2214, 3
        %vm2236 = vcmp.lt.s32.totalorder %v2214, 4
        %v2237 = vsel %vm2233, %v2217, %v2220
        %v2238 = vsel %vm2236, %v2226, 2102212464
        %v2239 = vsel %vm2235, %v2223, %v2238
        %v2240 = vsel %vm2234, %v2237, %v2239
        %v2241 = vsel %vm2233, %v2220, %v2223
        %v2242 = vsel %vm2236, %v2229, 920167782
        %v2243 = vsel %vm2235, %v2226, %v2242
        %v2244 = vsel %vm2234, %v2241, %v2243
        %v2245 = vsel %vm2233, %v2223, %v2226
        %v2246 = vsel %vm2236, %v2232, 1326507024
        %v2247 = vsel %vm2235, %v2229, %v2246
        %v2248 = vsel %vm2234, %v2245, %v2247
        %v2249 = vshll.u32 %v2209, 8
        %v2250 = vmul.u32.u64.compose %v2249, %v2248
        %v2251 = vextract.low.u32 %v2250
        %v2252 = vextract.high.u32 %v2250
        %v2253 = vmul.u32.u64.compose %v2249, %v2244
        %v2254 = vextract.low.u32 %v2253
        %v2255 = vextract.high.u32 %v2253
        %v2256 = vmul.u32 %v2249, %v2240
        %v2257 = vadd.s32 %v2252, %v2254
        %vm2258 = vc.u32 %v2252, %v2254
        %v2259 = vadd.s32 %v2255, 1
        %v2260 = vsel %vm2258, %v2259, %v2255
        %v2261 = vadd.s32 %v2256, %v2260
        %v2262 = vadd.s32 %v2261, 536870912
        %v2263 = vshrl.u32 %v2262, 30
        %v2264 = vshll.u32 %v2263, 30
        %v2265 = vsub.s32 %v2261, %v2264
        %vm2266 = vcmp.lt.s32.totalorder %v2265, 0
        %v2267 = vsub.s32 0, %v2265
        %v2268 = vsel %vm2266, %v2267, %v2265
        %v2269 = vclz %v2268
        %v2270 = vsub.s32 %v2269, 2
        %vm2271 = vcmp.gt.s32.totalorder 0, %v2270
        %v2272 = vsel %vm2271, 0, %v2270
        %v2273 = vsub.s32 32, %v2272
        %v2274 = vshll.u32 %v2265, %v2272
        %v2275 = vshrl.u32 %v2257, %v2273
        %v2276 = vor.u32 %v2274, %v2275
        %v2277 = vsub.s32 4294967266, %v2272
        %v2278 = vadd.s32 %v2277, 127
        %v2279 = vshll.u32 %v2278, 23
        %v2280 = vor.u32 4788187, %v2279
        %v2281 = vand.u32 2147483647, %v2280
        %v2283 = vcvt.s32.f32 %v2276
        %v2284 = vmul.f32 %v2283, %v2281
        %v2285 = vxor.u32 %v2284, 2147483648
        %v2286 = vsel %vm2203, %v2285, %v2284
        %v2287 = vsub.s32 4, %v2263
        %v2288 = vsel %vm2203, %v2287, %v2263
        %v2289 = vsel %vm2202, %v324, %v2286
        %v2290 = vsel %vm2202, 0, %v2288
        %v2291 = vcosq.f32.pop %v2289
        %v2292 = vsinq.f32.pop %v2289
        %vm2293 = vweird.f32 %v324
        %v2294 = vand.u32 %v2290, 3
        %vm2295 = vcmp.lt.s32.totalorder %v2294, 2
        %vm2296 = vcmp.eq.s32.totalorder %v2294, 0
        %v2297 = vxor.u32 %v2292, 2147483648
        %v2298 = vsel %vm2296, %v2291, %v2297
        %vm2299 = vcmp.eq.s32.totalorder %v2294, 2
        %v2300 = vxor.u32 %v2291, 2147483648
        %v2301 = vsel %vm2299, %v2300, %v2292
        %v2302 = vsel %vm2295, %v2298, %v2301
        %v2303 = vsel %vm2293, nan, %v2302
        %v2304 = vand.u32 2147483647, %v325
        %vm2305 = vcmp.le.f32.partialorder %v2304, 0.7853982
        %vm2306 = vcmp.lt.s32.totalorder %v325, 0
        %v2307 = vand.u32 %v325, 2139095040
        %v2308 = vshrl.u32 %v2307, 23
        %v2309 = vsub.s32 %v2308, 127
        %v2310 = vand.u32 2147483647, %v325
        %v2311 = vand.u32 %v2310, 8388607
        %v2312 = vor.u32 %v2311, 8388608
        %v2313 = vsub.s32 0, %v2312
        %v2314 = vadd.s32 %v2309, 1
        %vm2315 = vcmp.gt.s32.totalorder %v2314, 0
        %v2316 = vsel %vm2315, %v2314, 0
        %v2317 = vshrl.u32 %v2316, 5
        %v2318 = vand.u32 %v2316, 31
        %v2319 = vsub.s32 32, %v2318
        %v2320 = vshrl.u32 683565275, %v2319
        %v2321 = vshll.u32 683565275, %v2318
        %v2322 = vshrl.u32 2475754826, %v2319
        %v2323 = vor.u32 %v2321, %v2322
        %v2324 = vshll.u32 2475754826, %v2318
        %v2325 = vshrl.u32 2131351028, %v2319
        %v2326 = vor.u32 %v2324, %v2325
        %v2327 = vshll.u32 2131351028, %v2318
        %v2328 = vshrl.u32 2102212464, %v2319
        %v2329 = vor.u32 %v2327, %v2328
        %v2330 = vshll.u32 2102212464, %v2318
        %v2331 = vshrl.u32 920167782, %v2319
        %v2332 = vor.u32 %v2330, %v2331
        %v2333 = vshll.u32 920167782, %v2318
        %v2334 = vshrl.u32 1326507024, %v2319
        %v2335 = vor.u32 %v2333, %v2334
        %vm2336 = vcmp.lt.s32.totalorder %v2317, 1
        %vm2337 = vcmp.lt.s32.totalorder %v2317, 2
        %vm2338 = vcmp.lt.s32.totalorder %v2317, 3
        %vm2339 = vcmp.lt.s32.totalorder %v2317, 4
        %v2340 = vsel %vm2336, %v2320, %v2323
        %v2341 = vsel %vm2339, %v2329, 2102212464
        %v2342 = vsel %vm2338, %v2326, %v2341
        %v2343 = vsel %vm2337, %v2340, %v2342
        %v2344 = vsel %vm2336, %v2323, %v2326
        %v2345 = vsel %vm2339, %v2332, 920167782
        %v2346 = vsel %vm2338, %v2329, %v2345
        %v2347 = vsel %vm2337, %v2344, %v2346
        %v2348 = vsel %vm2336, %v2326, %v2329
        %v2349 = vsel %vm2339, %v2335, 1326507024
        %v2350 = vsel %vm2338, %v2332, %v2349
        %v2351 = vsel %vm2337, %v2348, %v2350
        %v2352 = vshll.u32 %v2312, 8
        %v2353 = vmul.u32.u64.compose %v2352, %v2351
        %v2354 = vextract.low.u32 %v2353
        %v2355 = vextract.high.u32 %v2353
        %v2356 = vmul.u32.u64.compose %v2352, %v2347
        %v2357 = vextract.low.u32 %v2356
        %v2358 = vextract.high.u32 %v2356
        %v2359 = vmul.u32 %v2352, %v2343
        %v2360 = vadd.s32 %v2355, %v2357
        %vm2361 = vc.u32 %v2355, %v2357
        %v2362 = vadd.s32 %v2358, 1
        %v2363 = vsel %vm2361, %v2362, %v2358
        %v2364 = vadd.s32 %v2359, %v2363
        %v2365 = vadd.s32 %v2364, 536870912
        %v2366 = vshrl.u32 %v2365, 30
        %v2367 = vshll.u32 %v2366, 30
        %v2368 = vsub.s32 %v2364, %v2367
        %vm2369 = vcmp.lt.s32.totalorder %v2368, 0
        %v2370 = vsub.s32 0, %v2368
        %v2371 = vsel %vm2369, %v2370, %v2368
        %v2372 = vclz %v2371
        %v2373 = vsub.s32 %v2372, 2
        %vm2374 = vcmp.gt.s32.totalorder 0, %v2373
        %v2375 = vsel %vm2374, 0, %v2373
        %v2376 = vsub.s32 32, %v2375
        %v2377 = vshll.u32 %v2368, %v2375
        %v2378 = vshrl.u32 %v2360, %v2376
        %v2379 = vor.u32 %v2377, %v2378
        %v2380 = vsub.s32 4294967266, %v2375
        %v2381 = vadd.s32 %v2380, 127
        %v2382 = vshll.u32 %v2381, 23
        %v2383 = vor.u32 4788187, %v2382
        %v2384 = vand.u32 2147483647, %v2383
        %v2386 = vcvt.s32.f32 %v2379
        %v2387 = vmul.f32 %v2386, %v2384
        %v2388 = vxor.u32 %v2387, 2147483648
        %v2389 = vsel %vm2306, %v2388, %v2387
        %v2390 = vsub.s32 4, %v2366
        %v2391 = vsel %vm2306, %v2390, %v2366
        %v2392 = vsel %vm2305, %v325, %v2389
        %v2393 = vsel %vm2305, 0, %v2391
        %v2394 = vcosq.f32.pop %v2392
        %v2395 = vsinq.f32.pop %v2392
        %vm2396 = vweird.f32 %v325
        %v2397 = vand.u32 %v2393, 3
        %vm2398 = vcmp.lt.s32.totalorder %v2397, 2
        %vm2399 = vcmp.eq.s32.totalorder %v2397, 0
        %v2400 = vxor.u32 %v2395, 2147483648
        %v2401 = vsel %vm2399, %v2394, %v2400
        %vm2402 = vcmp.eq.s32.totalorder %v2397, 2
        %v2403 = vxor.u32 %v2394, 2147483648
        %v2404 = vsel %vm2402, %v2403, %v2395
        %v2405 = vsel %vm2398, %v2401, %v2404
        %v2406 = vsel %vm2396, nan, %v2405
        %v2407 = vand.u32 2147483647, %v326
        %vm2408 = vcmp.le.f32.partialorder %v2407, 0.7853982
        %vm2409 = vcmp.lt.s32.totalorder %v326, 0
        %v2410 = vand.u32 %v326, 2139095040
        %v2411 = vshrl.u32 %v2410, 23
        %v2412 = vsub.s32 %v2411, 127
        %v2413 = vand.u32 2147483647, %v326
        %v2414 = vand.u32 %v2413, 8388607
        %v2415 = vor.u32 %v2414, 8388608
        %v2416 = vsub.s32 0, %v2415
        %v2417 = vadd.s32 %v2412, 1
        %vm2418 = vcmp.gt.s32.totalorder %v2417, 0
        %v2419 = vsel %vm2418, %v2417, 0
        %v2420 = vshrl.u32 %v2419, 5
        %v2421 = vand.u32 %v2419, 31
        %v2422 = vsub.s32 32, %v2421
        %v2423 = vshrl.u32 683565275, %v2422
        %v2424 = vshll.u32 683565275, %v2421
        %v2425 = vshrl.u32 2475754826, %v2422
        %v2426 = vor.u32 %v2424, %v2425
        %v2427 = vshll.u32 2475754826, %v2421
        %v2428 = vshrl.u32 2131351028, %v2422
        %v2429 = vor.u32 %v2427, %v2428
        %v2430 = vshll.u32 2131351028, %v2421
        %v2431 = vshrl.u32 2102212464, %v2422
        %v2432 = vor.u32 %v2430, %v2431
        %v2433 = vshll.u32 2102212464, %v2421
        %v2434 = vshrl.u32 920167782, %v2422
        %v2435 = vor.u32 %v2433, %v2434
        %v2436 = vshll.u32 920167782, %v2421
        %v2437 = vshrl.u32 1326507024, %v2422
        %v2438 = vor.u32 %v2436, %v2437
        %vm2439 = vcmp.lt.s32.totalorder %v2420, 1
        %vm2440 = vcmp.lt.s32.totalorder %v2420, 2
        %vm2441 = vcmp.lt.s32.totalorder %v2420, 3
        %vm2442 = vcmp.lt.s32.totalorder %v2420, 4
        %v2443 = vsel %vm2439, %v2423, %v2426
        %v2444 = vsel %vm2442, %v2432, 2102212464
        %v2445 = vsel %vm2441, %v2429, %v2444
        %v2446 = vsel %vm2440, %v2443, %v2445
        %v2447 = vsel %vm2439, %v2426, %v2429
        %v2448 = vsel %vm2442, %v2435, 920167782
        %v2449 = vsel %vm2441, %v2432, %v2448
        %v2450 = vsel %vm2440, %v2447, %v2449
        %v2451 = vsel %vm2439, %v2429, %v2432
        %v2452 = vsel %vm2442, %v2438, 1326507024
        %v2453 = vsel %vm2441, %v2435, %v2452
        %v2454 = vsel %vm2440, %v2451, %v2453
        %v2455 = vshll.u32 %v2415, 8
        %v2456 = vmul.u32.u64.compose %v2455, %v2454
        %v2457 = vextract.low.u32 %v2456
        %v2458 = vextract.high.u32 %v2456
        %v2459 = vmul.u32.u64.compose %v2455, %v2450
        %v2460 = vextract.low.u32 %v2459
        %v2461 = vextract.high.u32 %v2459
        %v2462 = vmul.u32 %v2455, %v2446
        %v2463 = vadd.s32 %v2458, %v2460
        %vm2464 = vc.u32 %v2458, %v2460
        %v2465 = vadd.s32 %v2461, 1
        %v2466 = vsel %vm2464, %v2465, %v2461
        %v2467 = vadd.s32 %v2462, %v2466
        %v2468 = vadd.s32 %v2467, 536870912
        %v2469 = vshrl.u32 %v2468, 30
        %v2470 = vshll.u32 %v2469, 30
        %v2471 = vsub.s32 %v2467, %v2470
        %vm2472 = vcmp.lt.s32.totalorder %v2471, 0
        %v2473 = vsub.s32 0, %v2471
        %v2474 = vsel %vm2472, %v2473, %v2471
        %v2475 = vclz %v2474
        %v2476 = vsub.s32 %v2475, 2
        %vm2477 = vcmp.gt.s32.totalorder 0, %v2476
        %v2478 = vsel %vm2477, 0, %v2476
        %v2479 = vsub.s32 32, %v2478
        %v2480 = vshll.u32 %v2471, %v2478
        %v2481 = vshrl.u32 %v2463, %v2479
        %v2482 = vor.u32 %v2480, %v2481
        %v2483 = vsub.s32 4294967266, %v2478
        %v2484 = vadd.s32 %v2483, 127
        %v2485 = vshll.u32 %v2484, 23
        %v2486 = vor.u32 4788187, %v2485
        %v2487 = vand.u32 2147483647, %v2486
        %v2489 = vcvt.s32.f32 %v2482
        %v2490 = vmul.f32 %v2489, %v2487
        %v2491 = vxor.u32 %v2490, 2147483648
        %v2492 = vsel %vm2409, %v2491, %v2490
        %v2493 = vsub.s32 4, %v2469
        %v2494 = vsel %vm2409, %v2493, %v2469
        %v2495 = vsel %vm2408, %v326, %v2492
        %v2496 = vsel %vm2408, 0, %v2494
        %v2497 = vcosq.f32.pop %v2495
        %v2498 = vsinq.f32.pop %v2495
        %vm2499 = vweird.f32 %v326
        %v2500 = vand.u32 %v2496, 3
        %vm2501 = vcmp.lt.s32.totalorder %v2500, 2
        %vm2502 = vcmp.eq.s32.totalorder %v2500, 0
        %v2503 = vxor.u32 %v2498, 2147483648
        %v2504 = vsel %vm2502, %v2497, %v2503
        %vm2505 = vcmp.eq.s32.totalorder %v2500, 2
        %v2506 = vxor.u32 %v2497, 2147483648
        %v2507 = vsel %vm2505, %v2506, %v2498
        %v2508 = vsel %vm2501, %v2504, %v2507
        %v2509 = vsel %vm2499, nan, %v2508
        %v2510 = vand.u32 2147483647, %v327
        %vm2511 = vcmp.le.f32.partialorder %v2510, 0.7853982
        %vm2512 = vcmp.lt.s32.totalorder %v327, 0
        %v2513 = vand.u32 %v327, 2139095040
        %v2514 = vshrl.u32 %v2513, 23
        %v2515 = vsub.s32 %v2514, 127
        %v2516 = vand.u32 2147483647, %v327
        %v2517 = vand.u32 %v2516, 8388607
        %v2518 = vor.u32 %v2517, 8388608
        %v2519 = vsub.s32 0, %v2518
        %v2520 = vadd.s32 %v2515, 1
        %vm2521 = vcmp.gt.s32.totalorder %v2520, 0
        %v2522 = vsel %vm2521, %v2520, 0
        %v2523 = vshrl.u32 %v2522, 5
        %v2524 = vand.u32 %v2522, 31
        %v2525 = vsub.s32 32, %v2524
        %v2526 = vshrl.u32 683565275, %v2525
        %v2527 = vshll.u32 683565275, %v2524
        %v2528 = vshrl.u32 2475754826, %v2525
        %v2529 = vor.u32 %v2527, %v2528
        %v2530 = vshll.u32 2475754826, %v2524
        %v2531 = vshrl.u32 2131351028, %v2525
        %v2532 = vor.u32 %v2530, %v2531
        %v2533 = vshll.u32 2131351028, %v2524
        %v2534 = vshrl.u32 2102212464, %v2525
        %v2535 = vor.u32 %v2533, %v2534
        %v2536 = vshll.u32 2102212464, %v2524
        %v2537 = vshrl.u32 920167782, %v2525
        %v2538 = vor.u32 %v2536, %v2537
        %v2539 = vshll.u32 920167782, %v2524
        %v2540 = vshrl.u32 1326507024, %v2525
        %v2541 = vor.u32 %v2539, %v2540
        %vm2542 = vcmp.lt.s32.totalorder %v2523, 1
        %vm2543 = vcmp.lt.s32.totalorder %v2523, 2
        %vm2544 = vcmp.lt.s32.totalorder %v2523, 3
        %vm2545 = vcmp.lt.s32.totalorder %v2523, 4
        %v2546 = vsel %vm2542, %v2526, %v2529
        %v2547 = vsel %vm2545, %v2535, 2102212464
        %v2548 = vsel %vm2544, %v2532, %v2547
        %v2549 = vsel %vm2543, %v2546, %v2548
        %v2550 = vsel %vm2542, %v2529, %v2532
        %v2551 = vsel %vm2545, %v2538, 920167782
        %v2552 = vsel %vm2544, %v2535, %v2551
        %v2553 = vsel %vm2543, %v2550, %v2552
        %v2554 = vsel %vm2542, %v2532, %v2535
        %v2555 = vsel %vm2545, %v2541, 1326507024
        %v2556 = vsel %vm2544, %v2538, %v2555
        %v2557 = vsel %vm2543, %v2554, %v2556
        %v2558 = vshll.u32 %v2518, 8
        %v2559 = vmul.u32.u64.compose %v2558, %v2557
        %v2560 = vextract.low.u32 %v2559
        %v2561 = vextract.high.u32 %v2559
        %v2562 = vmul.u32.u64.compose %v2558, %v2553
        %v2563 = vextract.low.u32 %v2562
        %v2564 = vextract.high.u32 %v2562
        %v2565 = vmul.u32 %v2558, %v2549
        %v2566 = vadd.s32 %v2561, %v2563
        %vm2567 = vc.u32 %v2561, %v2563
        %v2568 = vadd.s32 %v2564, 1
        %v2569 = vsel %vm2567, %v2568, %v2564
        %v2570 = vadd.s32 %v2565, %v2569
        %v2571 = vadd.s32 %v2570, 536870912
        %v2572 = vshrl.u32 %v2571, 30
        %v2573 = vshll.u32 %v2572, 30
        %v2574 = vsub.s32 %v2570, %v2573
        %vm2575 = vcmp.lt.s32.totalorder %v2574, 0
        %v2576 = vsub.s32 0, %v2574
        %v2577 = vsel %vm2575, %v2576, %v2574
        %v2578 = vclz %v2577
        %v2579 = vsub.s32 %v2578, 2
        %vm2580 = vcmp.gt.s32.totalorder 0, %v2579
        %v2581 = vsel %vm2580, 0, %v2579
        %v2582 = vsub.s32 32, %v2581
        %v2583 = vshll.u32 %v2574, %v2581
        %v2584 = vshrl.u32 %v2566, %v2582
        %v2585 = vor.u32 %v2583, %v2584
        %v2586 = vsub.s32 4294967266, %v2581
        %v2587 = vadd.s32 %v2586, 127
        %v2588 = vshll.u32 %v2587, 23
        %v2589 = vor.u32 4788187, %v2588
        %v2590 = vand.u32 2147483647, %v2589
        %v2592 = vcvt.s32.f32 %v2585
        %v2593 = vmul.f32 %v2592, %v2590
        %v2594 = vxor.u32 %v2593, 2147483648
        %v2595 = vsel %vm2512, %v2594, %v2593
        %v2596 = vsub.s32 4, %v2572
        %v2597 = vsel %vm2512, %v2596, %v2572
        %v2598 = vsel %vm2511, %v327, %v2595
        %v2599 = vsel %vm2511, 0, %v2597
        %v2600 = vcosq.f32.pop %v2598
        %v2601 = vsinq.f32.pop %v2598
        %vm2602 = vweird.f32 %v327
        %v2603 = vand.u32 %v2599, 3
        %vm2604 = vcmp.lt.s32.totalorder %v2603, 2
        %vm2605 = vcmp.eq.s32.totalorder %v2603, 0
        %v2606 = vxor.u32 %v2601, 2147483648
        %v2607 = vsel %vm2605, %v2600, %v2606
        %vm2608 = vcmp.eq.s32.totalorder %v2603, 2
        %v2609 = vxor.u32 %v2600, 2147483648
        %v2610 = vsel %vm2608, %v2609, %v2601
        %v2611 = vsel %vm2604, %v2607, %v2610
        %v2612 = vsel %vm2602, nan, %v2611
        %v2613 = vand.u32 2147483647, %v328
        %vm2614 = vcmp.le.f32.partialorder %v2613, 0.7853982
        %vm2615 = vcmp.lt.s32.totalorder %v328, 0
        %v2616 = vand.u32 %v328, 2139095040
        %v2617 = vshrl.u32 %v2616, 23
        %v2618 = vsub.s32 %v2617, 127
        %v2619 = vand.u32 2147483647, %v328
        %v2620 = vand.u32 %v2619, 8388607
        %v2621 = vor.u32 %v2620, 8388608
        %v2622 = vsub.s32 0, %v2621
        %v2623 = vadd.s32 %v2618, 1
        %vm2624 = vcmp.gt.s32.totalorder %v2623, 0
        %v2625 = vsel %vm2624, %v2623, 0
        %v2626 = vshrl.u32 %v2625, 5
        %v2627 = vand.u32 %v2625, 31
        %v2628 = vsub.s32 32, %v2627
        %v2629 = vshrl.u32 683565275, %v2628
        %v2630 = vshll.u32 683565275, %v2627
        %v2631 = vshrl.u32 2475754826, %v2628
        %v2632 = vor.u32 %v2630, %v2631
        %v2633 = vshll.u32 2475754826, %v2627
        %v2634 = vshrl.u32 2131351028, %v2628
        %v2635 = vor.u32 %v2633, %v2634
        %v2636 = vshll.u32 2131351028, %v2627
        %v2637 = vshrl.u32 2102212464, %v2628
        %v2638 = vor.u32 %v2636, %v2637
        %v2639 = vshll.u32 2102212464, %v2627
        %v2640 = vshrl.u32 920167782, %v2628
        %v2641 = vor.u32 %v2639, %v2640
        %v2642 = vshll.u32 920167782, %v2627
        %v2643 = vshrl.u32 1326507024, %v2628
        %v2644 = vor.u32 %v2642, %v2643
        %vm2645 = vcmp.lt.s32.totalorder %v2626, 1
        %vm2646 = vcmp.lt.s32.totalorder %v2626, 2
        %vm2647 = vcmp.lt.s32.totalorder %v2626, 3
        %vm2648 = vcmp.lt.s32.totalorder %v2626, 4
        %v2649 = vsel %vm2645, %v2629, %v2632
        %v2650 = vsel %vm2648, %v2638, 2102212464
        %v2651 = vsel %vm2647, %v2635, %v2650
        %v2652 = vsel %vm2646, %v2649, %v2651
        %v2653 = vsel %vm2645, %v2632, %v2635
        %v2654 = vsel %vm2648, %v2641, 920167782
        %v2655 = vsel %vm2647, %v2638, %v2654
        %v2656 = vsel %vm2646, %v2653, %v2655
        %v2657 = vsel %vm2645, %v2635, %v2638
        %v2658 = vsel %vm2648, %v2644, 1326507024
        %v2659 = vsel %vm2647, %v2641, %v2658
        %v2660 = vsel %vm2646, %v2657, %v2659
        %v2661 = vshll.u32 %v2621, 8
        %v2662 = vmul.u32.u64.compose %v2661, %v2660
        %v2663 = vextract.low.u32 %v2662
        %v2664 = vextract.high.u32 %v2662
        %v2665 = vmul.u32.u64.compose %v2661, %v2656
        %v2666 = vextract.low.u32 %v2665
        %v2667 = vextract.high.u32 %v2665
        %v2668 = vmul.u32 %v2661, %v2652
        %v2669 = vadd.s32 %v2664, %v2666
        %vm2670 = vc.u32 %v2664, %v2666
        %v2671 = vadd.s32 %v2667, 1
        %v2672 = vsel %vm2670, %v2671, %v2667
        %v2673 = vadd.s32 %v2668, %v2672
        %v2674 = vadd.s32 %v2673, 536870912
        %v2675 = vshrl.u32 %v2674, 30
        %v2676 = vshll.u32 %v2675, 30
        %v2677 = vsub.s32 %v2673, %v2676
        %vm2678 = vcmp.lt.s32.totalorder %v2677, 0
        %v2679 = vsub.s32 0, %v2677
        %v2680 = vsel %vm2678, %v2679, %v2677
        %v2681 = vclz %v2680
        %v2682 = vsub.s32 %v2681, 2
        %vm2683 = vcmp.gt.s32.totalorder 0, %v2682
        %v2684 = vsel %vm2683, 0, %v2682
        %v2685 = vsub.s32 32, %v2684
        %v2686 = vshll.u32 %v2677, %v2684
        %v2687 = vshrl.u32 %v2669, %v2685
        %v2688 = vor.u32 %v2686, %v2687
        %v2689 = vsub.s32 4294967266, %v2684
        %v2690 = vadd.s32 %v2689, 127
        %v2691 = vshll.u32 %v2690, 23
        %v2692 = vor.u32 4788187, %v2691
        %v2693 = vand.u32 2147483647, %v2692
        %v2695 = vcvt.s32.f32 %v2688
        %v2696 = vmul.f32 %v2695, %v2693
        %v2697 = vxor.u32 %v2696, 2147483648
        %v2698 = vsel %vm2615, %v2697, %v2696
        %v2699 = vsub.s32 4, %v2675
        %v2700 = vsel %vm2615, %v2699, %v2675
        %v2701 = vsel %vm2614, %v328, %v2698
        %v2702 = vsel %vm2614, 0, %v2700
        %v2703 = vcosq.f32.pop %v2701
        %v2704 = vsinq.f32.pop %v2701
        %vm2705 = vweird.f32 %v328
        %v2706 = vand.u32 %v2702, 3
        %vm2707 = vcmp.lt.s32.totalorder %v2706, 2
        %vm2708 = vcmp.eq.s32.totalorder %v2706, 0
        %v2709 = vxor.u32 %v2704, 2147483648
        %v2710 = vsel %vm2708, %v2703, %v2709
        %vm2711 = vcmp.eq.s32.totalorder %v2706, 2
        %v2712 = vxor.u32 %v2703, 2147483648
        %v2713 = vsel %vm2711, %v2712, %v2704
        %v2714 = vsel %vm2707, %v2710, %v2713
        %v2715 = vsel %vm2705, nan, %v2714
        %v2716 = vand.u32 2147483647, %v329
        %vm2717 = vcmp.le.f32.partialorder %v2716, 0.7853982
        %vm2718 = vcmp.lt.s32.totalorder %v329, 0
        %v2719 = vand.u32 %v329, 2139095040
        %v2720 = vshrl.u32 %v2719, 23
        %v2721 = vsub.s32 %v2720, 127
        %v2722 = vand.u32 2147483647, %v329
        %v2723 = vand.u32 %v2722, 8388607
        %v2724 = vor.u32 %v2723, 8388608
        %v2725 = vsub.s32 0, %v2724
        %v2726 = vadd.s32 %v2721, 1
        %vm2727 = vcmp.gt.s32.totalorder %v2726, 0
        %v2728 = vsel %vm2727, %v2726, 0
        %v2729 = vshrl.u32 %v2728, 5
        %v2730 = vand.u32 %v2728, 31
        %v2731 = vsub.s32 32, %v2730
        %v2732 = vshrl.u32 683565275, %v2731
        %v2733 = vshll.u32 683565275, %v2730
        %v2734 = vshrl.u32 2475754826, %v2731
        %v2735 = vor.u32 %v2733, %v2734
        %v2736 = vshll.u32 2475754826, %v2730
        %v2737 = vshrl.u32 2131351028, %v2731
        %v2738 = vor.u32 %v2736, %v2737
        %v2739 = vshll.u32 2131351028, %v2730
        %v2740 = vshrl.u32 2102212464, %v2731
        %v2741 = vor.u32 %v2739, %v2740
        %v2742 = vshll.u32 2102212464, %v2730
        %v2743 = vshrl.u32 920167782, %v2731
        %v2744 = vor.u32 %v2742, %v2743
        %v2745 = vshll.u32 920167782, %v2730
        %v2746 = vshrl.u32 1326507024, %v2731
        %v2747 = vor.u32 %v2745, %v2746
        %vm2748 = vcmp.lt.s32.totalorder %v2729, 1
        %vm2749 = vcmp.lt.s32.totalorder %v2729, 2
        %vm2750 = vcmp.lt.s32.totalorder %v2729, 3
        %vm2751 = vcmp.lt.s32.totalorder %v2729, 4
        %v2752 = vsel %vm2748, %v2732, %v2735
        %v2753 = vsel %vm2751, %v2741, 2102212464
        %v2754 = vsel %vm2750, %v2738, %v2753
        %v2755 = vsel %vm2749, %v2752, %v2754
        %v2756 = vsel %vm2748, %v2735, %v2738
        %v2757 = vsel %vm2751, %v2744, 920167782
        %v2758 = vsel %vm2750, %v2741, %v2757
        %v2759 = vsel %vm2749, %v2756, %v2758
        %v2760 = vsel %vm2748, %v2738, %v2741
        %v2761 = vsel %vm2751, %v2747, 1326507024
        %v2762 = vsel %vm2750, %v2744, %v2761
        %v2763 = vsel %vm2749, %v2760, %v2762
        %v2764 = vshll.u32 %v2724, 8
        %v2765 = vmul.u32.u64.compose %v2764, %v2763
        %v2766 = vextract.low.u32 %v2765
        %v2767 = vextract.high.u32 %v2765
        %v2768 = vmul.u32.u64.compose %v2764, %v2759
        %v2769 = vextract.low.u32 %v2768
        %v2770 = vextract.high.u32 %v2768
        %v2771 = vmul.u32 %v2764, %v2755
        %v2772 = vadd.s32 %v2767, %v2769
        %vm2773 = vc.u32 %v2767, %v2769
        %v2774 = vadd.s32 %v2770, 1
        %v2775 = vsel %vm2773, %v2774, %v2770
        %v2776 = vadd.s32 %v2771, %v2775
        %v2777 = vadd.s32 %v2776, 536870912
        %v2778 = vshrl.u32 %v2777, 30
        %v2779 = vshll.u32 %v2778, 30
        %v2780 = vsub.s32 %v2776, %v2779
        %vm2781 = vcmp.lt.s32.totalorder %v2780, 0
        %v2782 = vsub.s32 0, %v2780
        %v2783 = vsel %vm2781, %v2782, %v2780
        %v2784 = vclz %v2783
        %v2785 = vsub.s32 %v2784, 2
        %vm2786 = vcmp.gt.s32.totalorder 0, %v2785
        %v2787 = vsel %vm2786, 0, %v2785
        %v2788 = vsub.s32 32, %v2787
        %v2789 = vshll.u32 %v2780, %v2787
        %v2790 = vshrl.u32 %v2772, %v2788
        %v2791 = vor.u32 %v2789, %v2790
        %v2792 = vsub.s32 4294967266, %v2787
        %v2793 = vadd.s32 %v2792, 127
        %v2794 = vshll.u32 %v2793, 23
        %v2795 = vor.u32 4788187, %v2794
        %v2796 = vand.u32 2147483647, %v2795
        %v2798 = vcvt.s32.f32 %v2791
        %v2799 = vmul.f32 %v2798, %v2796
        %v2800 = vxor.u32 %v2799, 2147483648
        %v2801 = vsel %vm2718, %v2800, %v2799
        %v2802 = vsub.s32 4, %v2778
        %v2803 = vsel %vm2718, %v2802, %v2778
        %v2804 = vsel %vm2717, %v329, %v2801
        %v2805 = vsel %vm2717, 0, %v2803
        %v2806 = vcosq.f32.pop %v2804
        %v2807 = vsinq.f32.pop %v2804
        %vm2808 = vweird.f32 %v329
        %v2809 = vand.u32 %v2805, 3
        %vm2810 = vcmp.lt.s32.totalorder %v2809, 2
        %vm2811 = vcmp.eq.s32.totalorder %v2809, 0
        %v2812 = vxor.u32 %v2807, 2147483648
        %v2813 = vsel %vm2811, %v2806, %v2812
        %vm2814 = vcmp.eq.s32.totalorder %v2809, 2
        %v2815 = vxor.u32 %v2806, 2147483648
        %v2816 = vsel %vm2814, %v2815, %v2807
        %v2817 = vsel %vm2810, %v2813, %v2816
        %v2818 = vsel %vm2808, nan, %v2817
        %v2819 = vand.u32 2147483647, %v330
        %vm2820 = vcmp.le.f32.partialorder %v2819, 0.7853982
        %vm2821 = vcmp.lt.s32.totalorder %v330, 0
        %v2822 = vand.u32 %v330, 2139095040
        %v2823 = vshrl.u32 %v2822, 23
        %v2824 = vsub.s32 %v2823, 127
        %v2825 = vand.u32 2147483647, %v330
        %v2826 = vand.u32 %v2825, 8388607
        %v2827 = vor.u32 %v2826, 8388608
        %v2828 = vsub.s32 0, %v2827
        %v2829 = vadd.s32 %v2824, 1
        %vm2830 = vcmp.gt.s32.totalorder %v2829, 0
        %v2831 = vsel %vm2830, %v2829, 0
        %v2832 = vshrl.u32 %v2831, 5
        %v2833 = vand.u32 %v2831, 31
        %v2834 = vsub.s32 32, %v2833
        %v2835 = vshrl.u32 683565275, %v2834
        %v2836 = vshll.u32 683565275, %v2833
        %v2837 = vshrl.u32 2475754826, %v2834
        %v2838 = vor.u32 %v2836, %v2837
        %v2839 = vshll.u32 2475754826, %v2833
        %v2840 = vshrl.u32 2131351028, %v2834
        %v2841 = vor.u32 %v2839, %v2840
        %v2842 = vshll.u32 2131351028, %v2833
        %v2843 = vshrl.u32 2102212464, %v2834
        %v2844 = vor.u32 %v2842, %v2843
        %v2845 = vshll.u32 2102212464, %v2833
        %v2846 = vshrl.u32 920167782, %v2834
        %v2847 = vor.u32 %v2845, %v2846
        %v2848 = vshll.u32 920167782, %v2833
        %v2849 = vshrl.u32 1326507024, %v2834
        %v2850 = vor.u32 %v2848, %v2849
        %vm2851 = vcmp.lt.s32.totalorder %v2832, 1
        %vm2852 = vcmp.lt.s32.totalorder %v2832, 2
        %vm2853 = vcmp.lt.s32.totalorder %v2832, 3
        %vm2854 = vcmp.lt.s32.totalorder %v2832, 4
        %v2855 = vsel %vm2851, %v2835, %v2838
        %v2856 = vsel %vm2854, %v2844, 2102212464
        %v2857 = vsel %vm2853, %v2841, %v2856
        %v2858 = vsel %vm2852, %v2855, %v2857
        %v2859 = vsel %vm2851, %v2838, %v2841
        %v2860 = vsel %vm2854, %v2847, 920167782
        %v2861 = vsel %vm2853, %v2844, %v2860
        %v2862 = vsel %vm2852, %v2859, %v2861
        %v2863 = vsel %vm2851, %v2841, %v2844
        %v2864 = vsel %vm2854, %v2850, 1326507024
        %v2865 = vsel %vm2853, %v2847, %v2864
        %v2866 = vsel %vm2852, %v2863, %v2865
        %v2867 = vshll.u32 %v2827, 8
        %v2868 = vmul.u32.u64.compose %v2867, %v2866
        %v2869 = vextract.low.u32 %v2868
        %v2870 = vextract.high.u32 %v2868
        %v2871 = vmul.u32.u64.compose %v2867, %v2862
        %v2872 = vextract.low.u32 %v2871
        %v2873 = vextract.high.u32 %v2871
        %v2874 = vmul.u32 %v2867, %v2858
        %v2875 = vadd.s32 %v2870, %v2872
        %vm2876 = vc.u32 %v2870, %v2872
        %v2877 = vadd.s32 %v2873, 1
        %v2878 = vsel %vm2876, %v2877, %v2873
        %v2879 = vadd.s32 %v2874, %v2878
        %v2880 = vadd.s32 %v2879, 536870912
        %v2881 = vshrl.u32 %v2880, 30
        %v2882 = vshll.u32 %v2881, 30
        %v2883 = vsub.s32 %v2879, %v2882
        %vm2884 = vcmp.lt.s32.totalorder %v2883, 0
        %v2885 = vsub.s32 0, %v2883
        %v2886 = vsel %vm2884, %v2885, %v2883
        %v2887 = vclz %v2886
        %v2888 = vsub.s32 %v2887, 2
        %vm2889 = vcmp.gt.s32.totalorder 0, %v2888
        %v2890 = vsel %vm2889, 0, %v2888
        %v2891 = vsub.s32 32, %v2890
        %v2892 = vshll.u32 %v2883, %v2890
        %v2893 = vshrl.u32 %v2875, %v2891
        %v2894 = vor.u32 %v2892, %v2893
        %v2895 = vsub.s32 4294967266, %v2890
        %v2896 = vadd.s32 %v2895, 127
        %v2897 = vshll.u32 %v2896, 23
        %v2898 = vor.u32 4788187, %v2897
        %v2899 = vand.u32 2147483647, %v2898
        %v2901 = vcvt.s32.f32 %v2894
        %v2902 = vmul.f32 %v2901, %v2899
        %v2903 = vxor.u32 %v2902, 2147483648
        %v2904 = vsel %vm2821, %v2903, %v2902
        %v2905 = vsub.s32 4, %v2881
        %v2906 = vsel %vm2821, %v2905, %v2881
        %v2907 = vsel %vm2820, %v330, %v2904
        %v2908 = vsel %vm2820, 0, %v2906
        %v2909 = vcosq.f32.pop %v2907
        %v2910 = vsinq.f32.pop %v2907
        %vm2911 = vweird.f32 %v330
        %v2912 = vand.u32 %v2908, 3
        %vm2913 = vcmp.lt.s32.totalorder %v2912, 2
        %vm2914 = vcmp.eq.s32.totalorder %v2912, 0
        %v2915 = vxor.u32 %v2910, 2147483648
        %v2916 = vsel %vm2914, %v2909, %v2915
        %vm2917 = vcmp.eq.s32.totalorder %v2912, 2
        %v2918 = vxor.u32 %v2909, 2147483648
        %v2919 = vsel %vm2917, %v2918, %v2910
        %v2920 = vsel %vm2913, %v2916, %v2919
        %v2921 = vsel %vm2911, nan, %v2920
        %v2922 = vand.u32 2147483647, %v331
        %vm2923 = vcmp.le.f32.partialorder %v2922, 0.7853982
        %vm2924 = vcmp.lt.s32.totalorder %v331, 0
        %v2925 = vand.u32 %v331, 2139095040
        %v2926 = vshrl.u32 %v2925, 23
        %v2927 = vsub.s32 %v2926, 127
        %v2928 = vand.u32 2147483647, %v331
        %v2929 = vand.u32 %v2928, 8388607
        %v2930 = vor.u32 %v2929, 8388608
        %v2931 = vsub.s32 0, %v2930
        %v2932 = vadd.s32 %v2927, 1
        %vm2933 = vcmp.gt.s32.totalorder %v2932, 0
        %v2934 = vsel %vm2933, %v2932, 0
        %v2935 = vshrl.u32 %v2934, 5
        %v2936 = vand.u32 %v2934, 31
        %v2937 = vsub.s32 32, %v2936
        %v2938 = vshrl.u32 683565275, %v2937
        %v2939 = vshll.u32 683565275, %v2936
        %v2940 = vshrl.u32 2475754826, %v2937
        %v2941 = vor.u32 %v2939, %v2940
        %v2942 = vshll.u32 2475754826, %v2936
        %v2943 = vshrl.u32 2131351028, %v2937
        %v2944 = vor.u32 %v2942, %v2943
        %v2945 = vshll.u32 2131351028, %v2936
        %v2946 = vshrl.u32 2102212464, %v2937
        %v2947 = vor.u32 %v2945, %v2946
        %v2948 = vshll.u32 2102212464, %v2936
        %v2949 = vshrl.u32 920167782, %v2937
        %v2950 = vor.u32 %v2948, %v2949
        %v2951 = vshll.u32 920167782, %v2936
        %v2952 = vshrl.u32 1326507024, %v2937
        %v2953 = vor.u32 %v2951, %v2952
        %vm2954 = vcmp.lt.s32.totalorder %v2935, 1
        %vm2955 = vcmp.lt.s32.totalorder %v2935, 2
        %vm2956 = vcmp.lt.s32.totalorder %v2935, 3
        %vm2957 = vcmp.lt.s32.totalorder %v2935, 4
        %v2958 = vsel %vm2954, %v2938, %v2941
        %v2959 = vsel %vm2957, %v2947, 2102212464
        %v2960 = vsel %vm2956, %v2944, %v2959
        %v2961 = vsel %vm2955, %v2958, %v2960
        %v2962 = vsel %vm2954, %v2941, %v2944
        %v2963 = vsel %vm2957, %v2950, 920167782
        %v2964 = vsel %vm2956, %v2947, %v2963
        %v2965 = vsel %vm2955, %v2962, %v2964
        %v2966 = vsel %vm2954, %v2944, %v2947
        %v2967 = vsel %vm2957, %v2953, 1326507024
        %v2968 = vsel %vm2956, %v2950, %v2967
        %v2969 = vsel %vm2955, %v2966, %v2968
        %v2970 = vshll.u32 %v2930, 8
        %v2971 = vmul.u32.u64.compose %v2970, %v2969
        %v2972 = vextract.low.u32 %v2971
        %v2973 = vextract.high.u32 %v2971
        %v2974 = vmul.u32.u64.compose %v2970, %v2965
        %v2975 = vextract.low.u32 %v2974
        %v2976 = vextract.high.u32 %v2974
        %v2977 = vmul.u32 %v2970, %v2961
        %v2978 = vadd.s32 %v2973, %v2975
        %vm2979 = vc.u32 %v2973, %v2975
        %v2980 = vadd.s32 %v2976, 1
        %v2981 = vsel %vm2979, %v2980, %v2976
        %v2982 = vadd.s32 %v2977, %v2981
        %v2983 = vadd.s32 %v2982, 536870912
        %v2984 = vshrl.u32 %v2983, 30
        %v2985 = vshll.u32 %v2984, 30
        %v2986 = vsub.s32 %v2982, %v2985
        %vm2987 = vcmp.lt.s32.totalorder %v2986, 0
        %v2988 = vsub.s32 0, %v2986
        %v2989 = vsel %vm2987, %v2988, %v2986
        %v2990 = vclz %v2989
        %v2991 = vsub.s32 %v2990, 2
        %vm2992 = vcmp.gt.s32.totalorder 0, %v2991
        %v2993 = vsel %vm2992, 0, %v2991
        %v2994 = vsub.s32 32, %v2993
        %v2995 = vshll.u32 %v2986, %v2993
        %v2996 = vshrl.u32 %v2978, %v2994
        %v2997 = vor.u32 %v2995, %v2996
        %v2998 = vsub.s32 4294967266, %v2993
        %v2999 = vadd.s32 %v2998, 127
        %v3000 = vshll.u32 %v2999, 23
        %v3001 = vor.u32 4788187, %v3000
        %v3002 = vand.u32 2147483647, %v3001
        %v3004 = vcvt.s32.f32 %v2997
        %v3005 = vmul.f32 %v3004, %v3002
        %v3006 = vxor.u32 %v3005, 2147483648
        %v3007 = vsel %vm2924, %v3006, %v3005
        %v3008 = vsub.s32 4, %v2984
        %v3009 = vsel %vm2924, %v3008, %v2984
        %v3010 = vsel %vm2923, %v331, %v3007
        %v3011 = vsel %vm2923, 0, %v3009
        %v3012 = vcosq.f32.pop %v3010
        %v3013 = vsinq.f32.pop %v3010
        %vm3014 = vweird.f32 %v331
        %v3015 = vand.u32 %v3011, 3
        %vm3016 = vcmp.lt.s32.totalorder %v3015, 2
        %vm3017 = vcmp.eq.s32.totalorder %v3015, 0
        %v3018 = vxor.u32 %v3013, 2147483648
        %v3019 = vsel %vm3017, %v3012, %v3018
        %vm3020 = vcmp.eq.s32.totalorder %v3015, 2
        %v3021 = vxor.u32 %v3012, 2147483648
        %v3022 = vsel %vm3020, %v3021, %v3013
        %v3023 = vsel %vm3016, %v3019, %v3022
        %v3024 = vsel %vm3014, nan, %v3023
        %v3025 = vand.u32 2147483647, %v332
        %vm3026 = vcmp.le.f32.partialorder %v3025, 0.7853982
        %vm3027 = vcmp.lt.s32.totalorder %v332, 0
        %v3028 = vand.u32 %v332, 2139095040
        %v3029 = vshrl.u32 %v3028, 23
        %v3030 = vsub.s32 %v3029, 127
        %v3031 = vand.u32 2147483647, %v332
        %v3032 = vand.u32 %v3031, 8388607
        %v3033 = vor.u32 %v3032, 8388608
        %v3034 = vsub.s32 0, %v3033
        %v3035 = vadd.s32 %v3030, 1
        %vm3036 = vcmp.gt.s32.totalorder %v3035, 0
        %v3037 = vsel %vm3036, %v3035, 0
        %v3038 = vshrl.u32 %v3037, 5
        %v3039 = vand.u32 %v3037, 31
        %v3040 = vsub.s32 32, %v3039
        %v3041 = vshrl.u32 683565275, %v3040
        %v3042 = vshll.u32 683565275, %v3039
        %v3043 = vshrl.u32 2475754826, %v3040
        %v3044 = vor.u32 %v3042, %v3043
        %v3045 = vshll.u32 2475754826, %v3039
        %v3046 = vshrl.u32 2131351028, %v3040
        %v3047 = vor.u32 %v3045, %v3046
        %v3048 = vshll.u32 2131351028, %v3039
        %v3049 = vshrl.u32 2102212464, %v3040
        %v3050 = vor.u32 %v3048, %v3049
        %v3051 = vshll.u32 2102212464, %v3039
        %v3052 = vshrl.u32 920167782, %v3040
        %v3053 = vor.u32 %v3051, %v3052
        %v3054 = vshll.u32 920167782, %v3039
        %v3055 = vshrl.u32 1326507024, %v3040
        %v3056 = vor.u32 %v3054, %v3055
        %vm3057 = vcmp.lt.s32.totalorder %v3038, 1
        %vm3058 = vcmp.lt.s32.totalorder %v3038, 2
        %vm3059 = vcmp.lt.s32.totalorder %v3038, 3
        %vm3060 = vcmp.lt.s32.totalorder %v3038, 4
        %v3061 = vsel %vm3057, %v3041, %v3044
        %v3062 = vsel %vm3060, %v3050, 2102212464
        %v3063 = vsel %vm3059, %v3047, %v3062
        %v3064 = vsel %vm3058, %v3061, %v3063
        %v3065 = vsel %vm3057, %v3044, %v3047
        %v3066 = vsel %vm3060, %v3053, 920167782
        %v3067 = vsel %vm3059, %v3050, %v3066
        %v3068 = vsel %vm3058, %v3065, %v3067
        %v3069 = vsel %vm3057, %v3047, %v3050
        %v3070 = vsel %vm3060, %v3056, 1326507024
        %v3071 = vsel %vm3059, %v3053, %v3070
        %v3072 = vsel %vm3058, %v3069, %v3071
        %v3073 = vshll.u32 %v3033, 8
        %v3074 = vmul.u32.u64.compose %v3073, %v3072
        %v3075 = vextract.low.u32 %v3074
        %v3076 = vextract.high.u32 %v3074
        %v3077 = vmul.u32.u64.compose %v3073, %v3068
        %v3078 = vextract.low.u32 %v3077
        %v3079 = vextract.high.u32 %v3077
        %v3080 = vmul.u32 %v3073, %v3064
        %v3081 = vadd.s32 %v3076, %v3078
        %vm3082 = vc.u32 %v3076, %v3078
        %v3083 = vadd.s32 %v3079, 1
        %v3084 = vsel %vm3082, %v3083, %v3079
        %v3085 = vadd.s32 %v3080, %v3084
        %v3086 = vadd.s32 %v3085, 536870912
        %v3087 = vshrl.u32 %v3086, 30
        %v3088 = vshll.u32 %v3087, 30
        %v3089 = vsub.s32 %v3085, %v3088
        %vm3090 = vcmp.lt.s32.totalorder %v3089, 0
        %v3091 = vsub.s32 0, %v3089
        %v3092 = vsel %vm3090, %v3091, %v3089
        %v3093 = vclz %v3092
        %v3094 = vsub.s32 %v3093, 2
        %vm3095 = vcmp.gt.s32.totalorder 0, %v3094
        %v3096 = vsel %vm3095, 0, %v3094
        %v3097 = vsub.s32 32, %v3096
        %v3098 = vshll.u32 %v3089, %v3096
        %v3099 = vshrl.u32 %v3081, %v3097
        %v3100 = vor.u32 %v3098, %v3099
        %v3101 = vsub.s32 4294967266, %v3096
        %v3102 = vadd.s32 %v3101, 127
        %v3103 = vshll.u32 %v3102, 23
        %v3104 = vor.u32 4788187, %v3103
        %v3105 = vand.u32 2147483647, %v3104
        %v3107 = vcvt.s32.f32 %v3100
        %v3108 = vmul.f32 %v3107, %v3105
        %v3109 = vxor.u32 %v3108, 2147483648
        %v3110 = vsel %vm3027, %v3109, %v3108
        %v3111 = vsub.s32 4, %v3087
        %v3112 = vsel %vm3027, %v3111, %v3087
        %v3113 = vsel %vm3026, %v332, %v3110
        %v3114 = vsel %vm3026, 0, %v3112
        %v3115 = vcosq.f32.pop %v3113
        %v3116 = vsinq.f32.pop %v3113
        %vm3117 = vweird.f32 %v332
        %v3118 = vand.u32 %v3114, 3
        %vm3119 = vcmp.lt.s32.totalorder %v3118, 2
        %vm3120 = vcmp.eq.s32.totalorder %v3118, 0
        %v3121 = vxor.u32 %v3116, 2147483648
        %v3122 = vsel %vm3120, %v3115, %v3121
        %vm3123 = vcmp.eq.s32.totalorder %v3118, 2
        %v3124 = vxor.u32 %v3115, 2147483648
        %v3125 = vsel %vm3123, %v3124, %v3116
        %v3126 = vsel %vm3119, %v3122, %v3125
        %v3127 = vsel %vm3117, nan, %v3126
        %v3128 = vand.u32 2147483647, %v333
        %vm3129 = vcmp.le.f32.partialorder %v3128, 0.7853982
        %vm3130 = vcmp.lt.s32.totalorder %v333, 0
        %v3131 = vand.u32 %v333, 2139095040
        %v3132 = vshrl.u32 %v3131, 23
        %v3133 = vsub.s32 %v3132, 127
        %v3134 = vand.u32 2147483647, %v333
        %v3135 = vand.u32 %v3134, 8388607
        %v3136 = vor.u32 %v3135, 8388608
        %v3137 = vsub.s32 0, %v3136
        %v3138 = vadd.s32 %v3133, 1
        %vm3139 = vcmp.gt.s32.totalorder %v3138, 0
        %v3140 = vsel %vm3139, %v3138, 0
        %v3141 = vshrl.u32 %v3140, 5
        %v3142 = vand.u32 %v3140, 31
        %v3143 = vsub.s32 32, %v3142
        %v3144 = vshrl.u32 683565275, %v3143
        %v3145 = vshll.u32 683565275, %v3142
        %v3146 = vshrl.u32 2475754826, %v3143
        %v3147 = vor.u32 %v3145, %v3146
        %v3148 = vshll.u32 2475754826, %v3142
        %v3149 = vshrl.u32 2131351028, %v3143
        %v3150 = vor.u32 %v3148, %v3149
        %v3151 = vshll.u32 2131351028, %v3142
        %v3152 = vshrl.u32 2102212464, %v3143
        %v3153 = vor.u32 %v3151, %v3152
        %v3154 = vshll.u32 2102212464, %v3142
        %v3155 = vshrl.u32 920167782, %v3143
        %v3156 = vor.u32 %v3154, %v3155
        %v3157 = vshll.u32 920167782, %v3142
        %v3158 = vshrl.u32 1326507024, %v3143
        %v3159 = vor.u32 %v3157, %v3158
        %vm3160 = vcmp.lt.s32.totalorder %v3141, 1
        %vm3161 = vcmp.lt.s32.totalorder %v3141, 2
        %vm3162 = vcmp.lt.s32.totalorder %v3141, 3
        %vm3163 = vcmp.lt.s32.totalorder %v3141, 4
        %v3164 = vsel %vm3160, %v3144, %v3147
        %v3165 = vsel %vm3163, %v3153, 2102212464
        %v3166 = vsel %vm3162, %v3150, %v3165
        %v3167 = vsel %vm3161, %v3164, %v3166
        %v3168 = vsel %vm3160, %v3147, %v3150
        %v3169 = vsel %vm3163, %v3156, 920167782
        %v3170 = vsel %vm3162, %v3153, %v3169
        %v3171 = vsel %vm3161, %v3168, %v3170
        %v3172 = vsel %vm3160, %v3150, %v3153
        %v3173 = vsel %vm3163, %v3159, 1326507024
        %v3174 = vsel %vm3162, %v3156, %v3173
        %v3175 = vsel %vm3161, %v3172, %v3174
        %v3176 = vshll.u32 %v3136, 8
        %v3177 = vmul.u32.u64.compose %v3176, %v3175
        %v3178 = vextract.low.u32 %v3177
        %v3179 = vextract.high.u32 %v3177
        %v3180 = vmul.u32.u64.compose %v3176, %v3171
        %v3181 = vextract.low.u32 %v3180
        %v3182 = vextract.high.u32 %v3180
        %v3183 = vmul.u32 %v3176, %v3167
        %v3184 = vadd.s32 %v3179, %v3181
        %vm3185 = vc.u32 %v3179, %v3181
        %v3186 = vadd.s32 %v3182, 1
        %v3187 = vsel %vm3185, %v3186, %v3182
        %v3188 = vadd.s32 %v3183, %v3187
        %v3189 = vadd.s32 %v3188, 536870912
        %v3190 = vshrl.u32 %v3189, 30
        %v3191 = vshll.u32 %v3190, 30
        %v3192 = vsub.s32 %v3188, %v3191
        %vm3193 = vcmp.lt.s32.totalorder %v3192, 0
        %v3194 = vsub.s32 0, %v3192
        %v3195 = vsel %vm3193, %v3194, %v3192
        %v3196 = vclz %v3195
        %v3197 = vsub.s32 %v3196, 2
        %vm3198 = vcmp.gt.s32.totalorder 0, %v3197
        %v3199 = vsel %vm3198, 0, %v3197
        %v3200 = vsub.s32 32, %v3199
        %v3201 = vshll.u32 %v3192, %v3199
        %v3202 = vshrl.u32 %v3184, %v3200
        %v3203 = vor.u32 %v3201, %v3202
        %v3204 = vsub.s32 4294967266, %v3199
        %v3205 = vadd.s32 %v3204, 127
        %v3206 = vshll.u32 %v3205, 23
        %v3207 = vor.u32 4788187, %v3206
        %v3208 = vand.u32 2147483647, %v3207
        %v3210 = vcvt.s32.f32 %v3203
        %v3211 = vmul.f32 %v3210, %v3208
        %v3212 = vxor.u32 %v3211, 2147483648
        %v3213 = vsel %vm3130, %v3212, %v3211
        %v3214 = vsub.s32 4, %v3190
        %v3215 = vsel %vm3130, %v3214, %v3190
        %v3216 = vsel %vm3129, %v333, %v3213
        %v3217 = vsel %vm3129, 0, %v3215
        %v3218 = vcosq.f32.pop %v3216
        %v3219 = vsinq.f32.pop %v3216
        %vm3220 = vweird.f32 %v333
        %v3221 = vand.u32 %v3217, 3
        %vm3222 = vcmp.lt.s32.totalorder %v3221, 2
        %vm3223 = vcmp.eq.s32.totalorder %v3221, 0
        %v3224 = vxor.u32 %v3219, 2147483648
        %v3225 = vsel %vm3223, %v3218, %v3224
        %vm3226 = vcmp.eq.s32.totalorder %v3221, 2
        %v3227 = vxor.u32 %v3218, 2147483648
        %v3228 = vsel %vm3226, %v3227, %v3219
        %v3229 = vsel %vm3222, %v3225, %v3228
        %v3230 = vsel %vm3220, nan, %v3229
        %v3231 = vand.u32 2147483647, %v334
        %vm3232 = vcmp.le.f32.partialorder %v3231, 0.7853982
        %vm3233 = vcmp.lt.s32.totalorder %v334, 0
        %v3234 = vand.u32 %v334, 2139095040
        %v3235 = vshrl.u32 %v3234, 23
        %v3236 = vsub.s32 %v3235, 127
        %v3237 = vand.u32 2147483647, %v334
        %v3238 = vand.u32 %v3237, 8388607
        %v3239 = vor.u32 %v3238, 8388608
        %v3240 = vsub.s32 0, %v3239
        %v3241 = vadd.s32 %v3236, 1
        %vm3242 = vcmp.gt.s32.totalorder %v3241, 0
        %v3243 = vsel %vm3242, %v3241, 0
        %v3244 = vshrl.u32 %v3243, 5
        %v3245 = vand.u32 %v3243, 31
        %v3246 = vsub.s32 32, %v3245
        %v3247 = vshrl.u32 683565275, %v3246
        %v3248 = vshll.u32 683565275, %v3245
        %v3249 = vshrl.u32 2475754826, %v3246
        %v3250 = vor.u32 %v3248, %v3249
        %v3251 = vshll.u32 2475754826, %v3245
        %v3252 = vshrl.u32 2131351028, %v3246
        %v3253 = vor.u32 %v3251, %v3252
        %v3254 = vshll.u32 2131351028, %v3245
        %v3255 = vshrl.u32 2102212464, %v3246
        %v3256 = vor.u32 %v3254, %v3255
        %v3257 = vshll.u32 2102212464, %v3245
        %v3258 = vshrl.u32 920167782, %v3246
        %v3259 = vor.u32 %v3257, %v3258
        %v3260 = vshll.u32 920167782, %v3245
        %v3261 = vshrl.u32 1326507024, %v3246
        %v3262 = vor.u32 %v3260, %v3261
        %vm3263 = vcmp.lt.s32.totalorder %v3244, 1
        %vm3264 = vcmp.lt.s32.totalorder %v3244, 2
        %vm3265 = vcmp.lt.s32.totalorder %v3244, 3
        %vm3266 = vcmp.lt.s32.totalorder %v3244, 4
        %v3267 = vsel %vm3263, %v3247, %v3250
        %v3268 = vsel %vm3266, %v3256, 2102212464
        %v3269 = vsel %vm3265, %v3253, %v3268
        %v3270 = vsel %vm3264, %v3267, %v3269
        %v3271 = vsel %vm3263, %v3250, %v3253
        %v3272 = vsel %vm3266, %v3259, 920167782
        %v3273 = vsel %vm3265, %v3256, %v3272
        %v3274 = vsel %vm3264, %v3271, %v3273
        %v3275 = vsel %vm3263, %v3253, %v3256
        %v3276 = vsel %vm3266, %v3262, 1326507024
        %v3277 = vsel %vm3265, %v3259, %v3276
        %v3278 = vsel %vm3264, %v3275, %v3277
        %v3279 = vshll.u32 %v3239, 8
        %v3280 = vmul.u32.u64.compose %v3279, %v3278
        %v3281 = vextract.low.u32 %v3280
        %v3282 = vextract.high.u32 %v3280
        %v3283 = vmul.u32.u64.compose %v3279, %v3274
        %v3284 = vextract.low.u32 %v3283
        %v3285 = vextract.high.u32 %v3283
        %v3286 = vmul.u32 %v3279, %v3270
        %v3287 = vadd.s32 %v3282, %v3284
        %vm3288 = vc.u32 %v3282, %v3284
        %v3289 = vadd.s32 %v3285, 1
        %v3290 = vsel %vm3288, %v3289, %v3285
        %v3291 = vadd.s32 %v3286, %v3290
        %v3292 = vadd.s32 %v3291, 536870912
        %v3293 = vshrl.u32 %v3292, 30
        %v3294 = vshll.u32 %v3293, 30
        %v3295 = vsub.s32 %v3291, %v3294
        %vm3296 = vcmp.lt.s32.totalorder %v3295, 0
        %v3297 = vsub.s32 0, %v3295
        %v3298 = vsel %vm3296, %v3297, %v3295
        %v3299 = vclz %v3298
        %v3300 = vsub.s32 %v3299, 2
        %vm3301 = vcmp.gt.s32.totalorder 0, %v3300
        %v3302 = vsel %vm3301, 0, %v3300
        %v3303 = vsub.s32 32, %v3302
        %v3304 = vshll.u32 %v3295, %v3302
        %v3305 = vshrl.u32 %v3287, %v3303
        %v3306 = vor.u32 %v3304, %v3305
        %v3307 = vsub.s32 4294967266, %v3302
        %v3308 = vadd.s32 %v3307, 127
        %v3309 = vshll.u32 %v3308, 23
        %v3310 = vor.u32 4788187, %v3309
        %v3311 = vand.u32 2147483647, %v3310
        %v3313 = vcvt.s32.f32 %v3306
        %v3314 = vmul.f32 %v3313, %v3311
        %v3315 = vxor.u32 %v3314, 2147483648
        %v3316 = vsel %vm3233, %v3315, %v3314
        %v3317 = vsub.s32 4, %v3293
        %v3318 = vsel %vm3233, %v3317, %v3293
        %v3319 = vsel %vm3232, %v334, %v3316
        %v3320 = vsel %vm3232, 0, %v3318
        %v3321 = vcosq.f32.pop %v3319
        %v3322 = vsinq.f32.pop %v3319
        %vm3323 = vweird.f32 %v334
        %v3324 = vand.u32 %v3320, 3
        %vm3325 = vcmp.lt.s32.totalorder %v3324, 2
        %vm3326 = vcmp.eq.s32.totalorder %v3324, 0
        %v3327 = vxor.u32 %v3322, 2147483648
        %v3328 = vsel %vm3326, %v3321, %v3327
        %vm3329 = vcmp.eq.s32.totalorder %v3324, 2
        %v3330 = vxor.u32 %v3321, 2147483648
        %v3331 = vsel %vm3329, %v3330, %v3322
        %v3332 = vsel %vm3325, %v3328, %v3331
        %v3333 = vsel %vm3323, nan, %v3332
        %v3334 = vand.u32 2147483647, %v335
        %vm3335 = vcmp.le.f32.partialorder %v3334, 0.7853982
        %vm3336 = vcmp.lt.s32.totalorder %v335, 0
        %v3337 = vand.u32 %v335, 2139095040
        %v3338 = vshrl.u32 %v3337, 23
        %v3339 = vsub.s32 %v3338, 127
        %v3340 = vand.u32 2147483647, %v335
        %v3341 = vand.u32 %v3340, 8388607
        %v3342 = vor.u32 %v3341, 8388608
        %v3343 = vsub.s32 0, %v3342
        %v3344 = vadd.s32 %v3339, 1
        %vm3345 = vcmp.gt.s32.totalorder %v3344, 0
        %v3346 = vsel %vm3345, %v3344, 0
        %v3347 = vshrl.u32 %v3346, 5
        %v3348 = vand.u32 %v3346, 31
        %v3349 = vsub.s32 32, %v3348
        %v3350 = vshrl.u32 683565275, %v3349
        %v3351 = vshll.u32 683565275, %v3348
        %v3352 = vshrl.u32 2475754826, %v3349
        %v3353 = vor.u32 %v3351, %v3352
        %v3354 = vshll.u32 2475754826, %v3348
        %v3355 = vshrl.u32 2131351028, %v3349
        %v3356 = vor.u32 %v3354, %v3355
        %v3357 = vshll.u32 2131351028, %v3348
        %v3358 = vshrl.u32 2102212464, %v3349
        %v3359 = vor.u32 %v3357, %v3358
        %v3360 = vshll.u32 2102212464, %v3348
        %v3361 = vshrl.u32 920167782, %v3349
        %v3362 = vor.u32 %v3360, %v3361
        %v3363 = vshll.u32 920167782, %v3348
        %v3364 = vshrl.u32 1326507024, %v3349
        %v3365 = vor.u32 %v3363, %v3364
        %vm3366 = vcmp.lt.s32.totalorder %v3347, 1
        %vm3367 = vcmp.lt.s32.totalorder %v3347, 2
        %vm3368 = vcmp.lt.s32.totalorder %v3347, 3
        %vm3369 = vcmp.lt.s32.totalorder %v3347, 4
        %v3370 = vsel %vm3366, %v3350, %v3353
        %v3371 = vsel %vm3369, %v3359, 2102212464
        %v3372 = vsel %vm3368, %v3356, %v3371
        %v3373 = vsel %vm3367, %v3370, %v3372
        %v3374 = vsel %vm3366, %v3353, %v3356
        %v3375 = vsel %vm3369, %v3362, 920167782
        %v3376 = vsel %vm3368, %v3359, %v3375
        %v3377 = vsel %vm3367, %v3374, %v3376
        %v3378 = vsel %vm3366, %v3356, %v3359
        %v3379 = vsel %vm3369, %v3365, 1326507024
        %v3380 = vsel %vm3368, %v3362, %v3379
        %v3381 = vsel %vm3367, %v3378, %v3380
        %v3382 = vshll.u32 %v3342, 8
        %v3383 = vmul.u32.u64.compose %v3382, %v3381
        %v3384 = vextract.low.u32 %v3383
        %v3385 = vextract.high.u32 %v3383
        %v3386 = vmul.u32.u64.compose %v3382, %v3377
        %v3387 = vextract.low.u32 %v3386
        %v3388 = vextract.high.u32 %v3386
        %v3389 = vmul.u32 %v3382, %v3373
        %v3390 = vadd.s32 %v3385, %v3387
        %vm3391 = vc.u32 %v3385, %v3387
        %v3392 = vadd.s32 %v3388, 1
        %v3393 = vsel %vm3391, %v3392, %v3388
        %v3394 = vadd.s32 %v3389, %v3393
        %v3395 = vadd.s32 %v3394, 536870912
        %v3396 = vshrl.u32 %v3395, 30
        %v3397 = vshll.u32 %v3396, 30
        %v3398 = vsub.s32 %v3394, %v3397
        %vm3399 = vcmp.lt.s32.totalorder %v3398, 0
        %v3400 = vsub.s32 0, %v3398
        %v3401 = vsel %vm3399, %v3400, %v3398
        %v3402 = vclz %v3401
        %v3403 = vsub.s32 %v3402, 2
        %vm3404 = vcmp.gt.s32.totalorder 0, %v3403
        %v3405 = vsel %vm3404, 0, %v3403
        %v3406 = vsub.s32 32, %v3405
        %v3407 = vshll.u32 %v3398, %v3405
        %v3408 = vshrl.u32 %v3390, %v3406
        %v3409 = vor.u32 %v3407, %v3408
        %v3410 = vsub.s32 4294967266, %v3405
        %v3411 = vadd.s32 %v3410, 127
        %v3412 = vshll.u32 %v3411, 23
        %v3413 = vor.u32 4788187, %v3412
        %v3414 = vand.u32 2147483647, %v3413
        %v3416 = vcvt.s32.f32 %v3409
        %v3417 = vmul.f32 %v3416, %v3414
        %v3418 = vxor.u32 %v3417, 2147483648
        %v3419 = vsel %vm3336, %v3418, %v3417
        %v3420 = vsub.s32 4, %v3396
        %v3421 = vsel %vm3336, %v3420, %v3396
        %v3422 = vsel %vm3335, %v335, %v3419
        %v3423 = vsel %vm3335, 0, %v3421
        %v3424 = vcosq.f32.pop %v3422
        %v3425 = vsinq.f32.pop %v3422
        %vm3426 = vweird.f32 %v335
        %v3427 = vand.u32 %v3423, 3
        %vm3428 = vcmp.lt.s32.totalorder %v3427, 2
        %vm3429 = vcmp.eq.s32.totalorder %v3427, 0
        %v3430 = vxor.u32 %v3425, 2147483648
        %v3431 = vsel %vm3429, %v3424, %v3430
        %vm3432 = vcmp.eq.s32.totalorder %v3427, 2
        %v3433 = vxor.u32 %v3424, 2147483648
        %v3434 = vsel %vm3432, %v3433, %v3425
        %v3435 = vsel %vm3428, %v3431, %v3434
        %v3436 = vsel %vm3426, nan, %v3435
        %v3437 = vand.u32 2147483647, %v336
        %vm3438 = vcmp.le.f32.partialorder %v3437, 0.7853982
        %vm3439 = vcmp.lt.s32.totalorder %v336, 0
        %v3440 = vand.u32 %v336, 2139095040
        %v3441 = vshrl.u32 %v3440, 23
        %v3442 = vsub.s32 %v3441, 127
        %v3443 = vand.u32 2147483647, %v336
        %v3444 = vand.u32 %v3443, 8388607
        %v3445 = vor.u32 %v3444, 8388608
        %v3446 = vsub.s32 0, %v3445
        %v3447 = vadd.s32 %v3442, 1
        %vm3448 = vcmp.gt.s32.totalorder %v3447, 0
        %v3449 = vsel %vm3448, %v3447, 0
        %v3450 = vshrl.u32 %v3449, 5
        %v3451 = vand.u32 %v3449, 31
        %v3452 = vsub.s32 32, %v3451
        %v3453 = vshrl.u32 683565275, %v3452
        %v3454 = vshll.u32 683565275, %v3451
        %v3455 = vshrl.u32 2475754826, %v3452
        %v3456 = vor.u32 %v3454, %v3455
        %v3457 = vshll.u32 2475754826, %v3451
        %v3458 = vshrl.u32 2131351028, %v3452
        %v3459 = vor.u32 %v3457, %v3458
        %v3460 = vshll.u32 2131351028, %v3451
        %v3461 = vshrl.u32 2102212464, %v3452
        %v3462 = vor.u32 %v3460, %v3461
        %v3463 = vshll.u32 2102212464, %v3451
        %v3464 = vshrl.u32 920167782, %v3452
        %v3465 = vor.u32 %v3463, %v3464
        %v3466 = vshll.u32 920167782, %v3451
        %v3467 = vshrl.u32 1326507024, %v3452
        %v3468 = vor.u32 %v3466, %v3467
        %vm3469 = vcmp.lt.s32.totalorder %v3450, 1
        %vm3470 = vcmp.lt.s32.totalorder %v3450, 2
        %vm3471 = vcmp.lt.s32.totalorder %v3450, 3
        %vm3472 = vcmp.lt.s32.totalorder %v3450, 4
        %v3473 = vsel %vm3469, %v3453, %v3456
        %v3474 = vsel %vm3472, %v3462, 2102212464
        %v3475 = vsel %vm3471, %v3459, %v3474
        %v3476 = vsel %vm3470, %v3473, %v3475
        %v3477 = vsel %vm3469, %v3456, %v3459
        %v3478 = vsel %vm3472, %v3465, 920167782
        %v3479 = vsel %vm3471, %v3462, %v3478
        %v3480 = vsel %vm3470, %v3477, %v3479
        %v3481 = vsel %vm3469, %v3459, %v3462
        %v3482 = vsel %vm3472, %v3468, 1326507024
        %v3483 = vsel %vm3471, %v3465, %v3482
        %v3484 = vsel %vm3470, %v3481, %v3483
        %v3485 = vshll.u32 %v3445, 8
        %v3486 = vmul.u32.u64.compose %v3485, %v3484
        %v3487 = vextract.low.u32 %v3486
        %v3488 = vextract.high.u32 %v3486
        %v3489 = vmul.u32.u64.compose %v3485, %v3480
        %v3490 = vextract.low.u32 %v3489
        %v3491 = vextract.high.u32 %v3489
        %v3492 = vmul.u32 %v3485, %v3476
        %v3493 = vadd.s32 %v3488, %v3490
        %vm3494 = vc.u32 %v3488, %v3490
        %v3495 = vadd.s32 %v3491, 1
        %v3496 = vsel %vm3494, %v3495, %v3491
        %v3497 = vadd.s32 %v3492, %v3496
        %v3498 = vadd.s32 %v3497, 536870912
        %v3499 = vshrl.u32 %v3498, 30
        %v3500 = vshll.u32 %v3499, 30
        %v3501 = vsub.s32 %v3497, %v3500
        %vm3502 = vcmp.lt.s32.totalorder %v3501, 0
        %v3503 = vsub.s32 0, %v3501
        %v3504 = vsel %vm3502, %v3503, %v3501
        %v3505 = vclz %v3504
        %v3506 = vsub.s32 %v3505, 2
        %vm3507 = vcmp.gt.s32.totalorder 0, %v3506
        %v3508 = vsel %vm3507, 0, %v3506
        %v3509 = vsub.s32 32, %v3508
        %v3510 = vshll.u32 %v3501, %v3508
        %v3511 = vshrl.u32 %v3493, %v3509
        %v3512 = vor.u32 %v3510, %v3511
        %v3513 = vsub.s32 4294967266, %v3508
        %v3514 = vadd.s32 %v3513, 127
        %v3515 = vshll.u32 %v3514, 23
        %v3516 = vor.u32 4788187, %v3515
        %v3517 = vand.u32 2147483647, %v3516
        %v3519 = vcvt.s32.f32 %v3512
        %v3520 = vmul.f32 %v3519, %v3517
        %v3521 = vxor.u32 %v3520, 2147483648
        %v3522 = vsel %vm3439, %v3521, %v3520
        %v3523 = vsub.s32 4, %v3499
        %v3524 = vsel %vm3439, %v3523, %v3499
        %v3525 = vsel %vm3438, %v336, %v3522
        %v3526 = vsel %vm3438, 0, %v3524
        %v3527 = vcosq.f32.pop %v3525
        %v3528 = vsinq.f32.pop %v3525
        %vm3529 = vweird.f32 %v336
        %v3530 = vand.u32 %v3526, 3
        %vm3531 = vcmp.lt.s32.totalorder %v3530, 2
        %vm3532 = vcmp.eq.s32.totalorder %v3530, 0
        %v3533 = vxor.u32 %v3528, 2147483648
        %v3534 = vsel %vm3532, %v3527, %v3533
        %vm3535 = vcmp.eq.s32.totalorder %v3530, 2
        %v3536 = vxor.u32 %v3527, 2147483648
        %v3537 = vsel %vm3535, %v3536, %v3528
        %v3538 = vsel %vm3531, %v3534, %v3537
        %v3539 = vsel %vm3529, nan, %v3538
        %v3540 = vand.u32 2147483647, %v337
        %vm3541 = vcmp.le.f32.partialorder %v3540, 0.7853982
        %vm3542 = vcmp.lt.s32.totalorder %v337, 0
        %v3543 = vand.u32 %v337, 2139095040
        %v3544 = vshrl.u32 %v3543, 23
        %v3545 = vsub.s32 %v3544, 127
        %v3546 = vand.u32 2147483647, %v337
        %v3547 = vand.u32 %v3546, 8388607
        %v3548 = vor.u32 %v3547, 8388608
        %v3549 = vsub.s32 0, %v3548
        %v3550 = vadd.s32 %v3545, 1
        %vm3551 = vcmp.gt.s32.totalorder %v3550, 0
        %v3552 = vsel %vm3551, %v3550, 0
        %v3553 = vshrl.u32 %v3552, 5
        %v3554 = vand.u32 %v3552, 31
        %v3555 = vsub.s32 32, %v3554
        %v3556 = vshrl.u32 683565275, %v3555
        %v3557 = vshll.u32 683565275, %v3554
        %v3558 = vshrl.u32 2475754826, %v3555
        %v3559 = vor.u32 %v3557, %v3558
        %v3560 = vshll.u32 2475754826, %v3554
        %v3561 = vshrl.u32 2131351028, %v3555
        %v3562 = vor.u32 %v3560, %v3561
        %v3563 = vshll.u32 2131351028, %v3554
        %v3564 = vshrl.u32 2102212464, %v3555
        %v3565 = vor.u32 %v3563, %v3564
        %v3566 = vshll.u32 2102212464, %v3554
        %v3567 = vshrl.u32 920167782, %v3555
        %v3568 = vor.u32 %v3566, %v3567
        %v3569 = vshll.u32 920167782, %v3554
        %v3570 = vshrl.u32 1326507024, %v3555
        %v3571 = vor.u32 %v3569, %v3570
        %vm3572 = vcmp.lt.s32.totalorder %v3553, 1
        %vm3573 = vcmp.lt.s32.totalorder %v3553, 2
        %vm3574 = vcmp.lt.s32.totalorder %v3553, 3
        %vm3575 = vcmp.lt.s32.totalorder %v3553, 4
        %v3576 = vsel %vm3572, %v3556, %v3559
        %v3577 = vsel %vm3575, %v3565, 2102212464
        %v3578 = vsel %vm3574, %v3562, %v3577
        %v3579 = vsel %vm3573, %v3576, %v3578
        %v3580 = vsel %vm3572, %v3559, %v3562
        %v3581 = vsel %vm3575, %v3568, 920167782
        %v3582 = vsel %vm3574, %v3565, %v3581
        %v3583 = vsel %vm3573, %v3580, %v3582
        %v3584 = vsel %vm3572, %v3562, %v3565
        %v3585 = vsel %vm3575, %v3571, 1326507024
        %v3586 = vsel %vm3574, %v3568, %v3585
        %v3587 = vsel %vm3573, %v3584, %v3586
        %v3588 = vshll.u32 %v3548, 8
        %v3589 = vmul.u32.u64.compose %v3588, %v3587
        %v3590 = vextract.low.u32 %v3589
        %v3591 = vextract.high.u32 %v3589
        %v3592 = vmul.u32.u64.compose %v3588, %v3583
        %v3593 = vextract.low.u32 %v3592
        %v3594 = vextract.high.u32 %v3592
        %v3595 = vmul.u32 %v3588, %v3579
        %v3596 = vadd.s32 %v3591, %v3593
        %vm3597 = vc.u32 %v3591, %v3593
        %v3598 = vadd.s32 %v3594, 1
        %v3599 = vsel %vm3597, %v3598, %v3594
        %v3600 = vadd.s32 %v3595, %v3599
        %v3601 = vadd.s32 %v3600, 536870912
        %v3602 = vshrl.u32 %v3601, 30
        %v3603 = vshll.u32 %v3602, 30
        %v3604 = vsub.s32 %v3600, %v3603
        %vm3605 = vcmp.lt.s32.totalorder %v3604, 0
        %v3606 = vsub.s32 0, %v3604
        %v3607 = vsel %vm3605, %v3606, %v3604
        %v3608 = vclz %v3607
        %v3609 = vsub.s32 %v3608, 2
        %vm3610 = vcmp.gt.s32.totalorder 0, %v3609
        %v3611 = vsel %vm3610, 0, %v3609
        %v3612 = vsub.s32 32, %v3611
        %v3613 = vshll.u32 %v3604, %v3611
        %v3614 = vshrl.u32 %v3596, %v3612
        %v3615 = vor.u32 %v3613, %v3614
        %v3616 = vsub.s32 4294967266, %v3611
        %v3617 = vadd.s32 %v3616, 127
        %v3618 = vshll.u32 %v3617, 23
        %v3619 = vor.u32 4788187, %v3618
        %v3620 = vand.u32 2147483647, %v3619
        %v3622 = vcvt.s32.f32 %v3615
        %v3623 = vmul.f32 %v3622, %v3620
        %v3624 = vxor.u32 %v3623, 2147483648
        %v3625 = vsel %vm3542, %v3624, %v3623
        %v3626 = vsub.s32 4, %v3602
        %v3627 = vsel %vm3542, %v3626, %v3602
        %v3628 = vsel %vm3541, %v337, %v3625
        %v3629 = vsel %vm3541, 0, %v3627
        %v3630 = vcosq.f32.pop %v3628
        %v3631 = vsinq.f32.pop %v3628
        %vm3632 = vweird.f32 %v337
        %v3633 = vand.u32 %v3629, 3
        %vm3634 = vcmp.lt.s32.totalorder %v3633, 2
        %vm3635 = vcmp.eq.s32.totalorder %v3633, 0
        %v3636 = vxor.u32 %v3631, 2147483648
        %v3637 = vsel %vm3635, %v3630, %v3636
        %vm3638 = vcmp.eq.s32.totalorder %v3633, 2
        %v3639 = vxor.u32 %v3630, 2147483648
        %v3640 = vsel %vm3638, %v3639, %v3631
        %v3641 = vsel %vm3634, %v3637, %v3640
        %v3642 = vsel %vm3632, nan, %v3641
        %v3643 = vand.u32 2147483647, %v338
        %vm3644 = vcmp.le.f32.partialorder %v3643, 0.7853982
        %vm3645 = vcmp.lt.s32.totalorder %v338, 0
        %v3646 = vand.u32 %v338, 2139095040
        %v3647 = vshrl.u32 %v3646, 23
        %v3648 = vsub.s32 %v3647, 127
        %v3649 = vand.u32 2147483647, %v338
        %v3650 = vand.u32 %v3649, 8388607
        %v3651 = vor.u32 %v3650, 8388608
        %v3652 = vsub.s32 0, %v3651
        %v3653 = vadd.s32 %v3648, 1
        %vm3654 = vcmp.gt.s32.totalorder %v3653, 0
        %v3655 = vsel %vm3654, %v3653, 0
        %v3656 = vshrl.u32 %v3655, 5
        %v3657 = vand.u32 %v3655, 31
        %v3658 = vsub.s32 32, %v3657
        %v3659 = vshrl.u32 683565275, %v3658
        %v3660 = vshll.u32 683565275, %v3657
        %v3661 = vshrl.u32 2475754826, %v3658
        %v3662 = vor.u32 %v3660, %v3661
        %v3663 = vshll.u32 2475754826, %v3657
        %v3664 = vshrl.u32 2131351028, %v3658
        %v3665 = vor.u32 %v3663, %v3664
        %v3666 = vshll.u32 2131351028, %v3657
        %v3667 = vshrl.u32 2102212464, %v3658
        %v3668 = vor.u32 %v3666, %v3667
        %v3669 = vshll.u32 2102212464, %v3657
        %v3670 = vshrl.u32 920167782, %v3658
        %v3671 = vor.u32 %v3669, %v3670
        %v3672 = vshll.u32 920167782, %v3657
        %v3673 = vshrl.u32 1326507024, %v3658
        %v3674 = vor.u32 %v3672, %v3673
        %vm3675 = vcmp.lt.s32.totalorder %v3656, 1
        %vm3676 = vcmp.lt.s32.totalorder %v3656, 2
        %vm3677 = vcmp.lt.s32.totalorder %v3656, 3
        %vm3678 = vcmp.lt.s32.totalorder %v3656, 4
        %v3679 = vsel %vm3675, %v3659, %v3662
        %v3680 = vsel %vm3678, %v3668, 2102212464
        %v3681 = vsel %vm3677, %v3665, %v3680
        %v3682 = vsel %vm3676, %v3679, %v3681
        %v3683 = vsel %vm3675, %v3662, %v3665
        %v3684 = vsel %vm3678, %v3671, 920167782
        %v3685 = vsel %vm3677, %v3668, %v3684
        %v3686 = vsel %vm3676, %v3683, %v3685
        %v3687 = vsel %vm3675, %v3665, %v3668
        %v3688 = vsel %vm3678, %v3674, 1326507024
        %v3689 = vsel %vm3677, %v3671, %v3688
        %v3690 = vsel %vm3676, %v3687, %v3689
        %v3691 = vshll.u32 %v3651, 8
        %v3692 = vmul.u32.u64.compose %v3691, %v3690
        %v3693 = vextract.low.u32 %v3692
        %v3694 = vextract.high.u32 %v3692
        %v3695 = vmul.u32.u64.compose %v3691, %v3686
        %v3696 = vextract.low.u32 %v3695
        %v3697 = vextract.high.u32 %v3695
        %v3698 = vmul.u32 %v3691, %v3682
        %v3699 = vadd.s32 %v3694, %v3696
        %vm3700 = vc.u32 %v3694, %v3696
        %v3701 = vadd.s32 %v3697, 1
        %v3702 = vsel %vm3700, %v3701, %v3697
        %v3703 = vadd.s32 %v3698, %v3702
        %v3704 = vadd.s32 %v3703, 536870912
        %v3705 = vshrl.u32 %v3704, 30
        %v3706 = vshll.u32 %v3705, 30
        %v3707 = vsub.s32 %v3703, %v3706
        %vm3708 = vcmp.lt.s32.totalorder %v3707, 0
        %v3709 = vsub.s32 0, %v3707
        %v3710 = vsel %vm3708, %v3709, %v3707
        %v3711 = vclz %v3710
        %v3712 = vsub.s32 %v3711, 2
        %vm3713 = vcmp.gt.s32.totalorder 0, %v3712
        %v3714 = vsel %vm3713, 0, %v3712
        %v3715 = vsub.s32 32, %v3714
        %v3716 = vshll.u32 %v3707, %v3714
        %v3717 = vshrl.u32 %v3699, %v3715
        %v3718 = vor.u32 %v3716, %v3717
        %v3719 = vsub.s32 4294967266, %v3714
        %v3720 = vadd.s32 %v3719, 127
        %v3721 = vshll.u32 %v3720, 23
        %v3722 = vor.u32 4788187, %v3721
        %v3723 = vand.u32 2147483647, %v3722
        %v3725 = vcvt.s32.f32 %v3718
        %v3726 = vmul.f32 %v3725, %v3723
        %v3727 = vxor.u32 %v3726, 2147483648
        %v3728 = vsel %vm3645, %v3727, %v3726
        %v3729 = vsub.s32 4, %v3705
        %v3730 = vsel %vm3645, %v3729, %v3705
        %v3731 = vsel %vm3644, %v338, %v3728
        %v3732 = vsel %vm3644, 0, %v3730
        %v3733 = vcosq.f32.pop %v3731
        %v3734 = vsinq.f32.pop %v3731
        %vm3735 = vweird.f32 %v338
        %v3736 = vand.u32 %v3732, 3
        %vm3737 = vcmp.lt.s32.totalorder %v3736, 2
        %vm3738 = vcmp.eq.s32.totalorder %v3736, 0
        %v3739 = vxor.u32 %v3734, 2147483648
        %v3740 = vsel %vm3738, %v3733, %v3739
        %vm3741 = vcmp.eq.s32.totalorder %v3736, 2
        %v3742 = vxor.u32 %v3733, 2147483648
        %v3743 = vsel %vm3741, %v3742, %v3734
        %v3744 = vsel %vm3737, %v3740, %v3743
        %v3745 = vsel %vm3735, nan, %v3744
        %v3746 = vand.u32 2147483647, %v339
        %vm3747 = vcmp.le.f32.partialorder %v3746, 0.7853982
        %vm3748 = vcmp.lt.s32.totalorder %v339, 0
        %v3749 = vand.u32 %v339, 2139095040
        %v3750 = vshrl.u32 %v3749, 23
        %v3751 = vsub.s32 %v3750, 127
        %v3752 = vand.u32 2147483647, %v339
        %v3753 = vand.u32 %v3752, 8388607
        %v3754 = vor.u32 %v3753, 8388608
        %v3755 = vsub.s32 0, %v3754
        %v3756 = vadd.s32 %v3751, 1
        %vm3757 = vcmp.gt.s32.totalorder %v3756, 0
        %v3758 = vsel %vm3757, %v3756, 0
        %v3759 = vshrl.u32 %v3758, 5
        %v3760 = vand.u32 %v3758, 31
        %v3761 = vsub.s32 32, %v3760
        %v3762 = vshrl.u32 683565275, %v3761
        %v3763 = vshll.u32 683565275, %v3760
        %v3764 = vshrl.u32 2475754826, %v3761
        %v3765 = vor.u32 %v3763, %v3764
        %v3766 = vshll.u32 2475754826, %v3760
        %v3767 = vshrl.u32 2131351028, %v3761
        %v3768 = vor.u32 %v3766, %v3767
        %v3769 = vshll.u32 2131351028, %v3760
        %v3770 = vshrl.u32 2102212464, %v3761
        %v3771 = vor.u32 %v3769, %v3770
        %v3772 = vshll.u32 2102212464, %v3760
        %v3773 = vshrl.u32 920167782, %v3761
        %v3774 = vor.u32 %v3772, %v3773
        %v3775 = vshll.u32 920167782, %v3760
        %v3776 = vshrl.u32 1326507024, %v3761
        %v3777 = vor.u32 %v3775, %v3776
        %vm3778 = vcmp.lt.s32.totalorder %v3759, 1
        %vm3779 = vcmp.lt.s32.totalorder %v3759, 2
        %vm3780 = vcmp.lt.s32.totalorder %v3759, 3
        %vm3781 = vcmp.lt.s32.totalorder %v3759, 4
        %v3782 = vsel %vm3778, %v3762, %v3765
        %v3783 = vsel %vm3781, %v3771, 2102212464
        %v3784 = vsel %vm3780, %v3768, %v3783
        %v3785 = vsel %vm3779, %v3782, %v3784
        %v3786 = vsel %vm3778, %v3765, %v3768
        %v3787 = vsel %vm3781, %v3774, 920167782
        %v3788 = vsel %vm3780, %v3771, %v3787
        %v3789 = vsel %vm3779, %v3786, %v3788
        %v3790 = vsel %vm3778, %v3768, %v3771
        %v3791 = vsel %vm3781, %v3777, 1326507024
        %v3792 = vsel %vm3780, %v3774, %v3791
        %v3793 = vsel %vm3779, %v3790, %v3792
        %v3794 = vshll.u32 %v3754, 8
        %v3795 = vmul.u32.u64.compose %v3794, %v3793
        %v3796 = vextract.low.u32 %v3795
        %v3797 = vextract.high.u32 %v3795
        %v3798 = vmul.u32.u64.compose %v3794, %v3789
        %v3799 = vextract.low.u32 %v3798
        %v3800 = vextract.high.u32 %v3798
        %v3801 = vmul.u32 %v3794, %v3785
        %v3802 = vadd.s32 %v3797, %v3799
        %vm3803 = vc.u32 %v3797, %v3799
        %v3804 = vadd.s32 %v3800, 1
        %v3805 = vsel %vm3803, %v3804, %v3800
        %v3806 = vadd.s32 %v3801, %v3805
        %v3807 = vadd.s32 %v3806, 536870912
        %v3808 = vshrl.u32 %v3807, 30
        %v3809 = vshll.u32 %v3808, 30
        %v3810 = vsub.s32 %v3806, %v3809
        %vm3811 = vcmp.lt.s32.totalorder %v3810, 0
        %v3812 = vsub.s32 0, %v3810
        %v3813 = vsel %vm3811, %v3812, %v3810
        %v3814 = vclz %v3813
        %v3815 = vsub.s32 %v3814, 2
        %vm3816 = vcmp.gt.s32.totalorder 0, %v3815
        %v3817 = vsel %vm3816, 0, %v3815
        %v3818 = vsub.s32 32, %v3817
        %v3819 = vshll.u32 %v3810, %v3817
        %v3820 = vshrl.u32 %v3802, %v3818
        %v3821 = vor.u32 %v3819, %v3820
        %v3822 = vsub.s32 4294967266, %v3817
        %v3823 = vadd.s32 %v3822, 127
        %v3824 = vshll.u32 %v3823, 23
        %v3825 = vor.u32 4788187, %v3824
        %v3826 = vand.u32 2147483647, %v3825
        %v3828 = vcvt.s32.f32 %v3821
        %v3829 = vmul.f32 %v3828, %v3826
        %v3830 = vxor.u32 %v3829, 2147483648
        %v3831 = vsel %vm3748, %v3830, %v3829
        %v3832 = vsub.s32 4, %v3808
        %v3833 = vsel %vm3748, %v3832, %v3808
        %v3834 = vsel %vm3747, %v339, %v3831
        %v3835 = vsel %vm3747, 0, %v3833
        %v3836 = vcosq.f32.pop %v3834
        %v3837 = vsinq.f32.pop %v3834
        %vm3838 = vweird.f32 %v339
        %v3839 = vand.u32 %v3835, 3
        %vm3840 = vcmp.lt.s32.totalorder %v3839, 2
        %vm3841 = vcmp.eq.s32.totalorder %v3839, 0
        %v3842 = vxor.u32 %v3837, 2147483648
        %v3843 = vsel %vm3841, %v3836, %v3842
        %vm3844 = vcmp.eq.s32.totalorder %v3839, 2
        %v3845 = vxor.u32 %v3836, 2147483648
        %v3846 = vsel %vm3844, %v3845, %v3837
        %v3847 = vsel %vm3840, %v3843, %v3846
        %v3848 = vsel %vm3838, nan, %v3847
        %v3849 = vand.u32 2147483647, %v340
        %vm3850 = vcmp.le.f32.partialorder %v3849, 0.7853982
        %vm3851 = vcmp.lt.s32.totalorder %v340, 0
        %v3852 = vand.u32 %v340, 2139095040
        %v3853 = vshrl.u32 %v3852, 23
        %v3854 = vsub.s32 %v3853, 127
        %v3855 = vand.u32 2147483647, %v340
        %v3856 = vand.u32 %v3855, 8388607
        %v3857 = vor.u32 %v3856, 8388608
        %v3858 = vsub.s32 0, %v3857
        %v3859 = vadd.s32 %v3854, 1
        %vm3860 = vcmp.gt.s32.totalorder %v3859, 0
        %v3861 = vsel %vm3860, %v3859, 0
        %v3862 = vshrl.u32 %v3861, 5
        %v3863 = vand.u32 %v3861, 31
        %v3864 = vsub.s32 32, %v3863
        %v3865 = vshrl.u32 683565275, %v3864
        %v3866 = vshll.u32 683565275, %v3863
        %v3867 = vshrl.u32 2475754826, %v3864
        %v3868 = vor.u32 %v3866, %v3867
        %v3869 = vshll.u32 2475754826, %v3863
        %v3870 = vshrl.u32 2131351028, %v3864
        %v3871 = vor.u32 %v3869, %v3870
        %v3872 = vshll.u32 2131351028, %v3863
        %v3873 = vshrl.u32 2102212464, %v3864
        %v3874 = vor.u32 %v3872, %v3873
        %v3875 = vshll.u32 2102212464, %v3863
        %v3876 = vshrl.u32 920167782, %v3864
        %v3877 = vor.u32 %v3875, %v3876
        %v3878 = vshll.u32 920167782, %v3863
        %v3879 = vshrl.u32 1326507024, %v3864
        %v3880 = vor.u32 %v3878, %v3879
        %vm3881 = vcmp.lt.s32.totalorder %v3862, 1
        %vm3882 = vcmp.lt.s32.totalorder %v3862, 2
        %vm3883 = vcmp.lt.s32.totalorder %v3862, 3
        %vm3884 = vcmp.lt.s32.totalorder %v3862, 4
        %v3885 = vsel %vm3881, %v3865, %v3868
        %v3886 = vsel %vm3884, %v3874, 2102212464
        %v3887 = vsel %vm3883, %v3871, %v3886
        %v3888 = vsel %vm3882, %v3885, %v3887
        %v3889 = vsel %vm3881, %v3868, %v3871
        %v3890 = vsel %vm3884, %v3877, 920167782
        %v3891 = vsel %vm3883, %v3874, %v3890
        %v3892 = vsel %vm3882, %v3889, %v3891
        %v3893 = vsel %vm3881, %v3871, %v3874
        %v3894 = vsel %vm3884, %v3880, 1326507024
        %v3895 = vsel %vm3883, %v3877, %v3894
        %v3896 = vsel %vm3882, %v3893, %v3895
        %v3897 = vshll.u32 %v3857, 8
        %v3898 = vmul.u32.u64.compose %v3897, %v3896
        %v3899 = vextract.low.u32 %v3898
        %v3900 = vextract.high.u32 %v3898
        %v3901 = vmul.u32.u64.compose %v3897, %v3892
        %v3902 = vextract.low.u32 %v3901
        %v3903 = vextract.high.u32 %v3901
        %v3904 = vmul.u32 %v3897, %v3888
        %v3905 = vadd.s32 %v3900, %v3902
        %vm3906 = vc.u32 %v3900, %v3902
        %v3907 = vadd.s32 %v3903, 1
        %v3908 = vsel %vm3906, %v3907, %v3903
        %v3909 = vadd.s32 %v3904, %v3908
        %v3910 = vadd.s32 %v3909, 536870912
        %v3911 = vshrl.u32 %v3910, 30
        %v3912 = vshll.u32 %v3911, 30
        %v3913 = vsub.s32 %v3909, %v3912
        %vm3914 = vcmp.lt.s32.totalorder %v3913, 0
        %v3915 = vsub.s32 0, %v3913
        %v3916 = vsel %vm3914, %v3915, %v3913
        %v3917 = vclz %v3916
        %v3918 = vsub.s32 %v3917, 2
        %vm3919 = vcmp.gt.s32.totalorder 0, %v3918
        %v3920 = vsel %vm3919, 0, %v3918
        %v3921 = vsub.s32 32, %v3920
        %v3922 = vshll.u32 %v3913, %v3920
        %v3923 = vshrl.u32 %v3905, %v3921
        %v3924 = vor.u32 %v3922, %v3923
        %v3925 = vsub.s32 4294967266, %v3920
        %v3926 = vadd.s32 %v3925, 127
        %v3927 = vshll.u32 %v3926, 23
        %v3928 = vor.u32 4788187, %v3927
        %v3929 = vand.u32 2147483647, %v3928
        %v3931 = vcvt.s32.f32 %v3924
        %v3932 = vmul.f32 %v3931, %v3929
        %v3933 = vxor.u32 %v3932, 2147483648
        %v3934 = vsel %vm3851, %v3933, %v3932
        %v3935 = vsub.s32 4, %v3911
        %v3936 = vsel %vm3851, %v3935, %v3911
        %v3937 = vsel %vm3850, %v340, %v3934
        %v3938 = vsel %vm3850, 0, %v3936
        %v3939 = vcosq.f32.pop %v3937
        %v3940 = vsinq.f32.pop %v3937
        %vm3941 = vweird.f32 %v340
        %v3942 = vand.u32 %v3938, 3
        %vm3943 = vcmp.lt.s32.totalorder %v3942, 2
        %vm3944 = vcmp.eq.s32.totalorder %v3942, 0
        %v3945 = vxor.u32 %v3940, 2147483648
        %v3946 = vsel %vm3944, %v3939, %v3945
        %vm3947 = vcmp.eq.s32.totalorder %v3942, 2
        %v3948 = vxor.u32 %v3939, 2147483648
        %v3949 = vsel %vm3947, %v3948, %v3940
        %v3950 = vsel %vm3943, %v3946, %v3949
        %v3951 = vsel %vm3941, nan, %v3950
        %v3952 = vand.u32 2147483647, %v341
        %vm3953 = vcmp.le.f32.partialorder %v3952, 0.7853982
        %vm3954 = vcmp.lt.s32.totalorder %v341, 0
        %v3955 = vand.u32 %v341, 2139095040
        %v3956 = vshrl.u32 %v3955, 23
        %v3957 = vsub.s32 %v3956, 127
        %v3958 = vand.u32 2147483647, %v341
        %v3959 = vand.u32 %v3958, 8388607
        %v3960 = vor.u32 %v3959, 8388608
        %v3961 = vsub.s32 0, %v3960
        %v3962 = vadd.s32 %v3957, 1
        %vm3963 = vcmp.gt.s32.totalorder %v3962, 0
        %v3964 = vsel %vm3963, %v3962, 0
        %v3965 = vshrl.u32 %v3964, 5
        %v3966 = vand.u32 %v3964, 31
        %v3967 = vsub.s32 32, %v3966
        %v3968 = vshrl.u32 683565275, %v3967
        %v3969 = vshll.u32 683565275, %v3966
        %v3970 = vshrl.u32 2475754826, %v3967
        %v3971 = vor.u32 %v3969, %v3970
        %v3972 = vshll.u32 2475754826, %v3966
        %v3973 = vshrl.u32 2131351028, %v3967
        %v3974 = vor.u32 %v3972, %v3973
        %v3975 = vshll.u32 2131351028, %v3966
        %v3976 = vshrl.u32 2102212464, %v3967
        %v3977 = vor.u32 %v3975, %v3976
        %v3978 = vshll.u32 2102212464, %v3966
        %v3979 = vshrl.u32 920167782, %v3967
        %v3980 = vor.u32 %v3978, %v3979
        %v3981 = vshll.u32 920167782, %v3966
        %v3982 = vshrl.u32 1326507024, %v3967
        %v3983 = vor.u32 %v3981, %v3982
        %vm3984 = vcmp.lt.s32.totalorder %v3965, 1
        %vm3985 = vcmp.lt.s32.totalorder %v3965, 2
        %vm3986 = vcmp.lt.s32.totalorder %v3965, 3
        %vm3987 = vcmp.lt.s32.totalorder %v3965, 4
        %v3988 = vsel %vm3984, %v3968, %v3971
        %v3989 = vsel %vm3987, %v3977, 2102212464
        %v3990 = vsel %vm3986, %v3974, %v3989
        %v3991 = vsel %vm3985, %v3988, %v3990
        %v3992 = vsel %vm3984, %v3971, %v3974
        %v3993 = vsel %vm3987, %v3980, 920167782
        %v3994 = vsel %vm3986, %v3977, %v3993
        %v3995 = vsel %vm3985, %v3992, %v3994
        %v3996 = vsel %vm3984, %v3974, %v3977
        %v3997 = vsel %vm3987, %v3983, 1326507024
        %v3998 = vsel %vm3986, %v3980, %v3997
        %v3999 = vsel %vm3985, %v3996, %v3998
        %v4000 = vshll.u32 %v3960, 8
        %v4001 = vmul.u32.u64.compose %v4000, %v3999
        %v4002 = vextract.low.u32 %v4001
        %v4003 = vextract.high.u32 %v4001
        %v4004 = vmul.u32.u64.compose %v4000, %v3995
        %v4005 = vextract.low.u32 %v4004
        %v4006 = vextract.high.u32 %v4004
        %v4007 = vmul.u32 %v4000, %v3991
        %v4008 = vadd.s32 %v4003, %v4005
        %vm4009 = vc.u32 %v4003, %v4005
        %v4010 = vadd.s32 %v4006, 1
        %v4011 = vsel %vm4009, %v4010, %v4006
        %v4012 = vadd.s32 %v4007, %v4011
        %v4013 = vadd.s32 %v4012, 536870912
        %v4014 = vshrl.u32 %v4013, 30
        %v4015 = vshll.u32 %v4014, 30
        %v4016 = vsub.s32 %v4012, %v4015
        %vm4017 = vcmp.lt.s32.totalorder %v4016, 0
        %v4018 = vsub.s32 0, %v4016
        %v4019 = vsel %vm4017, %v4018, %v4016
        %v4020 = vclz %v4019
        %v4021 = vsub.s32 %v4020, 2
        %vm4022 = vcmp.gt.s32.totalorder 0, %v4021
        %v4023 = vsel %vm4022, 0, %v4021
        %v4024 = vsub.s32 32, %v4023
        %v4025 = vshll.u32 %v4016, %v4023
        %v4026 = vshrl.u32 %v4008, %v4024
        %v4027 = vor.u32 %v4025, %v4026
        %v4028 = vsub.s32 4294967266, %v4023
        %v4029 = vadd.s32 %v4028, 127
        %v4030 = vshll.u32 %v4029, 23
        %v4031 = vor.u32 4788187, %v4030
        %v4032 = vand.u32 2147483647, %v4031
        %v4034 = vcvt.s32.f32 %v4027
        %v4035 = vmul.f32 %v4034, %v4032
        %v4036 = vxor.u32 %v4035, 2147483648
        %v4037 = vsel %vm3954, %v4036, %v4035
        %v4038 = vsub.s32 4, %v4014
        %v4039 = vsel %vm3954, %v4038, %v4014
        %v4040 = vsel %vm3953, %v341, %v4037
        %v4041 = vsel %vm3953, 0, %v4039
        %v4042 = vcosq.f32.pop %v4040
        %v4043 = vsinq.f32.pop %v4040
        %vm4044 = vweird.f32 %v341
        %v4045 = vand.u32 %v4041, 3
        %vm4046 = vcmp.lt.s32.totalorder %v4045, 2
        %vm4047 = vcmp.eq.s32.totalorder %v4045, 0
        %v4048 = vxor.u32 %v4043, 2147483648
        %v4049 = vsel %vm4047, %v4042, %v4048
        %vm4050 = vcmp.eq.s32.totalorder %v4045, 2
        %v4051 = vxor.u32 %v4042, 2147483648
        %v4052 = vsel %vm4050, %v4051, %v4043
        %v4053 = vsel %vm4046, %v4049, %v4052
        %v4054 = vsel %vm4044, nan, %v4053
        %v4055 = vand.u32 2147483647, %v342
        %vm4056 = vcmp.le.f32.partialorder %v4055, 0.7853982
        %vm4057 = vcmp.lt.s32.totalorder %v342, 0
        %v4058 = vand.u32 %v342, 2139095040
        %v4059 = vshrl.u32 %v4058, 23
        %v4060 = vsub.s32 %v4059, 127
        %v4061 = vand.u32 2147483647, %v342
        %v4062 = vand.u32 %v4061, 8388607
        %v4063 = vor.u32 %v4062, 8388608
        %v4064 = vsub.s32 0, %v4063
        %v4065 = vadd.s32 %v4060, 1
        %vm4066 = vcmp.gt.s32.totalorder %v4065, 0
        %v4067 = vsel %vm4066, %v4065, 0
        %v4068 = vshrl.u32 %v4067, 5
        %v4069 = vand.u32 %v4067, 31
        %v4070 = vsub.s32 32, %v4069
        %v4071 = vshrl.u32 683565275, %v4070
        %v4072 = vshll.u32 683565275, %v4069
        %v4073 = vshrl.u32 2475754826, %v4070
        %v4074 = vor.u32 %v4072, %v4073
        %v4075 = vshll.u32 2475754826, %v4069
        %v4076 = vshrl.u32 2131351028, %v4070
        %v4077 = vor.u32 %v4075, %v4076
        %v4078 = vshll.u32 2131351028, %v4069
        %v4079 = vshrl.u32 2102212464, %v4070
        %v4080 = vor.u32 %v4078, %v4079
        %v4081 = vshll.u32 2102212464, %v4069
        %v4082 = vshrl.u32 920167782, %v4070
        %v4083 = vor.u32 %v4081, %v4082
        %v4084 = vshll.u32 920167782, %v4069
        %v4085 = vshrl.u32 1326507024, %v4070
        %v4086 = vor.u32 %v4084, %v4085
        %vm4087 = vcmp.lt.s32.totalorder %v4068, 1
        %vm4088 = vcmp.lt.s32.totalorder %v4068, 2
        %vm4089 = vcmp.lt.s32.totalorder %v4068, 3
        %vm4090 = vcmp.lt.s32.totalorder %v4068, 4
        %v4091 = vsel %vm4087, %v4071, %v4074
        %v4092 = vsel %vm4090, %v4080, 2102212464
        %v4093 = vsel %vm4089, %v4077, %v4092
        %v4094 = vsel %vm4088, %v4091, %v4093
        %v4095 = vsel %vm4087, %v4074, %v4077
        %v4096 = vsel %vm4090, %v4083, 920167782
        %v4097 = vsel %vm4089, %v4080, %v4096
        %v4098 = vsel %vm4088, %v4095, %v4097
        %v4099 = vsel %vm4087, %v4077, %v4080
        %v4100 = vsel %vm4090, %v4086, 1326507024
        %v4101 = vsel %vm4089, %v4083, %v4100
        %v4102 = vsel %vm4088, %v4099, %v4101
        %v4103 = vshll.u32 %v4063, 8
        %v4104 = vmul.u32.u64.compose %v4103, %v4102
        %v4105 = vextract.low.u32 %v4104
        %v4106 = vextract.high.u32 %v4104
        %v4107 = vmul.u32.u64.compose %v4103, %v4098
        %v4108 = vextract.low.u32 %v4107
        %v4109 = vextract.high.u32 %v4107
        %v4110 = vmul.u32 %v4103, %v4094
        %v4111 = vadd.s32 %v4106, %v4108
        %vm4112 = vc.u32 %v4106, %v4108
        %v4113 = vadd.s32 %v4109, 1
        %v4114 = vsel %vm4112, %v4113, %v4109
        %v4115 = vadd.s32 %v4110, %v4114
        %v4116 = vadd.s32 %v4115, 536870912
        %v4117 = vshrl.u32 %v4116, 30
        %v4118 = vshll.u32 %v4117, 30
        %v4119 = vsub.s32 %v4115, %v4118
        %vm4120 = vcmp.lt.s32.totalorder %v4119, 0
        %v4121 = vsub.s32 0, %v4119
        %v4122 = vsel %vm4120, %v4121, %v4119
        %v4123 = vclz %v4122
        %v4124 = vsub.s32 %v4123, 2
        %vm4125 = vcmp.gt.s32.totalorder 0, %v4124
        %v4126 = vsel %vm4125, 0, %v4124
        %v4127 = vsub.s32 32, %v4126
        %v4128 = vshll.u32 %v4119, %v4126
        %v4129 = vshrl.u32 %v4111, %v4127
        %v4130 = vor.u32 %v4128, %v4129
        %v4131 = vsub.s32 4294967266, %v4126
        %v4132 = vadd.s32 %v4131, 127
        %v4133 = vshll.u32 %v4132, 23
        %v4134 = vor.u32 4788187, %v4133
        %v4135 = vand.u32 2147483647, %v4134
        %v4137 = vcvt.s32.f32 %v4130
        %v4138 = vmul.f32 %v4137, %v4135
        %v4139 = vxor.u32 %v4138, 2147483648
        %v4140 = vsel %vm4057, %v4139, %v4138
        %v4141 = vsub.s32 4, %v4117
        %v4142 = vsel %vm4057, %v4141, %v4117
        %v4143 = vsel %vm4056, %v342, %v4140
        %v4144 = vsel %vm4056, 0, %v4142
        %v4145 = vcosq.f32.pop %v4143
        %v4146 = vsinq.f32.pop %v4143
        %vm4147 = vweird.f32 %v342
        %v4148 = vand.u32 %v4144, 3
        %vm4149 = vcmp.lt.s32.totalorder %v4148, 2
        %vm4150 = vcmp.eq.s32.totalorder %v4148, 0
        %v4151 = vxor.u32 %v4146, 2147483648
        %v4152 = vsel %vm4150, %v4145, %v4151
        %vm4153 = vcmp.eq.s32.totalorder %v4148, 2
        %v4154 = vxor.u32 %v4145, 2147483648
        %v4155 = vsel %vm4153, %v4154, %v4146
        %v4156 = vsel %vm4149, %v4152, %v4155
        %v4157 = vsel %vm4147, nan, %v4156
        %v4158 = vand.u32 2147483647, %v343
        %vm4159 = vcmp.le.f32.partialorder %v4158, 0.7853982
        %vm4160 = vcmp.lt.s32.totalorder %v343, 0
        %v4161 = vand.u32 %v343, 2139095040
        %v4162 = vshrl.u32 %v4161, 23
        %v4163 = vsub.s32 %v4162, 127
        %v4164 = vand.u32 2147483647, %v343
        %v4165 = vand.u32 %v4164, 8388607
        %v4166 = vor.u32 %v4165, 8388608
        %v4167 = vsub.s32 0, %v4166
        %v4168 = vadd.s32 %v4163, 1
        %vm4169 = vcmp.gt.s32.totalorder %v4168, 0
        %v4170 = vsel %vm4169, %v4168, 0
        %v4171 = vshrl.u32 %v4170, 5
        %v4172 = vand.u32 %v4170, 31
        %v4173 = vsub.s32 32, %v4172
        %v4174 = vshrl.u32 683565275, %v4173
        %v4175 = vshll.u32 683565275, %v4172
        %v4176 = vshrl.u32 2475754826, %v4173
        %v4177 = vor.u32 %v4175, %v4176
        %v4178 = vshll.u32 2475754826, %v4172
        %v4179 = vshrl.u32 2131351028, %v4173
        %v4180 = vor.u32 %v4178, %v4179
        %v4181 = vshll.u32 2131351028, %v4172
        %v4182 = vshrl.u32 2102212464, %v4173
        %v4183 = vor.u32 %v4181, %v4182
        %v4184 = vshll.u32 2102212464, %v4172
        %v4185 = vshrl.u32 920167782, %v4173
        %v4186 = vor.u32 %v4184, %v4185
        %v4187 = vshll.u32 920167782, %v4172
        %v4188 = vshrl.u32 1326507024, %v4173
        %v4189 = vor.u32 %v4187, %v4188
        %vm4190 = vcmp.lt.s32.totalorder %v4171, 1
        %vm4191 = vcmp.lt.s32.totalorder %v4171, 2
        %vm4192 = vcmp.lt.s32.totalorder %v4171, 3
        %vm4193 = vcmp.lt.s32.totalorder %v4171, 4
        %v4194 = vsel %vm4190, %v4174, %v4177
        %v4195 = vsel %vm4193, %v4183, 2102212464
        %v4196 = vsel %vm4192, %v4180, %v4195
        %v4197 = vsel %vm4191, %v4194, %v4196
        %v4198 = vsel %vm4190, %v4177, %v4180
        %v4199 = vsel %vm4193, %v4186, 920167782
        %v4200 = vsel %vm4192, %v4183, %v4199
        %v4201 = vsel %vm4191, %v4198, %v4200
        %v4202 = vsel %vm4190, %v4180, %v4183
        %v4203 = vsel %vm4193, %v4189, 1326507024
        %v4204 = vsel %vm4192, %v4186, %v4203
        %v4205 = vsel %vm4191, %v4202, %v4204
        %v4206 = vshll.u32 %v4166, 8
        %v4207 = vmul.u32.u64.compose %v4206, %v4205
        %v4208 = vextract.low.u32 %v4207
        %v4209 = vextract.high.u32 %v4207
        %v4210 = vmul.u32.u64.compose %v4206, %v4201
        %v4211 = vextract.low.u32 %v4210
        %v4212 = vextract.high.u32 %v4210
        %v4213 = vmul.u32 %v4206, %v4197
        %v4214 = vadd.s32 %v4209, %v4211
        %vm4215 = vc.u32 %v4209, %v4211
        %v4216 = vadd.s32 %v4212, 1
        %v4217 = vsel %vm4215, %v4216, %v4212
        %v4218 = vadd.s32 %v4213, %v4217
        %v4219 = vadd.s32 %v4218, 536870912
        %v4220 = vshrl.u32 %v4219, 30
        %v4221 = vshll.u32 %v4220, 30
        %v4222 = vsub.s32 %v4218, %v4221
        %vm4223 = vcmp.lt.s32.totalorder %v4222, 0
        %v4224 = vsub.s32 0, %v4222
        %v4225 = vsel %vm4223, %v4224, %v4222
        %v4226 = vclz %v4225
        %v4227 = vsub.s32 %v4226, 2
        %vm4228 = vcmp.gt.s32.totalorder 0, %v4227
        %v4229 = vsel %vm4228, 0, %v4227
        %v4230 = vsub.s32 32, %v4229
        %v4231 = vshll.u32 %v4222, %v4229
        %v4232 = vshrl.u32 %v4214, %v4230
        %v4233 = vor.u32 %v4231, %v4232
        %v4234 = vsub.s32 4294967266, %v4229
        %v4235 = vadd.s32 %v4234, 127
        %v4236 = vshll.u32 %v4235, 23
        %v4237 = vor.u32 4788187, %v4236
        %v4238 = vand.u32 2147483647, %v4237
        %v4240 = vcvt.s32.f32 %v4233
        %v4241 = vmul.f32 %v4240, %v4238
        %v4242 = vxor.u32 %v4241, 2147483648
        %v4243 = vsel %vm4160, %v4242, %v4241
        %v4244 = vsub.s32 4, %v4220
        %v4245 = vsel %vm4160, %v4244, %v4220
        %v4246 = vsel %vm4159, %v343, %v4243
        %v4247 = vsel %vm4159, 0, %v4245
        %v4248 = vcosq.f32.pop %v4246
        %v4249 = vsinq.f32.pop %v4246
        %vm4250 = vweird.f32 %v343
        %v4251 = vand.u32 %v4247, 3
        %vm4252 = vcmp.lt.s32.totalorder %v4251, 2
        %vm4253 = vcmp.eq.s32.totalorder %v4251, 0
        %v4254 = vxor.u32 %v4249, 2147483648
        %v4255 = vsel %vm4253, %v4248, %v4254
        %vm4256 = vcmp.eq.s32.totalorder %v4251, 2
        %v4257 = vxor.u32 %v4248, 2147483648
        %v4258 = vsel %vm4256, %v4257, %v4249
        %v4259 = vsel %vm4252, %v4255, %v4258
        %v4260 = vsel %vm4250, nan, %v4259
        %v4261 = vand.u32 2147483647, %v344
        %vm4262 = vcmp.le.f32.partialorder %v4261, 0.7853982
        %vm4263 = vcmp.lt.s32.totalorder %v344, 0
        %v4264 = vand.u32 %v344, 2139095040
        %v4265 = vshrl.u32 %v4264, 23
        %v4266 = vsub.s32 %v4265, 127
        %v4267 = vand.u32 2147483647, %v344
        %v4268 = vand.u32 %v4267, 8388607
        %v4269 = vor.u32 %v4268, 8388608
        %v4270 = vsub.s32 0, %v4269
        %v4271 = vadd.s32 %v4266, 1
        %vm4272 = vcmp.gt.s32.totalorder %v4271, 0
        %v4273 = vsel %vm4272, %v4271, 0
        %v4274 = vshrl.u32 %v4273, 5
        %v4275 = vand.u32 %v4273, 31
        %v4276 = vsub.s32 32, %v4275
        %v4277 = vshrl.u32 683565275, %v4276
        %v4278 = vshll.u32 683565275, %v4275
        %v4279 = vshrl.u32 2475754826, %v4276
        %v4280 = vor.u32 %v4278, %v4279
        %v4281 = vshll.u32 2475754826, %v4275
        %v4282 = vshrl.u32 2131351028, %v4276
        %v4283 = vor.u32 %v4281, %v4282
        %v4284 = vshll.u32 2131351028, %v4275
        %v4285 = vshrl.u32 2102212464, %v4276
        %v4286 = vor.u32 %v4284, %v4285
        %v4287 = vshll.u32 2102212464, %v4275
        %v4288 = vshrl.u32 920167782, %v4276
        %v4289 = vor.u32 %v4287, %v4288
        %v4290 = vshll.u32 920167782, %v4275
        %v4291 = vshrl.u32 1326507024, %v4276
        %v4292 = vor.u32 %v4290, %v4291
        %vm4293 = vcmp.lt.s32.totalorder %v4274, 1
        %vm4294 = vcmp.lt.s32.totalorder %v4274, 2
        %vm4295 = vcmp.lt.s32.totalorder %v4274, 3
        %vm4296 = vcmp.lt.s32.totalorder %v4274, 4
        %v4297 = vsel %vm4293, %v4277, %v4280
        %v4298 = vsel %vm4296, %v4286, 2102212464
        %v4299 = vsel %vm4295, %v4283, %v4298
        %v4300 = vsel %vm4294, %v4297, %v4299
        %v4301 = vsel %vm4293, %v4280, %v4283
        %v4302 = vsel %vm4296, %v4289, 920167782
        %v4303 = vsel %vm4295, %v4286, %v4302
        %v4304 = vsel %vm4294, %v4301, %v4303
        %v4305 = vsel %vm4293, %v4283, %v4286
        %v4306 = vsel %vm4296, %v4292, 1326507024
        %v4307 = vsel %vm4295, %v4289, %v4306
        %v4308 = vsel %vm4294, %v4305, %v4307
        %v4309 = vshll.u32 %v4269, 8
        %v4310 = vmul.u32.u64.compose %v4309, %v4308
        %v4311 = vextract.low.u32 %v4310
        %v4312 = vextract.high.u32 %v4310
        %v4313 = vmul.u32.u64.compose %v4309, %v4304
        %v4314 = vextract.low.u32 %v4313
        %v4315 = vextract.high.u32 %v4313
        %v4316 = vmul.u32 %v4309, %v4300
        %v4317 = vadd.s32 %v4312, %v4314
        %vm4318 = vc.u32 %v4312, %v4314
        %v4319 = vadd.s32 %v4315, 1
        %v4320 = vsel %vm4318, %v4319, %v4315
        %v4321 = vadd.s32 %v4316, %v4320
        %v4322 = vadd.s32 %v4321, 536870912
        %v4323 = vshrl.u32 %v4322, 30
        %v4324 = vshll.u32 %v4323, 30
        %v4325 = vsub.s32 %v4321, %v4324
        %vm4326 = vcmp.lt.s32.totalorder %v4325, 0
        %v4327 = vsub.s32 0, %v4325
        %v4328 = vsel %vm4326, %v4327, %v4325
        %v4329 = vclz %v4328
        %v4330 = vsub.s32 %v4329, 2
        %vm4331 = vcmp.gt.s32.totalorder 0, %v4330
        %v4332 = vsel %vm4331, 0, %v4330
        %v4333 = vsub.s32 32, %v4332
        %v4334 = vshll.u32 %v4325, %v4332
        %v4335 = vshrl.u32 %v4317, %v4333
        %v4336 = vor.u32 %v4334, %v4335
        %v4337 = vsub.s32 4294967266, %v4332
        %v4338 = vadd.s32 %v4337, 127
        %v4339 = vshll.u32 %v4338, 23
        %v4340 = vor.u32 4788187, %v4339
        %v4341 = vand.u32 2147483647, %v4340
        %v4343 = vcvt.s32.f32 %v4336
        %v4344 = vmul.f32 %v4343, %v4341
        %v4345 = vxor.u32 %v4344, 2147483648
        %v4346 = vsel %vm4263, %v4345, %v4344
        %v4347 = vsub.s32 4, %v4323
        %v4348 = vsel %vm4263, %v4347, %v4323
        %v4349 = vsel %vm4262, %v344, %v4346
        %v4350 = vsel %vm4262, 0, %v4348
        %v4351 = vcosq.f32.pop %v4349
        %v4352 = vsinq.f32.pop %v4349
        %vm4353 = vweird.f32 %v344
        %v4354 = vand.u32 %v4350, 3
        %vm4355 = vcmp.lt.s32.totalorder %v4354, 2
        %vm4356 = vcmp.eq.s32.totalorder %v4354, 0
        %v4357 = vxor.u32 %v4352, 2147483648
        %v4358 = vsel %vm4356, %v4351, %v4357
        %vm4359 = vcmp.eq.s32.totalorder %v4354, 2
        %v4360 = vxor.u32 %v4351, 2147483648
        %v4361 = vsel %vm4359, %v4360, %v4352
        %v4362 = vsel %vm4355, %v4358, %v4361
        %v4363 = vsel %vm4353, nan, %v4362
        %v4364 = vand.u32 2147483647, %v345
        %vm4365 = vcmp.le.f32.partialorder %v4364, 0.7853982
        %vm4366 = vcmp.lt.s32.totalorder %v345, 0
        %v4367 = vand.u32 %v345, 2139095040
        %v4368 = vshrl.u32 %v4367, 23
        %v4369 = vsub.s32 %v4368, 127
        %v4370 = vand.u32 2147483647, %v345
        %v4371 = vand.u32 %v4370, 8388607
        %v4372 = vor.u32 %v4371, 8388608
        %v4373 = vsub.s32 0, %v4372
        %v4374 = vadd.s32 %v4369, 1
        %vm4375 = vcmp.gt.s32.totalorder %v4374, 0
        %v4376 = vsel %vm4375, %v4374, 0
        %v4377 = vshrl.u32 %v4376, 5
        %v4378 = vand.u32 %v4376, 31
        %v4379 = vsub.s32 32, %v4378
        %v4380 = vshrl.u32 683565275, %v4379
        %v4381 = vshll.u32 683565275, %v4378
        %v4382 = vshrl.u32 2475754826, %v4379
        %v4383 = vor.u32 %v4381, %v4382
        %v4384 = vshll.u32 2475754826, %v4378
        %v4385 = vshrl.u32 2131351028, %v4379
        %v4386 = vor.u32 %v4384, %v4385
        %v4387 = vshll.u32 2131351028, %v4378
        %v4388 = vshrl.u32 2102212464, %v4379
        %v4389 = vor.u32 %v4387, %v4388
        %v4390 = vshll.u32 2102212464, %v4378
        %v4391 = vshrl.u32 920167782, %v4379
        %v4392 = vor.u32 %v4390, %v4391
        %v4393 = vshll.u32 920167782, %v4378
        %v4394 = vshrl.u32 1326507024, %v4379
        %v4395 = vor.u32 %v4393, %v4394
        %vm4396 = vcmp.lt.s32.totalorder %v4377, 1
        %vm4397 = vcmp.lt.s32.totalorder %v4377, 2
        %vm4398 = vcmp.lt.s32.totalorder %v4377, 3
        %vm4399 = vcmp.lt.s32.totalorder %v4377, 4
        %v4400 = vsel %vm4396, %v4380, %v4383
        %v4401 = vsel %vm4399, %v4389, 2102212464
        %v4402 = vsel %vm4398, %v4386, %v4401
        %v4403 = vsel %vm4397, %v4400, %v4402
        %v4404 = vsel %vm4396, %v4383, %v4386
        %v4405 = vsel %vm4399, %v4392, 920167782
        %v4406 = vsel %vm4398, %v4389, %v4405
        %v4407 = vsel %vm4397, %v4404, %v4406
        %v4408 = vsel %vm4396, %v4386, %v4389
        %v4409 = vsel %vm4399, %v4395, 1326507024
        %v4410 = vsel %vm4398, %v4392, %v4409
        %v4411 = vsel %vm4397, %v4408, %v4410
        %v4412 = vshll.u32 %v4372, 8
        %v4413 = vmul.u32.u64.compose %v4412, %v4411
        %v4414 = vextract.low.u32 %v4413
        %v4415 = vextract.high.u32 %v4413
        %v4416 = vmul.u32.u64.compose %v4412, %v4407
        %v4417 = vextract.low.u32 %v4416
        %v4418 = vextract.high.u32 %v4416
        %v4419 = vmul.u32 %v4412, %v4403
        %v4420 = vadd.s32 %v4415, %v4417
        %vm4421 = vc.u32 %v4415, %v4417
        %v4422 = vadd.s32 %v4418, 1
        %v4423 = vsel %vm4421, %v4422, %v4418
        %v4424 = vadd.s32 %v4419, %v4423
        %v4425 = vadd.s32 %v4424, 536870912
        %v4426 = vshrl.u32 %v4425, 30
        %v4427 = vshll.u32 %v4426, 30
        %v4428 = vsub.s32 %v4424, %v4427
        %vm4429 = vcmp.lt.s32.totalorder %v4428, 0
        %v4430 = vsub.s32 0, %v4428
        %v4431 = vsel %vm4429, %v4430, %v4428
        %v4432 = vclz %v4431
        %v4433 = vsub.s32 %v4432, 2
        %vm4434 = vcmp.gt.s32.totalorder 0, %v4433
        %v4435 = vsel %vm4434, 0, %v4433
        %v4436 = vsub.s32 32, %v4435
        %v4437 = vshll.u32 %v4428, %v4435
        %v4438 = vshrl.u32 %v4420, %v4436
        %v4439 = vor.u32 %v4437, %v4438
        %v4440 = vsub.s32 4294967266, %v4435
        %v4441 = vadd.s32 %v4440, 127
        %v4442 = vshll.u32 %v4441, 23
        %v4443 = vor.u32 4788187, %v4442
        %v4444 = vand.u32 2147483647, %v4443
        %v4446 = vcvt.s32.f32 %v4439
        %v4447 = vmul.f32 %v4446, %v4444
        %v4448 = vxor.u32 %v4447, 2147483648
        %v4449 = vsel %vm4366, %v4448, %v4447
        %v4450 = vsub.s32 4, %v4426
        %v4451 = vsel %vm4366, %v4450, %v4426
        %v4452 = vsel %vm4365, %v345, %v4449
        %v4453 = vsel %vm4365, 0, %v4451
        %v4454 = vcosq.f32.pop %v4452
        %v4455 = vsinq.f32.pop %v4452
        %vm4456 = vweird.f32 %v345
        %v4457 = vand.u32 %v4453, 3
        %vm4458 = vcmp.lt.s32.totalorder %v4457, 2
        %vm4459 = vcmp.eq.s32.totalorder %v4457, 0
        %v4460 = vxor.u32 %v4455, 2147483648
        %v4461 = vsel %vm4459, %v4454, %v4460
        %vm4462 = vcmp.eq.s32.totalorder %v4457, 2
        %v4463 = vxor.u32 %v4454, 2147483648
        %v4464 = vsel %vm4462, %v4463, %v4455
        %v4465 = vsel %vm4458, %v4461, %v4464
        %v4466 = vsel %vm4456, nan, %v4465
        %v4467 = vand.u32 2147483647, %v306
        %vm4468 = vcmp.le.f32.partialorder %v4467, 0.7853982
        %vm4469 = vcmp.lt.s32.totalorder %v306, 0
        %v4470 = vand.u32 %v306, 2139095040
        %v4471 = vshrl.u32 %v4470, 23
        %v4472 = vsub.s32 %v4471, 127
        %v4473 = vand.u32 2147483647, %v306
        %v4474 = vand.u32 %v4473, 8388607
        %v4475 = vor.u32 %v4474, 8388608
        %v4476 = vsub.s32 0, %v4475
        %v4477 = vadd.s32 %v4472, 1
        %vm4478 = vcmp.gt.s32.totalorder %v4477, 0
        %v4479 = vsel %vm4478, %v4477, 0
        %v4480 = vshrl.u32 %v4479, 5
        %v4481 = vand.u32 %v4479, 31
        %v4482 = vsub.s32 32, %v4481
        %v4483 = vshrl.u32 683565275, %v4482
        %v4484 = vshll.u32 683565275, %v4481
        %v4485 = vshrl.u32 2475754826, %v4482
        %v4486 = vor.u32 %v4484, %v4485
        %v4487 = vshll.u32 2475754826, %v4481
        %v4488 = vshrl.u32 2131351028, %v4482
        %v4489 = vor.u32 %v4487, %v4488
        %v4490 = vshll.u32 2131351028, %v4481
        %v4491 = vshrl.u32 2102212464, %v4482
        %v4492 = vor.u32 %v4490, %v4491
        %v4493 = vshll.u32 2102212464, %v4481
        %v4494 = vshrl.u32 920167782, %v4482
        %v4495 = vor.u32 %v4493, %v4494
        %v4496 = vshll.u32 920167782, %v4481
        %v4497 = vshrl.u32 1326507024, %v4482
        %v4498 = vor.u32 %v4496, %v4497
        %vm4499 = vcmp.lt.s32.totalorder %v4480, 1
        %vm4500 = vcmp.lt.s32.totalorder %v4480, 2
        %vm4501 = vcmp.lt.s32.totalorder %v4480, 3
        %vm4502 = vcmp.lt.s32.totalorder %v4480, 4
        %v4503 = vsel %vm4499, %v4483, %v4486
        %v4504 = vsel %vm4502, %v4492, 2102212464
        %v4505 = vsel %vm4501, %v4489, %v4504
        %v4506 = vsel %vm4500, %v4503, %v4505
        %v4507 = vsel %vm4499, %v4486, %v4489
        %v4508 = vsel %vm4502, %v4495, 920167782
        %v4509 = vsel %vm4501, %v4492, %v4508
        %v4510 = vsel %vm4500, %v4507, %v4509
        %v4511 = vsel %vm4499, %v4489, %v4492
        %v4512 = vsel %vm4502, %v4498, 1326507024
        %v4513 = vsel %vm4501, %v4495, %v4512
        %v4514 = vsel %vm4500, %v4511, %v4513
        %v4515 = vshll.u32 %v4475, 8
        %v4516 = vmul.u32.u64.compose %v4515, %v4514
        %v4517 = vextract.low.u32 %v4516
        %v4518 = vextract.high.u32 %v4516
        %v4519 = vmul.u32.u64.compose %v4515, %v4510
        %v4520 = vextract.low.u32 %v4519
        %v4521 = vextract.high.u32 %v4519
        %v4522 = vmul.u32 %v4515, %v4506
        %v4523 = vadd.s32 %v4518, %v4520
        %vm4524 = vc.u32 %v4518, %v4520
        %v4525 = vadd.s32 %v4521, 1
        %v4526 = vsel %vm4524, %v4525, %v4521
        %v4527 = vadd.s32 %v4522, %v4526
        %v4528 = vadd.s32 %v4527, 536870912
        %v4529 = vshrl.u32 %v4528, 30
        %v4530 = vshll.u32 %v4529, 30
        %v4531 = vsub.s32 %v4527, %v4530
        %vm4532 = vcmp.lt.s32.totalorder %v4531, 0
        %v4533 = vsub.s32 0, %v4531
        %v4534 = vsel %vm4532, %v4533, %v4531
        %v4535 = vclz %v4534
        %v4536 = vsub.s32 %v4535, 2
        %vm4537 = vcmp.gt.s32.totalorder 0, %v4536
        %v4538 = vsel %vm4537, 0, %v4536
        %v4539 = vsub.s32 32, %v4538
        %v4540 = vshll.u32 %v4531, %v4538
        %v4541 = vshrl.u32 %v4523, %v4539
        %v4542 = vor.u32 %v4540, %v4541
        %v4543 = vsub.s32 4294967266, %v4538
        %v4544 = vadd.s32 %v4543, 127
        %v4545 = vshll.u32 %v4544, 23
        %v4546 = vor.u32 4788187, %v4545
        %v4547 = vand.u32 2147483647, %v4546
        %v4549 = vcvt.s32.f32 %v4542
        %v4550 = vmul.f32 %v4549, %v4547
        %v4551 = vxor.u32 %v4550, 2147483648
        %v4552 = vsel %vm4469, %v4551, %v4550
        %v4553 = vsub.s32 4, %v4529
        %v4554 = vsel %vm4469, %v4553, %v4529
        %v4555 = vsel %vm4468, %v306, %v4552
        %v4556 = vsel %vm4468, 0, %v4554
        %v4557 = vcosq.f32.pop %v4555
        %v4558 = vsinq.f32.pop %v4555
        %vm4559 = vweird.f32 %v306
        %v4560 = vadd.s32 %v4556, 3
        %v4561 = vand.u32 %v4560, 3
        %vm4562 = vcmp.lt.s32.totalorder %v4561, 2
        %vm4563 = vcmp.eq.s32.totalorder %v4561, 0
        %v4564 = vxor.u32 %v4558, 2147483648
        %v4565 = vsel %vm4563, %v4557, %v4564
        %vm4566 = vcmp.eq.s32.totalorder %v4561, 2
        %v4567 = vxor.u32 %v4557, 2147483648
        %v4568 = vsel %vm4566, %v4567, %v4558
        %v4569 = vsel %vm4562, %v4565, %v4568
        %v4570 = vsel %vm4559, nan, %v4569
        %v4571 = vand.u32 2147483647, %v307
        %vm4572 = vcmp.le.f32.partialorder %v4571, 0.7853982
        %vm4573 = vcmp.lt.s32.totalorder %v307, 0
        %v4574 = vand.u32 %v307, 2139095040
        %v4575 = vshrl.u32 %v4574, 23
        %v4576 = vsub.s32 %v4575, 127
        %v4577 = vand.u32 2147483647, %v307
        %v4578 = vand.u32 %v4577, 8388607
        %v4579 = vor.u32 %v4578, 8388608
        %v4580 = vsub.s32 0, %v4579
        %v4581 = vadd.s32 %v4576, 1
        %vm4582 = vcmp.gt.s32.totalorder %v4581, 0
        %v4583 = vsel %vm4582, %v4581, 0
        %v4584 = vshrl.u32 %v4583, 5
        %v4585 = vand.u32 %v4583, 31
        %v4586 = vsub.s32 32, %v4585
        %v4587 = vshrl.u32 683565275, %v4586
        %v4588 = vshll.u32 683565275, %v4585
        %v4589 = vshrl.u32 2475754826, %v4586
        %v4590 = vor.u32 %v4588, %v4589
        %v4591 = vshll.u32 2475754826, %v4585
        %v4592 = vshrl.u32 2131351028, %v4586
        %v4593 = vor.u32 %v4591, %v4592
        %v4594 = vshll.u32 2131351028, %v4585
        %v4595 = vshrl.u32 2102212464, %v4586
        %v4596 = vor.u32 %v4594, %v4595
        %v4597 = vshll.u32 2102212464, %v4585
        %v4598 = vshrl.u32 920167782, %v4586
        %v4599 = vor.u32 %v4597, %v4598
        %v4600 = vshll.u32 920167782, %v4585
        %v4601 = vshrl.u32 1326507024, %v4586
        %v4602 = vor.u32 %v4600, %v4601
        %vm4603 = vcmp.lt.s32.totalorder %v4584, 1
        %vm4604 = vcmp.lt.s32.totalorder %v4584, 2
        %vm4605 = vcmp.lt.s32.totalorder %v4584, 3
        %vm4606 = vcmp.lt.s32.totalorder %v4584, 4
        %v4607 = vsel %vm4603, %v4587, %v4590
        %v4608 = vsel %vm4606, %v4596, 2102212464
        %v4609 = vsel %vm4605, %v4593, %v4608
        %v4610 = vsel %vm4604, %v4607, %v4609
        %v4611 = vsel %vm4603, %v4590, %v4593
        %v4612 = vsel %vm4606, %v4599, 920167782
        %v4613 = vsel %vm4605, %v4596, %v4612
        %v4614 = vsel %vm4604, %v4611, %v4613
        %v4615 = vsel %vm4603, %v4593, %v4596
        %v4616 = vsel %vm4606, %v4602, 1326507024
        %v4617 = vsel %vm4605, %v4599, %v4616
        %v4618 = vsel %vm4604, %v4615, %v4617
        %v4619 = vshll.u32 %v4579, 8
        %v4620 = vmul.u32.u64.compose %v4619, %v4618
        %v4621 = vextract.low.u32 %v4620
        %v4622 = vextract.high.u32 %v4620
        %v4623 = vmul.u32.u64.compose %v4619, %v4614
        %v4624 = vextract.low.u32 %v4623
        %v4625 = vextract.high.u32 %v4623
        %v4626 = vmul.u32 %v4619, %v4610
        %v4627 = vadd.s32 %v4622, %v4624
        %vm4628 = vc.u32 %v4622, %v4624
        %v4629 = vadd.s32 %v4625, 1
        %v4630 = vsel %vm4628, %v4629, %v4625
        %v4631 = vadd.s32 %v4626, %v4630
        %v4632 = vadd.s32 %v4631, 536870912
        %v4633 = vshrl.u32 %v4632, 30
        %v4634 = vshll.u32 %v4633, 30
        %v4635 = vsub.s32 %v4631, %v4634
        %vm4636 = vcmp.lt.s32.totalorder %v4635, 0
        %v4637 = vsub.s32 0, %v4635
        %v4638 = vsel %vm4636, %v4637, %v4635
        %v4639 = vclz %v4638
        %v4640 = vsub.s32 %v4639, 2
        %vm4641 = vcmp.gt.s32.totalorder 0, %v4640
        %v4642 = vsel %vm4641, 0, %v4640
        %v4643 = vsub.s32 32, %v4642
        %v4644 = vshll.u32 %v4635, %v4642
        %v4645 = vshrl.u32 %v4627, %v4643
        %v4646 = vor.u32 %v4644, %v4645
        %v4647 = vsub.s32 4294967266, %v4642
        %v4648 = vadd.s32 %v4647, 127
        %v4649 = vshll.u32 %v4648, 23
        %v4650 = vor.u32 4788187, %v4649
        %v4651 = vand.u32 2147483647, %v4650
        %v4653 = vcvt.s32.f32 %v4646
        %v4654 = vmul.f32 %v4653, %v4651
        %v4655 = vxor.u32 %v4654, 2147483648
        %v4656 = vsel %vm4573, %v4655, %v4654
        %v4657 = vsub.s32 4, %v4633
        %v4658 = vsel %vm4573, %v4657, %v4633
        %v4659 = vsel %vm4572, %v307, %v4656
        %v4660 = vsel %vm4572, 0, %v4658
        %v4661 = vcosq.f32.pop %v4659
        %v4662 = vsinq.f32.pop %v4659
        %vm4663 = vweird.f32 %v307
        %v4664 = vadd.s32 %v4660, 3
        %v4665 = vand.u32 %v4664, 3
        %vm4666 = vcmp.lt.s32.totalorder %v4665, 2
        %vm4667 = vcmp.eq.s32.totalorder %v4665, 0
        %v4668 = vxor.u32 %v4662, 2147483648
        %v4669 = vsel %vm4667, %v4661, %v4668
        %vm4670 = vcmp.eq.s32.totalorder %v4665, 2
        %v4671 = vxor.u32 %v4661, 2147483648
        %v4672 = vsel %vm4670, %v4671, %v4662
        %v4673 = vsel %vm4666, %v4669, %v4672
        %v4674 = vsel %vm4663, nan, %v4673
        %v4675 = vand.u32 2147483647, %v308
        %vm4676 = vcmp.le.f32.partialorder %v4675, 0.7853982
        %vm4677 = vcmp.lt.s32.totalorder %v308, 0
        %v4678 = vand.u32 %v308, 2139095040
        %v4679 = vshrl.u32 %v4678, 23
        %v4680 = vsub.s32 %v4679, 127
        %v4681 = vand.u32 2147483647, %v308
        %v4682 = vand.u32 %v4681, 8388607
        %v4683 = vor.u32 %v4682, 8388608
        %v4684 = vsub.s32 0, %v4683
        %v4685 = vadd.s32 %v4680, 1
        %vm4686 = vcmp.gt.s32.totalorder %v4685, 0
        %v4687 = vsel %vm4686, %v4685, 0
        %v4688 = vshrl.u32 %v4687, 5
        %v4689 = vand.u32 %v4687, 31
        %v4690 = vsub.s32 32, %v4689
        %v4691 = vshrl.u32 683565275, %v4690
        %v4692 = vshll.u32 683565275, %v4689
        %v4693 = vshrl.u32 2475754826, %v4690
        %v4694 = vor.u32 %v4692, %v4693
        %v4695 = vshll.u32 2475754826, %v4689
        %v4696 = vshrl.u32 2131351028, %v4690
        %v4697 = vor.u32 %v4695, %v4696
        %v4698 = vshll.u32 2131351028, %v4689
        %v4699 = vshrl.u32 2102212464, %v4690
        %v4700 = vor.u32 %v4698, %v4699
        %v4701 = vshll.u32 2102212464, %v4689
        %v4702 = vshrl.u32 920167782, %v4690
        %v4703 = vor.u32 %v4701, %v4702
        %v4704 = vshll.u32 920167782, %v4689
        %v4705 = vshrl.u32 1326507024, %v4690
        %v4706 = vor.u32 %v4704, %v4705
        %vm4707 = vcmp.lt.s32.totalorder %v4688, 1
        %vm4708 = vcmp.lt.s32.totalorder %v4688, 2
        %vm4709 = vcmp.lt.s32.totalorder %v4688, 3
        %vm4710 = vcmp.lt.s32.totalorder %v4688, 4
        %v4711 = vsel %vm4707, %v4691, %v4694
        %v4712 = vsel %vm4710, %v4700, 2102212464
        %v4713 = vsel %vm4709, %v4697, %v4712
        %v4714 = vsel %vm4708, %v4711, %v4713
        %v4715 = vsel %vm4707, %v4694, %v4697
        %v4716 = vsel %vm4710, %v4703, 920167782
        %v4717 = vsel %vm4709, %v4700, %v4716
        %v4718 = vsel %vm4708, %v4715, %v4717
        %v4719 = vsel %vm4707, %v4697, %v4700
        %v4720 = vsel %vm4710, %v4706, 1326507024
        %v4721 = vsel %vm4709, %v4703, %v4720
        %v4722 = vsel %vm4708, %v4719, %v4721
        %v4723 = vshll.u32 %v4683, 8
        %v4724 = vmul.u32.u64.compose %v4723, %v4722
        %v4725 = vextract.low.u32 %v4724
        %v4726 = vextract.high.u32 %v4724
        %v4727 = vmul.u32.u64.compose %v4723, %v4718
        %v4728 = vextract.low.u32 %v4727
        %v4729 = vextract.high.u32 %v4727
        %v4730 = vmul.u32 %v4723, %v4714
        %v4731 = vadd.s32 %v4726, %v4728
        %vm4732 = vc.u32 %v4726, %v4728
        %v4733 = vadd.s32 %v4729, 1
        %v4734 = vsel %vm4732, %v4733, %v4729
        %v4735 = vadd.s32 %v4730, %v4734
        %v4736 = vadd.s32 %v4735, 536870912
        %v4737 = vshrl.u32 %v4736, 30
        %v4738 = vshll.u32 %v4737, 30
        %v4739 = vsub.s32 %v4735, %v4738
        %vm4740 = vcmp.lt.s32.totalorder %v4739, 0
        %v4741 = vsub.s32 0, %v4739
        %v4742 = vsel %vm4740, %v4741, %v4739
        %v4743 = vclz %v4742
        %v4744 = vsub.s32 %v4743, 2
        %vm4745 = vcmp.gt.s32.totalorder 0, %v4744
        %v4746 = vsel %vm4745, 0, %v4744
        %v4747 = vsub.s32 32, %v4746
        %v4748 = vshll.u32 %v4739, %v4746
        %v4749 = vshrl.u32 %v4731, %v4747
        %v4750 = vor.u32 %v4748, %v4749
        %v4751 = vsub.s32 4294967266, %v4746
        %v4752 = vadd.s32 %v4751, 127
        %v4753 = vshll.u32 %v4752, 23
        %v4754 = vor.u32 4788187, %v4753
        %v4755 = vand.u32 2147483647, %v4754
        %v4757 = vcvt.s32.f32 %v4750
        %v4758 = vmul.f32 %v4757, %v4755
        %v4759 = vxor.u32 %v4758, 2147483648
        %v4760 = vsel %vm4677, %v4759, %v4758
        %v4761 = vsub.s32 4, %v4737
        %v4762 = vsel %vm4677, %v4761, %v4737
        %v4763 = vsel %vm4676, %v308, %v4760
        %v4764 = vsel %vm4676, 0, %v4762
        %v4765 = vcosq.f32.pop %v4763
        %v4766 = vsinq.f32.pop %v4763
        %vm4767 = vweird.f32 %v308
        %v4768 = vadd.s32 %v4764, 3
        %v4769 = vand.u32 %v4768, 3
        %vm4770 = vcmp.lt.s32.totalorder %v4769, 2
        %vm4771 = vcmp.eq.s32.totalorder %v4769, 0
        %v4772 = vxor.u32 %v4766, 2147483648
        %v4773 = vsel %vm4771, %v4765, %v4772
        %vm4774 = vcmp.eq.s32.totalorder %v4769, 2
        %v4775 = vxor.u32 %v4765, 2147483648
        %v4776 = vsel %vm4774, %v4775, %v4766
        %v4777 = vsel %vm4770, %v4773, %v4776
        %v4778 = vsel %vm4767, nan, %v4777
        %v4779 = vand.u32 2147483647, %v309
        %vm4780 = vcmp.le.f32.partialorder %v4779, 0.7853982
        %vm4781 = vcmp.lt.s32.totalorder %v309, 0
        %v4782 = vand.u32 %v309, 2139095040
        %v4783 = vshrl.u32 %v4782, 23
        %v4784 = vsub.s32 %v4783, 127
        %v4785 = vand.u32 2147483647, %v309
        %v4786 = vand.u32 %v4785, 8388607
        %v4787 = vor.u32 %v4786, 8388608
        %v4788 = vsub.s32 0, %v4787
        %v4789 = vadd.s32 %v4784, 1
        %vm4790 = vcmp.gt.s32.totalorder %v4789, 0
        %v4791 = vsel %vm4790, %v4789, 0
        %v4792 = vshrl.u32 %v4791, 5
        %v4793 = vand.u32 %v4791, 31
        %v4794 = vsub.s32 32, %v4793
        %v4795 = vshrl.u32 683565275, %v4794
        %v4796 = vshll.u32 683565275, %v4793
        %v4797 = vshrl.u32 2475754826, %v4794
        %v4798 = vor.u32 %v4796, %v4797
        %v4799 = vshll.u32 2475754826, %v4793
        %v4800 = vshrl.u32 2131351028, %v4794
        %v4801 = vor.u32 %v4799, %v4800
        %v4802 = vshll.u32 2131351028, %v4793
        %v4803 = vshrl.u32 2102212464, %v4794
        %v4804 = vor.u32 %v4802, %v4803
        %v4805 = vshll.u32 2102212464, %v4793
        %v4806 = vshrl.u32 920167782, %v4794
        %v4807 = vor.u32 %v4805, %v4806
        %v4808 = vshll.u32 920167782, %v4793
        %v4809 = vshrl.u32 1326507024, %v4794
        %v4810 = vor.u32 %v4808, %v4809
        %vm4811 = vcmp.lt.s32.totalorder %v4792, 1
        %vm4812 = vcmp.lt.s32.totalorder %v4792, 2
        %vm4813 = vcmp.lt.s32.totalorder %v4792, 3
        %vm4814 = vcmp.lt.s32.totalorder %v4792, 4
        %v4815 = vsel %vm4811, %v4795, %v4798
        %v4816 = vsel %vm4814, %v4804, 2102212464
        %v4817 = vsel %vm4813, %v4801, %v4816
        %v4818 = vsel %vm4812, %v4815, %v4817
        %v4819 = vsel %vm4811, %v4798, %v4801
        %v4820 = vsel %vm4814, %v4807, 920167782
        %v4821 = vsel %vm4813, %v4804, %v4820
        %v4822 = vsel %vm4812, %v4819, %v4821
        %v4823 = vsel %vm4811, %v4801, %v4804
        %v4824 = vsel %vm4814, %v4810, 1326507024
        %v4825 = vsel %vm4813, %v4807, %v4824
        %v4826 = vsel %vm4812, %v4823, %v4825
        %v4827 = vshll.u32 %v4787, 8
        %v4828 = vmul.u32.u64.compose %v4827, %v4826
        %v4829 = vextract.low.u32 %v4828
        %v4830 = vextract.high.u32 %v4828
        %v4831 = vmul.u32.u64.compose %v4827, %v4822
        %v4832 = vextract.low.u32 %v4831
        %v4833 = vextract.high.u32 %v4831
        %v4834 = vmul.u32 %v4827, %v4818
        %v4835 = vadd.s32 %v4830, %v4832
        %vm4836 = vc.u32 %v4830, %v4832
        %v4837 = vadd.s32 %v4833, 1
        %v4838 = vsel %vm4836, %v4837, %v4833
        %v4839 = vadd.s32 %v4834, %v4838
        %v4840 = vadd.s32 %v4839, 536870912
        %v4841 = vshrl.u32 %v4840, 30
        %v4842 = vshll.u32 %v4841, 30
        %v4843 = vsub.s32 %v4839, %v4842
        %vm4844 = vcmp.lt.s32.totalorder %v4843, 0
        %v4845 = vsub.s32 0, %v4843
        %v4846 = vsel %vm4844, %v4845, %v4843
        %v4847 = vclz %v4846
        %v4848 = vsub.s32 %v4847, 2
        %vm4849 = vcmp.gt.s32.totalorder 0, %v4848
        %v4850 = vsel %vm4849, 0, %v4848
        %v4851 = vsub.s32 32, %v4850
        %v4852 = vshll.u32 %v4843, %v4850
        %v4853 = vshrl.u32 %v4835, %v4851
        %v4854 = vor.u32 %v4852, %v4853
        %v4855 = vsub.s32 4294967266, %v4850
        %v4856 = vadd.s32 %v4855, 127
        %v4857 = vshll.u32 %v4856, 23
        %v4858 = vor.u32 4788187, %v4857
        %v4859 = vand.u32 2147483647, %v4858
        %v4861 = vcvt.s32.f32 %v4854
        %v4862 = vmul.f32 %v4861, %v4859
        %v4863 = vxor.u32 %v4862, 2147483648
        %v4864 = vsel %vm4781, %v4863, %v4862
        %v4865 = vsub.s32 4, %v4841
        %v4866 = vsel %vm4781, %v4865, %v4841
        %v4867 = vsel %vm4780, %v309, %v4864
        %v4868 = vsel %vm4780, 0, %v4866
        %v4869 = vcosq.f32.pop %v4867
        %v4870 = vsinq.f32.pop %v4867
        %vm4871 = vweird.f32 %v309
        %v4872 = vadd.s32 %v4868, 3
        %v4873 = vand.u32 %v4872, 3
        %vm4874 = vcmp.lt.s32.totalorder %v4873, 2
        %vm4875 = vcmp.eq.s32.totalorder %v4873, 0
        %v4876 = vxor.u32 %v4870, 2147483648
        %v4877 = vsel %vm4875, %v4869, %v4876
        %vm4878 = vcmp.eq.s32.totalorder %v4873, 2
        %v4879 = vxor.u32 %v4869, 2147483648
        %v4880 = vsel %vm4878, %v4879, %v4870
        %v4881 = vsel %vm4874, %v4877, %v4880
        %v4882 = vsel %vm4871, nan, %v4881
        %v4883 = vand.u32 2147483647, %v310
        %vm4884 = vcmp.le.f32.partialorder %v4883, 0.7853982
        %vm4885 = vcmp.lt.s32.totalorder %v310, 0
        %v4886 = vand.u32 %v310, 2139095040
        %v4887 = vshrl.u32 %v4886, 23
        %v4888 = vsub.s32 %v4887, 127
        %v4889 = vand.u32 2147483647, %v310
        %v4890 = vand.u32 %v4889, 8388607
        %v4891 = vor.u32 %v4890, 8388608
        %v4892 = vsub.s32 0, %v4891
        %v4893 = vadd.s32 %v4888, 1
        %vm4894 = vcmp.gt.s32.totalorder %v4893, 0
        %v4895 = vsel %vm4894, %v4893, 0
        %v4896 = vshrl.u32 %v4895, 5
        %v4897 = vand.u32 %v4895, 31
        %v4898 = vsub.s32 32, %v4897
        %v4899 = vshrl.u32 683565275, %v4898
        %v4900 = vshll.u32 683565275, %v4897
        %v4901 = vshrl.u32 2475754826, %v4898
        %v4902 = vor.u32 %v4900, %v4901
        %v4903 = vshll.u32 2475754826, %v4897
        %v4904 = vshrl.u32 2131351028, %v4898
        %v4905 = vor.u32 %v4903, %v4904
        %v4906 = vshll.u32 2131351028, %v4897
        %v4907 = vshrl.u32 2102212464, %v4898
        %v4908 = vor.u32 %v4906, %v4907
        %v4909 = vshll.u32 2102212464, %v4897
        %v4910 = vshrl.u32 920167782, %v4898
        %v4911 = vor.u32 %v4909, %v4910
        %v4912 = vshll.u32 920167782, %v4897
        %v4913 = vshrl.u32 1326507024, %v4898
        %v4914 = vor.u32 %v4912, %v4913
        %vm4915 = vcmp.lt.s32.totalorder %v4896, 1
        %vm4916 = vcmp.lt.s32.totalorder %v4896, 2
        %vm4917 = vcmp.lt.s32.totalorder %v4896, 3
        %vm4918 = vcmp.lt.s32.totalorder %v4896, 4
        %v4919 = vsel %vm4915, %v4899, %v4902
        %v4920 = vsel %vm4918, %v4908, 2102212464
        %v4921 = vsel %vm4917, %v4905, %v4920
        %v4922 = vsel %vm4916, %v4919, %v4921
        %v4923 = vsel %vm4915, %v4902, %v4905
        %v4924 = vsel %vm4918, %v4911, 920167782
        %v4925 = vsel %vm4917, %v4908, %v4924
        %v4926 = vsel %vm4916, %v4923, %v4925
        %v4927 = vsel %vm4915, %v4905, %v4908
        %v4928 = vsel %vm4918, %v4914, 1326507024
        %v4929 = vsel %vm4917, %v4911, %v4928
        %v4930 = vsel %vm4916, %v4927, %v4929
        %v4931 = vshll.u32 %v4891, 8
        %v4932 = vmul.u32.u64.compose %v4931, %v4930
        %v4933 = vextract.low.u32 %v4932
        %v4934 = vextract.high.u32 %v4932
        %v4935 = vmul.u32.u64.compose %v4931, %v4926
        %v4936 = vextract.low.u32 %v4935
        %v4937 = vextract.high.u32 %v4935
        %v4938 = vmul.u32 %v4931, %v4922
        %v4939 = vadd.s32 %v4934, %v4936
        %vm4940 = vc.u32 %v4934, %v4936
        %v4941 = vadd.s32 %v4937, 1
        %v4942 = vsel %vm4940, %v4941, %v4937
        %v4943 = vadd.s32 %v4938, %v4942
        %v4944 = vadd.s32 %v4943, 536870912
        %v4945 = vshrl.u32 %v4944, 30
        %v4946 = vshll.u32 %v4945, 30
        %v4947 = vsub.s32 %v4943, %v4946
        %vm4948 = vcmp.lt.s32.totalorder %v4947, 0
        %v4949 = vsub.s32 0, %v4947
        %v4950 = vsel %vm4948, %v4949, %v4947
        %v4951 = vclz %v4950
        %v4952 = vsub.s32 %v4951, 2
        %vm4953 = vcmp.gt.s32.totalorder 0, %v4952
        %v4954 = vsel %vm4953, 0, %v4952
        %v4955 = vsub.s32 32, %v4954
        %v4956 = vshll.u32 %v4947, %v4954
        %v4957 = vshrl.u32 %v4939, %v4955
        %v4958 = vor.u32 %v4956, %v4957
        %v4959 = vsub.s32 4294967266, %v4954
        %v4960 = vadd.s32 %v4959, 127
        %v4961 = vshll.u32 %v4960, 23
        %v4962 = vor.u32 4788187, %v4961
        %v4963 = vand.u32 2147483647, %v4962
        %v4965 = vcvt.s32.f32 %v4958
        %v4966 = vmul.f32 %v4965, %v4963
        %v4967 = vxor.u32 %v4966, 2147483648
        %v4968 = vsel %vm4885, %v4967, %v4966
        %v4969 = vsub.s32 4, %v4945
        %v4970 = vsel %vm4885, %v4969, %v4945
        %v4971 = vsel %vm4884, %v310, %v4968
        %v4972 = vsel %vm4884, 0, %v4970
        %v4973 = vcosq.f32.pop %v4971
        %v4974 = vsinq.f32.pop %v4971
        %vm4975 = vweird.f32 %v310
        %v4976 = vadd.s32 %v4972, 3
        %v4977 = vand.u32 %v4976, 3
        %vm4978 = vcmp.lt.s32.totalorder %v4977, 2
        %vm4979 = vcmp.eq.s32.totalorder %v4977, 0
        %v4980 = vxor.u32 %v4974, 2147483648
        %v4981 = vsel %vm4979, %v4973, %v4980
        %vm4982 = vcmp.eq.s32.totalorder %v4977, 2
        %v4983 = vxor.u32 %v4973, 2147483648
        %v4984 = vsel %vm4982, %v4983, %v4974
        %v4985 = vsel %vm4978, %v4981, %v4984
        %v4986 = vsel %vm4975, nan, %v4985
        %v4987 = vand.u32 2147483647, %v311
        %vm4988 = vcmp.le.f32.partialorder %v4987, 0.7853982
        %vm4989 = vcmp.lt.s32.totalorder %v311, 0
        %v4990 = vand.u32 %v311, 2139095040
        %v4991 = vshrl.u32 %v4990, 23
        %v4992 = vsub.s32 %v4991, 127
        %v4993 = vand.u32 2147483647, %v311
        %v4994 = vand.u32 %v4993, 8388607
        %v4995 = vor.u32 %v4994, 8388608
        %v4996 = vsub.s32 0, %v4995
        %v4997 = vadd.s32 %v4992, 1
        %vm4998 = vcmp.gt.s32.totalorder %v4997, 0
        %v4999 = vsel %vm4998, %v4997, 0
        %v5000 = vshrl.u32 %v4999, 5
        %v5001 = vand.u32 %v4999, 31
        %v5002 = vsub.s32 32, %v5001
        %v5003 = vshrl.u32 683565275, %v5002
        %v5004 = vshll.u32 683565275, %v5001
        %v5005 = vshrl.u32 2475754826, %v5002
        %v5006 = vor.u32 %v5004, %v5005
        %v5007 = vshll.u32 2475754826, %v5001
        %v5008 = vshrl.u32 2131351028, %v5002
        %v5009 = vor.u32 %v5007, %v5008
        %v5010 = vshll.u32 2131351028, %v5001
        %v5011 = vshrl.u32 2102212464, %v5002
        %v5012 = vor.u32 %v5010, %v5011
        %v5013 = vshll.u32 2102212464, %v5001
        %v5014 = vshrl.u32 920167782, %v5002
        %v5015 = vor.u32 %v5013, %v5014
        %v5016 = vshll.u32 920167782, %v5001
        %v5017 = vshrl.u32 1326507024, %v5002
        %v5018 = vor.u32 %v5016, %v5017
        %vm5019 = vcmp.lt.s32.totalorder %v5000, 1
        %vm5020 = vcmp.lt.s32.totalorder %v5000, 2
        %vm5021 = vcmp.lt.s32.totalorder %v5000, 3
        %vm5022 = vcmp.lt.s32.totalorder %v5000, 4
        %v5023 = vsel %vm5019, %v5003, %v5006
        %v5024 = vsel %vm5022, %v5012, 2102212464
        %v5025 = vsel %vm5021, %v5009, %v5024
        %v5026 = vsel %vm5020, %v5023, %v5025
        %v5027 = vsel %vm5019, %v5006, %v5009
        %v5028 = vsel %vm5022, %v5015, 920167782
        %v5029 = vsel %vm5021, %v5012, %v5028
        %v5030 = vsel %vm5020, %v5027, %v5029
        %v5031 = vsel %vm5019, %v5009, %v5012
        %v5032 = vsel %vm5022, %v5018, 1326507024
        %v5033 = vsel %vm5021, %v5015, %v5032
        %v5034 = vsel %vm5020, %v5031, %v5033
        %v5035 = vshll.u32 %v4995, 8
        %v5036 = vmul.u32.u64.compose %v5035, %v5034
        %v5037 = vextract.low.u32 %v5036
        %v5038 = vextract.high.u32 %v5036
        %v5039 = vmul.u32.u64.compose %v5035, %v5030
        %v5040 = vextract.low.u32 %v5039
        %v5041 = vextract.high.u32 %v5039
        %v5042 = vmul.u32 %v5035, %v5026
        %v5043 = vadd.s32 %v5038, %v5040
        %vm5044 = vc.u32 %v5038, %v5040
        %v5045 = vadd.s32 %v5041, 1
        %v5046 = vsel %vm5044, %v5045, %v5041
        %v5047 = vadd.s32 %v5042, %v5046
        %v5048 = vadd.s32 %v5047, 536870912
        %v5049 = vshrl.u32 %v5048, 30
        %v5050 = vshll.u32 %v5049, 30
        %v5051 = vsub.s32 %v5047, %v5050
        %vm5052 = vcmp.lt.s32.totalorder %v5051, 0
        %v5053 = vsub.s32 0, %v5051
        %v5054 = vsel %vm5052, %v5053, %v5051
        %v5055 = vclz %v5054
        %v5056 = vsub.s32 %v5055, 2
        %vm5057 = vcmp.gt.s32.totalorder 0, %v5056
        %v5058 = vsel %vm5057, 0, %v5056
        %v5059 = vsub.s32 32, %v5058
        %v5060 = vshll.u32 %v5051, %v5058
        %v5061 = vshrl.u32 %v5043, %v5059
        %v5062 = vor.u32 %v5060, %v5061
        %v5063 = vsub.s32 4294967266, %v5058
        %v5064 = vadd.s32 %v5063, 127
        %v5065 = vshll.u32 %v5064, 23
        %v5066 = vor.u32 4788187, %v5065
        %v5067 = vand.u32 2147483647, %v5066
        %v5069 = vcvt.s32.f32 %v5062
        %v5070 = vmul.f32 %v5069, %v5067
        %v5071 = vxor.u32 %v5070, 2147483648
        %v5072 = vsel %vm4989, %v5071, %v5070
        %v5073 = vsub.s32 4, %v5049
        %v5074 = vsel %vm4989, %v5073, %v5049
        %v5075 = vsel %vm4988, %v311, %v5072
        %v5076 = vsel %vm4988, 0, %v5074
        %v5077 = vcosq.f32.pop %v5075
        %v5078 = vsinq.f32.pop %v5075
        %vm5079 = vweird.f32 %v311
        %v5080 = vadd.s32 %v5076, 3
        %v5081 = vand.u32 %v5080, 3
        %vm5082 = vcmp.lt.s32.totalorder %v5081, 2
        %vm5083 = vcmp.eq.s32.totalorder %v5081, 0
        %v5084 = vxor.u32 %v5078, 2147483648
        %v5085 = vsel %vm5083, %v5077, %v5084
        %vm5086 = vcmp.eq.s32.totalorder %v5081, 2
        %v5087 = vxor.u32 %v5077, 2147483648
        %v5088 = vsel %vm5086, %v5087, %v5078
        %v5089 = vsel %vm5082, %v5085, %v5088
        %v5090 = vsel %vm5079, nan, %v5089
        %v5091 = vand.u32 2147483647, %v312
        %vm5092 = vcmp.le.f32.partialorder %v5091, 0.7853982
        %vm5093 = vcmp.lt.s32.totalorder %v312, 0
        %v5094 = vand.u32 %v312, 2139095040
        %v5095 = vshrl.u32 %v5094, 23
        %v5096 = vsub.s32 %v5095, 127
        %v5097 = vand.u32 2147483647, %v312
        %v5098 = vand.u32 %v5097, 8388607
        %v5099 = vor.u32 %v5098, 8388608
        %v5100 = vsub.s32 0, %v5099
        %v5101 = vadd.s32 %v5096, 1
        %vm5102 = vcmp.gt.s32.totalorder %v5101, 0
        %v5103 = vsel %vm5102, %v5101, 0
        %v5104 = vshrl.u32 %v5103, 5
        %v5105 = vand.u32 %v5103, 31
        %v5106 = vsub.s32 32, %v5105
        %v5107 = vshrl.u32 683565275, %v5106
        %v5108 = vshll.u32 683565275, %v5105
        %v5109 = vshrl.u32 2475754826, %v5106
        %v5110 = vor.u32 %v5108, %v5109
        %v5111 = vshll.u32 2475754826, %v5105
        %v5112 = vshrl.u32 2131351028, %v5106
        %v5113 = vor.u32 %v5111, %v5112
        %v5114 = vshll.u32 2131351028, %v5105
        %v5115 = vshrl.u32 2102212464, %v5106
        %v5116 = vor.u32 %v5114, %v5115
        %v5117 = vshll.u32 2102212464, %v5105
        %v5118 = vshrl.u32 920167782, %v5106
        %v5119 = vor.u32 %v5117, %v5118
        %v5120 = vshll.u32 920167782, %v5105
        %v5121 = vshrl.u32 1326507024, %v5106
        %v5122 = vor.u32 %v5120, %v5121
        %vm5123 = vcmp.lt.s32.totalorder %v5104, 1
        %vm5124 = vcmp.lt.s32.totalorder %v5104, 2
        %vm5125 = vcmp.lt.s32.totalorder %v5104, 3
        %vm5126 = vcmp.lt.s32.totalorder %v5104, 4
        %v5127 = vsel %vm5123, %v5107, %v5110
        %v5128 = vsel %vm5126, %v5116, 2102212464
        %v5129 = vsel %vm5125, %v5113, %v5128
        %v5130 = vsel %vm5124, %v5127, %v5129
        %v5131 = vsel %vm5123, %v5110, %v5113
        %v5132 = vsel %vm5126, %v5119, 920167782
        %v5133 = vsel %vm5125, %v5116, %v5132
        %v5134 = vsel %vm5124, %v5131, %v5133
        %v5135 = vsel %vm5123, %v5113, %v5116
        %v5136 = vsel %vm5126, %v5122, 1326507024
        %v5137 = vsel %vm5125, %v5119, %v5136
        %v5138 = vsel %vm5124, %v5135, %v5137
        %v5139 = vshll.u32 %v5099, 8
        %v5140 = vmul.u32.u64.compose %v5139, %v5138
        %v5141 = vextract.low.u32 %v5140
        %v5142 = vextract.high.u32 %v5140
        %v5143 = vmul.u32.u64.compose %v5139, %v5134
        %v5144 = vextract.low.u32 %v5143
        %v5145 = vextract.high.u32 %v5143
        %v5146 = vmul.u32 %v5139, %v5130
        %v5147 = vadd.s32 %v5142, %v5144
        %vm5148 = vc.u32 %v5142, %v5144
        %v5149 = vadd.s32 %v5145, 1
        %v5150 = vsel %vm5148, %v5149, %v5145
        %v5151 = vadd.s32 %v5146, %v5150
        %v5152 = vadd.s32 %v5151, 536870912
        %v5153 = vshrl.u32 %v5152, 30
        %v5154 = vshll.u32 %v5153, 30
        %v5155 = vsub.s32 %v5151, %v5154
        %vm5156 = vcmp.lt.s32.totalorder %v5155, 0
        %v5157 = vsub.s32 0, %v5155
        %v5158 = vsel %vm5156, %v5157, %v5155
        %v5159 = vclz %v5158
        %v5160 = vsub.s32 %v5159, 2
        %vm5161 = vcmp.gt.s32.totalorder 0, %v5160
        %v5162 = vsel %vm5161, 0, %v5160
        %v5163 = vsub.s32 32, %v5162
        %v5164 = vshll.u32 %v5155, %v5162
        %v5165 = vshrl.u32 %v5147, %v5163
        %v5166 = vor.u32 %v5164, %v5165
        %v5167 = vsub.s32 4294967266, %v5162
        %v5168 = vadd.s32 %v5167, 127
        %v5169 = vshll.u32 %v5168, 23
        %v5170 = vor.u32 4788187, %v5169
        %v5171 = vand.u32 2147483647, %v5170
        %v5173 = vcvt.s32.f32 %v5166
        %v5174 = vmul.f32 %v5173, %v5171
        %v5175 = vxor.u32 %v5174, 2147483648
        %v5176 = vsel %vm5093, %v5175, %v5174
        %v5177 = vsub.s32 4, %v5153
        %v5178 = vsel %vm5093, %v5177, %v5153
        %v5179 = vsel %vm5092, %v312, %v5176
        %v5180 = vsel %vm5092, 0, %v5178
        %v5181 = vcosq.f32.pop %v5179
        %v5182 = vsinq.f32.pop %v5179
        %vm5183 = vweird.f32 %v312
        %v5184 = vadd.s32 %v5180, 3
        %v5185 = vand.u32 %v5184, 3
        %vm5186 = vcmp.lt.s32.totalorder %v5185, 2
        %vm5187 = vcmp.eq.s32.totalorder %v5185, 0
        %v5188 = vxor.u32 %v5182, 2147483648
        %v5189 = vsel %vm5187, %v5181, %v5188
        %vm5190 = vcmp.eq.s32.totalorder %v5185, 2
        %v5191 = vxor.u32 %v5181, 2147483648
        %v5192 = vsel %vm5190, %v5191, %v5182
        %v5193 = vsel %vm5186, %v5189, %v5192
        %v5194 = vsel %vm5183, nan, %v5193
        %v5195 = vand.u32 2147483647, %v313
        %vm5196 = vcmp.le.f32.partialorder %v5195, 0.7853982
        %vm5197 = vcmp.lt.s32.totalorder %v313, 0
        %v5198 = vand.u32 %v313, 2139095040
        %v5199 = vshrl.u32 %v5198, 23
        %v5200 = vsub.s32 %v5199, 127
        %v5201 = vand.u32 2147483647, %v313
        %v5202 = vand.u32 %v5201, 8388607
        %v5203 = vor.u32 %v5202, 8388608
        %v5204 = vsub.s32 0, %v5203
        %v5205 = vadd.s32 %v5200, 1
        %vm5206 = vcmp.gt.s32.totalorder %v5205, 0
        %v5207 = vsel %vm5206, %v5205, 0
        %v5208 = vshrl.u32 %v5207, 5
        %v5209 = vand.u32 %v5207, 31
        %v5210 = vsub.s32 32, %v5209
        %v5211 = vshrl.u32 683565275, %v5210
        %v5212 = vshll.u32 683565275, %v5209
        %v5213 = vshrl.u32 2475754826, %v5210
        %v5214 = vor.u32 %v5212, %v5213
        %v5215 = vshll.u32 2475754826, %v5209
        %v5216 = vshrl.u32 2131351028, %v5210
        %v5217 = vor.u32 %v5215, %v5216
        %v5218 = vshll.u32 2131351028, %v5209
        %v5219 = vshrl.u32 2102212464, %v5210
        %v5220 = vor.u32 %v5218, %v5219
        %v5221 = vshll.u32 2102212464, %v5209
        %v5222 = vshrl.u32 920167782, %v5210
        %v5223 = vor.u32 %v5221, %v5222
        %v5224 = vshll.u32 920167782, %v5209
        %v5225 = vshrl.u32 1326507024, %v5210
        %v5226 = vor.u32 %v5224, %v5225
        %vm5227 = vcmp.lt.s32.totalorder %v5208, 1
        %vm5228 = vcmp.lt.s32.totalorder %v5208, 2
        %vm5229 = vcmp.lt.s32.totalorder %v5208, 3
        %vm5230 = vcmp.lt.s32.totalorder %v5208, 4
        %v5231 = vsel %vm5227, %v5211, %v5214
        %v5232 = vsel %vm5230, %v5220, 2102212464
        %v5233 = vsel %vm5229, %v5217, %v5232
        %v5234 = vsel %vm5228, %v5231, %v5233
        %v5235 = vsel %vm5227, %v5214, %v5217
        %v5236 = vsel %vm5230, %v5223, 920167782
        %v5237 = vsel %vm5229, %v5220, %v5236
        %v5238 = vsel %vm5228, %v5235, %v5237
        %v5239 = vsel %vm5227, %v5217, %v5220
        %v5240 = vsel %vm5230, %v5226, 1326507024
        %v5241 = vsel %vm5229, %v5223, %v5240
        %v5242 = vsel %vm5228, %v5239, %v5241
        %v5243 = vshll.u32 %v5203, 8
        %v5244 = vmul.u32.u64.compose %v5243, %v5242
        %v5245 = vextract.low.u32 %v5244
        %v5246 = vextract.high.u32 %v5244
        %v5247 = vmul.u32.u64.compose %v5243, %v5238
        %v5248 = vextract.low.u32 %v5247
        %v5249 = vextract.high.u32 %v5247
        %v5250 = vmul.u32 %v5243, %v5234
        %v5251 = vadd.s32 %v5246, %v5248
        %vm5252 = vc.u32 %v5246, %v5248
        %v5253 = vadd.s32 %v5249, 1
        %v5254 = vsel %vm5252, %v5253, %v5249
        %v5255 = vadd.s32 %v5250, %v5254
        %v5256 = vadd.s32 %v5255, 536870912
        %v5257 = vshrl.u32 %v5256, 30
        %v5258 = vshll.u32 %v5257, 30
        %v5259 = vsub.s32 %v5255, %v5258
        %vm5260 = vcmp.lt.s32.totalorder %v5259, 0
        %v5261 = vsub.s32 0, %v5259
        %v5262 = vsel %vm5260, %v5261, %v5259
        %v5263 = vclz %v5262
        %v5264 = vsub.s32 %v5263, 2
        %vm5265 = vcmp.gt.s32.totalorder 0, %v5264
        %v5266 = vsel %vm5265, 0, %v5264
        %v5267 = vsub.s32 32, %v5266
        %v5268 = vshll.u32 %v5259, %v5266
        %v5269 = vshrl.u32 %v5251, %v5267
        %v5270 = vor.u32 %v5268, %v5269
        %v5271 = vsub.s32 4294967266, %v5266
        %v5272 = vadd.s32 %v5271, 127
        %v5273 = vshll.u32 %v5272, 23
        %v5274 = vor.u32 4788187, %v5273
        %v5275 = vand.u32 2147483647, %v5274
        %v5277 = vcvt.s32.f32 %v5270
        %v5278 = vmul.f32 %v5277, %v5275
        %v5279 = vxor.u32 %v5278, 2147483648
        %v5280 = vsel %vm5197, %v5279, %v5278
        %v5281 = vsub.s32 4, %v5257
        %v5282 = vsel %vm5197, %v5281, %v5257
        %v5283 = vsel %vm5196, %v313, %v5280
        %v5284 = vsel %vm5196, 0, %v5282
        %v5285 = vcosq.f32.pop %v5283
        %v5286 = vsinq.f32.pop %v5283
        %vm5287 = vweird.f32 %v313
        %v5288 = vadd.s32 %v5284, 3
        %v5289 = vand.u32 %v5288, 3
        %vm5290 = vcmp.lt.s32.totalorder %v5289, 2
        %vm5291 = vcmp.eq.s32.totalorder %v5289, 0
        %v5292 = vxor.u32 %v5286, 2147483648
        %v5293 = vsel %vm5291, %v5285, %v5292
        %vm5294 = vcmp.eq.s32.totalorder %v5289, 2
        %v5295 = vxor.u32 %v5285, 2147483648
        %v5296 = vsel %vm5294, %v5295, %v5286
        %v5297 = vsel %vm5290, %v5293, %v5296
        %v5298 = vsel %vm5287, nan, %v5297
        %v5299 = vand.u32 2147483647, %v314
        %vm5300 = vcmp.le.f32.partialorder %v5299, 0.7853982
        %vm5301 = vcmp.lt.s32.totalorder %v314, 0
        %v5302 = vand.u32 %v314, 2139095040
        %v5303 = vshrl.u32 %v5302, 23
        %v5304 = vsub.s32 %v5303, 127
        %v5305 = vand.u32 2147483647, %v314
        %v5306 = vand.u32 %v5305, 8388607
        %v5307 = vor.u32 %v5306, 8388608
        %v5308 = vsub.s32 0, %v5307
        %v5309 = vadd.s32 %v5304, 1
        %vm5310 = vcmp.gt.s32.totalorder %v5309, 0
        %v5311 = vsel %vm5310, %v5309, 0
        %v5312 = vshrl.u32 %v5311, 5
        %v5313 = vand.u32 %v5311, 31
        %v5314 = vsub.s32 32, %v5313
        %v5315 = vshrl.u32 683565275, %v5314
        %v5316 = vshll.u32 683565275, %v5313
        %v5317 = vshrl.u32 2475754826, %v5314
        %v5318 = vor.u32 %v5316, %v5317
        %v5319 = vshll.u32 2475754826, %v5313
        %v5320 = vshrl.u32 2131351028, %v5314
        %v5321 = vor.u32 %v5319, %v5320
        %v5322 = vshll.u32 2131351028, %v5313
        %v5323 = vshrl.u32 2102212464, %v5314
        %v5324 = vor.u32 %v5322, %v5323
        %v5325 = vshll.u32 2102212464, %v5313
        %v5326 = vshrl.u32 920167782, %v5314
        %v5327 = vor.u32 %v5325, %v5326
        %v5328 = vshll.u32 920167782, %v5313
        %v5329 = vshrl.u32 1326507024, %v5314
        %v5330 = vor.u32 %v5328, %v5329
        %vm5331 = vcmp.lt.s32.totalorder %v5312, 1
        %vm5332 = vcmp.lt.s32.totalorder %v5312, 2
        %vm5333 = vcmp.lt.s32.totalorder %v5312, 3
        %vm5334 = vcmp.lt.s32.totalorder %v5312, 4
        %v5335 = vsel %vm5331, %v5315, %v5318
        %v5336 = vsel %vm5334, %v5324, 2102212464
        %v5337 = vsel %vm5333, %v5321, %v5336
        %v5338 = vsel %vm5332, %v5335, %v5337
        %v5339 = vsel %vm5331, %v5318, %v5321
        %v5340 = vsel %vm5334, %v5327, 920167782
        %v5341 = vsel %vm5333, %v5324, %v5340
        %v5342 = vsel %vm5332, %v5339, %v5341
        %v5343 = vsel %vm5331, %v5321, %v5324
        %v5344 = vsel %vm5334, %v5330, 1326507024
        %v5345 = vsel %vm5333, %v5327, %v5344
        %v5346 = vsel %vm5332, %v5343, %v5345
        %v5347 = vshll.u32 %v5307, 8
        %v5348 = vmul.u32.u64.compose %v5347, %v5346
        %v5349 = vextract.low.u32 %v5348
        %v5350 = vextract.high.u32 %v5348
        %v5351 = vmul.u32.u64.compose %v5347, %v5342
        %v5352 = vextract.low.u32 %v5351
        %v5353 = vextract.high.u32 %v5351
        %v5354 = vmul.u32 %v5347, %v5338
        %v5355 = vadd.s32 %v5350, %v5352
        %vm5356 = vc.u32 %v5350, %v5352
        %v5357 = vadd.s32 %v5353, 1
        %v5358 = vsel %vm5356, %v5357, %v5353
        %v5359 = vadd.s32 %v5354, %v5358
        %v5360 = vadd.s32 %v5359, 536870912
        %v5361 = vshrl.u32 %v5360, 30
        %v5362 = vshll.u32 %v5361, 30
        %v5363 = vsub.s32 %v5359, %v5362
        %vm5364 = vcmp.lt.s32.totalorder %v5363, 0
        %v5365 = vsub.s32 0, %v5363
        %v5366 = vsel %vm5364, %v5365, %v5363
        %v5367 = vclz %v5366
        %v5368 = vsub.s32 %v5367, 2
        %vm5369 = vcmp.gt.s32.totalorder 0, %v5368
        %v5370 = vsel %vm5369, 0, %v5368
        %v5371 = vsub.s32 32, %v5370
        %v5372 = vshll.u32 %v5363, %v5370
        %v5373 = vshrl.u32 %v5355, %v5371
        %v5374 = vor.u32 %v5372, %v5373
        %v5375 = vsub.s32 4294967266, %v5370
        %v5376 = vadd.s32 %v5375, 127
        %v5377 = vshll.u32 %v5376, 23
        %v5378 = vor.u32 4788187, %v5377
        %v5379 = vand.u32 2147483647, %v5378
        %v5381 = vcvt.s32.f32 %v5374
        %v5382 = vmul.f32 %v5381, %v5379
        %v5383 = vxor.u32 %v5382, 2147483648
        %v5384 = vsel %vm5301, %v5383, %v5382
        %v5385 = vsub.s32 4, %v5361
        %v5386 = vsel %vm5301, %v5385, %v5361
        %v5387 = vsel %vm5300, %v314, %v5384
        %v5388 = vsel %vm5300, 0, %v5386
        %v5389 = vcosq.f32.pop %v5387
        %v5390 = vsinq.f32.pop %v5387
        %vm5391 = vweird.f32 %v314
        %v5392 = vadd.s32 %v5388, 3
        %v5393 = vand.u32 %v5392, 3
        %vm5394 = vcmp.lt.s32.totalorder %v5393, 2
        %vm5395 = vcmp.eq.s32.totalorder %v5393, 0
        %v5396 = vxor.u32 %v5390, 2147483648
        %v5397 = vsel %vm5395, %v5389, %v5396
        %vm5398 = vcmp.eq.s32.totalorder %v5393, 2
        %v5399 = vxor.u32 %v5389, 2147483648
        %v5400 = vsel %vm5398, %v5399, %v5390
        %v5401 = vsel %vm5394, %v5397, %v5400
        %v5402 = vsel %vm5391, nan, %v5401
        %v5403 = vand.u32 2147483647, %v315
        %vm5404 = vcmp.le.f32.partialorder %v5403, 0.7853982
        %vm5405 = vcmp.lt.s32.totalorder %v315, 0
        %v5406 = vand.u32 %v315, 2139095040
        %v5407 = vshrl.u32 %v5406, 23
        %v5408 = vsub.s32 %v5407, 127
        %v5409 = vand.u32 2147483647, %v315
        %v5410 = vand.u32 %v5409, 8388607
        %v5411 = vor.u32 %v5410, 8388608
        %v5412 = vsub.s32 0, %v5411
        %v5413 = vadd.s32 %v5408, 1
        %vm5414 = vcmp.gt.s32.totalorder %v5413, 0
        %v5415 = vsel %vm5414, %v5413, 0
        %v5416 = vshrl.u32 %v5415, 5
        %v5417 = vand.u32 %v5415, 31
        %v5418 = vsub.s32 32, %v5417
        %v5419 = vshrl.u32 683565275, %v5418
        %v5420 = vshll.u32 683565275, %v5417
        %v5421 = vshrl.u32 2475754826, %v5418
        %v5422 = vor.u32 %v5420, %v5421
        %v5423 = vshll.u32 2475754826, %v5417
        %v5424 = vshrl.u32 2131351028, %v5418
        %v5425 = vor.u32 %v5423, %v5424
        %v5426 = vshll.u32 2131351028, %v5417
        %v5427 = vshrl.u32 2102212464, %v5418
        %v5428 = vor.u32 %v5426, %v5427
        %v5429 = vshll.u32 2102212464, %v5417
        %v5430 = vshrl.u32 920167782, %v5418
        %v5431 = vor.u32 %v5429, %v5430
        %v5432 = vshll.u32 920167782, %v5417
        %v5433 = vshrl.u32 1326507024, %v5418
        %v5434 = vor.u32 %v5432, %v5433
        %vm5435 = vcmp.lt.s32.totalorder %v5416, 1
        %vm5436 = vcmp.lt.s32.totalorder %v5416, 2
        %vm5437 = vcmp.lt.s32.totalorder %v5416, 3
        %vm5438 = vcmp.lt.s32.totalorder %v5416, 4
        %v5439 = vsel %vm5435, %v5419, %v5422
        %v5440 = vsel %vm5438, %v5428, 2102212464
        %v5441 = vsel %vm5437, %v5425, %v5440
        %v5442 = vsel %vm5436, %v5439, %v5441
        %v5443 = vsel %vm5435, %v5422, %v5425
        %v5444 = vsel %vm5438, %v5431, 920167782
        %v5445 = vsel %vm5437, %v5428, %v5444
        %v5446 = vsel %vm5436, %v5443, %v5445
        %v5447 = vsel %vm5435, %v5425, %v5428
        %v5448 = vsel %vm5438, %v5434, 1326507024
        %v5449 = vsel %vm5437, %v5431, %v5448
        %v5450 = vsel %vm5436, %v5447, %v5449
        %v5451 = vshll.u32 %v5411, 8
        %v5452 = vmul.u32.u64.compose %v5451, %v5450
        %v5453 = vextract.low.u32 %v5452
        %v5454 = vextract.high.u32 %v5452
        %v5455 = vmul.u32.u64.compose %v5451, %v5446
        %v5456 = vextract.low.u32 %v5455
        %v5457 = vextract.high.u32 %v5455
        %v5458 = vmul.u32 %v5451, %v5442
        %v5459 = vadd.s32 %v5454, %v5456
        %vm5460 = vc.u32 %v5454, %v5456
        %v5461 = vadd.s32 %v5457, 1
        %v5462 = vsel %vm5460, %v5461, %v5457
        %v5463 = vadd.s32 %v5458, %v5462
        %v5464 = vadd.s32 %v5463, 536870912
        %v5465 = vshrl.u32 %v5464, 30
        %v5466 = vshll.u32 %v5465, 30
        %v5467 = vsub.s32 %v5463, %v5466
        %vm5468 = vcmp.lt.s32.totalorder %v5467, 0
        %v5469 = vsub.s32 0, %v5467
        %v5470 = vsel %vm5468, %v5469, %v5467
        %v5471 = vclz %v5470
        %v5472 = vsub.s32 %v5471, 2
        %vm5473 = vcmp.gt.s32.totalorder 0, %v5472
        %v5474 = vsel %vm5473, 0, %v5472
        %v5475 = vsub.s32 32, %v5474
        %v5476 = vshll.u32 %v5467, %v5474
        %v5477 = vshrl.u32 %v5459, %v5475
        %v5478 = vor.u32 %v5476, %v5477
        %v5479 = vsub.s32 4294967266, %v5474
        %v5480 = vadd.s32 %v5479, 127
        %v5481 = vshll.u32 %v5480, 23
        %v5482 = vor.u32 4788187, %v5481
        %v5483 = vand.u32 2147483647, %v5482
        %v5485 = vcvt.s32.f32 %v5478
        %v5486 = vmul.f32 %v5485, %v5483
        %v5487 = vxor.u32 %v5486, 2147483648
        %v5488 = vsel %vm5405, %v5487, %v5486
        %v5489 = vsub.s32 4, %v5465
        %v5490 = vsel %vm5405, %v5489, %v5465
        %v5491 = vsel %vm5404, %v315, %v5488
        %v5492 = vsel %vm5404, 0, %v5490
        %v5493 = vcosq.f32.pop %v5491
        %v5494 = vsinq.f32.pop %v5491
        %vm5495 = vweird.f32 %v315
        %v5496 = vadd.s32 %v5492, 3
        %v5497 = vand.u32 %v5496, 3
        %vm5498 = vcmp.lt.s32.totalorder %v5497, 2
        %vm5499 = vcmp.eq.s32.totalorder %v5497, 0
        %v5500 = vxor.u32 %v5494, 2147483648
        %v5501 = vsel %vm5499, %v5493, %v5500
        %vm5502 = vcmp.eq.s32.totalorder %v5497, 2
        %v5503 = vxor.u32 %v5493, 2147483648
        %v5504 = vsel %vm5502, %v5503, %v5494
        %v5505 = vsel %vm5498, %v5501, %v5504
        %v5506 = vsel %vm5495, nan, %v5505
        %v5507 = vand.u32 2147483647, %v316
        %vm5508 = vcmp.le.f32.partialorder %v5507, 0.7853982
        %vm5509 = vcmp.lt.s32.totalorder %v316, 0
        %v5510 = vand.u32 %v316, 2139095040
        %v5511 = vshrl.u32 %v5510, 23
        %v5512 = vsub.s32 %v5511, 127
        %v5513 = vand.u32 2147483647, %v316
        %v5514 = vand.u32 %v5513, 8388607
        %v5515 = vor.u32 %v5514, 8388608
        %v5516 = vsub.s32 0, %v5515
        %v5517 = vadd.s32 %v5512, 1
        %vm5518 = vcmp.gt.s32.totalorder %v5517, 0
        %v5519 = vsel %vm5518, %v5517, 0
        %v5520 = vshrl.u32 %v5519, 5
        %v5521 = vand.u32 %v5519, 31
        %v5522 = vsub.s32 32, %v5521
        %v5523 = vshrl.u32 683565275, %v5522
        %v5524 = vshll.u32 683565275, %v5521
        %v5525 = vshrl.u32 2475754826, %v5522
        %v5526 = vor.u32 %v5524, %v5525
        %v5527 = vshll.u32 2475754826, %v5521
        %v5528 = vshrl.u32 2131351028, %v5522
        %v5529 = vor.u32 %v5527, %v5528
        %v5530 = vshll.u32 2131351028, %v5521
        %v5531 = vshrl.u32 2102212464, %v5522
        %v5532 = vor.u32 %v5530, %v5531
        %v5533 = vshll.u32 2102212464, %v5521
        %v5534 = vshrl.u32 920167782, %v5522
        %v5535 = vor.u32 %v5533, %v5534
        %v5536 = vshll.u32 920167782, %v5521
        %v5537 = vshrl.u32 1326507024, %v5522
        %v5538 = vor.u32 %v5536, %v5537
        %vm5539 = vcmp.lt.s32.totalorder %v5520, 1
        %vm5540 = vcmp.lt.s32.totalorder %v5520, 2
        %vm5541 = vcmp.lt.s32.totalorder %v5520, 3
        %vm5542 = vcmp.lt.s32.totalorder %v5520, 4
        %v5543 = vsel %vm5539, %v5523, %v5526
        %v5544 = vsel %vm5542, %v5532, 2102212464
        %v5545 = vsel %vm5541, %v5529, %v5544
        %v5546 = vsel %vm5540, %v5543, %v5545
        %v5547 = vsel %vm5539, %v5526, %v5529
        %v5548 = vsel %vm5542, %v5535, 920167782
        %v5549 = vsel %vm5541, %v5532, %v5548
        %v5550 = vsel %vm5540, %v5547, %v5549
        %v5551 = vsel %vm5539, %v5529, %v5532
        %v5552 = vsel %vm5542, %v5538, 1326507024
        %v5553 = vsel %vm5541, %v5535, %v5552
        %v5554 = vsel %vm5540, %v5551, %v5553
        %v5555 = vshll.u32 %v5515, 8
        %v5556 = vmul.u32.u64.compose %v5555, %v5554
        %v5557 = vextract.low.u32 %v5556
        %v5558 = vextract.high.u32 %v5556
        %v5559 = vmul.u32.u64.compose %v5555, %v5550
        %v5560 = vextract.low.u32 %v5559
        %v5561 = vextract.high.u32 %v5559
        %v5562 = vmul.u32 %v5555, %v5546
        %v5563 = vadd.s32 %v5558, %v5560
        %vm5564 = vc.u32 %v5558, %v5560
        %v5565 = vadd.s32 %v5561, 1
        %v5566 = vsel %vm5564, %v5565, %v5561
        %v5567 = vadd.s32 %v5562, %v5566
        %v5568 = vadd.s32 %v5567, 536870912
        %v5569 = vshrl.u32 %v5568, 30
        %v5570 = vshll.u32 %v5569, 30
        %v5571 = vsub.s32 %v5567, %v5570
        %vm5572 = vcmp.lt.s32.totalorder %v5571, 0
        %v5573 = vsub.s32 0, %v5571
        %v5574 = vsel %vm5572, %v5573, %v5571
        %v5575 = vclz %v5574
        %v5576 = vsub.s32 %v5575, 2
        %vm5577 = vcmp.gt.s32.totalorder 0, %v5576
        %v5578 = vsel %vm5577, 0, %v5576
        %v5579 = vsub.s32 32, %v5578
        %v5580 = vshll.u32 %v5571, %v5578
        %v5581 = vshrl.u32 %v5563, %v5579
        %v5582 = vor.u32 %v5580, %v5581
        %v5583 = vsub.s32 4294967266, %v5578
        %v5584 = vadd.s32 %v5583, 127
        %v5585 = vshll.u32 %v5584, 23
        %v5586 = vor.u32 4788187, %v5585
        %v5587 = vand.u32 2147483647, %v5586
        %v5589 = vcvt.s32.f32 %v5582
        %v5590 = vmul.f32 %v5589, %v5587
        %v5591 = vxor.u32 %v5590, 2147483648
        %v5592 = vsel %vm5509, %v5591, %v5590
        %v5593 = vsub.s32 4, %v5569
        %v5594 = vsel %vm5509, %v5593, %v5569
        %v5595 = vsel %vm5508, %v316, %v5592
        %v5596 = vsel %vm5508, 0, %v5594
        %v5597 = vcosq.f32.pop %v5595
        %v5598 = vsinq.f32.pop %v5595
        %vm5599 = vweird.f32 %v316
        %v5600 = vadd.s32 %v5596, 3
        %v5601 = vand.u32 %v5600, 3
        %vm5602 = vcmp.lt.s32.totalorder %v5601, 2
        %vm5603 = vcmp.eq.s32.totalorder %v5601, 0
        %v5604 = vxor.u32 %v5598, 2147483648
        %v5605 = vsel %vm5603, %v5597, %v5604
        %vm5606 = vcmp.eq.s32.totalorder %v5601, 2
        %v5607 = vxor.u32 %v5597, 2147483648
        %v5608 = vsel %vm5606, %v5607, %v5598
        %v5609 = vsel %vm5602, %v5605, %v5608
        %v5610 = vsel %vm5599, nan, %v5609
        %v5611 = vand.u32 2147483647, %v317
        %vm5612 = vcmp.le.f32.partialorder %v5611, 0.7853982
        %vm5613 = vcmp.lt.s32.totalorder %v317, 0
        %v5614 = vand.u32 %v317, 2139095040
        %v5615 = vshrl.u32 %v5614, 23
        %v5616 = vsub.s32 %v5615, 127
        %v5617 = vand.u32 2147483647, %v317
        %v5618 = vand.u32 %v5617, 8388607
        %v5619 = vor.u32 %v5618, 8388608
        %v5620 = vsub.s32 0, %v5619
        %v5621 = vadd.s32 %v5616, 1
        %vm5622 = vcmp.gt.s32.totalorder %v5621, 0
        %v5623 = vsel %vm5622, %v5621, 0
        %v5624 = vshrl.u32 %v5623, 5
        %v5625 = vand.u32 %v5623, 31
        %v5626 = vsub.s32 32, %v5625
        %v5627 = vshrl.u32 683565275, %v5626
        %v5628 = vshll.u32 683565275, %v5625
        %v5629 = vshrl.u32 2475754826, %v5626
        %v5630 = vor.u32 %v5628, %v5629
        %v5631 = vshll.u32 2475754826, %v5625
        %v5632 = vshrl.u32 2131351028, %v5626
        %v5633 = vor.u32 %v5631, %v5632
        %v5634 = vshll.u32 2131351028, %v5625
        %v5635 = vshrl.u32 2102212464, %v5626
        %v5636 = vor.u32 %v5634, %v5635
        %v5637 = vshll.u32 2102212464, %v5625
        %v5638 = vshrl.u32 920167782, %v5626
        %v5639 = vor.u32 %v5637, %v5638
        %v5640 = vshll.u32 920167782, %v5625
        %v5641 = vshrl.u32 1326507024, %v5626
        %v5642 = vor.u32 %v5640, %v5641
        %vm5643 = vcmp.lt.s32.totalorder %v5624, 1
        %vm5644 = vcmp.lt.s32.totalorder %v5624, 2
        %vm5645 = vcmp.lt.s32.totalorder %v5624, 3
        %vm5646 = vcmp.lt.s32.totalorder %v5624, 4
        %v5647 = vsel %vm5643, %v5627, %v5630
        %v5648 = vsel %vm5646, %v5636, 2102212464
        %v5649 = vsel %vm5645, %v5633, %v5648
        %v5650 = vsel %vm5644, %v5647, %v5649
        %v5651 = vsel %vm5643, %v5630, %v5633
        %v5652 = vsel %vm5646, %v5639, 920167782
        %v5653 = vsel %vm5645, %v5636, %v5652
        %v5654 = vsel %vm5644, %v5651, %v5653
        %v5655 = vsel %vm5643, %v5633, %v5636
        %v5656 = vsel %vm5646, %v5642, 1326507024
        %v5657 = vsel %vm5645, %v5639, %v5656
        %v5658 = vsel %vm5644, %v5655, %v5657
        %v5659 = vshll.u32 %v5619, 8
        %v5660 = vmul.u32.u64.compose %v5659, %v5658
        %v5661 = vextract.low.u32 %v5660
        %v5662 = vextract.high.u32 %v5660
        %v5663 = vmul.u32.u64.compose %v5659, %v5654
        %v5664 = vextract.low.u32 %v5663
        %v5665 = vextract.high.u32 %v5663
        %v5666 = vmul.u32 %v5659, %v5650
        %v5667 = vadd.s32 %v5662, %v5664
        %vm5668 = vc.u32 %v5662, %v5664
        %v5669 = vadd.s32 %v5665, 1
        %v5670 = vsel %vm5668, %v5669, %v5665
        %v5671 = vadd.s32 %v5666, %v5670
        %v5672 = vadd.s32 %v5671, 536870912
        %v5673 = vshrl.u32 %v5672, 30
        %v5674 = vshll.u32 %v5673, 30
        %v5675 = vsub.s32 %v5671, %v5674
        %vm5676 = vcmp.lt.s32.totalorder %v5675, 0
        %v5677 = vsub.s32 0, %v5675
        %v5678 = vsel %vm5676, %v5677, %v5675
        %v5679 = vclz %v5678
        %v5680 = vsub.s32 %v5679, 2
        %vm5681 = vcmp.gt.s32.totalorder 0, %v5680
        %v5682 = vsel %vm5681, 0, %v5680
        %v5683 = vsub.s32 32, %v5682
        %v5684 = vshll.u32 %v5675, %v5682
        %v5685 = vshrl.u32 %v5667, %v5683
        %v5686 = vor.u32 %v5684, %v5685
        %v5687 = vsub.s32 4294967266, %v5682
        %v5688 = vadd.s32 %v5687, 127
        %v5689 = vshll.u32 %v5688, 23
        %v5690 = vor.u32 4788187, %v5689
        %v5691 = vand.u32 2147483647, %v5690
        %v5693 = vcvt.s32.f32 %v5686
        %v5694 = vmul.f32 %v5693, %v5691
        %v5695 = vxor.u32 %v5694, 2147483648
        %v5696 = vsel %vm5613, %v5695, %v5694
        %v5697 = vsub.s32 4, %v5673
        %v5698 = vsel %vm5613, %v5697, %v5673
        %v5699 = vsel %vm5612, %v317, %v5696
        %v5700 = vsel %vm5612, 0, %v5698
        %v5701 = vcosq.f32.pop %v5699
        %v5702 = vsinq.f32.pop %v5699
        %vm5703 = vweird.f32 %v317
        %v5704 = vadd.s32 %v5700, 3
        %v5705 = vand.u32 %v5704, 3
        %vm5706 = vcmp.lt.s32.totalorder %v5705, 2
        %vm5707 = vcmp.eq.s32.totalorder %v5705, 0
        %v5708 = vxor.u32 %v5702, 2147483648
        %v5709 = vsel %vm5707, %v5701, %v5708
        %vm5710 = vcmp.eq.s32.totalorder %v5705, 2
        %v5711 = vxor.u32 %v5701, 2147483648
        %v5712 = vsel %vm5710, %v5711, %v5702
        %v5713 = vsel %vm5706, %v5709, %v5712
        %v5714 = vsel %vm5703, nan, %v5713
        %v5715 = vand.u32 2147483647, %v318
        %vm5716 = vcmp.le.f32.partialorder %v5715, 0.7853982
        %vm5717 = vcmp.lt.s32.totalorder %v318, 0
        %v5718 = vand.u32 %v318, 2139095040
        %v5719 = vshrl.u32 %v5718, 23
        %v5720 = vsub.s32 %v5719, 127
        %v5721 = vand.u32 2147483647, %v318
        %v5722 = vand.u32 %v5721, 8388607
        %v5723 = vor.u32 %v5722, 8388608
        %v5724 = vsub.s32 0, %v5723
        %v5725 = vadd.s32 %v5720, 1
        %vm5726 = vcmp.gt.s32.totalorder %v5725, 0
        %v5727 = vsel %vm5726, %v5725, 0
        %v5728 = vshrl.u32 %v5727, 5
        %v5729 = vand.u32 %v5727, 31
        %v5730 = vsub.s32 32, %v5729
        %v5731 = vshrl.u32 683565275, %v5730
        %v5732 = vshll.u32 683565275, %v5729
        %v5733 = vshrl.u32 2475754826, %v5730
        %v5734 = vor.u32 %v5732, %v5733
        %v5735 = vshll.u32 2475754826, %v5729
        %v5736 = vshrl.u32 2131351028, %v5730
        %v5737 = vor.u32 %v5735, %v5736
        %v5738 = vshll.u32 2131351028, %v5729
        %v5739 = vshrl.u32 2102212464, %v5730
        %v5740 = vor.u32 %v5738, %v5739
        %v5741 = vshll.u32 2102212464, %v5729
        %v5742 = vshrl.u32 920167782, %v5730
        %v5743 = vor.u32 %v5741, %v5742
        %v5744 = vshll.u32 920167782, %v5729
        %v5745 = vshrl.u32 1326507024, %v5730
        %v5746 = vor.u32 %v5744, %v5745
        %vm5747 = vcmp.lt.s32.totalorder %v5728, 1
        %vm5748 = vcmp.lt.s32.totalorder %v5728, 2
        %vm5749 = vcmp.lt.s32.totalorder %v5728, 3
        %vm5750 = vcmp.lt.s32.totalorder %v5728, 4
        %v5751 = vsel %vm5747, %v5731, %v5734
        %v5752 = vsel %vm5750, %v5740, 2102212464
        %v5753 = vsel %vm5749, %v5737, %v5752
        %v5754 = vsel %vm5748, %v5751, %v5753
        %v5755 = vsel %vm5747, %v5734, %v5737
        %v5756 = vsel %vm5750, %v5743, 920167782
        %v5757 = vsel %vm5749, %v5740, %v5756
        %v5758 = vsel %vm5748, %v5755, %v5757
        %v5759 = vsel %vm5747, %v5737, %v5740
        %v5760 = vsel %vm5750, %v5746, 1326507024
        %v5761 = vsel %vm5749, %v5743, %v5760
        %v5762 = vsel %vm5748, %v5759, %v5761
        %v5763 = vshll.u32 %v5723, 8
        %v5764 = vmul.u32.u64.compose %v5763, %v5762
        %v5765 = vextract.low.u32 %v5764
        %v5766 = vextract.high.u32 %v5764
        %v5767 = vmul.u32.u64.compose %v5763, %v5758
        %v5768 = vextract.low.u32 %v5767
        %v5769 = vextract.high.u32 %v5767
        %v5770 = vmul.u32 %v5763, %v5754
        %v5771 = vadd.s32 %v5766, %v5768
        %vm5772 = vc.u32 %v5766, %v5768
        %v5773 = vadd.s32 %v5769, 1
        %v5774 = vsel %vm5772, %v5773, %v5769
        %v5775 = vadd.s32 %v5770, %v5774
        %v5776 = vadd.s32 %v5775, 536870912
        %v5777 = vshrl.u32 %v5776, 30
        %v5778 = vshll.u32 %v5777, 30
        %v5779 = vsub.s32 %v5775, %v5778
        %vm5780 = vcmp.lt.s32.totalorder %v5779, 0
        %v5781 = vsub.s32 0, %v5779
        %v5782 = vsel %vm5780, %v5781, %v5779
        %v5783 = vclz %v5782
        %v5784 = vsub.s32 %v5783, 2
        %vm5785 = vcmp.gt.s32.totalorder 0, %v5784
        %v5786 = vsel %vm5785, 0, %v5784
        %v5787 = vsub.s32 32, %v5786
        %v5788 = vshll.u32 %v5779, %v5786
        %v5789 = vshrl.u32 %v5771, %v5787
        %v5790 = vor.u32 %v5788, %v5789
        %v5791 = vsub.s32 4294967266, %v5786
        %v5792 = vadd.s32 %v5791, 127
        %v5793 = vshll.u32 %v5792, 23
        %v5794 = vor.u32 4788187, %v5793
        %v5795 = vand.u32 2147483647, %v5794
        %v5797 = vcvt.s32.f32 %v5790
        %v5798 = vmul.f32 %v5797, %v5795
        %v5799 = vxor.u32 %v5798, 2147483648
        %v5800 = vsel %vm5717, %v5799, %v5798
        %v5801 = vsub.s32 4, %v5777
        %v5802 = vsel %vm5717, %v5801, %v5777
        %v5803 = vsel %vm5716, %v318, %v5800
        %v5804 = vsel %vm5716, 0, %v5802
        %v5805 = vcosq.f32.pop %v5803
        %v5806 = vsinq.f32.pop %v5803
        %vm5807 = vweird.f32 %v318
        %v5808 = vadd.s32 %v5804, 3
        %v5809 = vand.u32 %v5808, 3
        %vm5810 = vcmp.lt.s32.totalorder %v5809, 2
        %vm5811 = vcmp.eq.s32.totalorder %v5809, 0
        %v5812 = vxor.u32 %v5806, 2147483648
        %v5813 = vsel %vm5811, %v5805, %v5812
        %vm5814 = vcmp.eq.s32.totalorder %v5809, 2
        %v5815 = vxor.u32 %v5805, 2147483648
        %v5816 = vsel %vm5814, %v5815, %v5806
        %v5817 = vsel %vm5810, %v5813, %v5816
        %v5818 = vsel %vm5807, nan, %v5817
        %v5819 = vand.u32 2147483647, %v319
        %vm5820 = vcmp.le.f32.partialorder %v5819, 0.7853982
        %vm5821 = vcmp.lt.s32.totalorder %v319, 0
        %v5822 = vand.u32 %v319, 2139095040
        %v5823 = vshrl.u32 %v5822, 23
        %v5824 = vsub.s32 %v5823, 127
        %v5825 = vand.u32 2147483647, %v319
        %v5826 = vand.u32 %v5825, 8388607
        %v5827 = vor.u32 %v5826, 8388608
        %v5828 = vsub.s32 0, %v5827
        %v5829 = vadd.s32 %v5824, 1
        %vm5830 = vcmp.gt.s32.totalorder %v5829, 0
        %v5831 = vsel %vm5830, %v5829, 0
        %v5832 = vshrl.u32 %v5831, 5
        %v5833 = vand.u32 %v5831, 31
        %v5834 = vsub.s32 32, %v5833
        %v5835 = vshrl.u32 683565275, %v5834
        %v5836 = vshll.u32 683565275, %v5833
        %v5837 = vshrl.u32 2475754826, %v5834
        %v5838 = vor.u32 %v5836, %v5837
        %v5839 = vshll.u32 2475754826, %v5833
        %v5840 = vshrl.u32 2131351028, %v5834
        %v5841 = vor.u32 %v5839, %v5840
        %v5842 = vshll.u32 2131351028, %v5833
        %v5843 = vshrl.u32 2102212464, %v5834
        %v5844 = vor.u32 %v5842, %v5843
        %v5845 = vshll.u32 2102212464, %v5833
        %v5846 = vshrl.u32 920167782, %v5834
        %v5847 = vor.u32 %v5845, %v5846
        %v5848 = vshll.u32 920167782, %v5833
        %v5849 = vshrl.u32 1326507024, %v5834
        %v5850 = vor.u32 %v5848, %v5849
        %vm5851 = vcmp.lt.s32.totalorder %v5832, 1
        %vm5852 = vcmp.lt.s32.totalorder %v5832, 2
        %vm5853 = vcmp.lt.s32.totalorder %v5832, 3
        %vm5854 = vcmp.lt.s32.totalorder %v5832, 4
        %v5855 = vsel %vm5851, %v5835, %v5838
        %v5856 = vsel %vm5854, %v5844, 2102212464
        %v5857 = vsel %vm5853, %v5841, %v5856
        %v5858 = vsel %vm5852, %v5855, %v5857
        %v5859 = vsel %vm5851, %v5838, %v5841
        %v5860 = vsel %vm5854, %v5847, 920167782
        %v5861 = vsel %vm5853, %v5844, %v5860
        %v5862 = vsel %vm5852, %v5859, %v5861
        %v5863 = vsel %vm5851, %v5841, %v5844
        %v5864 = vsel %vm5854, %v5850, 1326507024
        %v5865 = vsel %vm5853, %v5847, %v5864
        %v5866 = vsel %vm5852, %v5863, %v5865
        %v5867 = vshll.u32 %v5827, 8
        %v5868 = vmul.u32.u64.compose %v5867, %v5866
        %v5869 = vextract.low.u32 %v5868
        %v5870 = vextract.high.u32 %v5868
        %v5871 = vmul.u32.u64.compose %v5867, %v5862
        %v5872 = vextract.low.u32 %v5871
        %v5873 = vextract.high.u32 %v5871
        %v5874 = vmul.u32 %v5867, %v5858
        %v5875 = vadd.s32 %v5870, %v5872
        %vm5876 = vc.u32 %v5870, %v5872
        %v5877 = vadd.s32 %v5873, 1
        %v5878 = vsel %vm5876, %v5877, %v5873
        %v5879 = vadd.s32 %v5874, %v5878
        %v5880 = vadd.s32 %v5879, 536870912
        %v5881 = vshrl.u32 %v5880, 30
        %v5882 = vshll.u32 %v5881, 30
        %v5883 = vsub.s32 %v5879, %v5882
        %vm5884 = vcmp.lt.s32.totalorder %v5883, 0
        %v5885 = vsub.s32 0, %v5883
        %v5886 = vsel %vm5884, %v5885, %v5883
        %v5887 = vclz %v5886
        %v5888 = vsub.s32 %v5887, 2
        %vm5889 = vcmp.gt.s32.totalorder 0, %v5888
        %v5890 = vsel %vm5889, 0, %v5888
        %v5891 = vsub.s32 32, %v5890
        %v5892 = vshll.u32 %v5883, %v5890
        %v5893 = vshrl.u32 %v5875, %v5891
        %v5894 = vor.u32 %v5892, %v5893
        %v5895 = vsub.s32 4294967266, %v5890
        %v5896 = vadd.s32 %v5895, 127
        %v5897 = vshll.u32 %v5896, 23
        %v5898 = vor.u32 4788187, %v5897
        %v5899 = vand.u32 2147483647, %v5898
        %v5901 = vcvt.s32.f32 %v5894
        %v5902 = vmul.f32 %v5901, %v5899
        %v5903 = vxor.u32 %v5902, 2147483648
        %v5904 = vsel %vm5821, %v5903, %v5902
        %v5905 = vsub.s32 4, %v5881
        %v5906 = vsel %vm5821, %v5905, %v5881
        %v5907 = vsel %vm5820, %v319, %v5904
        %v5908 = vsel %vm5820, 0, %v5906
        %v5909 = vcosq.f32.pop %v5907
        %v5910 = vsinq.f32.pop %v5907
        %vm5911 = vweird.f32 %v319
        %v5912 = vadd.s32 %v5908, 3
        %v5913 = vand.u32 %v5912, 3
        %vm5914 = vcmp.lt.s32.totalorder %v5913, 2
        %vm5915 = vcmp.eq.s32.totalorder %v5913, 0
        %v5916 = vxor.u32 %v5910, 2147483648
        %v5917 = vsel %vm5915, %v5909, %v5916
        %vm5918 = vcmp.eq.s32.totalorder %v5913, 2
        %v5919 = vxor.u32 %v5909, 2147483648
        %v5920 = vsel %vm5918, %v5919, %v5910
        %v5921 = vsel %vm5914, %v5917, %v5920
        %v5922 = vsel %vm5911, nan, %v5921
        %v5923 = vand.u32 2147483647, %v320
        %vm5924 = vcmp.le.f32.partialorder %v5923, 0.7853982
        %vm5925 = vcmp.lt.s32.totalorder %v320, 0
        %v5926 = vand.u32 %v320, 2139095040
        %v5927 = vshrl.u32 %v5926, 23
        %v5928 = vsub.s32 %v5927, 127
        %v5929 = vand.u32 2147483647, %v320
        %v5930 = vand.u32 %v5929, 8388607
        %v5931 = vor.u32 %v5930, 8388608
        %v5932 = vsub.s32 0, %v5931
        %v5933 = vadd.s32 %v5928, 1
        %vm5934 = vcmp.gt.s32.totalorder %v5933, 0
        %v5935 = vsel %vm5934, %v5933, 0
        %v5936 = vshrl.u32 %v5935, 5
        %v5937 = vand.u32 %v5935, 31
        %v5938 = vsub.s32 32, %v5937
        %v5939 = vshrl.u32 683565275, %v5938
        %v5940 = vshll.u32 683565275, %v5937
        %v5941 = vshrl.u32 2475754826, %v5938
        %v5942 = vor.u32 %v5940, %v5941
        %v5943 = vshll.u32 2475754826, %v5937
        %v5944 = vshrl.u32 2131351028, %v5938
        %v5945 = vor.u32 %v5943, %v5944
        %v5946 = vshll.u32 2131351028, %v5937
        %v5947 = vshrl.u32 2102212464, %v5938
        %v5948 = vor.u32 %v5946, %v5947
        %v5949 = vshll.u32 2102212464, %v5937
        %v5950 = vshrl.u32 920167782, %v5938
        %v5951 = vor.u32 %v5949, %v5950
        %v5952 = vshll.u32 920167782, %v5937
        %v5953 = vshrl.u32 1326507024, %v5938
        %v5954 = vor.u32 %v5952, %v5953
        %vm5955 = vcmp.lt.s32.totalorder %v5936, 1
        %vm5956 = vcmp.lt.s32.totalorder %v5936, 2
        %vm5957 = vcmp.lt.s32.totalorder %v5936, 3
        %vm5958 = vcmp.lt.s32.totalorder %v5936, 4
        %v5959 = vsel %vm5955, %v5939, %v5942
        %v5960 = vsel %vm5958, %v5948, 2102212464
        %v5961 = vsel %vm5957, %v5945, %v5960
        %v5962 = vsel %vm5956, %v5959, %v5961
        %v5963 = vsel %vm5955, %v5942, %v5945
        %v5964 = vsel %vm5958, %v5951, 920167782
        %v5965 = vsel %vm5957, %v5948, %v5964
        %v5966 = vsel %vm5956, %v5963, %v5965
        %v5967 = vsel %vm5955, %v5945, %v5948
        %v5968 = vsel %vm5958, %v5954, 1326507024
        %v5969 = vsel %vm5957, %v5951, %v5968
        %v5970 = vsel %vm5956, %v5967, %v5969
        %v5971 = vshll.u32 %v5931, 8
        %v5972 = vmul.u32.u64.compose %v5971, %v5970
        %v5973 = vextract.low.u32 %v5972
        %v5974 = vextract.high.u32 %v5972
        %v5975 = vmul.u32.u64.compose %v5971, %v5966
        %v5976 = vextract.low.u32 %v5975
        %v5977 = vextract.high.u32 %v5975
        %v5978 = vmul.u32 %v5971, %v5962
        %v5979 = vadd.s32 %v5974, %v5976
        %vm5980 = vc.u32 %v5974, %v5976
        %v5981 = vadd.s32 %v5977, 1
        %v5982 = vsel %vm5980, %v5981, %v5977
        %v5983 = vadd.s32 %v5978, %v5982
        %v5984 = vadd.s32 %v5983, 536870912
        %v5985 = vshrl.u32 %v5984, 30
        %v5986 = vshll.u32 %v5985, 30
        %v5987 = vsub.s32 %v5983, %v5986
        %vm5988 = vcmp.lt.s32.totalorder %v5987, 0
        %v5989 = vsub.s32 0, %v5987
        %v5990 = vsel %vm5988, %v5989, %v5987
        %v5991 = vclz %v5990
        %v5992 = vsub.s32 %v5991, 2
        %vm5993 = vcmp.gt.s32.totalorder 0, %v5992
        %v5994 = vsel %vm5993, 0, %v5992
        %v5995 = vsub.s32 32, %v5994
        %v5996 = vshll.u32 %v5987, %v5994
        %v5997 = vshrl.u32 %v5979, %v5995
        %v5998 = vor.u32 %v5996, %v5997
        %v5999 = vsub.s32 4294967266, %v5994
        %v6000 = vadd.s32 %v5999, 127
        %v6001 = vshll.u32 %v6000, 23
        %v6002 = vor.u32 4788187, %v6001
        %v6003 = vand.u32 2147483647, %v6002
        %v6005 = vcvt.s32.f32 %v5998
        %v6006 = vmul.f32 %v6005, %v6003
        %v6007 = vxor.u32 %v6006, 2147483648
        %v6008 = vsel %vm5925, %v6007, %v6006
        %v6009 = vsub.s32 4, %v5985
        %v6010 = vsel %vm5925, %v6009, %v5985
        %v6011 = vsel %vm5924, %v320, %v6008
        %v6012 = vsel %vm5924, 0, %v6010
        %v6013 = vcosq.f32.pop %v6011
        %v6014 = vsinq.f32.pop %v6011
        %vm6015 = vweird.f32 %v320
        %v6016 = vadd.s32 %v6012, 3
        %v6017 = vand.u32 %v6016, 3
        %vm6018 = vcmp.lt.s32.totalorder %v6017, 2
        %vm6019 = vcmp.eq.s32.totalorder %v6017, 0
        %v6020 = vxor.u32 %v6014, 2147483648
        %v6021 = vsel %vm6019, %v6013, %v6020
        %vm6022 = vcmp.eq.s32.totalorder %v6017, 2
        %v6023 = vxor.u32 %v6013, 2147483648
        %v6024 = vsel %vm6022, %v6023, %v6014
        %v6025 = vsel %vm6018, %v6021, %v6024
        %v6026 = vsel %vm6015, nan, %v6025
        %v6027 = vand.u32 2147483647, %v321
        %vm6028 = vcmp.le.f32.partialorder %v6027, 0.7853982
        %vm6029 = vcmp.lt.s32.totalorder %v321, 0
        %v6030 = vand.u32 %v321, 2139095040
        %v6031 = vshrl.u32 %v6030, 23
        %v6032 = vsub.s32 %v6031, 127
        %v6033 = vand.u32 2147483647, %v321
        %v6034 = vand.u32 %v6033, 8388607
        %v6035 = vor.u32 %v6034, 8388608
        %v6036 = vsub.s32 0, %v6035
        %v6037 = vadd.s32 %v6032, 1
        %vm6038 = vcmp.gt.s32.totalorder %v6037, 0
        %v6039 = vsel %vm6038, %v6037, 0
        %v6040 = vshrl.u32 %v6039, 5
        %v6041 = vand.u32 %v6039, 31
        %v6042 = vsub.s32 32, %v6041
        %v6043 = vshrl.u32 683565275, %v6042
        %v6044 = vshll.u32 683565275, %v6041
        %v6045 = vshrl.u32 2475754826, %v6042
        %v6046 = vor.u32 %v6044, %v6045
        %v6047 = vshll.u32 2475754826, %v6041
        %v6048 = vshrl.u32 2131351028, %v6042
        %v6049 = vor.u32 %v6047, %v6048
        %v6050 = vshll.u32 2131351028, %v6041
        %v6051 = vshrl.u32 2102212464, %v6042
        %v6052 = vor.u32 %v6050, %v6051
        %v6053 = vshll.u32 2102212464, %v6041
        %v6054 = vshrl.u32 920167782, %v6042
        %v6055 = vor.u32 %v6053, %v6054
        %v6056 = vshll.u32 920167782, %v6041
        %v6057 = vshrl.u32 1326507024, %v6042
        %v6058 = vor.u32 %v6056, %v6057
        %vm6059 = vcmp.lt.s32.totalorder %v6040, 1
        %vm6060 = vcmp.lt.s32.totalorder %v6040, 2
        %vm6061 = vcmp.lt.s32.totalorder %v6040, 3
        %vm6062 = vcmp.lt.s32.totalorder %v6040, 4
        %v6063 = vsel %vm6059, %v6043, %v6046
        %v6064 = vsel %vm6062, %v6052, 2102212464
        %v6065 = vsel %vm6061, %v6049, %v6064
        %v6066 = vsel %vm6060, %v6063, %v6065
        %v6067 = vsel %vm6059, %v6046, %v6049
        %v6068 = vsel %vm6062, %v6055, 920167782
        %v6069 = vsel %vm6061, %v6052, %v6068
        %v6070 = vsel %vm6060, %v6067, %v6069
        %v6071 = vsel %vm6059, %v6049, %v6052
        %v6072 = vsel %vm6062, %v6058, 1326507024
        %v6073 = vsel %vm6061, %v6055, %v6072
        %v6074 = vsel %vm6060, %v6071, %v6073
        %v6075 = vshll.u32 %v6035, 8
        %v6076 = vmul.u32.u64.compose %v6075, %v6074
        %v6077 = vextract.low.u32 %v6076
        %v6078 = vextract.high.u32 %v6076
        %v6079 = vmul.u32.u64.compose %v6075, %v6070
        %v6080 = vextract.low.u32 %v6079
        %v6081 = vextract.high.u32 %v6079
        %v6082 = vmul.u32 %v6075, %v6066
        %v6083 = vadd.s32 %v6078, %v6080
        %vm6084 = vc.u32 %v6078, %v6080
        %v6085 = vadd.s32 %v6081, 1
        %v6086 = vsel %vm6084, %v6085, %v6081
        %v6087 = vadd.s32 %v6082, %v6086
        %v6088 = vadd.s32 %v6087, 536870912
        %v6089 = vshrl.u32 %v6088, 30
        %v6090 = vshll.u32 %v6089, 30
        %v6091 = vsub.s32 %v6087, %v6090
        %vm6092 = vcmp.lt.s32.totalorder %v6091, 0
        %v6093 = vsub.s32 0, %v6091
        %v6094 = vsel %vm6092, %v6093, %v6091
        %v6095 = vclz %v6094
        %v6096 = vsub.s32 %v6095, 2
        %vm6097 = vcmp.gt.s32.totalorder 0, %v6096
        %v6098 = vsel %vm6097, 0, %v6096
        %v6099 = vsub.s32 32, %v6098
        %v6100 = vshll.u32 %v6091, %v6098
        %v6101 = vshrl.u32 %v6083, %v6099
        %v6102 = vor.u32 %v6100, %v6101
        %v6103 = vsub.s32 4294967266, %v6098
        %v6104 = vadd.s32 %v6103, 127
        %v6105 = vshll.u32 %v6104, 23
        %v6106 = vor.u32 4788187, %v6105
        %v6107 = vand.u32 2147483647, %v6106
        %v6109 = vcvt.s32.f32 %v6102
        %v6110 = vmul.f32 %v6109, %v6107
        %v6111 = vxor.u32 %v6110, 2147483648
        %v6112 = vsel %vm6029, %v6111, %v6110
        %v6113 = vsub.s32 4, %v6089
        %v6114 = vsel %vm6029, %v6113, %v6089
        %v6115 = vsel %vm6028, %v321, %v6112
        %v6116 = vsel %vm6028, 0, %v6114
        %v6117 = vcosq.f32.pop %v6115
        %v6118 = vsinq.f32.pop %v6115
        %vm6119 = vweird.f32 %v321
        %v6120 = vadd.s32 %v6116, 3
        %v6121 = vand.u32 %v6120, 3
        %vm6122 = vcmp.lt.s32.totalorder %v6121, 2
        %vm6123 = vcmp.eq.s32.totalorder %v6121, 0
        %v6124 = vxor.u32 %v6118, 2147483648
        %v6125 = vsel %vm6123, %v6117, %v6124
        %vm6126 = vcmp.eq.s32.totalorder %v6121, 2
        %v6127 = vxor.u32 %v6117, 2147483648
        %v6128 = vsel %vm6126, %v6127, %v6118
        %v6129 = vsel %vm6122, %v6125, %v6128
        %v6130 = vsel %vm6119, nan, %v6129
        %v6131 = vand.u32 2147483647, %v322
        %vm6132 = vcmp.le.f32.partialorder %v6131, 0.7853982
        %vm6133 = vcmp.lt.s32.totalorder %v322, 0
        %v6134 = vand.u32 %v322, 2139095040
        %v6135 = vshrl.u32 %v6134, 23
        %v6136 = vsub.s32 %v6135, 127
        %v6137 = vand.u32 2147483647, %v322
        %v6138 = vand.u32 %v6137, 8388607
        %v6139 = vor.u32 %v6138, 8388608
        %v6140 = vsub.s32 0, %v6139
        %v6141 = vadd.s32 %v6136, 1
        %vm6142 = vcmp.gt.s32.totalorder %v6141, 0
        %v6143 = vsel %vm6142, %v6141, 0
        %v6144 = vshrl.u32 %v6143, 5
        %v6145 = vand.u32 %v6143, 31
        %v6146 = vsub.s32 32, %v6145
        %v6147 = vshrl.u32 683565275, %v6146
        %v6148 = vshll.u32 683565275, %v6145
        %v6149 = vshrl.u32 2475754826, %v6146
        %v6150 = vor.u32 %v6148, %v6149
        %v6151 = vshll.u32 2475754826, %v6145
        %v6152 = vshrl.u32 2131351028, %v6146
        %v6153 = vor.u32 %v6151, %v6152
        %v6154 = vshll.u32 2131351028, %v6145
        %v6155 = vshrl.u32 2102212464, %v6146
        %v6156 = vor.u32 %v6154, %v6155
        %v6157 = vshll.u32 2102212464, %v6145
        %v6158 = vshrl.u32 920167782, %v6146
        %v6159 = vor.u32 %v6157, %v6158
        %v6160 = vshll.u32 920167782, %v6145
        %v6161 = vshrl.u32 1326507024, %v6146
        %v6162 = vor.u32 %v6160, %v6161
        %vm6163 = vcmp.lt.s32.totalorder %v6144, 1
        %vm6164 = vcmp.lt.s32.totalorder %v6144, 2
        %vm6165 = vcmp.lt.s32.totalorder %v6144, 3
        %vm6166 = vcmp.lt.s32.totalorder %v6144, 4
        %v6167 = vsel %vm6163, %v6147, %v6150
        %v6168 = vsel %vm6166, %v6156, 2102212464
        %v6169 = vsel %vm6165, %v6153, %v6168
        %v6170 = vsel %vm6164, %v6167, %v6169
        %v6171 = vsel %vm6163, %v6150, %v6153
        %v6172 = vsel %vm6166, %v6159, 920167782
        %v6173 = vsel %vm6165, %v6156, %v6172
        %v6174 = vsel %vm6164, %v6171, %v6173
        %v6175 = vsel %vm6163, %v6153, %v6156
        %v6176 = vsel %vm6166, %v6162, 1326507024
        %v6177 = vsel %vm6165, %v6159, %v6176
        %v6178 = vsel %vm6164, %v6175, %v6177
        %v6179 = vshll.u32 %v6139, 8
        %v6180 = vmul.u32.u64.compose %v6179, %v6178
        %v6181 = vextract.low.u32 %v6180
        %v6182 = vextract.high.u32 %v6180
        %v6183 = vmul.u32.u64.compose %v6179, %v6174
        %v6184 = vextract.low.u32 %v6183
        %v6185 = vextract.high.u32 %v6183
        %v6186 = vmul.u32 %v6179, %v6170
        %v6187 = vadd.s32 %v6182, %v6184
        %vm6188 = vc.u32 %v6182, %v6184
        %v6189 = vadd.s32 %v6185, 1
        %v6190 = vsel %vm6188, %v6189, %v6185
        %v6191 = vadd.s32 %v6186, %v6190
        %v6192 = vadd.s32 %v6191, 536870912
        %v6193 = vshrl.u32 %v6192, 30
        %v6194 = vshll.u32 %v6193, 30
        %v6195 = vsub.s32 %v6191, %v6194
        %vm6196 = vcmp.lt.s32.totalorder %v6195, 0
        %v6197 = vsub.s32 0, %v6195
        %v6198 = vsel %vm6196, %v6197, %v6195
        %v6199 = vclz %v6198
        %v6200 = vsub.s32 %v6199, 2
        %vm6201 = vcmp.gt.s32.totalorder 0, %v6200
        %v6202 = vsel %vm6201, 0, %v6200
        %v6203 = vsub.s32 32, %v6202
        %v6204 = vshll.u32 %v6195, %v6202
        %v6205 = vshrl.u32 %v6187, %v6203
        %v6206 = vor.u32 %v6204, %v6205
        %v6207 = vsub.s32 4294967266, %v6202
        %v6208 = vadd.s32 %v6207, 127
        %v6209 = vshll.u32 %v6208, 23
        %v6210 = vor.u32 4788187, %v6209
        %v6211 = vand.u32 2147483647, %v6210
        %v6213 = vcvt.s32.f32 %v6206
        %v6214 = vmul.f32 %v6213, %v6211
        %v6215 = vxor.u32 %v6214, 2147483648
        %v6216 = vsel %vm6133, %v6215, %v6214
        %v6217 = vsub.s32 4, %v6193
        %v6218 = vsel %vm6133, %v6217, %v6193
        %v6219 = vsel %vm6132, %v322, %v6216
        %v6220 = vsel %vm6132, 0, %v6218
        %v6221 = vcosq.f32.pop %v6219
        %v6222 = vsinq.f32.pop %v6219
        %vm6223 = vweird.f32 %v322
        %v6224 = vadd.s32 %v6220, 3
        %v6225 = vand.u32 %v6224, 3
        %vm6226 = vcmp.lt.s32.totalorder %v6225, 2
        %vm6227 = vcmp.eq.s32.totalorder %v6225, 0
        %v6228 = vxor.u32 %v6222, 2147483648
        %v6229 = vsel %vm6227, %v6221, %v6228
        %vm6230 = vcmp.eq.s32.totalorder %v6225, 2
        %v6231 = vxor.u32 %v6221, 2147483648
        %v6232 = vsel %vm6230, %v6231, %v6222
        %v6233 = vsel %vm6226, %v6229, %v6232
        %v6234 = vsel %vm6223, nan, %v6233
        %v6235 = vand.u32 2147483647, %v323
        %vm6236 = vcmp.le.f32.partialorder %v6235, 0.7853982
        %vm6237 = vcmp.lt.s32.totalorder %v323, 0
        %v6238 = vand.u32 %v323, 2139095040
        %v6239 = vshrl.u32 %v6238, 23
        %v6240 = vsub.s32 %v6239, 127
        %v6241 = vand.u32 2147483647, %v323
        %v6242 = vand.u32 %v6241, 8388607
        %v6243 = vor.u32 %v6242, 8388608
        %v6244 = vsub.s32 0, %v6243
        %v6245 = vadd.s32 %v6240, 1
        %vm6246 = vcmp.gt.s32.totalorder %v6245, 0
        %v6247 = vsel %vm6246, %v6245, 0
        %v6248 = vshrl.u32 %v6247, 5
        %v6249 = vand.u32 %v6247, 31
        %v6250 = vsub.s32 32, %v6249
        %v6251 = vshrl.u32 683565275, %v6250
        %v6252 = vshll.u32 683565275, %v6249
        %v6253 = vshrl.u32 2475754826, %v6250
        %v6254 = vor.u32 %v6252, %v6253
        %v6255 = vshll.u32 2475754826, %v6249
        %v6256 = vshrl.u32 2131351028, %v6250
        %v6257 = vor.u32 %v6255, %v6256
        %v6258 = vshll.u32 2131351028, %v6249
        %v6259 = vshrl.u32 2102212464, %v6250
        %v6260 = vor.u32 %v6258, %v6259
        %v6261 = vshll.u32 2102212464, %v6249
        %v6262 = vshrl.u32 920167782, %v6250
        %v6263 = vor.u32 %v6261, %v6262
        %v6264 = vshll.u32 920167782, %v6249
        %v6265 = vshrl.u32 1326507024, %v6250
        %v6266 = vor.u32 %v6264, %v6265
        %vm6267 = vcmp.lt.s32.totalorder %v6248, 1
        %vm6268 = vcmp.lt.s32.totalorder %v6248, 2
        %vm6269 = vcmp.lt.s32.totalorder %v6248, 3
        %vm6270 = vcmp.lt.s32.totalorder %v6248, 4
        %v6271 = vsel %vm6267, %v6251, %v6254
        %v6272 = vsel %vm6270, %v6260, 2102212464
        %v6273 = vsel %vm6269, %v6257, %v6272
        %v6274 = vsel %vm6268, %v6271, %v6273
        %v6275 = vsel %vm6267, %v6254, %v6257
        %v6276 = vsel %vm6270, %v6263, 920167782
        %v6277 = vsel %vm6269, %v6260, %v6276
        %v6278 = vsel %vm6268, %v6275, %v6277
        %v6279 = vsel %vm6267, %v6257, %v6260
        %v6280 = vsel %vm6270, %v6266, 1326507024
        %v6281 = vsel %vm6269, %v6263, %v6280
        %v6282 = vsel %vm6268, %v6279, %v6281
        %v6283 = vshll.u32 %v6243, 8
        %v6284 = vmul.u32.u64.compose %v6283, %v6282
        %v6285 = vextract.low.u32 %v6284
        %v6286 = vextract.high.u32 %v6284
        %v6287 = vmul.u32.u64.compose %v6283, %v6278
        %v6288 = vextract.low.u32 %v6287
        %v6289 = vextract.high.u32 %v6287
        %v6290 = vmul.u32 %v6283, %v6274
        %v6291 = vadd.s32 %v6286, %v6288
        %vm6292 = vc.u32 %v6286, %v6288
        %v6293 = vadd.s32 %v6289, 1
        %v6294 = vsel %vm6292, %v6293, %v6289
        %v6295 = vadd.s32 %v6290, %v6294
        %v6296 = vadd.s32 %v6295, 536870912
        %v6297 = vshrl.u32 %v6296, 30
        %v6298 = vshll.u32 %v6297, 30
        %v6299 = vsub.s32 %v6295, %v6298
        %vm6300 = vcmp.lt.s32.totalorder %v6299, 0
        %v6301 = vsub.s32 0, %v6299
        %v6302 = vsel %vm6300, %v6301, %v6299
        %v6303 = vclz %v6302
        %v6304 = vsub.s32 %v6303, 2
        %vm6305 = vcmp.gt.s32.totalorder 0, %v6304
        %v6306 = vsel %vm6305, 0, %v6304
        %v6307 = vsub.s32 32, %v6306
        %v6308 = vshll.u32 %v6299, %v6306
        %v6309 = vshrl.u32 %v6291, %v6307
        %v6310 = vor.u32 %v6308, %v6309
        %v6311 = vsub.s32 4294967266, %v6306
        %v6312 = vadd.s32 %v6311, 127
        %v6313 = vshll.u32 %v6312, 23
        %v6314 = vor.u32 4788187, %v6313
        %v6315 = vand.u32 2147483647, %v6314
        %v6317 = vcvt.s32.f32 %v6310
        %v6318 = vmul.f32 %v6317, %v6315
        %v6319 = vxor.u32 %v6318, 2147483648
        %v6320 = vsel %vm6237, %v6319, %v6318
        %v6321 = vsub.s32 4, %v6297
        %v6322 = vsel %vm6237, %v6321, %v6297
        %v6323 = vsel %vm6236, %v323, %v6320
        %v6324 = vsel %vm6236, 0, %v6322
        %v6325 = vcosq.f32.pop %v6323
        %v6326 = vsinq.f32.pop %v6323
        %vm6327 = vweird.f32 %v323
        %v6328 = vadd.s32 %v6324, 3
        %v6329 = vand.u32 %v6328, 3
        %vm6330 = vcmp.lt.s32.totalorder %v6329, 2
        %vm6331 = vcmp.eq.s32.totalorder %v6329, 0
        %v6332 = vxor.u32 %v6326, 2147483648
        %v6333 = vsel %vm6331, %v6325, %v6332
        %vm6334 = vcmp.eq.s32.totalorder %v6329, 2
        %v6335 = vxor.u32 %v6325, 2147483648
        %v6336 = vsel %vm6334, %v6335, %v6326
        %v6337 = vsel %vm6330, %v6333, %v6336
        %v6338 = vsel %vm6327, nan, %v6337
        %v6339 = vand.u32 2147483647, %v324
        %vm6340 = vcmp.le.f32.partialorder %v6339, 0.7853982
        %vm6341 = vcmp.lt.s32.totalorder %v324, 0
        %v6342 = vand.u32 %v324, 2139095040
        %v6343 = vshrl.u32 %v6342, 23
        %v6344 = vsub.s32 %v6343, 127
        %v6345 = vand.u32 2147483647, %v324
        %v6346 = vand.u32 %v6345, 8388607
        %v6347 = vor.u32 %v6346, 8388608
        %v6348 = vsub.s32 0, %v6347
        %v6349 = vadd.s32 %v6344, 1
        %vm6350 = vcmp.gt.s32.totalorder %v6349, 0
        %v6351 = vsel %vm6350, %v6349, 0
        %v6352 = vshrl.u32 %v6351, 5
        %v6353 = vand.u32 %v6351, 31
        %v6354 = vsub.s32 32, %v6353
        %v6355 = vshrl.u32 683565275, %v6354
        %v6356 = vshll.u32 683565275, %v6353
        %v6357 = vshrl.u32 2475754826, %v6354
        %v6358 = vor.u32 %v6356, %v6357
        %v6359 = vshll.u32 2475754826, %v6353
        %v6360 = vshrl.u32 2131351028, %v6354
        %v6361 = vor.u32 %v6359, %v6360
        %v6362 = vshll.u32 2131351028, %v6353
        %v6363 = vshrl.u32 2102212464, %v6354
        %v6364 = vor.u32 %v6362, %v6363
        %v6365 = vshll.u32 2102212464, %v6353
        %v6366 = vshrl.u32 920167782, %v6354
        %v6367 = vor.u32 %v6365, %v6366
        %v6368 = vshll.u32 920167782, %v6353
        %v6369 = vshrl.u32 1326507024, %v6354
        %v6370 = vor.u32 %v6368, %v6369
        %vm6371 = vcmp.lt.s32.totalorder %v6352, 1
        %vm6372 = vcmp.lt.s32.totalorder %v6352, 2
        %vm6373 = vcmp.lt.s32.totalorder %v6352, 3
        %vm6374 = vcmp.lt.s32.totalorder %v6352, 4
        %v6375 = vsel %vm6371, %v6355, %v6358
        %v6376 = vsel %vm6374, %v6364, 2102212464
        %v6377 = vsel %vm6373, %v6361, %v6376
        %v6378 = vsel %vm6372, %v6375, %v6377
        %v6379 = vsel %vm6371, %v6358, %v6361
        %v6380 = vsel %vm6374, %v6367, 920167782
        %v6381 = vsel %vm6373, %v6364, %v6380
        %v6382 = vsel %vm6372, %v6379, %v6381
        %v6383 = vsel %vm6371, %v6361, %v6364
        %v6384 = vsel %vm6374, %v6370, 1326507024
        %v6385 = vsel %vm6373, %v6367, %v6384
        %v6386 = vsel %vm6372, %v6383, %v6385
        %v6387 = vshll.u32 %v6347, 8
        %v6388 = vmul.u32.u64.compose %v6387, %v6386
        %v6389 = vextract.low.u32 %v6388
        %v6390 = vextract.high.u32 %v6388
        %v6391 = vmul.u32.u64.compose %v6387, %v6382
        %v6392 = vextract.low.u32 %v6391
        %v6393 = vextract.high.u32 %v6391
        %v6394 = vmul.u32 %v6387, %v6378
        %v6395 = vadd.s32 %v6390, %v6392
        %vm6396 = vc.u32 %v6390, %v6392
        %v6397 = vadd.s32 %v6393, 1
        %v6398 = vsel %vm6396, %v6397, %v6393
        %v6399 = vadd.s32 %v6394, %v6398
        %v6400 = vadd.s32 %v6399, 536870912
        %v6401 = vshrl.u32 %v6400, 30
        %v6402 = vshll.u32 %v6401, 30
        %v6403 = vsub.s32 %v6399, %v6402
        %vm6404 = vcmp.lt.s32.totalorder %v6403, 0
        %v6405 = vsub.s32 0, %v6403
        %v6406 = vsel %vm6404, %v6405, %v6403
        %v6407 = vclz %v6406
        %v6408 = vsub.s32 %v6407, 2
        %vm6409 = vcmp.gt.s32.totalorder 0, %v6408
        %v6410 = vsel %vm6409, 0, %v6408
        %v6411 = vsub.s32 32, %v6410
        %v6412 = vshll.u32 %v6403, %v6410
        %v6413 = vshrl.u32 %v6395, %v6411
        %v6414 = vor.u32 %v6412, %v6413
        %v6415 = vsub.s32 4294967266, %v6410
        %v6416 = vadd.s32 %v6415, 127
        %v6417 = vshll.u32 %v6416, 23
        %v6418 = vor.u32 4788187, %v6417
        %v6419 = vand.u32 2147483647, %v6418
        %v6421 = vcvt.s32.f32 %v6414
        %v6422 = vmul.f32 %v6421, %v6419
        %v6423 = vxor.u32 %v6422, 2147483648
        %v6424 = vsel %vm6341, %v6423, %v6422
        %v6425 = vsub.s32 4, %v6401
        %v6426 = vsel %vm6341, %v6425, %v6401
        %v6427 = vsel %vm6340, %v324, %v6424
        %v6428 = vsel %vm6340, 0, %v6426
        %v6429 = vcosq.f32.pop %v6427
        %v6430 = vsinq.f32.pop %v6427
        %vm6431 = vweird.f32 %v324
        %v6432 = vadd.s32 %v6428, 3
        %v6433 = vand.u32 %v6432, 3
        %vm6434 = vcmp.lt.s32.totalorder %v6433, 2
        %vm6435 = vcmp.eq.s32.totalorder %v6433, 0
        %v6436 = vxor.u32 %v6430, 2147483648
        %v6437 = vsel %vm6435, %v6429, %v6436
        %vm6438 = vcmp.eq.s32.totalorder %v6433, 2
        %v6439 = vxor.u32 %v6429, 2147483648
        %v6440 = vsel %vm6438, %v6439, %v6430
        %v6441 = vsel %vm6434, %v6437, %v6440
        %v6442 = vsel %vm6431, nan, %v6441
        %v6443 = vand.u32 2147483647, %v325
        %vm6444 = vcmp.le.f32.partialorder %v6443, 0.7853982
        %vm6445 = vcmp.lt.s32.totalorder %v325, 0
        %v6446 = vand.u32 %v325, 2139095040
        %v6447 = vshrl.u32 %v6446, 23
        %v6448 = vsub.s32 %v6447, 127
        %v6449 = vand.u32 2147483647, %v325
        %v6450 = vand.u32 %v6449, 8388607
        %v6451 = vor.u32 %v6450, 8388608
        %v6452 = vsub.s32 0, %v6451
        %v6453 = vadd.s32 %v6448, 1
        %vm6454 = vcmp.gt.s32.totalorder %v6453, 0
        %v6455 = vsel %vm6454, %v6453, 0
        %v6456 = vshrl.u32 %v6455, 5
        %v6457 = vand.u32 %v6455, 31
        %v6458 = vsub.s32 32, %v6457
        %v6459 = vshrl.u32 683565275, %v6458
        %v6460 = vshll.u32 683565275, %v6457
        %v6461 = vshrl.u32 2475754826, %v6458
        %v6462 = vor.u32 %v6460, %v6461
        %v6463 = vshll.u32 2475754826, %v6457
        %v6464 = vshrl.u32 2131351028, %v6458
        %v6465 = vor.u32 %v6463, %v6464
        %v6466 = vshll.u32 2131351028, %v6457
        %v6467 = vshrl.u32 2102212464, %v6458
        %v6468 = vor.u32 %v6466, %v6467
        %v6469 = vshll.u32 2102212464, %v6457
        %v6470 = vshrl.u32 920167782, %v6458
        %v6471 = vor.u32 %v6469, %v6470
        %v6472 = vshll.u32 920167782, %v6457
        %v6473 = vshrl.u32 1326507024, %v6458
        %v6474 = vor.u32 %v6472, %v6473
        %vm6475 = vcmp.lt.s32.totalorder %v6456, 1
        %vm6476 = vcmp.lt.s32.totalorder %v6456, 2
        %vm6477 = vcmp.lt.s32.totalorder %v6456, 3
        %vm6478 = vcmp.lt.s32.totalorder %v6456, 4
        %v6479 = vsel %vm6475, %v6459, %v6462
        %v6480 = vsel %vm6478, %v6468, 2102212464
        %v6481 = vsel %vm6477, %v6465, %v6480
        %v6482 = vsel %vm6476, %v6479, %v6481
        %v6483 = vsel %vm6475, %v6462, %v6465
        %v6484 = vsel %vm6478, %v6471, 920167782
        %v6485 = vsel %vm6477, %v6468, %v6484
        %v6486 = vsel %vm6476, %v6483, %v6485
        %v6487 = vsel %vm6475, %v6465, %v6468
        %v6488 = vsel %vm6478, %v6474, 1326507024
        %v6489 = vsel %vm6477, %v6471, %v6488
        %v6490 = vsel %vm6476, %v6487, %v6489
        %v6491 = vshll.u32 %v6451, 8
        %v6492 = vmul.u32.u64.compose %v6491, %v6490
        %v6493 = vextract.low.u32 %v6492
        %v6494 = vextract.high.u32 %v6492
        %v6495 = vmul.u32.u64.compose %v6491, %v6486
        %v6496 = vextract.low.u32 %v6495
        %v6497 = vextract.high.u32 %v6495
        %v6498 = vmul.u32 %v6491, %v6482
        %v6499 = vadd.s32 %v6494, %v6496
        %vm6500 = vc.u32 %v6494, %v6496
        %v6501 = vadd.s32 %v6497, 1
        %v6502 = vsel %vm6500, %v6501, %v6497
        %v6503 = vadd.s32 %v6498, %v6502
        %v6504 = vadd.s32 %v6503, 536870912
        %v6505 = vshrl.u32 %v6504, 30
        %v6506 = vshll.u32 %v6505, 30
        %v6507 = vsub.s32 %v6503, %v6506
        %vm6508 = vcmp.lt.s32.totalorder %v6507, 0
        %v6509 = vsub.s32 0, %v6507
        %v6510 = vsel %vm6508, %v6509, %v6507
        %v6511 = vclz %v6510
        %v6512 = vsub.s32 %v6511, 2
        %vm6513 = vcmp.gt.s32.totalorder 0, %v6512
        %v6514 = vsel %vm6513, 0, %v6512
        %v6515 = vsub.s32 32, %v6514
        %v6516 = vshll.u32 %v6507, %v6514
        %v6517 = vshrl.u32 %v6499, %v6515
        %v6518 = vor.u32 %v6516, %v6517
        %v6519 = vsub.s32 4294967266, %v6514
        %v6520 = vadd.s32 %v6519, 127
        %v6521 = vshll.u32 %v6520, 23
        %v6522 = vor.u32 4788187, %v6521
        %v6523 = vand.u32 2147483647, %v6522
        %v6525 = vcvt.s32.f32 %v6518
        %v6526 = vmul.f32 %v6525, %v6523
        %v6527 = vxor.u32 %v6526, 2147483648
        %v6528 = vsel %vm6445, %v6527, %v6526
        %v6529 = vsub.s32 4, %v6505
        %v6530 = vsel %vm6445, %v6529, %v6505
        %v6531 = vsel %vm6444, %v325, %v6528
        %v6532 = vsel %vm6444, 0, %v6530
        %v6533 = vcosq.f32.pop %v6531
        %v6534 = vsinq.f32.pop %v6531
        %vm6535 = vweird.f32 %v325
        %v6536 = vadd.s32 %v6532, 3
        %v6537 = vand.u32 %v6536, 3
        %vm6538 = vcmp.lt.s32.totalorder %v6537, 2
        %vm6539 = vcmp.eq.s32.totalorder %v6537, 0
        %v6540 = vxor.u32 %v6534, 2147483648
        %v6541 = vsel %vm6539, %v6533, %v6540
        %vm6542 = vcmp.eq.s32.totalorder %v6537, 2
        %v6543 = vxor.u32 %v6533, 2147483648
        %v6544 = vsel %vm6542, %v6543, %v6534
        %v6545 = vsel %vm6538, %v6541, %v6544
        %v6546 = vsel %vm6535, nan, %v6545
        %v6547 = vand.u32 2147483647, %v326
        %vm6548 = vcmp.le.f32.partialorder %v6547, 0.7853982
        %vm6549 = vcmp.lt.s32.totalorder %v326, 0
        %v6550 = vand.u32 %v326, 2139095040
        %v6551 = vshrl.u32 %v6550, 23
        %v6552 = vsub.s32 %v6551, 127
        %v6553 = vand.u32 2147483647, %v326
        %v6554 = vand.u32 %v6553, 8388607
        %v6555 = vor.u32 %v6554, 8388608
        %v6556 = vsub.s32 0, %v6555
        %v6557 = vadd.s32 %v6552, 1
        %vm6558 = vcmp.gt.s32.totalorder %v6557, 0
        %v6559 = vsel %vm6558, %v6557, 0
        %v6560 = vshrl.u32 %v6559, 5
        %v6561 = vand.u32 %v6559, 31
        %v6562 = vsub.s32 32, %v6561
        %v6563 = vshrl.u32 683565275, %v6562
        %v6564 = vshll.u32 683565275, %v6561
        %v6565 = vshrl.u32 2475754826, %v6562
        %v6566 = vor.u32 %v6564, %v6565
        %v6567 = vshll.u32 2475754826, %v6561
        %v6568 = vshrl.u32 2131351028, %v6562
        %v6569 = vor.u32 %v6567, %v6568
        %v6570 = vshll.u32 2131351028, %v6561
        %v6571 = vshrl.u32 2102212464, %v6562
        %v6572 = vor.u32 %v6570, %v6571
        %v6573 = vshll.u32 2102212464, %v6561
        %v6574 = vshrl.u32 920167782, %v6562
        %v6575 = vor.u32 %v6573, %v6574
        %v6576 = vshll.u32 920167782, %v6561
        %v6577 = vshrl.u32 1326507024, %v6562
        %v6578 = vor.u32 %v6576, %v6577
        %vm6579 = vcmp.lt.s32.totalorder %v6560, 1
        %vm6580 = vcmp.lt.s32.totalorder %v6560, 2
        %vm6581 = vcmp.lt.s32.totalorder %v6560, 3
        %vm6582 = vcmp.lt.s32.totalorder %v6560, 4
        %v6583 = vsel %vm6579, %v6563, %v6566
        %v6584 = vsel %vm6582, %v6572, 2102212464
        %v6585 = vsel %vm6581, %v6569, %v6584
        %v6586 = vsel %vm6580, %v6583, %v6585
        %v6587 = vsel %vm6579, %v6566, %v6569
        %v6588 = vsel %vm6582, %v6575, 920167782
        %v6589 = vsel %vm6581, %v6572, %v6588
        %v6590 = vsel %vm6580, %v6587, %v6589
        %v6591 = vsel %vm6579, %v6569, %v6572
        %v6592 = vsel %vm6582, %v6578, 1326507024
        %v6593 = vsel %vm6581, %v6575, %v6592
        %v6594 = vsel %vm6580, %v6591, %v6593
        %v6595 = vshll.u32 %v6555, 8
        %v6596 = vmul.u32.u64.compose %v6595, %v6594
        %v6597 = vextract.low.u32 %v6596
        %v6598 = vextract.high.u32 %v6596
        %v6599 = vmul.u32.u64.compose %v6595, %v6590
        %v6600 = vextract.low.u32 %v6599
        %v6601 = vextract.high.u32 %v6599
        %v6602 = vmul.u32 %v6595, %v6586
        %v6603 = vadd.s32 %v6598, %v6600
        %vm6604 = vc.u32 %v6598, %v6600
        %v6605 = vadd.s32 %v6601, 1
        %v6606 = vsel %vm6604, %v6605, %v6601
        %v6607 = vadd.s32 %v6602, %v6606
        %v6608 = vadd.s32 %v6607, 536870912
        %v6609 = vshrl.u32 %v6608, 30
        %v6610 = vshll.u32 %v6609, 30
        %v6611 = vsub.s32 %v6607, %v6610
        %vm6612 = vcmp.lt.s32.totalorder %v6611, 0
        %v6613 = vsub.s32 0, %v6611
        %v6614 = vsel %vm6612, %v6613, %v6611
        %v6615 = vclz %v6614
        %v6616 = vsub.s32 %v6615, 2
        %vm6617 = vcmp.gt.s32.totalorder 0, %v6616
        %v6618 = vsel %vm6617, 0, %v6616
        %v6619 = vsub.s32 32, %v6618
        %v6620 = vshll.u32 %v6611, %v6618
        %v6621 = vshrl.u32 %v6603, %v6619
        %v6622 = vor.u32 %v6620, %v6621
        %v6623 = vsub.s32 4294967266, %v6618
        %v6624 = vadd.s32 %v6623, 127
        %v6625 = vshll.u32 %v6624, 23
        %v6626 = vor.u32 4788187, %v6625
        %v6627 = vand.u32 2147483647, %v6626
        %v6629 = vcvt.s32.f32 %v6622
        %v6630 = vmul.f32 %v6629, %v6627
        %v6631 = vxor.u32 %v6630, 2147483648
        %v6632 = vsel %vm6549, %v6631, %v6630
        %v6633 = vsub.s32 4, %v6609
        %v6634 = vsel %vm6549, %v6633, %v6609
        %v6635 = vsel %vm6548, %v326, %v6632
        %v6636 = vsel %vm6548, 0, %v6634
        %v6637 = vcosq.f32.pop %v6635
        %v6638 = vsinq.f32.pop %v6635
        %vm6639 = vweird.f32 %v326
        %v6640 = vadd.s32 %v6636, 3
        %v6641 = vand.u32 %v6640, 3
        %vm6642 = vcmp.lt.s32.totalorder %v6641, 2
        %vm6643 = vcmp.eq.s32.totalorder %v6641, 0
        %v6644 = vxor.u32 %v6638, 2147483648
        %v6645 = vsel %vm6643, %v6637, %v6644
        %vm6646 = vcmp.eq.s32.totalorder %v6641, 2
        %v6647 = vxor.u32 %v6637, 2147483648
        %v6648 = vsel %vm6646, %v6647, %v6638
        %v6649 = vsel %vm6642, %v6645, %v6648
        %v6650 = vsel %vm6639, nan, %v6649
        %v6651 = vand.u32 2147483647, %v327
        %vm6652 = vcmp.le.f32.partialorder %v6651, 0.7853982
        %vm6653 = vcmp.lt.s32.totalorder %v327, 0
        %v6654 = vand.u32 %v327, 2139095040
        %v6655 = vshrl.u32 %v6654, 23
        %v6656 = vsub.s32 %v6655, 127
        %v6657 = vand.u32 2147483647, %v327
        %v6658 = vand.u32 %v6657, 8388607
        %v6659 = vor.u32 %v6658, 8388608
        %v6660 = vsub.s32 0, %v6659
        %v6661 = vadd.s32 %v6656, 1
        %vm6662 = vcmp.gt.s32.totalorder %v6661, 0
        %v6663 = vsel %vm6662, %v6661, 0
        %v6664 = vshrl.u32 %v6663, 5
        %v6665 = vand.u32 %v6663, 31
        %v6666 = vsub.s32 32, %v6665
        %v6667 = vshrl.u32 683565275, %v6666
        %v6668 = vshll.u32 683565275, %v6665
        %v6669 = vshrl.u32 2475754826, %v6666
        %v6670 = vor.u32 %v6668, %v6669
        %v6671 = vshll.u32 2475754826, %v6665
        %v6672 = vshrl.u32 2131351028, %v6666
        %v6673 = vor.u32 %v6671, %v6672
        %v6674 = vshll.u32 2131351028, %v6665
        %v6675 = vshrl.u32 2102212464, %v6666
        %v6676 = vor.u32 %v6674, %v6675
        %v6677 = vshll.u32 2102212464, %v6665
        %v6678 = vshrl.u32 920167782, %v6666
        %v6679 = vor.u32 %v6677, %v6678
        %v6680 = vshll.u32 920167782, %v6665
        %v6681 = vshrl.u32 1326507024, %v6666
        %v6682 = vor.u32 %v6680, %v6681
        %vm6683 = vcmp.lt.s32.totalorder %v6664, 1
        %vm6684 = vcmp.lt.s32.totalorder %v6664, 2
        %vm6685 = vcmp.lt.s32.totalorder %v6664, 3
        %vm6686 = vcmp.lt.s32.totalorder %v6664, 4
        %v6687 = vsel %vm6683, %v6667, %v6670
        %v6688 = vsel %vm6686, %v6676, 2102212464
        %v6689 = vsel %vm6685, %v6673, %v6688
        %v6690 = vsel %vm6684, %v6687, %v6689
        %v6691 = vsel %vm6683, %v6670, %v6673
        %v6692 = vsel %vm6686, %v6679, 920167782
        %v6693 = vsel %vm6685, %v6676, %v6692
        %v6694 = vsel %vm6684, %v6691, %v6693
        %v6695 = vsel %vm6683, %v6673, %v6676
        %v6696 = vsel %vm6686, %v6682, 1326507024
        %v6697 = vsel %vm6685, %v6679, %v6696
        %v6698 = vsel %vm6684, %v6695, %v6697
        %v6699 = vshll.u32 %v6659, 8
        %v6700 = vmul.u32.u64.compose %v6699, %v6698
        %v6701 = vextract.low.u32 %v6700
        %v6702 = vextract.high.u32 %v6700
        %v6703 = vmul.u32.u64.compose %v6699, %v6694
        %v6704 = vextract.low.u32 %v6703
        %v6705 = vextract.high.u32 %v6703
        %v6706 = vmul.u32 %v6699, %v6690
        %v6707 = vadd.s32 %v6702, %v6704
        %vm6708 = vc.u32 %v6702, %v6704
        %v6709 = vadd.s32 %v6705, 1
        %v6710 = vsel %vm6708, %v6709, %v6705
        %v6711 = vadd.s32 %v6706, %v6710
        %v6712 = vadd.s32 %v6711, 536870912
        %v6713 = vshrl.u32 %v6712, 30
        %v6714 = vshll.u32 %v6713, 30
        %v6715 = vsub.s32 %v6711, %v6714
        %vm6716 = vcmp.lt.s32.totalorder %v6715, 0
        %v6717 = vsub.s32 0, %v6715
        %v6718 = vsel %vm6716, %v6717, %v6715
        %v6719 = vclz %v6718
        %v6720 = vsub.s32 %v6719, 2
        %vm6721 = vcmp.gt.s32.totalorder 0, %v6720
        %v6722 = vsel %vm6721, 0, %v6720
        %v6723 = vsub.s32 32, %v6722
        %v6724 = vshll.u32 %v6715, %v6722
        %v6725 = vshrl.u32 %v6707, %v6723
        %v6726 = vor.u32 %v6724, %v6725
        %v6727 = vsub.s32 4294967266, %v6722
        %v6728 = vadd.s32 %v6727, 127
        %v6729 = vshll.u32 %v6728, 23
        %v6730 = vor.u32 4788187, %v6729
        %v6731 = vand.u32 2147483647, %v6730
        %v6733 = vcvt.s32.f32 %v6726
        %v6734 = vmul.f32 %v6733, %v6731
        %v6735 = vxor.u32 %v6734, 2147483648
        %v6736 = vsel %vm6653, %v6735, %v6734
        %v6737 = vsub.s32 4, %v6713
        %v6738 = vsel %vm6653, %v6737, %v6713
        %v6739 = vsel %vm6652, %v327, %v6736
        %v6740 = vsel %vm6652, 0, %v6738
        %v6741 = vcosq.f32.pop %v6739
        %v6742 = vsinq.f32.pop %v6739
        %vm6743 = vweird.f32 %v327
        %v6744 = vadd.s32 %v6740, 3
        %v6745 = vand.u32 %v6744, 3
        %vm6746 = vcmp.lt.s32.totalorder %v6745, 2
        %vm6747 = vcmp.eq.s32.totalorder %v6745, 0
        %v6748 = vxor.u32 %v6742, 2147483648
        %v6749 = vsel %vm6747, %v6741, %v6748
        %vm6750 = vcmp.eq.s32.totalorder %v6745, 2
        %v6751 = vxor.u32 %v6741, 2147483648
        %v6752 = vsel %vm6750, %v6751, %v6742
        %v6753 = vsel %vm6746, %v6749, %v6752
        %v6754 = vsel %vm6743, nan, %v6753
        %v6755 = vand.u32 2147483647, %v328
        %vm6756 = vcmp.le.f32.partialorder %v6755, 0.7853982
        %vm6757 = vcmp.lt.s32.totalorder %v328, 0
        %v6758 = vand.u32 %v328, 2139095040
        %v6759 = vshrl.u32 %v6758, 23
        %v6760 = vsub.s32 %v6759, 127
        %v6761 = vand.u32 2147483647, %v328
        %v6762 = vand.u32 %v6761, 8388607
        %v6763 = vor.u32 %v6762, 8388608
        %v6764 = vsub.s32 0, %v6763
        %v6765 = vadd.s32 %v6760, 1
        %vm6766 = vcmp.gt.s32.totalorder %v6765, 0
        %v6767 = vsel %vm6766, %v6765, 0
        %v6768 = vshrl.u32 %v6767, 5
        %v6769 = vand.u32 %v6767, 31
        %v6770 = vsub.s32 32, %v6769
        %v6771 = vshrl.u32 683565275, %v6770
        %v6772 = vshll.u32 683565275, %v6769
        %v6773 = vshrl.u32 2475754826, %v6770
        %v6774 = vor.u32 %v6772, %v6773
        %v6775 = vshll.u32 2475754826, %v6769
        %v6776 = vshrl.u32 2131351028, %v6770
        %v6777 = vor.u32 %v6775, %v6776
        %v6778 = vshll.u32 2131351028, %v6769
        %v6779 = vshrl.u32 2102212464, %v6770
        %v6780 = vor.u32 %v6778, %v6779
        %v6781 = vshll.u32 2102212464, %v6769
        %v6782 = vshrl.u32 920167782, %v6770
        %v6783 = vor.u32 %v6781, %v6782
        %v6784 = vshll.u32 920167782, %v6769
        %v6785 = vshrl.u32 1326507024, %v6770
        %v6786 = vor.u32 %v6784, %v6785
        %vm6787 = vcmp.lt.s32.totalorder %v6768, 1
        %vm6788 = vcmp.lt.s32.totalorder %v6768, 2
        %vm6789 = vcmp.lt.s32.totalorder %v6768, 3
        %vm6790 = vcmp.lt.s32.totalorder %v6768, 4
        %v6791 = vsel %vm6787, %v6771, %v6774
        %v6792 = vsel %vm6790, %v6780, 2102212464
        %v6793 = vsel %vm6789, %v6777, %v6792
        %v6794 = vsel %vm6788, %v6791, %v6793
        %v6795 = vsel %vm6787, %v6774, %v6777
        %v6796 = vsel %vm6790, %v6783, 920167782
        %v6797 = vsel %vm6789, %v6780, %v6796
        %v6798 = vsel %vm6788, %v6795, %v6797
        %v6799 = vsel %vm6787, %v6777, %v6780
        %v6800 = vsel %vm6790, %v6786, 1326507024
        %v6801 = vsel %vm6789, %v6783, %v6800
        %v6802 = vsel %vm6788, %v6799, %v6801
        %v6803 = vshll.u32 %v6763, 8
        %v6804 = vmul.u32.u64.compose %v6803, %v6802
        %v6805 = vextract.low.u32 %v6804
        %v6806 = vextract.high.u32 %v6804
        %v6807 = vmul.u32.u64.compose %v6803, %v6798
        %v6808 = vextract.low.u32 %v6807
        %v6809 = vextract.high.u32 %v6807
        %v6810 = vmul.u32 %v6803, %v6794
        %v6811 = vadd.s32 %v6806, %v6808
        %vm6812 = vc.u32 %v6806, %v6808
        %v6813 = vadd.s32 %v6809, 1
        %v6814 = vsel %vm6812, %v6813, %v6809
        %v6815 = vadd.s32 %v6810, %v6814
        %v6816 = vadd.s32 %v6815, 536870912
        %v6817 = vshrl.u32 %v6816, 30
        %v6818 = vshll.u32 %v6817, 30
        %v6819 = vsub.s32 %v6815, %v6818
        %vm6820 = vcmp.lt.s32.totalorder %v6819, 0
        %v6821 = vsub.s32 0, %v6819
        %v6822 = vsel %vm6820, %v6821, %v6819
        %v6823 = vclz %v6822
        %v6824 = vsub.s32 %v6823, 2
        %vm6825 = vcmp.gt.s32.totalorder 0, %v6824
        %v6826 = vsel %vm6825, 0, %v6824
        %v6827 = vsub.s32 32, %v6826
        %v6828 = vshll.u32 %v6819, %v6826
        %v6829 = vshrl.u32 %v6811, %v6827
        %v6830 = vor.u32 %v6828, %v6829
        %v6831 = vsub.s32 4294967266, %v6826
        %v6832 = vadd.s32 %v6831, 127
        %v6833 = vshll.u32 %v6832, 23
        %v6834 = vor.u32 4788187, %v6833
        %v6835 = vand.u32 2147483647, %v6834
        %v6837 = vcvt.s32.f32 %v6830
        %v6838 = vmul.f32 %v6837, %v6835
        %v6839 = vxor.u32 %v6838, 2147483648
        %v6840 = vsel %vm6757, %v6839, %v6838
        %v6841 = vsub.s32 4, %v6817
        %v6842 = vsel %vm6757, %v6841, %v6817
        %v6843 = vsel %vm6756, %v328, %v6840
        %v6844 = vsel %vm6756, 0, %v6842
        %v6845 = vcosq.f32.pop %v6843
        %v6846 = vsinq.f32.pop %v6843
        %vm6847 = vweird.f32 %v328
        %v6848 = vadd.s32 %v6844, 3
        %v6849 = vand.u32 %v6848, 3
        %vm6850 = vcmp.lt.s32.totalorder %v6849, 2
        %vm6851 = vcmp.eq.s32.totalorder %v6849, 0
        %v6852 = vxor.u32 %v6846, 2147483648
        %v6853 = vsel %vm6851, %v6845, %v6852
        %vm6854 = vcmp.eq.s32.totalorder %v6849, 2
        %v6855 = vxor.u32 %v6845, 2147483648
        %v6856 = vsel %vm6854, %v6855, %v6846
        %v6857 = vsel %vm6850, %v6853, %v6856
        %v6858 = vsel %vm6847, nan, %v6857
        %v6859 = vand.u32 2147483647, %v329
        %vm6860 = vcmp.le.f32.partialorder %v6859, 0.7853982
        %vm6861 = vcmp.lt.s32.totalorder %v329, 0
        %v6862 = vand.u32 %v329, 2139095040
        %v6863 = vshrl.u32 %v6862, 23
        %v6864 = vsub.s32 %v6863, 127
        %v6865 = vand.u32 2147483647, %v329
        %v6866 = vand.u32 %v6865, 8388607
        %v6867 = vor.u32 %v6866, 8388608
        %v6868 = vsub.s32 0, %v6867
        %v6869 = vadd.s32 %v6864, 1
        %vm6870 = vcmp.gt.s32.totalorder %v6869, 0
        %v6871 = vsel %vm6870, %v6869, 0
        %v6872 = vshrl.u32 %v6871, 5
        %v6873 = vand.u32 %v6871, 31
        %v6874 = vsub.s32 32, %v6873
        %v6875 = vshrl.u32 683565275, %v6874
        %v6876 = vshll.u32 683565275, %v6873
        %v6877 = vshrl.u32 2475754826, %v6874
        %v6878 = vor.u32 %v6876, %v6877
        %v6879 = vshll.u32 2475754826, %v6873
        %v6880 = vshrl.u32 2131351028, %v6874
        %v6881 = vor.u32 %v6879, %v6880
        %v6882 = vshll.u32 2131351028, %v6873
        %v6883 = vshrl.u32 2102212464, %v6874
        %v6884 = vor.u32 %v6882, %v6883
        %v6885 = vshll.u32 2102212464, %v6873
        %v6886 = vshrl.u32 920167782, %v6874
        %v6887 = vor.u32 %v6885, %v6886
        %v6888 = vshll.u32 920167782, %v6873
        %v6889 = vshrl.u32 1326507024, %v6874
        %v6890 = vor.u32 %v6888, %v6889
        %vm6891 = vcmp.lt.s32.totalorder %v6872, 1
        %vm6892 = vcmp.lt.s32.totalorder %v6872, 2
        %vm6893 = vcmp.lt.s32.totalorder %v6872, 3
        %vm6894 = vcmp.lt.s32.totalorder %v6872, 4
        %v6895 = vsel %vm6891, %v6875, %v6878
        %v6896 = vsel %vm6894, %v6884, 2102212464
        %v6897 = vsel %vm6893, %v6881, %v6896
        %v6898 = vsel %vm6892, %v6895, %v6897
        %v6899 = vsel %vm6891, %v6878, %v6881
        %v6900 = vsel %vm6894, %v6887, 920167782
        %v6901 = vsel %vm6893, %v6884, %v6900
        %v6902 = vsel %vm6892, %v6899, %v6901
        %v6903 = vsel %vm6891, %v6881, %v6884
        %v6904 = vsel %vm6894, %v6890, 1326507024
        %v6905 = vsel %vm6893, %v6887, %v6904
        %v6906 = vsel %vm6892, %v6903, %v6905
        %v6907 = vshll.u32 %v6867, 8
        %v6908 = vmul.u32.u64.compose %v6907, %v6906
        %v6909 = vextract.low.u32 %v6908
        %v6910 = vextract.high.u32 %v6908
        %v6911 = vmul.u32.u64.compose %v6907, %v6902
        %v6912 = vextract.low.u32 %v6911
        %v6913 = vextract.high.u32 %v6911
        %v6914 = vmul.u32 %v6907, %v6898
        %v6915 = vadd.s32 %v6910, %v6912
        %vm6916 = vc.u32 %v6910, %v6912
        %v6917 = vadd.s32 %v6913, 1
        %v6918 = vsel %vm6916, %v6917, %v6913
        %v6919 = vadd.s32 %v6914, %v6918
        %v6920 = vadd.s32 %v6919, 536870912
        %v6921 = vshrl.u32 %v6920, 30
        %v6922 = vshll.u32 %v6921, 30
        %v6923 = vsub.s32 %v6919, %v6922
        %vm6924 = vcmp.lt.s32.totalorder %v6923, 0
        %v6925 = vsub.s32 0, %v6923
        %v6926 = vsel %vm6924, %v6925, %v6923
        %v6927 = vclz %v6926
        %v6928 = vsub.s32 %v6927, 2
        %vm6929 = vcmp.gt.s32.totalorder 0, %v6928
        %v6930 = vsel %vm6929, 0, %v6928
        %v6931 = vsub.s32 32, %v6930
        %v6932 = vshll.u32 %v6923, %v6930
        %v6933 = vshrl.u32 %v6915, %v6931
        %v6934 = vor.u32 %v6932, %v6933
        %v6935 = vsub.s32 4294967266, %v6930
        %v6936 = vadd.s32 %v6935, 127
        %v6937 = vshll.u32 %v6936, 23
        %v6938 = vor.u32 4788187, %v6937
        %v6939 = vand.u32 2147483647, %v6938
        %v6941 = vcvt.s32.f32 %v6934
        %v6942 = vmul.f32 %v6941, %v6939
        %v6943 = vxor.u32 %v6942, 2147483648
        %v6944 = vsel %vm6861, %v6943, %v6942
        %v6945 = vsub.s32 4, %v6921
        %v6946 = vsel %vm6861, %v6945, %v6921
        %v6947 = vsel %vm6860, %v329, %v6944
        %v6948 = vsel %vm6860, 0, %v6946
        %v6949 = vcosq.f32.pop %v6947
        %v6950 = vsinq.f32.pop %v6947
        %vm6951 = vweird.f32 %v329
        %v6952 = vadd.s32 %v6948, 3
        %v6953 = vand.u32 %v6952, 3
        %vm6954 = vcmp.lt.s32.totalorder %v6953, 2
        %vm6955 = vcmp.eq.s32.totalorder %v6953, 0
        %v6956 = vxor.u32 %v6950, 2147483648
        %v6957 = vsel %vm6955, %v6949, %v6956
        %vm6958 = vcmp.eq.s32.totalorder %v6953, 2
        %v6959 = vxor.u32 %v6949, 2147483648
        %v6960 = vsel %vm6958, %v6959, %v6950
        %v6961 = vsel %vm6954, %v6957, %v6960
        %v6962 = vsel %vm6951, nan, %v6961
        %v6963 = vand.u32 2147483647, %v330
        %vm6964 = vcmp.le.f32.partialorder %v6963, 0.7853982
        %vm6965 = vcmp.lt.s32.totalorder %v330, 0
        %v6966 = vand.u32 %v330, 2139095040
        %v6967 = vshrl.u32 %v6966, 23
        %v6968 = vsub.s32 %v6967, 127
        %v6969 = vand.u32 2147483647, %v330
        %v6970 = vand.u32 %v6969, 8388607
        %v6971 = vor.u32 %v6970, 8388608
        %v6972 = vsub.s32 0, %v6971
        %v6973 = vadd.s32 %v6968, 1
        %vm6974 = vcmp.gt.s32.totalorder %v6973, 0
        %v6975 = vsel %vm6974, %v6973, 0
        %v6976 = vshrl.u32 %v6975, 5
        %v6977 = vand.u32 %v6975, 31
        %v6978 = vsub.s32 32, %v6977
        %v6979 = vshrl.u32 683565275, %v6978
        %v6980 = vshll.u32 683565275, %v6977
        %v6981 = vshrl.u32 2475754826, %v6978
        %v6982 = vor.u32 %v6980, %v6981
        %v6983 = vshll.u32 2475754826, %v6977
        %v6984 = vshrl.u32 2131351028, %v6978
        %v6985 = vor.u32 %v6983, %v6984
        %v6986 = vshll.u32 2131351028, %v6977
        %v6987 = vshrl.u32 2102212464, %v6978
        %v6988 = vor.u32 %v6986, %v6987
        %v6989 = vshll.u32 2102212464, %v6977
        %v6990 = vshrl.u32 920167782, %v6978
        %v6991 = vor.u32 %v6989, %v6990
        %v6992 = vshll.u32 920167782, %v6977
        %v6993 = vshrl.u32 1326507024, %v6978
        %v6994 = vor.u32 %v6992, %v6993
        %vm6995 = vcmp.lt.s32.totalorder %v6976, 1
        %vm6996 = vcmp.lt.s32.totalorder %v6976, 2
        %vm6997 = vcmp.lt.s32.totalorder %v6976, 3
        %vm6998 = vcmp.lt.s32.totalorder %v6976, 4
        %v6999 = vsel %vm6995, %v6979, %v6982
        %v7000 = vsel %vm6998, %v6988, 2102212464
        %v7001 = vsel %vm6997, %v6985, %v7000
        %v7002 = vsel %vm6996, %v6999, %v7001
        %v7003 = vsel %vm6995, %v6982, %v6985
        %v7004 = vsel %vm6998, %v6991, 920167782
        %v7005 = vsel %vm6997, %v6988, %v7004
        %v7006 = vsel %vm6996, %v7003, %v7005
        %v7007 = vsel %vm6995, %v6985, %v6988
        %v7008 = vsel %vm6998, %v6994, 1326507024
        %v7009 = vsel %vm6997, %v6991, %v7008
        %v7010 = vsel %vm6996, %v7007, %v7009
        %v7011 = vshll.u32 %v6971, 8
        %v7012 = vmul.u32.u64.compose %v7011, %v7010
        %v7013 = vextract.low.u32 %v7012
        %v7014 = vextract.high.u32 %v7012
        %v7015 = vmul.u32.u64.compose %v7011, %v7006
        %v7016 = vextract.low.u32 %v7015
        %v7017 = vextract.high.u32 %v7015
        %v7018 = vmul.u32 %v7011, %v7002
        %v7019 = vadd.s32 %v7014, %v7016
        %vm7020 = vc.u32 %v7014, %v7016
        %v7021 = vadd.s32 %v7017, 1
        %v7022 = vsel %vm7020, %v7021, %v7017
        %v7023 = vadd.s32 %v7018, %v7022
        %v7024 = vadd.s32 %v7023, 536870912
        %v7025 = vshrl.u32 %v7024, 30
        %v7026 = vshll.u32 %v7025, 30
        %v7027 = vsub.s32 %v7023, %v7026
        %vm7028 = vcmp.lt.s32.totalorder %v7027, 0
        %v7029 = vsub.s32 0, %v7027
        %v7030 = vsel %vm7028, %v7029, %v7027
        %v7031 = vclz %v7030
        %v7032 = vsub.s32 %v7031, 2
        %vm7033 = vcmp.gt.s32.totalorder 0, %v7032
        %v7034 = vsel %vm7033, 0, %v7032
        %v7035 = vsub.s32 32, %v7034
        %v7036 = vshll.u32 %v7027, %v7034
        %v7037 = vshrl.u32 %v7019, %v7035
        %v7038 = vor.u32 %v7036, %v7037
        %v7039 = vsub.s32 4294967266, %v7034
        %v7040 = vadd.s32 %v7039, 127
        %v7041 = vshll.u32 %v7040, 23
        %v7042 = vor.u32 4788187, %v7041
        %v7043 = vand.u32 2147483647, %v7042
        %v7045 = vcvt.s32.f32 %v7038
        %v7046 = vmul.f32 %v7045, %v7043
        %v7047 = vxor.u32 %v7046, 2147483648
        %v7048 = vsel %vm6965, %v7047, %v7046
        %v7049 = vsub.s32 4, %v7025
        %v7050 = vsel %vm6965, %v7049, %v7025
        %v7051 = vsel %vm6964, %v330, %v7048
        %v7052 = vsel %vm6964, 0, %v7050
        %v7053 = vcosq.f32.pop %v7051
        %v7054 = vsinq.f32.pop %v7051
        %vm7055 = vweird.f32 %v330
        %v7056 = vadd.s32 %v7052, 3
        %v7057 = vand.u32 %v7056, 3
        %vm7058 = vcmp.lt.s32.totalorder %v7057, 2
        %vm7059 = vcmp.eq.s32.totalorder %v7057, 0
        %v7060 = vxor.u32 %v7054, 2147483648
        %v7061 = vsel %vm7059, %v7053, %v7060
        %vm7062 = vcmp.eq.s32.totalorder %v7057, 2
        %v7063 = vxor.u32 %v7053, 2147483648
        %v7064 = vsel %vm7062, %v7063, %v7054
        %v7065 = vsel %vm7058, %v7061, %v7064
        %v7066 = vsel %vm7055, nan, %v7065
        %v7067 = vand.u32 2147483647, %v331
        %vm7068 = vcmp.le.f32.partialorder %v7067, 0.7853982
        %vm7069 = vcmp.lt.s32.totalorder %v331, 0
        %v7070 = vand.u32 %v331, 2139095040
        %v7071 = vshrl.u32 %v7070, 23
        %v7072 = vsub.s32 %v7071, 127
        %v7073 = vand.u32 2147483647, %v331
        %v7074 = vand.u32 %v7073, 8388607
        %v7075 = vor.u32 %v7074, 8388608
        %v7076 = vsub.s32 0, %v7075
        %v7077 = vadd.s32 %v7072, 1
        %vm7078 = vcmp.gt.s32.totalorder %v7077, 0
        %v7079 = vsel %vm7078, %v7077, 0
        %v7080 = vshrl.u32 %v7079, 5
        %v7081 = vand.u32 %v7079, 31
        %v7082 = vsub.s32 32, %v7081
        %v7083 = vshrl.u32 683565275, %v7082
        %v7084 = vshll.u32 683565275, %v7081
        %v7085 = vshrl.u32 2475754826, %v7082
        %v7086 = vor.u32 %v7084, %v7085
        %v7087 = vshll.u32 2475754826, %v7081
        %v7088 = vshrl.u32 2131351028, %v7082
        %v7089 = vor.u32 %v7087, %v7088
        %v7090 = vshll.u32 2131351028, %v7081
        %v7091 = vshrl.u32 2102212464, %v7082
        %v7092 = vor.u32 %v7090, %v7091
        %v7093 = vshll.u32 2102212464, %v7081
        %v7094 = vshrl.u32 920167782, %v7082
        %v7095 = vor.u32 %v7093, %v7094
        %v7096 = vshll.u32 920167782, %v7081
        %v7097 = vshrl.u32 1326507024, %v7082
        %v7098 = vor.u32 %v7096, %v7097
        %vm7099 = vcmp.lt.s32.totalorder %v7080, 1
        %vm7100 = vcmp.lt.s32.totalorder %v7080, 2
        %vm7101 = vcmp.lt.s32.totalorder %v7080, 3
        %vm7102 = vcmp.lt.s32.totalorder %v7080, 4
        %v7103 = vsel %vm7099, %v7083, %v7086
        %v7104 = vsel %vm7102, %v7092, 2102212464
        %v7105 = vsel %vm7101, %v7089, %v7104
        %v7106 = vsel %vm7100, %v7103, %v7105
        %v7107 = vsel %vm7099, %v7086, %v7089
        %v7108 = vsel %vm7102, %v7095, 920167782
        %v7109 = vsel %vm7101, %v7092, %v7108
        %v7110 = vsel %vm7100, %v7107, %v7109
        %v7111 = vsel %vm7099, %v7089, %v7092
        %v7112 = vsel %vm7102, %v7098, 1326507024
        %v7113 = vsel %vm7101, %v7095, %v7112
        %v7114 = vsel %vm7100, %v7111, %v7113
        %v7115 = vshll.u32 %v7075, 8
        %v7116 = vmul.u32.u64.compose %v7115, %v7114
        %v7117 = vextract.low.u32 %v7116
        %v7118 = vextract.high.u32 %v7116
        %v7119 = vmul.u32.u64.compose %v7115, %v7110
        %v7120 = vextract.low.u32 %v7119
        %v7121 = vextract.high.u32 %v7119
        %v7122 = vmul.u32 %v7115, %v7106
        %v7123 = vadd.s32 %v7118, %v7120
        %vm7124 = vc.u32 %v7118, %v7120
        %v7125 = vadd.s32 %v7121, 1
        %v7126 = vsel %vm7124, %v7125, %v7121
        %v7127 = vadd.s32 %v7122, %v7126
        %v7128 = vadd.s32 %v7127, 536870912
        %v7129 = vshrl.u32 %v7128, 30
        %v7130 = vshll.u32 %v7129, 30
        %v7131 = vsub.s32 %v7127, %v7130
        %vm7132 = vcmp.lt.s32.totalorder %v7131, 0
        %v7133 = vsub.s32 0, %v7131
        %v7134 = vsel %vm7132, %v7133, %v7131
        %v7135 = vclz %v7134
        %v7136 = vsub.s32 %v7135, 2
        %vm7137 = vcmp.gt.s32.totalorder 0, %v7136
        %v7138 = vsel %vm7137, 0, %v7136
        %v7139 = vsub.s32 32, %v7138
        %v7140 = vshll.u32 %v7131, %v7138
        %v7141 = vshrl.u32 %v7123, %v7139
        %v7142 = vor.u32 %v7140, %v7141
        %v7143 = vsub.s32 4294967266, %v7138
        %v7144 = vadd.s32 %v7143, 127
        %v7145 = vshll.u32 %v7144, 23
        %v7146 = vor.u32 4788187, %v7145
        %v7147 = vand.u32 2147483647, %v7146
        %v7149 = vcvt.s32.f32 %v7142
        %v7150 = vmul.f32 %v7149, %v7147
        %v7151 = vxor.u32 %v7150, 2147483648
        %v7152 = vsel %vm7069, %v7151, %v7150
        %v7153 = vsub.s32 4, %v7129
        %v7154 = vsel %vm7069, %v7153, %v7129
        %v7155 = vsel %vm7068, %v331, %v7152
        %v7156 = vsel %vm7068, 0, %v7154
        %v7157 = vcosq.f32.pop %v7155
        %v7158 = vsinq.f32.pop %v7155
        %vm7159 = vweird.f32 %v331
        %v7160 = vadd.s32 %v7156, 3
        %v7161 = vand.u32 %v7160, 3
        %vm7162 = vcmp.lt.s32.totalorder %v7161, 2
        %vm7163 = vcmp.eq.s32.totalorder %v7161, 0
        %v7164 = vxor.u32 %v7158, 2147483648
        %v7165 = vsel %vm7163, %v7157, %v7164
        %vm7166 = vcmp.eq.s32.totalorder %v7161, 2
        %v7167 = vxor.u32 %v7157, 2147483648
        %v7168 = vsel %vm7166, %v7167, %v7158
        %v7169 = vsel %vm7162, %v7165, %v7168
        %v7170 = vsel %vm7159, nan, %v7169
        %v7171 = vand.u32 2147483647, %v332
        %vm7172 = vcmp.le.f32.partialorder %v7171, 0.7853982
        %vm7173 = vcmp.lt.s32.totalorder %v332, 0
        %v7174 = vand.u32 %v332, 2139095040
        %v7175 = vshrl.u32 %v7174, 23
        %v7176 = vsub.s32 %v7175, 127
        %v7177 = vand.u32 2147483647, %v332
        %v7178 = vand.u32 %v7177, 8388607
        %v7179 = vor.u32 %v7178, 8388608
        %v7180 = vsub.s32 0, %v7179
        %v7181 = vadd.s32 %v7176, 1
        %vm7182 = vcmp.gt.s32.totalorder %v7181, 0
        %v7183 = vsel %vm7182, %v7181, 0
        %v7184 = vshrl.u32 %v7183, 5
        %v7185 = vand.u32 %v7183, 31
        %v7186 = vsub.s32 32, %v7185
        %v7187 = vshrl.u32 683565275, %v7186
        %v7188 = vshll.u32 683565275, %v7185
        %v7189 = vshrl.u32 2475754826, %v7186
        %v7190 = vor.u32 %v7188, %v7189
        %v7191 = vshll.u32 2475754826, %v7185
        %v7192 = vshrl.u32 2131351028, %v7186
        %v7193 = vor.u32 %v7191, %v7192
        %v7194 = vshll.u32 2131351028, %v7185
        %v7195 = vshrl.u32 2102212464, %v7186
        %v7196 = vor.u32 %v7194, %v7195
        %v7197 = vshll.u32 2102212464, %v7185
        %v7198 = vshrl.u32 920167782, %v7186
        %v7199 = vor.u32 %v7197, %v7198
        %v7200 = vshll.u32 920167782, %v7185
        %v7201 = vshrl.u32 1326507024, %v7186
        %v7202 = vor.u32 %v7200, %v7201
        %vm7203 = vcmp.lt.s32.totalorder %v7184, 1
        %vm7204 = vcmp.lt.s32.totalorder %v7184, 2
        %vm7205 = vcmp.lt.s32.totalorder %v7184, 3
        %vm7206 = vcmp.lt.s32.totalorder %v7184, 4
        %v7207 = vsel %vm7203, %v7187, %v7190
        %v7208 = vsel %vm7206, %v7196, 2102212464
        %v7209 = vsel %vm7205, %v7193, %v7208
        %v7210 = vsel %vm7204, %v7207, %v7209
        %v7211 = vsel %vm7203, %v7190, %v7193
        %v7212 = vsel %vm7206, %v7199, 920167782
        %v7213 = vsel %vm7205, %v7196, %v7212
        %v7214 = vsel %vm7204, %v7211, %v7213
        %v7215 = vsel %vm7203, %v7193, %v7196
        %v7216 = vsel %vm7206, %v7202, 1326507024
        %v7217 = vsel %vm7205, %v7199, %v7216
        %v7218 = vsel %vm7204, %v7215, %v7217
        %v7219 = vshll.u32 %v7179, 8
        %v7220 = vmul.u32.u64.compose %v7219, %v7218
        %v7221 = vextract.low.u32 %v7220
        %v7222 = vextract.high.u32 %v7220
        %v7223 = vmul.u32.u64.compose %v7219, %v7214
        %v7224 = vextract.low.u32 %v7223
        %v7225 = vextract.high.u32 %v7223
        %v7226 = vmul.u32 %v7219, %v7210
        %v7227 = vadd.s32 %v7222, %v7224
        %vm7228 = vc.u32 %v7222, %v7224
        %v7229 = vadd.s32 %v7225, 1
        %v7230 = vsel %vm7228, %v7229, %v7225
        %v7231 = vadd.s32 %v7226, %v7230
        %v7232 = vadd.s32 %v7231, 536870912
        %v7233 = vshrl.u32 %v7232, 30
        %v7234 = vshll.u32 %v7233, 30
        %v7235 = vsub.s32 %v7231, %v7234
        %vm7236 = vcmp.lt.s32.totalorder %v7235, 0
        %v7237 = vsub.s32 0, %v7235
        %v7238 = vsel %vm7236, %v7237, %v7235
        %v7239 = vclz %v7238
        %v7240 = vsub.s32 %v7239, 2
        %vm7241 = vcmp.gt.s32.totalorder 0, %v7240
        %v7242 = vsel %vm7241, 0, %v7240
        %v7243 = vsub.s32 32, %v7242
        %v7244 = vshll.u32 %v7235, %v7242
        %v7245 = vshrl.u32 %v7227, %v7243
        %v7246 = vor.u32 %v7244, %v7245
        %v7247 = vsub.s32 4294967266, %v7242
        %v7248 = vadd.s32 %v7247, 127
        %v7249 = vshll.u32 %v7248, 23
        %v7250 = vor.u32 4788187, %v7249
        %v7251 = vand.u32 2147483647, %v7250
        %v7253 = vcvt.s32.f32 %v7246
        %v7254 = vmul.f32 %v7253, %v7251
        %v7255 = vxor.u32 %v7254, 2147483648
        %v7256 = vsel %vm7173, %v7255, %v7254
        %v7257 = vsub.s32 4, %v7233
        %v7258 = vsel %vm7173, %v7257, %v7233
        %v7259 = vsel %vm7172, %v332, %v7256
        %v7260 = vsel %vm7172, 0, %v7258
        %v7261 = vcosq.f32.pop %v7259
        %v7262 = vsinq.f32.pop %v7259
        %vm7263 = vweird.f32 %v332
        %v7264 = vadd.s32 %v7260, 3
        %v7265 = vand.u32 %v7264, 3
        %vm7266 = vcmp.lt.s32.totalorder %v7265, 2
        %vm7267 = vcmp.eq.s32.totalorder %v7265, 0
        %v7268 = vxor.u32 %v7262, 2147483648
        %v7269 = vsel %vm7267, %v7261, %v7268
        %vm7270 = vcmp.eq.s32.totalorder %v7265, 2
        %v7271 = vxor.u32 %v7261, 2147483648
        %v7272 = vsel %vm7270, %v7271, %v7262
        %v7273 = vsel %vm7266, %v7269, %v7272
        %v7274 = vsel %vm7263, nan, %v7273
        %v7275 = vand.u32 2147483647, %v333
        %vm7276 = vcmp.le.f32.partialorder %v7275, 0.7853982
        %vm7277 = vcmp.lt.s32.totalorder %v333, 0
        %v7278 = vand.u32 %v333, 2139095040
        %v7279 = vshrl.u32 %v7278, 23
        %v7280 = vsub.s32 %v7279, 127
        %v7281 = vand.u32 2147483647, %v333
        %v7282 = vand.u32 %v7281, 8388607
        %v7283 = vor.u32 %v7282, 8388608
        %v7284 = vsub.s32 0, %v7283
        %v7285 = vadd.s32 %v7280, 1
        %vm7286 = vcmp.gt.s32.totalorder %v7285, 0
        %v7287 = vsel %vm7286, %v7285, 0
        %v7288 = vshrl.u32 %v7287, 5
        %v7289 = vand.u32 %v7287, 31
        %v7290 = vsub.s32 32, %v7289
        %v7291 = vshrl.u32 683565275, %v7290
        %v7292 = vshll.u32 683565275, %v7289
        %v7293 = vshrl.u32 2475754826, %v7290
        %v7294 = vor.u32 %v7292, %v7293
        %v7295 = vshll.u32 2475754826, %v7289
        %v7296 = vshrl.u32 2131351028, %v7290
        %v7297 = vor.u32 %v7295, %v7296
        %v7298 = vshll.u32 2131351028, %v7289
        %v7299 = vshrl.u32 2102212464, %v7290
        %v7300 = vor.u32 %v7298, %v7299
        %v7301 = vshll.u32 2102212464, %v7289
        %v7302 = vshrl.u32 920167782, %v7290
        %v7303 = vor.u32 %v7301, %v7302
        %v7304 = vshll.u32 920167782, %v7289
        %v7305 = vshrl.u32 1326507024, %v7290
        %v7306 = vor.u32 %v7304, %v7305
        %vm7307 = vcmp.lt.s32.totalorder %v7288, 1
        %vm7308 = vcmp.lt.s32.totalorder %v7288, 2
        %vm7309 = vcmp.lt.s32.totalorder %v7288, 3
        %vm7310 = vcmp.lt.s32.totalorder %v7288, 4
        %v7311 = vsel %vm7307, %v7291, %v7294
        %v7312 = vsel %vm7310, %v7300, 2102212464
        %v7313 = vsel %vm7309, %v7297, %v7312
        %v7314 = vsel %vm7308, %v7311, %v7313
        %v7315 = vsel %vm7307, %v7294, %v7297
        %v7316 = vsel %vm7310, %v7303, 920167782
        %v7317 = vsel %vm7309, %v7300, %v7316
        %v7318 = vsel %vm7308, %v7315, %v7317
        %v7319 = vsel %vm7307, %v7297, %v7300
        %v7320 = vsel %vm7310, %v7306, 1326507024
        %v7321 = vsel %vm7309, %v7303, %v7320
        %v7322 = vsel %vm7308, %v7319, %v7321
        %v7323 = vshll.u32 %v7283, 8
        %v7324 = vmul.u32.u64.compose %v7323, %v7322
        %v7325 = vextract.low.u32 %v7324
        %v7326 = vextract.high.u32 %v7324
        %v7327 = vmul.u32.u64.compose %v7323, %v7318
        %v7328 = vextract.low.u32 %v7327
        %v7329 = vextract.high.u32 %v7327
        %v7330 = vmul.u32 %v7323, %v7314
        %v7331 = vadd.s32 %v7326, %v7328
        %vm7332 = vc.u32 %v7326, %v7328
        %v7333 = vadd.s32 %v7329, 1
        %v7334 = vsel %vm7332, %v7333, %v7329
        %v7335 = vadd.s32 %v7330, %v7334
        %v7336 = vadd.s32 %v7335, 536870912
        %v7337 = vshrl.u32 %v7336, 30
        %v7338 = vshll.u32 %v7337, 30
        %v7339 = vsub.s32 %v7335, %v7338
        %vm7340 = vcmp.lt.s32.totalorder %v7339, 0
        %v7341 = vsub.s32 0, %v7339
        %v7342 = vsel %vm7340, %v7341, %v7339
        %v7343 = vclz %v7342
        %v7344 = vsub.s32 %v7343, 2
        %vm7345 = vcmp.gt.s32.totalorder 0, %v7344
        %v7346 = vsel %vm7345, 0, %v7344
        %v7347 = vsub.s32 32, %v7346
        %v7348 = vshll.u32 %v7339, %v7346
        %v7349 = vshrl.u32 %v7331, %v7347
        %v7350 = vor.u32 %v7348, %v7349
        %v7351 = vsub.s32 4294967266, %v7346
        %v7352 = vadd.s32 %v7351, 127
        %v7353 = vshll.u32 %v7352, 23
        %v7354 = vor.u32 4788187, %v7353
        %v7355 = vand.u32 2147483647, %v7354
        %v7357 = vcvt.s32.f32 %v7350
        %v7358 = vmul.f32 %v7357, %v7355
        %v7359 = vxor.u32 %v7358, 2147483648
        %v7360 = vsel %vm7277, %v7359, %v7358
        %v7361 = vsub.s32 4, %v7337
        %v7362 = vsel %vm7277, %v7361, %v7337
        %v7363 = vsel %vm7276, %v333, %v7360
        %v7364 = vsel %vm7276, 0, %v7362
        %v7365 = vcosq.f32.pop %v7363
        %v7366 = vsinq.f32.pop %v7363
        %vm7367 = vweird.f32 %v333
        %v7368 = vadd.s32 %v7364, 3
        %v7369 = vand.u32 %v7368, 3
        %vm7370 = vcmp.lt.s32.totalorder %v7369, 2
        %vm7371 = vcmp.eq.s32.totalorder %v7369, 0
        %v7372 = vxor.u32 %v7366, 2147483648
        %v7373 = vsel %vm7371, %v7365, %v7372
        %vm7374 = vcmp.eq.s32.totalorder %v7369, 2
        %v7375 = vxor.u32 %v7365, 2147483648
        %v7376 = vsel %vm7374, %v7375, %v7366
        %v7377 = vsel %vm7370, %v7373, %v7376
        %v7378 = vsel %vm7367, nan, %v7377
        %v7379 = vand.u32 2147483647, %v334
        %vm7380 = vcmp.le.f32.partialorder %v7379, 0.7853982
        %vm7381 = vcmp.lt.s32.totalorder %v334, 0
        %v7382 = vand.u32 %v334, 2139095040
        %v7383 = vshrl.u32 %v7382, 23
        %v7384 = vsub.s32 %v7383, 127
        %v7385 = vand.u32 2147483647, %v334
        %v7386 = vand.u32 %v7385, 8388607
        %v7387 = vor.u32 %v7386, 8388608
        %v7388 = vsub.s32 0, %v7387
        %v7389 = vadd.s32 %v7384, 1
        %vm7390 = vcmp.gt.s32.totalorder %v7389, 0
        %v7391 = vsel %vm7390, %v7389, 0
        %v7392 = vshrl.u32 %v7391, 5
        %v7393 = vand.u32 %v7391, 31
        %v7394 = vsub.s32 32, %v7393
        %v7395 = vshrl.u32 683565275, %v7394
        %v7396 = vshll.u32 683565275, %v7393
        %v7397 = vshrl.u32 2475754826, %v7394
        %v7398 = vor.u32 %v7396, %v7397
        %v7399 = vshll.u32 2475754826, %v7393
        %v7400 = vshrl.u32 2131351028, %v7394
        %v7401 = vor.u32 %v7399, %v7400
        %v7402 = vshll.u32 2131351028, %v7393
        %v7403 = vshrl.u32 2102212464, %v7394
        %v7404 = vor.u32 %v7402, %v7403
        %v7405 = vshll.u32 2102212464, %v7393
        %v7406 = vshrl.u32 920167782, %v7394
        %v7407 = vor.u32 %v7405, %v7406
        %v7408 = vshll.u32 920167782, %v7393
        %v7409 = vshrl.u32 1326507024, %v7394
        %v7410 = vor.u32 %v7408, %v7409
        %vm7411 = vcmp.lt.s32.totalorder %v7392, 1
        %vm7412 = vcmp.lt.s32.totalorder %v7392, 2
        %vm7413 = vcmp.lt.s32.totalorder %v7392, 3
        %vm7414 = vcmp.lt.s32.totalorder %v7392, 4
        %v7415 = vsel %vm7411, %v7395, %v7398
        %v7416 = vsel %vm7414, %v7404, 2102212464
        %v7417 = vsel %vm7413, %v7401, %v7416
        %v7418 = vsel %vm7412, %v7415, %v7417
        %v7419 = vsel %vm7411, %v7398, %v7401
        %v7420 = vsel %vm7414, %v7407, 920167782
        %v7421 = vsel %vm7413, %v7404, %v7420
        %v7422 = vsel %vm7412, %v7419, %v7421
        %v7423 = vsel %vm7411, %v7401, %v7404
        %v7424 = vsel %vm7414, %v7410, 1326507024
        %v7425 = vsel %vm7413, %v7407, %v7424
        %v7426 = vsel %vm7412, %v7423, %v7425
        %v7427 = vshll.u32 %v7387, 8
        %v7428 = vmul.u32.u64.compose %v7427, %v7426
        %v7429 = vextract.low.u32 %v7428
        %v7430 = vextract.high.u32 %v7428
        %v7431 = vmul.u32.u64.compose %v7427, %v7422
        %v7432 = vextract.low.u32 %v7431
        %v7433 = vextract.high.u32 %v7431
        %v7434 = vmul.u32 %v7427, %v7418
        %v7435 = vadd.s32 %v7430, %v7432
        %vm7436 = vc.u32 %v7430, %v7432
        %v7437 = vadd.s32 %v7433, 1
        %v7438 = vsel %vm7436, %v7437, %v7433
        %v7439 = vadd.s32 %v7434, %v7438
        %v7440 = vadd.s32 %v7439, 536870912
        %v7441 = vshrl.u32 %v7440, 30
        %v7442 = vshll.u32 %v7441, 30
        %v7443 = vsub.s32 %v7439, %v7442
        %vm7444 = vcmp.lt.s32.totalorder %v7443, 0
        %v7445 = vsub.s32 0, %v7443
        %v7446 = vsel %vm7444, %v7445, %v7443
        %v7447 = vclz %v7446
        %v7448 = vsub.s32 %v7447, 2
        %vm7449 = vcmp.gt.s32.totalorder 0, %v7448
        %v7450 = vsel %vm7449, 0, %v7448
        %v7451 = vsub.s32 32, %v7450
        %v7452 = vshll.u32 %v7443, %v7450
        %v7453 = vshrl.u32 %v7435, %v7451
        %v7454 = vor.u32 %v7452, %v7453
        %v7455 = vsub.s32 4294967266, %v7450
        %v7456 = vadd.s32 %v7455, 127
        %v7457 = vshll.u32 %v7456, 23
        %v7458 = vor.u32 4788187, %v7457
        %v7459 = vand.u32 2147483647, %v7458
        %v7461 = vcvt.s32.f32 %v7454
        %v7462 = vmul.f32 %v7461, %v7459
        %v7463 = vxor.u32 %v7462, 2147483648
        %v7464 = vsel %vm7381, %v7463, %v7462
        %v7465 = vsub.s32 4, %v7441
        %v7466 = vsel %vm7381, %v7465, %v7441
        %v7467 = vsel %vm7380, %v334, %v7464
        %v7468 = vsel %vm7380, 0, %v7466
        %v7469 = vcosq.f32.pop %v7467
        %v7470 = vsinq.f32.pop %v7467
        %vm7471 = vweird.f32 %v334
        %v7472 = vadd.s32 %v7468, 3
        %v7473 = vand.u32 %v7472, 3
        %vm7474 = vcmp.lt.s32.totalorder %v7473, 2
        %vm7475 = vcmp.eq.s32.totalorder %v7473, 0
        %v7476 = vxor.u32 %v7470, 2147483648
        %v7477 = vsel %vm7475, %v7469, %v7476
        %vm7478 = vcmp.eq.s32.totalorder %v7473, 2
        %v7479 = vxor.u32 %v7469, 2147483648
        %v7480 = vsel %vm7478, %v7479, %v7470
        %v7481 = vsel %vm7474, %v7477, %v7480
        %v7482 = vsel %vm7471, nan, %v7481
        %v7483 = vand.u32 2147483647, %v335
        %vm7484 = vcmp.le.f32.partialorder %v7483, 0.7853982
        %vm7485 = vcmp.lt.s32.totalorder %v335, 0
        %v7486 = vand.u32 %v335, 2139095040
        %v7487 = vshrl.u32 %v7486, 23
        %v7488 = vsub.s32 %v7487, 127
        %v7489 = vand.u32 2147483647, %v335
        %v7490 = vand.u32 %v7489, 8388607
        %v7491 = vor.u32 %v7490, 8388608
        %v7492 = vsub.s32 0, %v7491
        %v7493 = vadd.s32 %v7488, 1
        %vm7494 = vcmp.gt.s32.totalorder %v7493, 0
        %v7495 = vsel %vm7494, %v7493, 0
        %v7496 = vshrl.u32 %v7495, 5
        %v7497 = vand.u32 %v7495, 31
        %v7498 = vsub.s32 32, %v7497
        %v7499 = vshrl.u32 683565275, %v7498
        %v7500 = vshll.u32 683565275, %v7497
        %v7501 = vshrl.u32 2475754826, %v7498
        %v7502 = vor.u32 %v7500, %v7501
        %v7503 = vshll.u32 2475754826, %v7497
        %v7504 = vshrl.u32 2131351028, %v7498
        %v7505 = vor.u32 %v7503, %v7504
        %v7506 = vshll.u32 2131351028, %v7497
        %v7507 = vshrl.u32 2102212464, %v7498
        %v7508 = vor.u32 %v7506, %v7507
        %v7509 = vshll.u32 2102212464, %v7497
        %v7510 = vshrl.u32 920167782, %v7498
        %v7511 = vor.u32 %v7509, %v7510
        %v7512 = vshll.u32 920167782, %v7497
        %v7513 = vshrl.u32 1326507024, %v7498
        %v7514 = vor.u32 %v7512, %v7513
        %vm7515 = vcmp.lt.s32.totalorder %v7496, 1
        %vm7516 = vcmp.lt.s32.totalorder %v7496, 2
        %vm7517 = vcmp.lt.s32.totalorder %v7496, 3
        %vm7518 = vcmp.lt.s32.totalorder %v7496, 4
        %v7519 = vsel %vm7515, %v7499, %v7502
        %v7520 = vsel %vm7518, %v7508, 2102212464
        %v7521 = vsel %vm7517, %v7505, %v7520
        %v7522 = vsel %vm7516, %v7519, %v7521
        %v7523 = vsel %vm7515, %v7502, %v7505
        %v7524 = vsel %vm7518, %v7511, 920167782
        %v7525 = vsel %vm7517, %v7508, %v7524
        %v7526 = vsel %vm7516, %v7523, %v7525
        %v7527 = vsel %vm7515, %v7505, %v7508
        %v7528 = vsel %vm7518, %v7514, 1326507024
        %v7529 = vsel %vm7517, %v7511, %v7528
        %v7530 = vsel %vm7516, %v7527, %v7529
        %v7531 = vshll.u32 %v7491, 8
        %v7532 = vmul.u32.u64.compose %v7531, %v7530
        %v7533 = vextract.low.u32 %v7532
        %v7534 = vextract.high.u32 %v7532
        %v7535 = vmul.u32.u64.compose %v7531, %v7526
        %v7536 = vextract.low.u32 %v7535
        %v7537 = vextract.high.u32 %v7535
        %v7538 = vmul.u32 %v7531, %v7522
        %v7539 = vadd.s32 %v7534, %v7536
        %vm7540 = vc.u32 %v7534, %v7536
        %v7541 = vadd.s32 %v7537, 1
        %v7542 = vsel %vm7540, %v7541, %v7537
        %v7543 = vadd.s32 %v7538, %v7542
        %v7544 = vadd.s32 %v7543, 536870912
        %v7545 = vshrl.u32 %v7544, 30
        %v7546 = vshll.u32 %v7545, 30
        %v7547 = vsub.s32 %v7543, %v7546
        %vm7548 = vcmp.lt.s32.totalorder %v7547, 0
        %v7549 = vsub.s32 0, %v7547
        %v7550 = vsel %vm7548, %v7549, %v7547
        %v7551 = vclz %v7550
        %v7552 = vsub.s32 %v7551, 2
        %vm7553 = vcmp.gt.s32.totalorder 0, %v7552
        %v7554 = vsel %vm7553, 0, %v7552
        %v7555 = vsub.s32 32, %v7554
        %v7556 = vshll.u32 %v7547, %v7554
        %v7557 = vshrl.u32 %v7539, %v7555
        %v7558 = vor.u32 %v7556, %v7557
        %v7559 = vsub.s32 4294967266, %v7554
        %v7560 = vadd.s32 %v7559, 127
        %v7561 = vshll.u32 %v7560, 23
        %v7562 = vor.u32 4788187, %v7561
        %v7563 = vand.u32 2147483647, %v7562
        %v7565 = vcvt.s32.f32 %v7558
        %v7566 = vmul.f32 %v7565, %v7563
        %v7567 = vxor.u32 %v7566, 2147483648
        %v7568 = vsel %vm7485, %v7567, %v7566
        %v7569 = vsub.s32 4, %v7545
        %v7570 = vsel %vm7485, %v7569, %v7545
        %v7571 = vsel %vm7484, %v335, %v7568
        %v7572 = vsel %vm7484, 0, %v7570
        %v7573 = vcosq.f32.pop %v7571
        %v7574 = vsinq.f32.pop %v7571
        %vm7575 = vweird.f32 %v335
        %v7576 = vadd.s32 %v7572, 3
        %v7577 = vand.u32 %v7576, 3
        %vm7578 = vcmp.lt.s32.totalorder %v7577, 2
        %vm7579 = vcmp.eq.s32.totalorder %v7577, 0
        %v7580 = vxor.u32 %v7574, 2147483648
        %v7581 = vsel %vm7579, %v7573, %v7580
        %vm7582 = vcmp.eq.s32.totalorder %v7577, 2
        %v7583 = vxor.u32 %v7573, 2147483648
        %v7584 = vsel %vm7582, %v7583, %v7574
        %v7585 = vsel %vm7578, %v7581, %v7584
        %v7586 = vsel %vm7575, nan, %v7585
        %v7587 = vand.u32 2147483647, %v336
        %vm7588 = vcmp.le.f32.partialorder %v7587, 0.7853982
        %vm7589 = vcmp.lt.s32.totalorder %v336, 0
        %v7590 = vand.u32 %v336, 2139095040
        %v7591 = vshrl.u32 %v7590, 23
        %v7592 = vsub.s32 %v7591, 127
        %v7593 = vand.u32 2147483647, %v336
        %v7594 = vand.u32 %v7593, 8388607
        %v7595 = vor.u32 %v7594, 8388608
        %v7596 = vsub.s32 0, %v7595
        %v7597 = vadd.s32 %v7592, 1
        %vm7598 = vcmp.gt.s32.totalorder %v7597, 0
        %v7599 = vsel %vm7598, %v7597, 0
        %v7600 = vshrl.u32 %v7599, 5
        %v7601 = vand.u32 %v7599, 31
        %v7602 = vsub.s32 32, %v7601
        %v7603 = vshrl.u32 683565275, %v7602
        %v7604 = vshll.u32 683565275, %v7601
        %v7605 = vshrl.u32 2475754826, %v7602
        %v7606 = vor.u32 %v7604, %v7605
        %v7607 = vshll.u32 2475754826, %v7601
        %v7608 = vshrl.u32 2131351028, %v7602
        %v7609 = vor.u32 %v7607, %v7608
        %v7610 = vshll.u32 2131351028, %v7601
        %v7611 = vshrl.u32 2102212464, %v7602
        %v7612 = vor.u32 %v7610, %v7611
        %v7613 = vshll.u32 2102212464, %v7601
        %v7614 = vshrl.u32 920167782, %v7602
        %v7615 = vor.u32 %v7613, %v7614
        %v7616 = vshll.u32 920167782, %v7601
        %v7617 = vshrl.u32 1326507024, %v7602
        %v7618 = vor.u32 %v7616, %v7617
        %vm7619 = vcmp.lt.s32.totalorder %v7600, 1
        %vm7620 = vcmp.lt.s32.totalorder %v7600, 2
        %vm7621 = vcmp.lt.s32.totalorder %v7600, 3
        %vm7622 = vcmp.lt.s32.totalorder %v7600, 4
        %v7623 = vsel %vm7619, %v7603, %v7606
        %v7624 = vsel %vm7622, %v7612, 2102212464
        %v7625 = vsel %vm7621, %v7609, %v7624
        %v7626 = vsel %vm7620, %v7623, %v7625
        %v7627 = vsel %vm7619, %v7606, %v7609
        %v7628 = vsel %vm7622, %v7615, 920167782
        %v7629 = vsel %vm7621, %v7612, %v7628
        %v7630 = vsel %vm7620, %v7627, %v7629
        %v7631 = vsel %vm7619, %v7609, %v7612
        %v7632 = vsel %vm7622, %v7618, 1326507024
        %v7633 = vsel %vm7621, %v7615, %v7632
        %v7634 = vsel %vm7620, %v7631, %v7633
        %v7635 = vshll.u32 %v7595, 8
        %v7636 = vmul.u32.u64.compose %v7635, %v7634
        %v7637 = vextract.low.u32 %v7636
        %v7638 = vextract.high.u32 %v7636
        %v7639 = vmul.u32.u64.compose %v7635, %v7630
        %v7640 = vextract.low.u32 %v7639
        %v7641 = vextract.high.u32 %v7639
        %v7642 = vmul.u32 %v7635, %v7626
        %v7643 = vadd.s32 %v7638, %v7640
        %vm7644 = vc.u32 %v7638, %v7640
        %v7645 = vadd.s32 %v7641, 1
        %v7646 = vsel %vm7644, %v7645, %v7641
        %v7647 = vadd.s32 %v7642, %v7646
        %v7648 = vadd.s32 %v7647, 536870912
        %v7649 = vshrl.u32 %v7648, 30
        %v7650 = vshll.u32 %v7649, 30
        %v7651 = vsub.s32 %v7647, %v7650
        %vm7652 = vcmp.lt.s32.totalorder %v7651, 0
        %v7653 = vsub.s32 0, %v7651
        %v7654 = vsel %vm7652, %v7653, %v7651
        %v7655 = vclz %v7654
        %v7656 = vsub.s32 %v7655, 2
        %vm7657 = vcmp.gt.s32.totalorder 0, %v7656
        %v7658 = vsel %vm7657, 0, %v7656
        %v7659 = vsub.s32 32, %v7658
        %v7660 = vshll.u32 %v7651, %v7658
        %v7661 = vshrl.u32 %v7643, %v7659
        %v7662 = vor.u32 %v7660, %v7661
        %v7663 = vsub.s32 4294967266, %v7658
        %v7664 = vadd.s32 %v7663, 127
        %v7665 = vshll.u32 %v7664, 23
        %v7666 = vor.u32 4788187, %v7665
        %v7667 = vand.u32 2147483647, %v7666
        %v7669 = vcvt.s32.f32 %v7662
        %v7670 = vmul.f32 %v7669, %v7667
        %v7671 = vxor.u32 %v7670, 2147483648
        %v7672 = vsel %vm7589, %v7671, %v7670
        %v7673 = vsub.s32 4, %v7649
        %v7674 = vsel %vm7589, %v7673, %v7649
        %v7675 = vsel %vm7588, %v336, %v7672
        %v7676 = vsel %vm7588, 0, %v7674
        %v7677 = vcosq.f32.pop %v7675
        %v7678 = vsinq.f32.pop %v7675
        %vm7679 = vweird.f32 %v336
        %v7680 = vadd.s32 %v7676, 3
        %v7681 = vand.u32 %v7680, 3
        %vm7682 = vcmp.lt.s32.totalorder %v7681, 2
        %vm7683 = vcmp.eq.s32.totalorder %v7681, 0
        %v7684 = vxor.u32 %v7678, 2147483648
        %v7685 = vsel %vm7683, %v7677, %v7684
        %vm7686 = vcmp.eq.s32.totalorder %v7681, 2
        %v7687 = vxor.u32 %v7677, 2147483648
        %v7688 = vsel %vm7686, %v7687, %v7678
        %v7689 = vsel %vm7682, %v7685, %v7688
        %v7690 = vsel %vm7679, nan, %v7689
        %v7691 = vand.u32 2147483647, %v337
        %vm7692 = vcmp.le.f32.partialorder %v7691, 0.7853982
        %vm7693 = vcmp.lt.s32.totalorder %v337, 0
        %v7694 = vand.u32 %v337, 2139095040
        %v7695 = vshrl.u32 %v7694, 23
        %v7696 = vsub.s32 %v7695, 127
        %v7697 = vand.u32 2147483647, %v337
        %v7698 = vand.u32 %v7697, 8388607
        %v7699 = vor.u32 %v7698, 8388608
        %v7700 = vsub.s32 0, %v7699
        %v7701 = vadd.s32 %v7696, 1
        %vm7702 = vcmp.gt.s32.totalorder %v7701, 0
        %v7703 = vsel %vm7702, %v7701, 0
        %v7704 = vshrl.u32 %v7703, 5
        %v7705 = vand.u32 %v7703, 31
        %v7706 = vsub.s32 32, %v7705
        %v7707 = vshrl.u32 683565275, %v7706
        %v7708 = vshll.u32 683565275, %v7705
        %v7709 = vshrl.u32 2475754826, %v7706
        %v7710 = vor.u32 %v7708, %v7709
        %v7711 = vshll.u32 2475754826, %v7705
        %v7712 = vshrl.u32 2131351028, %v7706
        %v7713 = vor.u32 %v7711, %v7712
        %v7714 = vshll.u32 2131351028, %v7705
        %v7715 = vshrl.u32 2102212464, %v7706
        %v7716 = vor.u32 %v7714, %v7715
        %v7717 = vshll.u32 2102212464, %v7705
        %v7718 = vshrl.u32 920167782, %v7706
        %v7719 = vor.u32 %v7717, %v7718
        %v7720 = vshll.u32 920167782, %v7705
        %v7721 = vshrl.u32 1326507024, %v7706
        %v7722 = vor.u32 %v7720, %v7721
        %vm7723 = vcmp.lt.s32.totalorder %v7704, 1
        %vm7724 = vcmp.lt.s32.totalorder %v7704, 2
        %vm7725 = vcmp.lt.s32.totalorder %v7704, 3
        %vm7726 = vcmp.lt.s32.totalorder %v7704, 4
        %v7727 = vsel %vm7723, %v7707, %v7710
        %v7728 = vsel %vm7726, %v7716, 2102212464
        %v7729 = vsel %vm7725, %v7713, %v7728
        %v7730 = vsel %vm7724, %v7727, %v7729
        %v7731 = vsel %vm7723, %v7710, %v7713
        %v7732 = vsel %vm7726, %v7719, 920167782
        %v7733 = vsel %vm7725, %v7716, %v7732
        %v7734 = vsel %vm7724, %v7731, %v7733
        %v7735 = vsel %vm7723, %v7713, %v7716
        %v7736 = vsel %vm7726, %v7722, 1326507024
        %v7737 = vsel %vm7725, %v7719, %v7736
        %v7738 = vsel %vm7724, %v7735, %v7737
        %v7739 = vshll.u32 %v7699, 8
        %v7740 = vmul.u32.u64.compose %v7739, %v7738
        %v7741 = vextract.low.u32 %v7740
        %v7742 = vextract.high.u32 %v7740
        %v7743 = vmul.u32.u64.compose %v7739, %v7734
        %v7744 = vextract.low.u32 %v7743
        %v7745 = vextract.high.u32 %v7743
        %v7746 = vmul.u32 %v7739, %v7730
        %v7747 = vadd.s32 %v7742, %v7744
        %vm7748 = vc.u32 %v7742, %v7744
        %v7749 = vadd.s32 %v7745, 1
        %v7750 = vsel %vm7748, %v7749, %v7745
        %v7751 = vadd.s32 %v7746, %v7750
        %v7752 = vadd.s32 %v7751, 536870912
        %v7753 = vshrl.u32 %v7752, 30
        %v7754 = vshll.u32 %v7753, 30
        %v7755 = vsub.s32 %v7751, %v7754
        %vm7756 = vcmp.lt.s32.totalorder %v7755, 0
        %v7757 = vsub.s32 0, %v7755
        %v7758 = vsel %vm7756, %v7757, %v7755
        %v7759 = vclz %v7758
        %v7760 = vsub.s32 %v7759, 2
        %vm7761 = vcmp.gt.s32.totalorder 0, %v7760
        %v7762 = vsel %vm7761, 0, %v7760
        %v7763 = vsub.s32 32, %v7762
        %v7764 = vshll.u32 %v7755, %v7762
        %v7765 = vshrl.u32 %v7747, %v7763
        %v7766 = vor.u32 %v7764, %v7765
        %v7767 = vsub.s32 4294967266, %v7762
        %v7768 = vadd.s32 %v7767, 127
        %v7769 = vshll.u32 %v7768, 23
        %v7770 = vor.u32 4788187, %v7769
        %v7771 = vand.u32 2147483647, %v7770
        %v7773 = vcvt.s32.f32 %v7766
        %v7774 = vmul.f32 %v7773, %v7771
        %v7775 = vxor.u32 %v7774, 2147483648
        %v7776 = vsel %vm7693, %v7775, %v7774
        %v7777 = vsub.s32 4, %v7753
        %v7778 = vsel %vm7693, %v7777, %v7753
        %v7779 = vsel %vm7692, %v337, %v7776
        %v7780 = vsel %vm7692, 0, %v7778
        %v7781 = vcosq.f32.pop %v7779
        %v7782 = vsinq.f32.pop %v7779
        %vm7783 = vweird.f32 %v337
        %v7784 = vadd.s32 %v7780, 3
        %v7785 = vand.u32 %v7784, 3
        %vm7786 = vcmp.lt.s32.totalorder %v7785, 2
        %vm7787 = vcmp.eq.s32.totalorder %v7785, 0
        %v7788 = vxor.u32 %v7782, 2147483648
        %v7789 = vsel %vm7787, %v7781, %v7788
        %vm7790 = vcmp.eq.s32.totalorder %v7785, 2
        %v7791 = vxor.u32 %v7781, 2147483648
        %v7792 = vsel %vm7790, %v7791, %v7782
        %v7793 = vsel %vm7786, %v7789, %v7792
        %v7794 = vsel %vm7783, nan, %v7793
        %v7795 = vand.u32 2147483647, %v338
        %vm7796 = vcmp.le.f32.partialorder %v7795, 0.7853982
        %vm7797 = vcmp.lt.s32.totalorder %v338, 0
        %v7798 = vand.u32 %v338, 2139095040
        %v7799 = vshrl.u32 %v7798, 23
        %v7800 = vsub.s32 %v7799, 127
        %v7801 = vand.u32 2147483647, %v338
        %v7802 = vand.u32 %v7801, 8388607
        %v7803 = vor.u32 %v7802, 8388608
        %v7804 = vsub.s32 0, %v7803
        %v7805 = vadd.s32 %v7800, 1
        %vm7806 = vcmp.gt.s32.totalorder %v7805, 0
        %v7807 = vsel %vm7806, %v7805, 0
        %v7808 = vshrl.u32 %v7807, 5
        %v7809 = vand.u32 %v7807, 31
        %v7810 = vsub.s32 32, %v7809
        %v7811 = vshrl.u32 683565275, %v7810
        %v7812 = vshll.u32 683565275, %v7809
        %v7813 = vshrl.u32 2475754826, %v7810
        %v7814 = vor.u32 %v7812, %v7813
        %v7815 = vshll.u32 2475754826, %v7809
        %v7816 = vshrl.u32 2131351028, %v7810
        %v7817 = vor.u32 %v7815, %v7816
        %v7818 = vshll.u32 2131351028, %v7809
        %v7819 = vshrl.u32 2102212464, %v7810
        %v7820 = vor.u32 %v7818, %v7819
        %v7821 = vshll.u32 2102212464, %v7809
        %v7822 = vshrl.u32 920167782, %v7810
        %v7823 = vor.u32 %v7821, %v7822
        %v7824 = vshll.u32 920167782, %v7809
        %v7825 = vshrl.u32 1326507024, %v7810
        %v7826 = vor.u32 %v7824, %v7825
        %vm7827 = vcmp.lt.s32.totalorder %v7808, 1
        %vm7828 = vcmp.lt.s32.totalorder %v7808, 2
        %vm7829 = vcmp.lt.s32.totalorder %v7808, 3
        %vm7830 = vcmp.lt.s32.totalorder %v7808, 4
        %v7831 = vsel %vm7827, %v7811, %v7814
        %v7832 = vsel %vm7830, %v7820, 2102212464
        %v7833 = vsel %vm7829, %v7817, %v7832
        %v7834 = vsel %vm7828, %v7831, %v7833
        %v7835 = vsel %vm7827, %v7814, %v7817
        %v7836 = vsel %vm7830, %v7823, 920167782
        %v7837 = vsel %vm7829, %v7820, %v7836
        %v7838 = vsel %vm7828, %v7835, %v7837
        %v7839 = vsel %vm7827, %v7817, %v7820
        %v7840 = vsel %vm7830, %v7826, 1326507024
        %v7841 = vsel %vm7829, %v7823, %v7840
        %v7842 = vsel %vm7828, %v7839, %v7841
        %v7843 = vshll.u32 %v7803, 8
        %v7844 = vmul.u32.u64.compose %v7843, %v7842
        %v7845 = vextract.low.u32 %v7844
        %v7846 = vextract.high.u32 %v7844
        %v7847 = vmul.u32.u64.compose %v7843, %v7838
        %v7848 = vextract.low.u32 %v7847
        %v7849 = vextract.high.u32 %v7847
        %v7850 = vmul.u32 %v7843, %v7834
        %v7851 = vadd.s32 %v7846, %v7848
        %vm7852 = vc.u32 %v7846, %v7848
        %v7853 = vadd.s32 %v7849, 1
        %v7854 = vsel %vm7852, %v7853, %v7849
        %v7855 = vadd.s32 %v7850, %v7854
        %v7856 = vadd.s32 %v7855, 536870912
        %v7857 = vshrl.u32 %v7856, 30
        %v7858 = vshll.u32 %v7857, 30
        %v7859 = vsub.s32 %v7855, %v7858
        %vm7860 = vcmp.lt.s32.totalorder %v7859, 0
        %v7861 = vsub.s32 0, %v7859
        %v7862 = vsel %vm7860, %v7861, %v7859
        %v7863 = vclz %v7862
        %v7864 = vsub.s32 %v7863, 2
        %vm7865 = vcmp.gt.s32.totalorder 0, %v7864
        %v7866 = vsel %vm7865, 0, %v7864
        %v7867 = vsub.s32 32, %v7866
        %v7868 = vshll.u32 %v7859, %v7866
        %v7869 = vshrl.u32 %v7851, %v7867
        %v7870 = vor.u32 %v7868, %v7869
        %v7871 = vsub.s32 4294967266, %v7866
        %v7872 = vadd.s32 %v7871, 127
        %v7873 = vshll.u32 %v7872, 23
        %v7874 = vor.u32 4788187, %v7873
        %v7875 = vand.u32 2147483647, %v7874
        %v7877 = vcvt.s32.f32 %v7870
        %v7878 = vmul.f32 %v7877, %v7875
        %v7879 = vxor.u32 %v7878, 2147483648
        %v7880 = vsel %vm7797, %v7879, %v7878
        %v7881 = vsub.s32 4, %v7857
        %v7882 = vsel %vm7797, %v7881, %v7857
        %v7883 = vsel %vm7796, %v338, %v7880
        %v7884 = vsel %vm7796, 0, %v7882
        %v7885 = vcosq.f32.pop %v7883
        %v7886 = vsinq.f32.pop %v7883
        %vm7887 = vweird.f32 %v338
        %v7888 = vadd.s32 %v7884, 3
        %v7889 = vand.u32 %v7888, 3
        %vm7890 = vcmp.lt.s32.totalorder %v7889, 2
        %vm7891 = vcmp.eq.s32.totalorder %v7889, 0
        %v7892 = vxor.u32 %v7886, 2147483648
        %v7893 = vsel %vm7891, %v7885, %v7892
        %vm7894 = vcmp.eq.s32.totalorder %v7889, 2
        %v7895 = vxor.u32 %v7885, 2147483648
        %v7896 = vsel %vm7894, %v7895, %v7886
        %v7897 = vsel %vm7890, %v7893, %v7896
        %v7898 = vsel %vm7887, nan, %v7897
        %v7899 = vand.u32 2147483647, %v339
        %vm7900 = vcmp.le.f32.partialorder %v7899, 0.7853982
        %vm7901 = vcmp.lt.s32.totalorder %v339, 0
        %v7902 = vand.u32 %v339, 2139095040
        %v7903 = vshrl.u32 %v7902, 23
        %v7904 = vsub.s32 %v7903, 127
        %v7905 = vand.u32 2147483647, %v339
        %v7906 = vand.u32 %v7905, 8388607
        %v7907 = vor.u32 %v7906, 8388608
        %v7908 = vsub.s32 0, %v7907
        %v7909 = vadd.s32 %v7904, 1
        %vm7910 = vcmp.gt.s32.totalorder %v7909, 0
        %v7911 = vsel %vm7910, %v7909, 0
        %v7912 = vshrl.u32 %v7911, 5
        %v7913 = vand.u32 %v7911, 31
        %v7914 = vsub.s32 32, %v7913
        %v7915 = vshrl.u32 683565275, %v7914
        %v7916 = vshll.u32 683565275, %v7913
        %v7917 = vshrl.u32 2475754826, %v7914
        %v7918 = vor.u32 %v7916, %v7917
        %v7919 = vshll.u32 2475754826, %v7913
        %v7920 = vshrl.u32 2131351028, %v7914
        %v7921 = vor.u32 %v7919, %v7920
        %v7922 = vshll.u32 2131351028, %v7913
        %v7923 = vshrl.u32 2102212464, %v7914
        %v7924 = vor.u32 %v7922, %v7923
        %v7925 = vshll.u32 2102212464, %v7913
        %v7926 = vshrl.u32 920167782, %v7914
        %v7927 = vor.u32 %v7925, %v7926
        %v7928 = vshll.u32 920167782, %v7913
        %v7929 = vshrl.u32 1326507024, %v7914
        %v7930 = vor.u32 %v7928, %v7929
        %vm7931 = vcmp.lt.s32.totalorder %v7912, 1
        %vm7932 = vcmp.lt.s32.totalorder %v7912, 2
        %vm7933 = vcmp.lt.s32.totalorder %v7912, 3
        %vm7934 = vcmp.lt.s32.totalorder %v7912, 4
        %v7935 = vsel %vm7931, %v7915, %v7918
        %v7936 = vsel %vm7934, %v7924, 2102212464
        %v7937 = vsel %vm7933, %v7921, %v7936
        %v7938 = vsel %vm7932, %v7935, %v7937
        %v7939 = vsel %vm7931, %v7918, %v7921
        %v7940 = vsel %vm7934, %v7927, 920167782
        %v7941 = vsel %vm7933, %v7924, %v7940
        %v7942 = vsel %vm7932, %v7939, %v7941
        %v7943 = vsel %vm7931, %v7921, %v7924
        %v7944 = vsel %vm7934, %v7930, 1326507024
        %v7945 = vsel %vm7933, %v7927, %v7944
        %v7946 = vsel %vm7932, %v7943, %v7945
        %v7947 = vshll.u32 %v7907, 8
        %v7948 = vmul.u32.u64.compose %v7947, %v7946
        %v7949 = vextract.low.u32 %v7948
        %v7950 = vextract.high.u32 %v7948
        %v7951 = vmul.u32.u64.compose %v7947, %v7942
        %v7952 = vextract.low.u32 %v7951
        %v7953 = vextract.high.u32 %v7951
        %v7954 = vmul.u32 %v7947, %v7938
        %v7955 = vadd.s32 %v7950, %v7952
        %vm7956 = vc.u32 %v7950, %v7952
        %v7957 = vadd.s32 %v7953, 1
        %v7958 = vsel %vm7956, %v7957, %v7953
        %v7959 = vadd.s32 %v7954, %v7958
        %v7960 = vadd.s32 %v7959, 536870912
        %v7961 = vshrl.u32 %v7960, 30
        %v7962 = vshll.u32 %v7961, 30
        %v7963 = vsub.s32 %v7959, %v7962
        %vm7964 = vcmp.lt.s32.totalorder %v7963, 0
        %v7965 = vsub.s32 0, %v7963
        %v7966 = vsel %vm7964, %v7965, %v7963
        %v7967 = vclz %v7966
        %v7968 = vsub.s32 %v7967, 2
        %vm7969 = vcmp.gt.s32.totalorder 0, %v7968
        %v7970 = vsel %vm7969, 0, %v7968
        %v7971 = vsub.s32 32, %v7970
        %v7972 = vshll.u32 %v7963, %v7970
        %v7973 = vshrl.u32 %v7955, %v7971
        %v7974 = vor.u32 %v7972, %v7973
        %v7975 = vsub.s32 4294967266, %v7970
        %v7976 = vadd.s32 %v7975, 127
        %v7977 = vshll.u32 %v7976, 23
        %v7978 = vor.u32 4788187, %v7977
        %v7979 = vand.u32 2147483647, %v7978
        %v7981 = vcvt.s32.f32 %v7974
        %v7982 = vmul.f32 %v7981, %v7979
        %v7983 = vxor.u32 %v7982, 2147483648
        %v7984 = vsel %vm7901, %v7983, %v7982
        %v7985 = vsub.s32 4, %v7961
        %v7986 = vsel %vm7901, %v7985, %v7961
        %v7987 = vsel %vm7900, %v339, %v7984
        %v7988 = vsel %vm7900, 0, %v7986
        %v7989 = vcosq.f32.pop %v7987
        %v7990 = vsinq.f32.pop %v7987
        %vm7991 = vweird.f32 %v339
        %v7992 = vadd.s32 %v7988, 3
        %v7993 = vand.u32 %v7992, 3
        %vm7994 = vcmp.lt.s32.totalorder %v7993, 2
        %vm7995 = vcmp.eq.s32.totalorder %v7993, 0
        %v7996 = vxor.u32 %v7990, 2147483648
        %v7997 = vsel %vm7995, %v7989, %v7996
        %vm7998 = vcmp.eq.s32.totalorder %v7993, 2
        %v7999 = vxor.u32 %v7989, 2147483648
        %v8000 = vsel %vm7998, %v7999, %v7990
        %v8001 = vsel %vm7994, %v7997, %v8000
        %v8002 = vsel %vm7991, nan, %v8001
        %v8003 = vand.u32 2147483647, %v340
        %vm8004 = vcmp.le.f32.partialorder %v8003, 0.7853982
        %vm8005 = vcmp.lt.s32.totalorder %v340, 0
        %v8006 = vand.u32 %v340, 2139095040
        %v8007 = vshrl.u32 %v8006, 23
        %v8008 = vsub.s32 %v8007, 127
        %v8009 = vand.u32 2147483647, %v340
        %v8010 = vand.u32 %v8009, 8388607
        %v8011 = vor.u32 %v8010, 8388608
        %v8012 = vsub.s32 0, %v8011
        %v8013 = vadd.s32 %v8008, 1
        %vm8014 = vcmp.gt.s32.totalorder %v8013, 0
        %v8015 = vsel %vm8014, %v8013, 0
        %v8016 = vshrl.u32 %v8015, 5
        %v8017 = vand.u32 %v8015, 31
        %v8018 = vsub.s32 32, %v8017
        %v8019 = vshrl.u32 683565275, %v8018
        %v8020 = vshll.u32 683565275, %v8017
        %v8021 = vshrl.u32 2475754826, %v8018
        %v8022 = vor.u32 %v8020, %v8021
        %v8023 = vshll.u32 2475754826, %v8017
        %v8024 = vshrl.u32 2131351028, %v8018
        %v8025 = vor.u32 %v8023, %v8024
        %v8026 = vshll.u32 2131351028, %v8017
        %v8027 = vshrl.u32 2102212464, %v8018
        %v8028 = vor.u32 %v8026, %v8027
        %v8029 = vshll.u32 2102212464, %v8017
        %v8030 = vshrl.u32 920167782, %v8018
        %v8031 = vor.u32 %v8029, %v8030
        %v8032 = vshll.u32 920167782, %v8017
        %v8033 = vshrl.u32 1326507024, %v8018
        %v8034 = vor.u32 %v8032, %v8033
        %vm8035 = vcmp.lt.s32.totalorder %v8016, 1
        %vm8036 = vcmp.lt.s32.totalorder %v8016, 2
        %vm8037 = vcmp.lt.s32.totalorder %v8016, 3
        %vm8038 = vcmp.lt.s32.totalorder %v8016, 4
        %v8039 = vsel %vm8035, %v8019, %v8022
        %v8040 = vsel %vm8038, %v8028, 2102212464
        %v8041 = vsel %vm8037, %v8025, %v8040
        %v8042 = vsel %vm8036, %v8039, %v8041
        %v8043 = vsel %vm8035, %v8022, %v8025
        %v8044 = vsel %vm8038, %v8031, 920167782
        %v8045 = vsel %vm8037, %v8028, %v8044
        %v8046 = vsel %vm8036, %v8043, %v8045
        %v8047 = vsel %vm8035, %v8025, %v8028
        %v8048 = vsel %vm8038, %v8034, 1326507024
        %v8049 = vsel %vm8037, %v8031, %v8048
        %v8050 = vsel %vm8036, %v8047, %v8049
        %v8051 = vshll.u32 %v8011, 8
        %v8052 = vmul.u32.u64.compose %v8051, %v8050
        %v8053 = vextract.low.u32 %v8052
        %v8054 = vextract.high.u32 %v8052
        %v8055 = vmul.u32.u64.compose %v8051, %v8046
        %v8056 = vextract.low.u32 %v8055
        %v8057 = vextract.high.u32 %v8055
        %v8058 = vmul.u32 %v8051, %v8042
        %v8059 = vadd.s32 %v8054, %v8056
        %vm8060 = vc.u32 %v8054, %v8056
        %v8061 = vadd.s32 %v8057, 1
        %v8062 = vsel %vm8060, %v8061, %v8057
        %v8063 = vadd.s32 %v8058, %v8062
        %v8064 = vadd.s32 %v8063, 536870912
        %v8065 = vshrl.u32 %v8064, 30
        %v8066 = vshll.u32 %v8065, 30
        %v8067 = vsub.s32 %v8063, %v8066
        %vm8068 = vcmp.lt.s32.totalorder %v8067, 0
        %v8069 = vsub.s32 0, %v8067
        %v8070 = vsel %vm8068, %v8069, %v8067
        %v8071 = vclz %v8070
        %v8072 = vsub.s32 %v8071, 2
        %vm8073 = vcmp.gt.s32.totalorder 0, %v8072
        %v8074 = vsel %vm8073, 0, %v8072
        %v8075 = vsub.s32 32, %v8074
        %v8076 = vshll.u32 %v8067, %v8074
        %v8077 = vshrl.u32 %v8059, %v8075
        %v8078 = vor.u32 %v8076, %v8077
        %v8079 = vsub.s32 4294967266, %v8074
        %v8080 = vadd.s32 %v8079, 127
        %v8081 = vshll.u32 %v8080, 23
        %v8082 = vor.u32 4788187, %v8081
        %v8083 = vand.u32 2147483647, %v8082
        %v8085 = vcvt.s32.f32 %v8078
        %v8086 = vmul.f32 %v8085, %v8083
        %v8087 = vxor.u32 %v8086, 2147483648
        %v8088 = vsel %vm8005, %v8087, %v8086
        %v8089 = vsub.s32 4, %v8065
        %v8090 = vsel %vm8005, %v8089, %v8065
        %v8091 = vsel %vm8004, %v340, %v8088
        %v8092 = vsel %vm8004, 0, %v8090
        %v8093 = vcosq.f32.pop %v8091
        %v8094 = vsinq.f32.pop %v8091
        %vm8095 = vweird.f32 %v340
        %v8096 = vadd.s32 %v8092, 3
        %v8097 = vand.u32 %v8096, 3
        %vm8098 = vcmp.lt.s32.totalorder %v8097, 2
        %vm8099 = vcmp.eq.s32.totalorder %v8097, 0
        %v8100 = vxor.u32 %v8094, 2147483648
        %v8101 = vsel %vm8099, %v8093, %v8100
        %vm8102 = vcmp.eq.s32.totalorder %v8097, 2
        %v8103 = vxor.u32 %v8093, 2147483648
        %v8104 = vsel %vm8102, %v8103, %v8094
        %v8105 = vsel %vm8098, %v8101, %v8104
        %v8106 = vsel %vm8095, nan, %v8105
        %v8107 = vand.u32 2147483647, %v341
        %vm8108 = vcmp.le.f32.partialorder %v8107, 0.7853982
        %vm8109 = vcmp.lt.s32.totalorder %v341, 0
        %v8110 = vand.u32 %v341, 2139095040
        %v8111 = vshrl.u32 %v8110, 23
        %v8112 = vsub.s32 %v8111, 127
        %v8113 = vand.u32 2147483647, %v341
        %v8114 = vand.u32 %v8113, 8388607
        %v8115 = vor.u32 %v8114, 8388608
        %v8116 = vsub.s32 0, %v8115
        %v8117 = vadd.s32 %v8112, 1
        %vm8118 = vcmp.gt.s32.totalorder %v8117, 0
        %v8119 = vsel %vm8118, %v8117, 0
        %v8120 = vshrl.u32 %v8119, 5
        %v8121 = vand.u32 %v8119, 31
        %v8122 = vsub.s32 32, %v8121
        %v8123 = vshrl.u32 683565275, %v8122
        %v8124 = vshll.u32 683565275, %v8121
        %v8125 = vshrl.u32 2475754826, %v8122
        %v8126 = vor.u32 %v8124, %v8125
        %v8127 = vshll.u32 2475754826, %v8121
        %v8128 = vshrl.u32 2131351028, %v8122
        %v8129 = vor.u32 %v8127, %v8128
        %v8130 = vshll.u32 2131351028, %v8121
        %v8131 = vshrl.u32 2102212464, %v8122
        %v8132 = vor.u32 %v8130, %v8131
        %v8133 = vshll.u32 2102212464, %v8121
        %v8134 = vshrl.u32 920167782, %v8122
        %v8135 = vor.u32 %v8133, %v8134
        %v8136 = vshll.u32 920167782, %v8121
        %v8137 = vshrl.u32 1326507024, %v8122
        %v8138 = vor.u32 %v8136, %v8137
        %vm8139 = vcmp.lt.s32.totalorder %v8120, 1
        %vm8140 = vcmp.lt.s32.totalorder %v8120, 2
        %vm8141 = vcmp.lt.s32.totalorder %v8120, 3
        %vm8142 = vcmp.lt.s32.totalorder %v8120, 4
        %v8143 = vsel %vm8139, %v8123, %v8126
        %v8144 = vsel %vm8142, %v8132, 2102212464
        %v8145 = vsel %vm8141, %v8129, %v8144
        %v8146 = vsel %vm8140, %v8143, %v8145
        %v8147 = vsel %vm8139, %v8126, %v8129
        %v8148 = vsel %vm8142, %v8135, 920167782
        %v8149 = vsel %vm8141, %v8132, %v8148
        %v8150 = vsel %vm8140, %v8147, %v8149
        %v8151 = vsel %vm8139, %v8129, %v8132
        %v8152 = vsel %vm8142, %v8138, 1326507024
        %v8153 = vsel %vm8141, %v8135, %v8152
        %v8154 = vsel %vm8140, %v8151, %v8153
        %v8155 = vshll.u32 %v8115, 8
        %v8156 = vmul.u32.u64.compose %v8155, %v8154
        %v8157 = vextract.low.u32 %v8156
        %v8158 = vextract.high.u32 %v8156
        %v8159 = vmul.u32.u64.compose %v8155, %v8150
        %v8160 = vextract.low.u32 %v8159
        %v8161 = vextract.high.u32 %v8159
        %v8162 = vmul.u32 %v8155, %v8146
        %v8163 = vadd.s32 %v8158, %v8160
        %vm8164 = vc.u32 %v8158, %v8160
        %v8165 = vadd.s32 %v8161, 1
        %v8166 = vsel %vm8164, %v8165, %v8161
        %v8167 = vadd.s32 %v8162, %v8166
        %v8168 = vadd.s32 %v8167, 536870912
        %v8169 = vshrl.u32 %v8168, 30
        %v8170 = vshll.u32 %v8169, 30
        %v8171 = vsub.s32 %v8167, %v8170
        %vm8172 = vcmp.lt.s32.totalorder %v8171, 0
        %v8173 = vsub.s32 0, %v8171
        %v8174 = vsel %vm8172, %v8173, %v8171
        %v8175 = vclz %v8174
        %v8176 = vsub.s32 %v8175, 2
        %vm8177 = vcmp.gt.s32.totalorder 0, %v8176
        %v8178 = vsel %vm8177, 0, %v8176
        %v8179 = vsub.s32 32, %v8178
        %v8180 = vshll.u32 %v8171, %v8178
        %v8181 = vshrl.u32 %v8163, %v8179
        %v8182 = vor.u32 %v8180, %v8181
        %v8183 = vsub.s32 4294967266, %v8178
        %v8184 = vadd.s32 %v8183, 127
        %v8185 = vshll.u32 %v8184, 23
        %v8186 = vor.u32 4788187, %v8185
        %v8187 = vand.u32 2147483647, %v8186
        %v8189 = vcvt.s32.f32 %v8182
        %v8190 = vmul.f32 %v8189, %v8187
        %v8191 = vxor.u32 %v8190, 2147483648
        %v8192 = vsel %vm8109, %v8191, %v8190
        %v8193 = vsub.s32 4, %v8169
        %v8194 = vsel %vm8109, %v8193, %v8169
        %v8195 = vsel %vm8108, %v341, %v8192
        %v8196 = vsel %vm8108, 0, %v8194
        %v8197 = vcosq.f32.pop %v8195
        %v8198 = vsinq.f32.pop %v8195
        %vm8199 = vweird.f32 %v341
        %v8200 = vadd.s32 %v8196, 3
        %v8201 = vand.u32 %v8200, 3
        %vm8202 = vcmp.lt.s32.totalorder %v8201, 2
        %vm8203 = vcmp.eq.s32.totalorder %v8201, 0
        %v8204 = vxor.u32 %v8198, 2147483648
        %v8205 = vsel %vm8203, %v8197, %v8204
        %vm8206 = vcmp.eq.s32.totalorder %v8201, 2
        %v8207 = vxor.u32 %v8197, 2147483648
        %v8208 = vsel %vm8206, %v8207, %v8198
        %v8209 = vsel %vm8202, %v8205, %v8208
        %v8210 = vsel %vm8199, nan, %v8209
        %v8211 = vand.u32 2147483647, %v342
        %vm8212 = vcmp.le.f32.partialorder %v8211, 0.7853982
        %vm8213 = vcmp.lt.s32.totalorder %v342, 0
        %v8214 = vand.u32 %v342, 2139095040
        %v8215 = vshrl.u32 %v8214, 23
        %v8216 = vsub.s32 %v8215, 127
        %v8217 = vand.u32 2147483647, %v342
        %v8218 = vand.u32 %v8217, 8388607
        %v8219 = vor.u32 %v8218, 8388608
        %v8220 = vsub.s32 0, %v8219
        %v8221 = vadd.s32 %v8216, 1
        %vm8222 = vcmp.gt.s32.totalorder %v8221, 0
        %v8223 = vsel %vm8222, %v8221, 0
        %v8224 = vshrl.u32 %v8223, 5
        %v8225 = vand.u32 %v8223, 31
        %v8226 = vsub.s32 32, %v8225
        %v8227 = vshrl.u32 683565275, %v8226
        %v8228 = vshll.u32 683565275, %v8225
        %v8229 = vshrl.u32 2475754826, %v8226
        %v8230 = vor.u32 %v8228, %v8229
        %v8231 = vshll.u32 2475754826, %v8225
        %v8232 = vshrl.u32 2131351028, %v8226
        %v8233 = vor.u32 %v8231, %v8232
        %v8234 = vshll.u32 2131351028, %v8225
        %v8235 = vshrl.u32 2102212464, %v8226
        %v8236 = vor.u32 %v8234, %v8235
        %v8237 = vshll.u32 2102212464, %v8225
        %v8238 = vshrl.u32 920167782, %v8226
        %v8239 = vor.u32 %v8237, %v8238
        %v8240 = vshll.u32 920167782, %v8225
        %v8241 = vshrl.u32 1326507024, %v8226
        %v8242 = vor.u32 %v8240, %v8241
        %vm8243 = vcmp.lt.s32.totalorder %v8224, 1
        %vm8244 = vcmp.lt.s32.totalorder %v8224, 2
        %vm8245 = vcmp.lt.s32.totalorder %v8224, 3
        %vm8246 = vcmp.lt.s32.totalorder %v8224, 4
        %v8247 = vsel %vm8243, %v8227, %v8230
        %v8248 = vsel %vm8246, %v8236, 2102212464
        %v8249 = vsel %vm8245, %v8233, %v8248
        %v8250 = vsel %vm8244, %v8247, %v8249
        %v8251 = vsel %vm8243, %v8230, %v8233
        %v8252 = vsel %vm8246, %v8239, 920167782
        %v8253 = vsel %vm8245, %v8236, %v8252
        %v8254 = vsel %vm8244, %v8251, %v8253
        %v8255 = vsel %vm8243, %v8233, %v8236
        %v8256 = vsel %vm8246, %v8242, 1326507024
        %v8257 = vsel %vm8245, %v8239, %v8256
        %v8258 = vsel %vm8244, %v8255, %v8257
        %v8259 = vshll.u32 %v8219, 8
        %v8260 = vmul.u32.u64.compose %v8259, %v8258
        %v8261 = vextract.low.u32 %v8260
        %v8262 = vextract.high.u32 %v8260
        %v8263 = vmul.u32.u64.compose %v8259, %v8254
        %v8264 = vextract.low.u32 %v8263
        %v8265 = vextract.high.u32 %v8263
        %v8266 = vmul.u32 %v8259, %v8250
        %v8267 = vadd.s32 %v8262, %v8264
        %vm8268 = vc.u32 %v8262, %v8264
        %v8269 = vadd.s32 %v8265, 1
        %v8270 = vsel %vm8268, %v8269, %v8265
        %v8271 = vadd.s32 %v8266, %v8270
        %v8272 = vadd.s32 %v8271, 536870912
        %v8273 = vshrl.u32 %v8272, 30
        %v8274 = vshll.u32 %v8273, 30
        %v8275 = vsub.s32 %v8271, %v8274
        %vm8276 = vcmp.lt.s32.totalorder %v8275, 0
        %v8277 = vsub.s32 0, %v8275
        %v8278 = vsel %vm8276, %v8277, %v8275
        %v8279 = vclz %v8278
        %v8280 = vsub.s32 %v8279, 2
        %vm8281 = vcmp.gt.s32.totalorder 0, %v8280
        %v8282 = vsel %vm8281, 0, %v8280
        %v8283 = vsub.s32 32, %v8282
        %v8284 = vshll.u32 %v8275, %v8282
        %v8285 = vshrl.u32 %v8267, %v8283
        %v8286 = vor.u32 %v8284, %v8285
        %v8287 = vsub.s32 4294967266, %v8282
        %v8288 = vadd.s32 %v8287, 127
        %v8289 = vshll.u32 %v8288, 23
        %v8290 = vor.u32 4788187, %v8289
        %v8291 = vand.u32 2147483647, %v8290
        %v8293 = vcvt.s32.f32 %v8286
        %v8294 = vmul.f32 %v8293, %v8291
        %v8295 = vxor.u32 %v8294, 2147483648
        %v8296 = vsel %vm8213, %v8295, %v8294
        %v8297 = vsub.s32 4, %v8273
        %v8298 = vsel %vm8213, %v8297, %v8273
        %v8299 = vsel %vm8212, %v342, %v8296
        %v8300 = vsel %vm8212, 0, %v8298
        %v8301 = vcosq.f32.pop %v8299
        %v8302 = vsinq.f32.pop %v8299
        %vm8303 = vweird.f32 %v342
        %v8304 = vadd.s32 %v8300, 3
        %v8305 = vand.u32 %v8304, 3
        %vm8306 = vcmp.lt.s32.totalorder %v8305, 2
        %vm8307 = vcmp.eq.s32.totalorder %v8305, 0
        %v8308 = vxor.u32 %v8302, 2147483648
        %v8309 = vsel %vm8307, %v8301, %v8308
        %vm8310 = vcmp.eq.s32.totalorder %v8305, 2
        %v8311 = vxor.u32 %v8301, 2147483648
        %v8312 = vsel %vm8310, %v8311, %v8302
        %v8313 = vsel %vm8306, %v8309, %v8312
        %v8314 = vsel %vm8303, nan, %v8313
        %v8315 = vand.u32 2147483647, %v343
        %vm8316 = vcmp.le.f32.partialorder %v8315, 0.7853982
        %vm8317 = vcmp.lt.s32.totalorder %v343, 0
        %v8318 = vand.u32 %v343, 2139095040
        %v8319 = vshrl.u32 %v8318, 23
        %v8320 = vsub.s32 %v8319, 127
        %v8321 = vand.u32 2147483647, %v343
        %v8322 = vand.u32 %v8321, 8388607
        %v8323 = vor.u32 %v8322, 8388608
        %v8324 = vsub.s32 0, %v8323
        %v8325 = vadd.s32 %v8320, 1
        %vm8326 = vcmp.gt.s32.totalorder %v8325, 0
        %v8327 = vsel %vm8326, %v8325, 0
        %v8328 = vshrl.u32 %v8327, 5
        %v8329 = vand.u32 %v8327, 31
        %v8330 = vsub.s32 32, %v8329
        %v8331 = vshrl.u32 683565275, %v8330
        %v8332 = vshll.u32 683565275, %v8329
        %v8333 = vshrl.u32 2475754826, %v8330
        %v8334 = vor.u32 %v8332, %v8333
        %v8335 = vshll.u32 2475754826, %v8329
        %v8336 = vshrl.u32 2131351028, %v8330
        %v8337 = vor.u32 %v8335, %v8336
        %v8338 = vshll.u32 2131351028, %v8329
        %v8339 = vshrl.u32 2102212464, %v8330
        %v8340 = vor.u32 %v8338, %v8339
        %v8341 = vshll.u32 2102212464, %v8329
        %v8342 = vshrl.u32 920167782, %v8330
        %v8343 = vor.u32 %v8341, %v8342
        %v8344 = vshll.u32 920167782, %v8329
        %v8345 = vshrl.u32 1326507024, %v8330
        %v8346 = vor.u32 %v8344, %v8345
        %vm8347 = vcmp.lt.s32.totalorder %v8328, 1
        %vm8348 = vcmp.lt.s32.totalorder %v8328, 2
        %vm8349 = vcmp.lt.s32.totalorder %v8328, 3
        %vm8350 = vcmp.lt.s32.totalorder %v8328, 4
        %v8351 = vsel %vm8347, %v8331, %v8334
        %v8352 = vsel %vm8350, %v8340, 2102212464
        %v8353 = vsel %vm8349, %v8337, %v8352
        %v8354 = vsel %vm8348, %v8351, %v8353
        %v8355 = vsel %vm8347, %v8334, %v8337
        %v8356 = vsel %vm8350, %v8343, 920167782
        %v8357 = vsel %vm8349, %v8340, %v8356
        %v8358 = vsel %vm8348, %v8355, %v8357
        %v8359 = vsel %vm8347, %v8337, %v8340
        %v8360 = vsel %vm8350, %v8346, 1326507024
        %v8361 = vsel %vm8349, %v8343, %v8360
        %v8362 = vsel %vm8348, %v8359, %v8361
        %v8363 = vshll.u32 %v8323, 8
        %v8364 = vmul.u32.u64.compose %v8363, %v8362
        %v8365 = vextract.low.u32 %v8364
        %v8366 = vextract.high.u32 %v8364
        %v8367 = vmul.u32.u64.compose %v8363, %v8358
        %v8368 = vextract.low.u32 %v8367
        %v8369 = vextract.high.u32 %v8367
        %v8370 = vmul.u32 %v8363, %v8354
        %v8371 = vadd.s32 %v8366, %v8368
        %vm8372 = vc.u32 %v8366, %v8368
        %v8373 = vadd.s32 %v8369, 1
        %v8374 = vsel %vm8372, %v8373, %v8369
        %v8375 = vadd.s32 %v8370, %v8374
        %v8376 = vadd.s32 %v8375, 536870912
        %v8377 = vshrl.u32 %v8376, 30
        %v8378 = vshll.u32 %v8377, 30
        %v8379 = vsub.s32 %v8375, %v8378
        %vm8380 = vcmp.lt.s32.totalorder %v8379, 0
        %v8381 = vsub.s32 0, %v8379
        %v8382 = vsel %vm8380, %v8381, %v8379
        %v8383 = vclz %v8382
        %v8384 = vsub.s32 %v8383, 2
        %vm8385 = vcmp.gt.s32.totalorder 0, %v8384
        %v8386 = vsel %vm8385, 0, %v8384
        %v8387 = vsub.s32 32, %v8386
        %v8388 = vshll.u32 %v8379, %v8386
        %v8389 = vshrl.u32 %v8371, %v8387
        %v8390 = vor.u32 %v8388, %v8389
        %v8391 = vsub.s32 4294967266, %v8386
        %v8392 = vadd.s32 %v8391, 127
        %v8393 = vshll.u32 %v8392, 23
        %v8394 = vor.u32 4788187, %v8393
        %v8395 = vand.u32 2147483647, %v8394
        %v8397 = vcvt.s32.f32 %v8390
        %v8398 = vmul.f32 %v8397, %v8395
        %v8399 = vxor.u32 %v8398, 2147483648
        %v8400 = vsel %vm8317, %v8399, %v8398
        %v8401 = vsub.s32 4, %v8377
        %v8402 = vsel %vm8317, %v8401, %v8377
        %v8403 = vsel %vm8316, %v343, %v8400
        %v8404 = vsel %vm8316, 0, %v8402
        %v8405 = vcosq.f32.pop %v8403
        %v8406 = vsinq.f32.pop %v8403
        %vm8407 = vweird.f32 %v343
        %v8408 = vadd.s32 %v8404, 3
        %v8409 = vand.u32 %v8408, 3
        %vm8410 = vcmp.lt.s32.totalorder %v8409, 2
        %vm8411 = vcmp.eq.s32.totalorder %v8409, 0
        %v8412 = vxor.u32 %v8406, 2147483648
        %v8413 = vsel %vm8411, %v8405, %v8412
        %vm8414 = vcmp.eq.s32.totalorder %v8409, 2
        %v8415 = vxor.u32 %v8405, 2147483648
        %v8416 = vsel %vm8414, %v8415, %v8406
        %v8417 = vsel %vm8410, %v8413, %v8416
        %v8418 = vsel %vm8407, nan, %v8417
        %v8419 = vand.u32 2147483647, %v344
        %vm8420 = vcmp.le.f32.partialorder %v8419, 0.7853982
        %vm8421 = vcmp.lt.s32.totalorder %v344, 0
        %v8422 = vand.u32 %v344, 2139095040
        %v8423 = vshrl.u32 %v8422, 23
        %v8424 = vsub.s32 %v8423, 127
        %v8425 = vand.u32 2147483647, %v344
        %v8426 = vand.u32 %v8425, 8388607
        %v8427 = vor.u32 %v8426, 8388608
        %v8428 = vsub.s32 0, %v8427
        %v8429 = vadd.s32 %v8424, 1
        %vm8430 = vcmp.gt.s32.totalorder %v8429, 0
        %v8431 = vsel %vm8430, %v8429, 0
        %v8432 = vshrl.u32 %v8431, 5
        %v8433 = vand.u32 %v8431, 31
        %v8434 = vsub.s32 32, %v8433
        %v8435 = vshrl.u32 683565275, %v8434
        %v8436 = vshll.u32 683565275, %v8433
        %v8437 = vshrl.u32 2475754826, %v8434
        %v8438 = vor.u32 %v8436, %v8437
        %v8439 = vshll.u32 2475754826, %v8433
        %v8440 = vshrl.u32 2131351028, %v8434
        %v8441 = vor.u32 %v8439, %v8440
        %v8442 = vshll.u32 2131351028, %v8433
        %v8443 = vshrl.u32 2102212464, %v8434
        %v8444 = vor.u32 %v8442, %v8443
        %v8445 = vshll.u32 2102212464, %v8433
        %v8446 = vshrl.u32 920167782, %v8434
        %v8447 = vor.u32 %v8445, %v8446
        %v8448 = vshll.u32 920167782, %v8433
        %v8449 = vshrl.u32 1326507024, %v8434
        %v8450 = vor.u32 %v8448, %v8449
        %vm8451 = vcmp.lt.s32.totalorder %v8432, 1
        %vm8452 = vcmp.lt.s32.totalorder %v8432, 2
        %vm8453 = vcmp.lt.s32.totalorder %v8432, 3
        %vm8454 = vcmp.lt.s32.totalorder %v8432, 4
        %v8455 = vsel %vm8451, %v8435, %v8438
        %v8456 = vsel %vm8454, %v8444, 2102212464
        %v8457 = vsel %vm8453, %v8441, %v8456
        %v8458 = vsel %vm8452, %v8455, %v8457
        %v8459 = vsel %vm8451, %v8438, %v8441
        %v8460 = vsel %vm8454, %v8447, 920167782
        %v8461 = vsel %vm8453, %v8444, %v8460
        %v8462 = vsel %vm8452, %v8459, %v8461
        %v8463 = vsel %vm8451, %v8441, %v8444
        %v8464 = vsel %vm8454, %v8450, 1326507024
        %v8465 = vsel %vm8453, %v8447, %v8464
        %v8466 = vsel %vm8452, %v8463, %v8465
        %v8467 = vshll.u32 %v8427, 8
        %v8468 = vmul.u32.u64.compose %v8467, %v8466
        %v8469 = vextract.low.u32 %v8468
        %v8470 = vextract.high.u32 %v8468
        %v8471 = vmul.u32.u64.compose %v8467, %v8462
        %v8472 = vextract.low.u32 %v8471
        %v8473 = vextract.high.u32 %v8471
        %v8474 = vmul.u32 %v8467, %v8458
        %v8475 = vadd.s32 %v8470, %v8472
        %vm8476 = vc.u32 %v8470, %v8472
        %v8477 = vadd.s32 %v8473, 1
        %v8478 = vsel %vm8476, %v8477, %v8473
        %v8479 = vadd.s32 %v8474, %v8478
        %v8480 = vadd.s32 %v8479, 536870912
        %v8481 = vshrl.u32 %v8480, 30
        %v8482 = vshll.u32 %v8481, 30
        %v8483 = vsub.s32 %v8479, %v8482
        %vm8484 = vcmp.lt.s32.totalorder %v8483, 0
        %v8485 = vsub.s32 0, %v8483
        %v8486 = vsel %vm8484, %v8485, %v8483
        %v8487 = vclz %v8486
        %v8488 = vsub.s32 %v8487, 2
        %vm8489 = vcmp.gt.s32.totalorder 0, %v8488
        %v8490 = vsel %vm8489, 0, %v8488
        %v8491 = vsub.s32 32, %v8490
        %v8492 = vshll.u32 %v8483, %v8490
        %v8493 = vshrl.u32 %v8475, %v8491
        %v8494 = vor.u32 %v8492, %v8493
        %v8495 = vsub.s32 4294967266, %v8490
        %v8496 = vadd.s32 %v8495, 127
        %v8497 = vshll.u32 %v8496, 23
        %v8498 = vor.u32 4788187, %v8497
        %v8499 = vand.u32 2147483647, %v8498
        %v8501 = vcvt.s32.f32 %v8494
        %v8502 = vmul.f32 %v8501, %v8499
        %v8503 = vxor.u32 %v8502, 2147483648
        %v8504 = vsel %vm8421, %v8503, %v8502
        %v8505 = vsub.s32 4, %v8481
        %v8506 = vsel %vm8421, %v8505, %v8481
        %v8507 = vsel %vm8420, %v344, %v8504
        %v8508 = vsel %vm8420, 0, %v8506
        %v8509 = vcosq.f32.pop %v8507
        %v8510 = vsinq.f32.pop %v8507
        %vm8511 = vweird.f32 %v344
        %v8512 = vadd.s32 %v8508, 3
        %v8513 = vand.u32 %v8512, 3
        %vm8514 = vcmp.lt.s32.totalorder %v8513, 2
        %vm8515 = vcmp.eq.s32.totalorder %v8513, 0
        %v8516 = vxor.u32 %v8510, 2147483648
        %v8517 = vsel %vm8515, %v8509, %v8516
        %vm8518 = vcmp.eq.s32.totalorder %v8513, 2
        %v8519 = vxor.u32 %v8509, 2147483648
        %v8520 = vsel %vm8518, %v8519, %v8510
        %v8521 = vsel %vm8514, %v8517, %v8520
        %v8522 = vsel %vm8511, nan, %v8521
        %v8523 = vand.u32 2147483647, %v345
        %vm8524 = vcmp.le.f32.partialorder %v8523, 0.7853982
        %vm8525 = vcmp.lt.s32.totalorder %v345, 0
        %v8526 = vand.u32 %v345, 2139095040
        %v8527 = vshrl.u32 %v8526, 23
        %v8528 = vsub.s32 %v8527, 127
        %v8529 = vand.u32 2147483647, %v345
        %v8530 = vand.u32 %v8529, 8388607
        %v8531 = vor.u32 %v8530, 8388608
        %v8532 = vsub.s32 0, %v8531
        %v8533 = vadd.s32 %v8528, 1
        %vm8534 = vcmp.gt.s32.totalorder %v8533, 0
        %v8535 = vsel %vm8534, %v8533, 0
        %v8536 = vshrl.u32 %v8535, 5
        %v8537 = vand.u32 %v8535, 31
        %v8538 = vsub.s32 32, %v8537
        %v8539 = vshrl.u32 683565275, %v8538
        %v8540 = vshll.u32 683565275, %v8537
        %v8541 = vshrl.u32 2475754826, %v8538
        %v8542 = vor.u32 %v8540, %v8541
        %v8543 = vshll.u32 2475754826, %v8537
        %v8544 = vshrl.u32 2131351028, %v8538
        %v8545 = vor.u32 %v8543, %v8544
        %v8546 = vshll.u32 2131351028, %v8537
        %v8547 = vshrl.u32 2102212464, %v8538
        %v8548 = vor.u32 %v8546, %v8547
        %v8549 = vshll.u32 2102212464, %v8537
        %v8550 = vshrl.u32 920167782, %v8538
        %v8551 = vor.u32 %v8549, %v8550
        %v8552 = vshll.u32 920167782, %v8537
        %v8553 = vshrl.u32 1326507024, %v8538
        %v8554 = vor.u32 %v8552, %v8553
        %vm8555 = vcmp.lt.s32.totalorder %v8536, 1
        %vm8556 = vcmp.lt.s32.totalorder %v8536, 2
        %vm8557 = vcmp.lt.s32.totalorder %v8536, 3
        %vm8558 = vcmp.lt.s32.totalorder %v8536, 4
        %v8559 = vsel %vm8555, %v8539, %v8542
        %v8560 = vsel %vm8558, %v8548, 2102212464
        %v8561 = vsel %vm8557, %v8545, %v8560
        %v8562 = vsel %vm8556, %v8559, %v8561
        %v8563 = vsel %vm8555, %v8542, %v8545
        %v8564 = vsel %vm8558, %v8551, 920167782
        %v8565 = vsel %vm8557, %v8548, %v8564
        %v8566 = vsel %vm8556, %v8563, %v8565
        %v8567 = vsel %vm8555, %v8545, %v8548
        %v8568 = vsel %vm8558, %v8554, 1326507024
        %v8569 = vsel %vm8557, %v8551, %v8568
        %v8570 = vsel %vm8556, %v8567, %v8569
        %v8571 = vshll.u32 %v8531, 8
        %v8572 = vmul.u32.u64.compose %v8571, %v8570
        %v8573 = vextract.low.u32 %v8572
        %v8574 = vextract.high.u32 %v8572
        %v8575 = vmul.u32.u64.compose %v8571, %v8566
        %v8576 = vextract.low.u32 %v8575
        %v8577 = vextract.high.u32 %v8575
        %v8578 = vmul.u32 %v8571, %v8562
        %v8579 = vadd.s32 %v8574, %v8576
        %vm8580 = vc.u32 %v8574, %v8576
        %v8581 = vadd.s32 %v8577, 1
        %v8582 = vsel %vm8580, %v8581, %v8577
        %v8583 = vadd.s32 %v8578, %v8582
        %v8584 = vadd.s32 %v8583, 536870912
        %v8585 = vshrl.u32 %v8584, 30
        %v8586 = vshll.u32 %v8585, 30
        %v8587 = vsub.s32 %v8583, %v8586
        %vm8588 = vcmp.lt.s32.totalorder %v8587, 0
        %v8589 = vsub.s32 0, %v8587
        %v8590 = vsel %vm8588, %v8589, %v8587
        %v8591 = vclz %v8590
        %v8592 = vsub.s32 %v8591, 2
        %vm8593 = vcmp.gt.s32.totalorder 0, %v8592
        %v8594 = vsel %vm8593, 0, %v8592
        %v8595 = vsub.s32 32, %v8594
        %v8596 = vshll.u32 %v8587, %v8594
        %v8597 = vshrl.u32 %v8579, %v8595
        %v8598 = vor.u32 %v8596, %v8597
        %v8599 = vsub.s32 4294967266, %v8594
        %v8600 = vadd.s32 %v8599, 127
        %v8601 = vshll.u32 %v8600, 23
        %v8602 = vor.u32 4788187, %v8601
        %v8603 = vand.u32 2147483647, %v8602
        %v8605 = vcvt.s32.f32 %v8598
        %v8606 = vmul.f32 %v8605, %v8603
        %v8607 = vxor.u32 %v8606, 2147483648
        %v8608 = vsel %vm8525, %v8607, %v8606
        %v8609 = vsub.s32 4, %v8585
        %v8610 = vsel %vm8525, %v8609, %v8585
        %v8611 = vsel %vm8524, %v345, %v8608
        %v8612 = vsel %vm8524, 0, %v8610
        %v8613 = vcosq.f32.pop %v8611
        %v8614 = vsinq.f32.pop %v8611
        %vm8615 = vweird.f32 %v345
        %v8616 = vadd.s32 %v8612, 3
        %v8617 = vand.u32 %v8616, 3
        %vm8618 = vcmp.lt.s32.totalorder %v8617, 2
        %vm8619 = vcmp.eq.s32.totalorder %v8617, 0
        %v8620 = vxor.u32 %v8614, 2147483648
        %v8621 = vsel %vm8619, %v8613, %v8620
        %vm8622 = vcmp.eq.s32.totalorder %v8617, 2
        %v8623 = vxor.u32 %v8613, 2147483648
        %v8624 = vsel %vm8622, %v8623, %v8614
        %v8625 = vsel %vm8618, %v8621, %v8624
        %v8626 = vsel %vm8615, nan, %v8625
        %v8627 = vsel %vm346, 1, 0
        %v8628 = vlaneseq
        %v8629 = vshrl.u32 %v8628, 7
        %v8630 = vsub.s32 0, %v8629
        %v8631 = vrot.slane %v8627, %v8630
        %vm8632 = vcmp.eq.s32.totalorder %v8631, 1
        %v8633 = vsel %vm8632, %v449, %v4570
        %v8634 = vsel %vm8632, %v552, %v4674
        %v8635 = vsel %vm8632, %v655, %v4778
        %v8636 = vsel %vm8632, %v758, %v4882
        %v8637 = vsel %vm8632, %v861, %v4986
        %v8638 = vsel %vm8632, %v964, %v5090
        %v8639 = vsel %vm8632, %v1067, %v5194
        %v8640 = vsel %vm8632, %v1170, %v5298
        %v8641 = vsel %vm8632, %v1273, %v5402
        %v8642 = vsel %vm8632, %v1376, %v5506
        %v8643 = vsel %vm8632, %v1479, %v5610
        %v8644 = vsel %vm8632, %v1582, %v5714
        %v8645 = vsel %vm8632, %v1685, %v5818
        %v8646 = vsel %vm8632, %v1788, %v5922
        %v8647 = vsel %vm8632, %v1891, %v6026
        %v8648 = vsel %vm8632, %v1994, %v6130
        %v8649 = vsel %vm8632, %v2097, %v6234
        %v8650 = vsel %vm8632, %v2200, %v6338
        %v8651 = vsel %vm8632, %v2303, %v6442
        %v8652 = vsel %vm8632, %v2406, %v6546
        %v8653 = vsel %vm8632, %v2509, %v6650
        %v8654 = vsel %vm8632, %v2612, %v6754
        %v8655 = vsel %vm8632, %v2715, %v6858
        %v8656 = vsel %vm8632, %v2818, %v6962
        %v8657 = vsel %vm8632, %v2921, %v7066
        %v8658 = vsel %vm8632, %v3024, %v7170
        %v8659 = vsel %vm8632, %v3127, %v7274
        %v8660 = vsel %vm8632, %v3230, %v7378
        %v8661 = vsel %vm8632, %v3333, %v7482
        %v8662 = vsel %vm8632, %v3436, %v7586
        %v8663 = vsel %vm8632, %v3539, %v7690
        %v8664 = vsel %vm8632, %v3642, %v7794
        %v8665 = vsel %vm8632, %v3745, %v7898
        %v8666 = vsel %vm8632, %v3848, %v8002
        %v8667 = vsel %vm8632, %v3951, %v8106
        %v8668 = vsel %vm8632, %v4054, %v8210
        %v8669 = vsel %vm8632, %v4157, %v8314
        %v8670 = vsel %vm8632, %v4260, %v8418
        %v8671 = vsel %vm8632, %v4363, %v8522
        %v8672 = vsel %vm8632, %v4466, %v8626
        %8673 = vst [vmem:[%s128] sm:$0xff] %v8633
        %8674 = vst [vmem:[%s128 + $0x8] sm:$0xff] %v8634
        %8675 = vst [vmem:[%s128 + $0x10] sm:$0xff] %v8635
        %8676 = vst [vmem:[%s128 + $0x18] sm:$0xff] %v8636
        %8677 = vst [vmem:[%s128 + $0x20] sm:$0xff] %v8637
        %8678 = vst [vmem:[%s128 + $0x28] sm:$0xff] %v8638
        %8679 = vst [vmem:[%s128 + $0x30] sm:$0xff] %v8639
        %8680 = vst [vmem:[%s128 + $0x38] sm:$0xff] %v8640
        %8681 = vst [vmem:[%s128 + $0x40] sm:$0xff] %v8641
        %8682 = vst [vmem:[%s128 + $0x48] sm:$0xff] %v8642
        %8683 = vst [vmem:[%s128 + $0x50] sm:$0xff] %v8643
        %8684 = vst [vmem:[%s128 + $0x58] sm:$0xff] %v8644
        %8685 = vst [vmem:[%s128 + $0x60] sm:$0xff] %v8645
        %8686 = vst [vmem:[%s128 + $0x68] sm:$0xff] %v8646
        %8687 = vst [vmem:[%s128 + $0x70] sm:$0xff] %v8647
        %8688 = vst [vmem:[%s128 + $0x78] sm:$0xff] %v8648
        %8689 = vst [vmem:[%s128 + $0x80] sm:$0xff] %v8649
        %8690 = vst [vmem:[%s128 + $0x88] sm:$0xff] %v8650
        %8691 = vst [vmem:[%s128 + $0x90] sm:$0xff] %v8651
        %8692 = vst [vmem:[%s128 + $0x98] sm:$0xff] %v8652
        %8693 = vst [vmem:[%s128 + $0xa0] sm:$0xff] %v8653
        %8694 = vst [vmem:[%s128 + $0xa8] sm:$0xff] %v8654
        %8695 = vst [vmem:[%s128 + $0xb0] sm:$0xff] %v8655
        %8696 = vst [vmem:[%s128 + $0xb8] sm:$0xff] %v8656
        %8697 = vst [vmem:[%s128 + $0xc0] sm:$0xff] %v8657
        %8698 = vst [vmem:[%s128 + $0xc8] sm:$0xff] %v8658
        %8699 = vst [vmem:[%s128 + $0xd0] sm:$0xff] %v8659
        %8700 = vst [vmem:[%s128 + $0xd8] sm:$0xff] %v8660
        %8701 = vst [vmem:[%s128 + $0xe0] sm:$0xff] %v8661
        %8702 = vst [vmem:[%s128 + $0xe8] sm:$0xff] %v8662
        %8703 = vst [vmem:[%s128 + $0xf0] sm:$0xff] %v8663
        %8704 = vst [vmem:[%s128 + $0xf8] sm:$0xff] %v8664
        %8705 = vst [vmem:[%s128 + $0x100] sm:$0xff] %v8665
        %8706 = vst [vmem:[%s128 + $0x108] sm:$0xff] %v8666
        %8707 = vst [vmem:[%s128 + $0x110] sm:$0xff] %v8667
        %8708 = vst [vmem:[%s128 + $0x118] sm:$0xff] %v8668
        %8709 = vst [vmem:[%s128 + $0x120] sm:$0xff] %v8669
        %8710 = vst [vmem:[%s128 + $0x128] sm:$0xff] %v8670
        %8711 = vst [vmem:[%s128 + $0x130] sm:$0xff] %v8671
        %8712 = vst [vmem:[%s128 + $0x138] sm:$0xff] %v8672
        %s8713 = sand.u32 %s64, 1
        %s8714 = scalar_lea.sflag [#allocation4], %s8713
        %s8715 = sand.u32 %s64, 1
        %s8716 = smul.addr %s8715, 320
        %s8717 = scalar_lea.vmem [#allocation5], %s8716
        // Predicated region
        $region29: #{tpu_custom_call.1} parent=23 // pred_check
          %p8718 = pneg %p74
        $region30: #{tpu_custom_call.1} parent=23 // pred_check_branch
          %8720 = sbr.rel (%p8718) target = $region32
        $region31: #{tpu_custom_call.1} parent=23 // pred_region
          %s8721 = smul.u32 40, %s20
          %s8723 = ssub.s32 5120, 5120
          %8724 = vsyncadd %s8714, %s8723
          %s8725 = sadd.s32 %s21, %s8721
          %s8726 = smul.addr %s8725, 128
          %s8727 = scalar_lea.hbm %s1, %s8726
          %s8728 = sshll.u32 %s8717, 4
          %s8729 = int_to_ptr.vmem [resolvable:$true] %s8728
          %8734 = dma.vmem_to_hbm [thread:$0]  %s8729, 5120, %s8727, %s8714, 128, 128, 8
        $region32: #{tpu_custom_call.1} parent=23 // pred_fallthru
          _
      $region24: #{tpu_custom_call.1} parent=5 // pred_fallthru
        _
      %p8735 = scmp.le.s32.totalorder 2, %s11
      // Predicated region
      $region33: #{tpu_custom_call.1} parent=5 // pred_check
        %p8736 = pneg %p8735
      $region34: #{tpu_custom_call.1} parent=5 // pred_check_branch
        %8738 = sbr.rel (%p8736) target = $region36
      $region35: #{tpu_custom_call.1} parent=5 // pred_region
        %s8739 = ssub.s32 %s11, 2
        // Predicated region
        $region37: #{tpu_custom_call.1} parent=35 // pred_check
          %p8740 = pneg %p80
        $region38: #{tpu_custom_call.1} parent=35 // pred_check_branch
          %8742 = sbr.rel (%p8740) target = $region40
        $region39: #{tpu_custom_call.1} parent=35 // pred_region
          %s8743 = sand.u32 %s65, 1
          %s8744 = scalar_lea.sflag [#allocation4], %s8743
          %s8745 = sand.u32 %s65, 1
          %s8746 = smul.addr %s8745, 320
          %s8747 = scalar_lea.vmem [#allocation5], %s8746
          %8748 = dma.done %s8744, 5120
        $region40: #{tpu_custom_call.1} parent=35 // pred_fallthru
          _
      $region36: #{tpu_custom_call.1} parent=5 // pred_fallthru
        _
    $region6: #{tpu_custom_call.1} parent=1 // loop_footer
      %s15 = sadd.s32 1, %s11
    $region7: #{tpu_custom_call.1} parent=1 // loop_footer_branch
      %10 = sbr.rel target = $region3
    $region8: #{tpu_custom_call.1} parent=1 // loop_exit
      _
    %8749 = vsyncpa [#allocation3], 1
    %s8750 = scalar_lea.sflag [#allocation3], 1
    %8751 = vsyncpa %s8750, 1
    %8752 = vsyncpa [#allocation4], 1
    %s8753 = scalar_lea.sflag [#allocation4], 1
    %8754 = vsyncpa %s8753, 1

</llo_original>
